<compile_context>
chip_gen: v6e
topology: v6e:2x2x1
jax: 0.10.0
libtpu: 0.0.40
codegen_flags: <defaults>
</compile_context>

<pallas_src>
import functools

import jax
import jax.numpy as jnp
from jax.experimental import pallas as pl
from jax.experimental.pallas import tpu as pltpu

# ---------------- config (mirrors the PyTorch config dict) ----------------
CONFIG = dict(
    gnn_encoder="GIN",
    gnn_filters=[32, 32],
    tau=0.05,
    n_sink_iter=20,
    n_samples=2,
    max_set_size=16,
    dropout=0.0,           # eval mode -> F.dropout is a no-op
)
N_FEAT = 16
GIN_EPS = 1.0              # GINConv(..., eps=True) -> eps buffer = 1.0 -> (1+eps) = 2.0


# ===================== the single fused kernel =====================
def gsmodel_kernel(x_ref, a_ref, m_ref, noise_ref,
                   w1a_ref, b1a_ref, w2a_ref, b2a_ref,
                   w1b_ref, b1b_ref, w2b_ref, b2b_ref,
                   fc1w_ref, fc1b_ref, fc2w_ref, fc2b_ref, W_ref,
                   m1w_ref, m1b_ref, m2w_ref, m2b_ref,
                   out_ref, *, n_batch, set_size, n_samples, inv_tau, n_sink_iter, eps_gin):
    B, N, S = n_batch, set_size, n_samples
    BN = B * N

    x = x_ref[...]                  # (2*B*N, Fin)   node features, graph1 rows then graph2 rows
    a = a_ref[...]                  # (2*B*N, 2*B*N) block-diagonal adjacency (2B blocks of NxN)
    m = m_ref[...]                  # (2*B*N, 1)     node (padding) mask

    # -------- 2-layer GIN encoder, both graphs in one stacked 2-D matmul chain --------
    def gin_layer(h, w1, b1, w2, b2):
        # GINConv: nn( sum_{j in N(i)} h_j + (1 + eps) * h_i )
        agg = jnp.dot(a, h, preferred_element_type=jnp.float32) + (1.0 + eps_gin) * h
        z = jnp.maximum(jnp.dot(agg, w1, preferred_element_type=jnp.float32) + b1, 0.0)
        z = jnp.dot(z, w2, preferred_element_type=jnp.float32) + b2   # BatchNorm folded in w2/b2
        z = jnp.maximum(z, 0.0)                                       # convolutional_pass_level relu
        return z * m                                                  # keep padded rows exactly 0 (F.pad)

    h = gin_layer(x, w1a_ref[...], b1a_ref[...], w2a_ref[...], b2a_ref[...])
    emb = gin_layer(h, w1b_ref[...], b1b_ref[...], w2b_ref[...], b2b_ref[...])   # (2*B*N, D)

    # -------- fc_transform1 -> ReLU -> fc_transform2 for BOTH graphs at once --------
    t = jnp.maximum(jnp.dot(emb, fc1w_ref[...], preferred_element_type=jnp.float32)
                    + fc1b_ref[...], 0.0)
    t = jnp.dot(t, fc2w_ref[...], preferred_element_type=jnp.float32) + fc2b_ref[...]
    t = t * m                                           # graph_size_to_mask_map masking
    t1 = t[:BN]                                         # masked graph-1 transform (B*N, D)
    t2 = t[BN:]                                         # masked graph-2 transform
    g1 = emb[:BN]                                       # un-transformed GIN embeddings (padded)
    g2 = emb[BN:]

    mw = jnp.dot(t1, W_ref[...], preferred_element_type=jnp.float32)   # (B*N, D)

    # -------- per-pair sinkhorn input S_b = (M1_b @ W) @ M2_b^T + shared input MLP --------
    m1w, m1b = m1w_ref[...], m1b_ref[...]
    m2w, m2b = m2w_ref[...], m2b_ref[...]
    h_list, g1_list, g2_list = [], [], []
    for b in range(B):                                  # B tiny & static -> unrolled
        mw_b = mw[b * N:(b + 1) * N]                    # (N, D)
        t2_b = t2[b * N:(b + 1) * N]
        s_b = jnp.einsum("nd,md->nm", mw_b, t2_b, preferred_element_type=jnp.float32)  # (N, N)
        h_b = jnp.maximum(jnp.dot(s_b, m1w, preferred_element_type=jnp.float32) + m1b, 0.0)
        h_b = jnp.dot(h_b, m2w, preferred_element_type=jnp.float32) + m2b
        h_list.append(h_b)
        g1_list.append(g1[b * N:(b + 1) * N])
        g2_list.append(g2[b * N:(b + 1) * N])

    # samples x batch stacked on the leading dim -> one Sinkhorn pass for everything
    h_stack = jnp.stack(h_list * S, axis=0)             # (S*B, N, N), sample-major
    g2_stack = jnp.stack(g2_list * S, axis=0)           # (S*B, N, D)

    u = noise_ref[...]                                  # (S*B, N, N) uniform noise
    gumbel = -jnp.log(-jnp.log(u + 1e-20) + 1e-20)
    la = (h_stack + gumbel) * inv_tau                   # (log_alpha + gumbel) / tau

    def lse(v, axis):                                   # stable logsumexp, keepdims
        mx = jnp.max(v, axis=axis, keepdims=True)
        return mx + jnp.log(jnp.sum(jnp.exp(v - mx), axis=axis, keepdims=True))

    for _ in range(n_sink_iter):                        # log_sinkhorn_norm (static unroll)
        la = la - lse(la, -1)
        la = la - lse(la, -2)
    perm = jnp.exp(la)                                  # (S*B, N, N) doubly-stochastic

    pg2 = jnp.einsum("bij,bjd->bid", perm, g2_stack,
                     preferred_element_type=jnp.float32)   # (S*B, N, D)

    # -------- p_score, per-sample min/max normalisation, exp(-.), mean over samples --------
    # Kept strictly 2-D: (N,D) -> (N,1) -> (1,1), lane-concat to (1,B).
    acc = jnp.zeros((1, B), jnp.float32)
    for s in range(S):
        cols = []
        for b in range(B):
            diff = g1_list[b] - pg2[s * B + b]                       # (N, D)
            col = jnp.sum(diff, axis=1, keepdims=True)               # (N, 1)
            cols.append(jnp.sum(col, axis=0, keepdims=True))         # (1, 1)
        ps = jnp.concatenate(cols, axis=1)                           # (1, B) signed residual sums
        pmin = jnp.min(ps, axis=1, keepdims=True)
        pmax = jnp.max(ps, axis=1, keepdims=True)
        acc = acc + jnp.exp(-(ps - pmin) / (pmax - pmin))            # NOTE: reference also has no eps
    out_ref[...] = acc * (1.0 / S)


def gsmodel_pallas(x_all, a_all, m_all, noise_sb, params, *,
                   n_batch, set_size, n_samples, tau, n_sink_iter):
    BN2, Fin = x_all.shape
    B, N, S = n_batch, set_size, n_samples
    gin = params["gin"]
    assert len(gin) == 2, "kernel is written for the 2-layer gnn_filters=[32,32] config"
    D0 = gin[0]["w1"].shape[1]
    D1 = gin[1]["w2"].shape[1]
    D = params["fc1_w"].shape[0]

    kernel = functools.partial(gsmodel_kernel, n_batch=B, set_size=N, n_samples=S,
                               inv_tau=1.0 / tau, n_sink_iter=n_sink_iter, eps_gin=GIN_EPS)
    full = lambda shape: pl.BlockSpec(shape, lambda i: (0,) * len(shape))

    return pl.pallas_call(
        kernel,
        out_shape=jax.ShapeDtypeStruct((1, B), jnp.float32),
        grid=(1,),
        in_specs=[
            full((BN2, Fin)),            # stacked node features (both graphs)
            full((BN2, BN2)),            # block-diagonal adjacency
            full((BN2, 1)),              # node masks
            full((S * B, N, N)),         # uniform noise (sample-major)
            full((Fin, D0)), full((1, D0)), full((D0, D0)), full((1, D0)),   # GIN layer 1
            full((D0, D1)), full((1, D1)), full((D1, D1)), full((1, D1)),    # GIN layer 2
            full((D, D)), full((1, D)), full((D, D)), full((1, D)), full((D, D)),  # fc1, fc2, W
            full((N, N)), full((1, N)), full((N, N)), full((1, N)),          # input_mlp1/2
        ],
        out_specs=full((1, B)),
        compiler_params=pltpu.CompilerParams(dimension_semantics=("arbitrary",)),
    )(x_all, a_all, m_all, noise_sb,
      gin[0]["w1"], gin[0]["b1"], gin[0]["w2"], gin[0]["b2"],
      gin[1]["w1"], gin[1]["b1"], gin[1]["w2"], gin[1]["b2"],
      params["fc1_w"], params["fc1_b"], params["fc2_w"], params["fc2_b"], params["W"],
      params["m1_w"], params["m1_b"], params["m2_w"], params["m2_b"])


# =========================== host-side (one-time) prep ===========================
def prepare_params(params):
    """Fold eval-mode BatchNorm1d into the second GIN linear (one-time host transform)."""
    folded = []
    for p in params["gin"]:
        scale = p["gamma"] / jnp.sqrt(p["rv"] + 1e-5)          # (1, Fout)
        folded.append(dict(w1=p["w1"], b1=p["b1"],
                           w2=p["w2"] * scale,
                           b2=(p["b2"] - p["rm"]) * scale + p["beta"]))
    out = dict(params)
    out["gin"] = folded
    return out


def block_diag_adj(a):
    """(G, N, N) per-graph adjacency -> (G*N, G*N) block-diagonal matrix (host-side layout prep)."""
    G, N, _ = a.shape
    eye = jnp.eye(G, dtype=a.dtype)
    return (eye[:, None, :, None] * a[:, :, None, :]).reshape(G * N, G * N)


# ================================ full forward ================================
def gsmodel_forward(params, g1, g2, sizes1, sizes2, noise_u):
    """params must already be BN-folded (prepare_params). noise_u: (S, B, N, N) uniform."""
    x1, a1 = g1
    x2, a2 = g2
    B, N, Fin = x1.shape
    S = noise_u.shape[0]

    # host-side layout prep (tiny, fused into the jit by XLA)
    x_all = jnp.concatenate([x1.reshape(B * N, Fin), x2.reshape(B * N, Fin)], axis=0)  # (2*B*N, F)
    a_all = block_diag_adj(jnp.concatenate([a1, a2], axis=0))                          # (2*B*N, 2*B*N)
    m1 = (jnp.arange(N)[None, :] < sizes1[:, None]).astype(jnp.float32).reshape(B * N, 1)
    m2 = (jnp.arange(N)[None, :] < sizes2[:, None]).astype(jnp.float32).reshape(B * N, 1)
    m_all = jnp.concatenate([m1, m2], axis=0)                                          # (2*B*N, 1)
    noise_sb = noise_u.reshape(S * B, N, N)                                            # sample-major

    pred = gsmodel_pallas(x_all, a_all, m_all, noise_sb, params,
                          n_batch=B, set_size=N, n_samples=S,
                          tau=CONFIG["tau"], n_sink_iter=CONFIG["n_sink_iter"])
    return pred[0]                                                                     # (B,)


# ============================== parameter / input setup ==============================
def linear_params(key, fan_in, fan_out):
    # torch.nn.Linear default init: U(-1/sqrt(fan_in), 1/sqrt(fan_in)); stored as (in, out)
    kw, kb = jax.random.split(key)
    bound = 1.0 / (fan_in ** 0.5)
    w = jax.random.uniform(kw, (fan_out, fan_in), jnp.float32, -bound, bound)
    b = jax.random.uniform(kb, (fan_out,), jnp.float32, -bound, bound)
    return w.T, b.reshape(1, fan_out)


def make_graph(key, B, N, n_feat, sizes):
    kx, ka = jax.random.split(key)
    x = jax.random.normal(kx, (B, N, n_feat), jnp.float32)
    a = (jax.random.uniform(ka, (B, N, N)) < 0.4).astype(jnp.float32)
    a = a * (1.0 - jnp.eye(N, dtype=jnp.float32))  # no self-loops
    a = jnp.maximum(a, a.transpose(0, 2, 1))       # undirected
    node_mask = (jnp.arange(N)[None, :] < sizes[:, None]).astype(jnp.float32)  # (B, N)
    x = x * node_mask[:, :, None]
    a = a * node_mask[:, :, None] * node_mask[:, None, :]
    return x, a


if __name__ == "__main__":
    key = jax.random.PRNGKey(0)
    keys = jax.random.split(key, 11)

    B = 2
    N = CONFIG["max_set_size"]        # 16
    filters = CONFIG["gnn_filters"]   # [32, 32]
    D = filters[-1]
    S = CONFIG["n_samples"]

    sizes1 = jnp.array([12, 16], dtype=jnp.int32)
    sizes2 = jnp.array([10, 14], dtype=jnp.int32)
    g1 = make_graph(keys[0], B, N, N_FEAT, sizes1)
    g2 = make_graph(keys[1], B, N, N_FEAT, sizes2)

    # GIN stack (Linear -> ReLU -> Linear -> BatchNorm1d per level)
    gin_params = []
    fin = N_FEAT
    for i, fout in enumerate(filters):
        k1, k2 = jax.random.split(keys[2 + i])
        w1, b1 = linear_params(k1, fin, fout)
        w2, b2 = linear_params(k2, fout, fout)
        gin_params.append(dict(
            w1=w1, b1=b1, w2=w2, b2=b2,
            gamma=jnp.ones((1, fout), jnp.float32), beta=jnp.zeros((1, fout), jnp.float32),
            rm=jnp.zeros((1, fout), jnp.float32), rv=jnp.ones((1, fout), jnp.float32)))
        fin = fout

    fc1_w, fc1_b = linear_params(keys[5], D, D)
    fc2_w, fc2_b = linear_params(keys[6], D, D)
    xavier = (6.0 / (D + D)) ** 0.5
    W = jax.random.uniform(keys[7], (D, D), jnp.float32, -xavier, xavier)
    m1_w, m1_b = linear_params(keys[8], N, N)
    m2_w, m2_b = linear_params(keys[9], N, N)

    params = prepare_params(dict(gin=gin_params, fc1_w=fc1_w, fc1_b=fc1_b,
                                 fc2_w=fc2_w, fc2_b=fc2_b, W=W,
                                 m1_w=m1_w, m1_b=m1_b, m2_w=m2_w, m2_b=m2_b))

    # uniform noise for gumbel perturbation (torch.rand_like equivalent, host-side)
    noise_u = jax.random.uniform(keys[10], (S, B, N, N), jnp.float32)

    fwd = jax.jit(gsmodel_forward)
    prediction = jax.block_until_ready(fwd(params, g1, g2, sizes1, sizes2, noise_u))
    assert prediction.shape == (B,), prediction.shape
    assert bool(jnp.all(jnp.isfinite(prediction)))
    print("KERNEL_OK")
</pallas_src>

<mosaic_0001>
module attributes {stable_mosaic.version = 11 : i64} {
  func.func @gsmodel_kernel(%arg0: i32, %arg1: memref<64x16xf32, #tpu.memory_space<vmem>>, %arg2: memref<64x64xf32, #tpu.memory_space<vmem>>, %arg3: memref<64x1xf32, #tpu.memory_space<vmem>>, %arg4: memref<4x16x16xf32, #tpu.memory_space<vmem>>, %arg5: memref<16x32xf32, #tpu.memory_space<vmem>>, %arg6: memref<1x32xf32, #tpu.memory_space<vmem>>, %arg7: memref<32x32xf32, #tpu.memory_space<vmem>>, %arg8: memref<1x32xf32, #tpu.memory_space<vmem>>, %arg9: memref<32x32xf32, #tpu.memory_space<vmem>>, %arg10: memref<1x32xf32, #tpu.memory_space<vmem>>, %arg11: memref<32x32xf32, #tpu.memory_space<vmem>>, %arg12: memref<1x32xf32, #tpu.memory_space<vmem>>, %arg13: memref<32x32xf32, #tpu.memory_space<vmem>>, %arg14: memref<1x32xf32, #tpu.memory_space<vmem>>, %arg15: memref<32x32xf32, #tpu.memory_space<vmem>>, %arg16: memref<1x32xf32, #tpu.memory_space<vmem>>, %arg17: memref<32x32xf32, #tpu.memory_space<vmem>>, %arg18: memref<16x16xf32, #tpu.memory_space<vmem>>, %arg19: memref<1x16xf32, #tpu.memory_space<vmem>>, %arg20: memref<16x16xf32, #tpu.memory_space<vmem>>, %arg21: memref<1x16xf32, #tpu.memory_space<vmem>>, %arg22: memref<1x2xf32, #tpu.memory_space<vmem>>) attributes {dimension_semantics = [#tpu.dimension_semantics<arbitrary>], iteration_bounds = array<i64: 1>, scalar_prefetch = 0 : i64, scratch_operands = 0 : i64, tpu.core_type = #tpu.core_type<tc>, window_params = [{pipeline_mode = #tpu.pipeline_mode<synchronous>, transform_indices = @transform_0, window_bounds = array<i64: 64, 16>}, {pipeline_mode = #tpu.pipeline_mode<synchronous>, transform_indices = @transform_1, window_bounds = array<i64: 64, 64>}, {pipeline_mode = #tpu.pipeline_mode<synchronous>, transform_indices = @transform_2, window_bounds = array<i64: 64, 1>}, {pipeline_mode = #tpu.pipeline_mode<synchronous>, transform_indices = @transform_3, window_bounds = array<i64: 4, 16, 16>}, {pipeline_mode = #tpu.pipeline_mode<synchronous>, transform_indices = @transform_4, window_bounds = array<i64: 16, 32>}, {pipeline_mode = #tpu.pipeline_mode<synchronous>, transform_indices = @transform_5, window_bounds = array<i64: 1, 32>}, {pipeline_mode = #tpu.pipeline_mode<synchronous>, transform_indices = @transform_6, window_bounds = array<i64: 32, 32>}, {pipeline_mode = #tpu.pipeline_mode<synchronous>, transform_indices = @transform_7, window_bounds = array<i64: 1, 32>}, {pipeline_mode = #tpu.pipeline_mode<synchronous>, transform_indices = @transform_8, window_bounds = array<i64: 32, 32>}, {pipeline_mode = #tpu.pipeline_mode<synchronous>, transform_indices = @transform_9, window_bounds = array<i64: 1, 32>}, {pipeline_mode = #tpu.pipeline_mode<synchronous>, transform_indices = @transform_10, window_bounds = array<i64: 32, 32>}, {pipeline_mode = #tpu.pipeline_mode<synchronous>, transform_indices = @transform_11, window_bounds = array<i64: 1, 32>}, {pipeline_mode = #tpu.pipeline_mode<synchronous>, transform_indices = @transform_12, window_bounds = array<i64: 32, 32>}, {pipeline_mode = #tpu.pipeline_mode<synchronous>, transform_indices = @transform_13, window_bounds = array<i64: 1, 32>}, {pipeline_mode = #tpu.pipeline_mode<synchronous>, transform_indices = @transform_14, window_bounds = array<i64: 32, 32>}, {pipeline_mode = #tpu.pipeline_mode<synchronous>, transform_indices = @transform_15, window_bounds = array<i64: 1, 32>}, {pipeline_mode = #tpu.pipeline_mode<synchronous>, transform_indices = @transform_16, window_bounds = array<i64: 32, 32>}, {pipeline_mode = #tpu.pipeline_mode<synchronous>, transform_indices = @transform_17, window_bounds = array<i64: 16, 16>}, {pipeline_mode = #tpu.pipeline_mode<synchronous>, transform_indices = @transform_18, window_bounds = array<i64: 1, 16>}, {pipeline_mode = #tpu.pipeline_mode<synchronous>, transform_indices = @transform_19, window_bounds = array<i64: 16, 16>}, {pipeline_mode = #tpu.pipeline_mode<synchronous>, transform_indices = @transform_20, window_bounds = array<i64: 1, 16>}, {pipeline_mode = #tpu.pipeline_mode<synchronous>, transform_indices = @transform_21, window_bounds = array<i64: 1, 2>}]} {
    %c0 = arith.constant 0 : index
    %c0_0 = arith.constant 0 : index
    %0 = vector.load %arg1[%c0, %c0_0] : memref<64x16xf32, #tpu.memory_space<vmem>>, vector<64x16xf32>
    %c0_1 = arith.constant 0 : index
    %c0_2 = arith.constant 0 : index
    %1 = vector.load %arg2[%c0_1, %c0_2] : memref<64x64xf32, #tpu.memory_space<vmem>>, vector<64x64xf32>
    %c0_3 = arith.constant 0 : index
    %c0_4 = arith.constant 0 : index
    %2 = vector.load %arg3[%c0_3, %c0_4] : memref<64x1xf32, #tpu.memory_space<vmem>>, vector<64x1xf32>
    %c0_5 = arith.constant 0 : index
    %c0_6 = arith.constant 0 : index
    %3 = vector.load %arg5[%c0_5, %c0_6] : memref<16x32xf32, #tpu.memory_space<vmem>>, vector<16x32xf32>
    %c0_7 = arith.constant 0 : index
    %c0_8 = arith.constant 0 : index
    %4 = vector.load %arg6[%c0_7, %c0_8] : memref<1x32xf32, #tpu.memory_space<vmem>>, vector<1x32xf32>
    %c0_9 = arith.constant 0 : index
    %c0_10 = arith.constant 0 : index
    %5 = vector.load %arg7[%c0_9, %c0_10] : memref<32x32xf32, #tpu.memory_space<vmem>>, vector<32x32xf32>
    %c0_11 = arith.constant 0 : index
    %c0_12 = arith.constant 0 : index
    %6 = vector.load %arg8[%c0_11, %c0_12] : memref<1x32xf32, #tpu.memory_space<vmem>>, vector<1x32xf32>
    %cst = arith.constant dense<0.000000e+00> : vector<64x16xf32>
    %7 = tpu.matmul %1, %0, %cst {dimension_numbers = #tpu.dot_dimension_numbers<[1], [0], [0], [1], [0, 0, 1, 1], [], []>} : vector<64x64xf32>, vector<64x16xf32>, vector<64x16xf32> -> vector<64x16xf32>
    %cst_13 = arith.constant 2.000000e+00 : f32
    %8 = vector.broadcast %cst_13 : f32 to vector<64x16xf32>
    %9 = arith.mulf %8, %0 : vector<64x16xf32>
    %10 = arith.addf %7, %9 : vector<64x16xf32>
    %cst_14 = arith.constant dense<0.000000e+00> : vector<64x32xf32>
    %11 = tpu.matmul %10, %3, %cst_14 {dimension_numbers = #tpu.dot_dimension_numbers<[1], [0], [0], [1], [0, 0, 1, 1], [], []>} : vector<64x16xf32>, vector<16x32xf32>, vector<64x32xf32> -> vector<64x32xf32>
    %12 = vector.broadcast %4 : vector<1x32xf32> to vector<64x32xf32>
    %13 = arith.addf %11, %12 : vector<64x32xf32>
    %cst_15 = arith.constant 0.000000e+00 : f32
    %14 = vector.broadcast %cst_15 : f32 to vector<64x32xf32>
    %15 = arith.maximumf %13, %14 : vector<64x32xf32>
    %cst_16 = arith.constant dense<0.000000e+00> : vector<64x32xf32>
    %16 = tpu.matmul %15, %5, %cst_16 {dimension_numbers = #tpu.dot_dimension_numbers<[1], [0], [0], [1], [0, 0, 1, 1], [], []>} : vector<64x32xf32>, vector<32x32xf32>, vector<64x32xf32> -> vector<64x32xf32>
    %17 = vector.broadcast %6 : vector<1x32xf32> to vector<64x32xf32>
    %18 = arith.addf %16, %17 : vector<64x32xf32>
    %cst_17 = arith.constant 0.000000e+00 : f32
    %19 = vector.broadcast %cst_17 : f32 to vector<64x32xf32>
    %20 = arith.maximumf %18, %19 : vector<64x32xf32>
    %21 = vector.broadcast %2 : vector<64x1xf32> to vector<64x32xf32>
    %22 = arith.mulf %20, %21 : vector<64x32xf32>
    %c0_18 = arith.constant 0 : index
    %c0_19 = arith.constant 0 : index
    %23 = vector.load %arg9[%c0_18, %c0_19] : memref<32x32xf32, #tpu.memory_space<vmem>>, vector<32x32xf32>
    %c0_20 = arith.constant 0 : index
    %c0_21 = arith.constant 0 : index
    %24 = vector.load %arg10[%c0_20, %c0_21] : memref<1x32xf32, #tpu.memory_space<vmem>>, vector<1x32xf32>
    %c0_22 = arith.constant 0 : index
    %c0_23 = arith.constant 0 : index
    %25 = vector.load %arg11[%c0_22, %c0_23] : memref<32x32xf32, #tpu.memory_space<vmem>>, vector<32x32xf32>
    %c0_24 = arith.constant 0 : index
    %c0_25 = arith.constant 0 : index
    %26 = vector.load %arg12[%c0_24, %c0_25] : memref<1x32xf32, #tpu.memory_space<vmem>>, vector<1x32xf32>
    %cst_26 = arith.constant dense<0.000000e+00> : vector<64x32xf32>
    %27 = tpu.matmul %1, %22, %cst_26 {dimension_numbers = #tpu.dot_dimension_numbers<[1], [0], [0], [1], [0, 0, 1, 1], [], []>} : vector<64x64xf32>, vector<64x32xf32>, vector<64x32xf32> -> vector<64x32xf32>
    %cst_27 = arith.constant 2.000000e+00 : f32
    %28 = vector.broadcast %cst_27 : f32 to vector<64x32xf32>
    %29 = arith.mulf %28, %22 : vector<64x32xf32>
    %30 = arith.addf %27, %29 : vector<64x32xf32>
    %cst_28 = arith.constant dense<0.000000e+00> : vector<64x32xf32>
    %31 = tpu.matmul %30, %23, %cst_28 {dimension_numbers = #tpu.dot_dimension_numbers<[1], [0], [0], [1], [0, 0, 1, 1], [], []>} : vector<64x32xf32>, vector<32x32xf32>, vector<64x32xf32> -> vector<64x32xf32>
    %32 = vector.broadcast %24 : vector<1x32xf32> to vector<64x32xf32>
    %33 = arith.addf %31, %32 : vector<64x32xf32>
    %cst_29 = arith.constant 0.000000e+00 : f32
    %34 = vector.broadcast %cst_29 : f32 to vector<64x32xf32>
    %35 = arith.maximumf %33, %34 : vector<64x32xf32>
    %cst_30 = arith.constant dense<0.000000e+00> : vector<64x32xf32>
    %36 = tpu.matmul %35, %25, %cst_30 {dimension_numbers = #tpu.dot_dimension_numbers<[1], [0], [0], [1], [0, 0, 1, 1], [], []>} : vector<64x32xf32>, vector<32x32xf32>, vector<64x32xf32> -> vector<64x32xf32>
    %37 = vector.broadcast %26 : vector<1x32xf32> to vector<64x32xf32>
    %38 = arith.addf %36, %37 : vector<64x32xf32>
    %cst_31 = arith.constant 0.000000e+00 : f32
    %39 = vector.broadcast %cst_31 : f32 to vector<64x32xf32>
    %40 = arith.maximumf %38, %39 : vector<64x32xf32>
    %41 = vector.broadcast %2 : vector<64x1xf32> to vector<64x32xf32>
    %42 = arith.mulf %40, %41 : vector<64x32xf32>
    %c0_32 = arith.constant 0 : index
    %c0_33 = arith.constant 0 : index
    %43 = vector.load %arg13[%c0_32, %c0_33] : memref<32x32xf32, #tpu.memory_space<vmem>>, vector<32x32xf32>
    %cst_34 = arith.constant dense<0.000000e+00> : vector<64x32xf32>
    %44 = tpu.matmul %42, %43, %cst_34 {dimension_numbers = #tpu.dot_dimension_numbers<[1], [0], [0], [1], [0, 0, 1, 1], [], []>} : vector<64x32xf32>, vector<32x32xf32>, vector<64x32xf32> -> vector<64x32xf32>
    %c0_35 = arith.constant 0 : index
    %c0_36 = arith.constant 0 : index
    %45 = vector.load %arg14[%c0_35, %c0_36] : memref<1x32xf32, #tpu.memory_space<vmem>>, vector<1x32xf32>
    %46 = vector.broadcast %45 : vector<1x32xf32> to vector<64x32xf32>
    %47 = arith.addf %44, %46 : vector<64x32xf32>
    %cst_37 = arith.constant 0.000000e+00 : f32
    %48 = vector.broadcast %cst_37 : f32 to vector<64x32xf32>
    %49 = arith.maximumf %47, %48 : vector<64x32xf32>
    %c0_38 = arith.constant 0 : index
    %c0_39 = arith.constant 0 : index
    %50 = vector.load %arg15[%c0_38, %c0_39] : memref<32x32xf32, #tpu.memory_space<vmem>>, vector<32x32xf32>
    %cst_40 = arith.constant dense<0.000000e+00> : vector<64x32xf32>
    %51 = tpu.matmul %49, %50, %cst_40 {dimension_numbers = #tpu.dot_dimension_numbers<[1], [0], [0], [1], [0, 0, 1, 1], [], []>} : vector<64x32xf32>, vector<32x32xf32>, vector<64x32xf32> -> vector<64x32xf32>
    %c0_41 = arith.constant 0 : index
    %c0_42 = arith.constant 0 : index
    %52 = vector.load %arg16[%c0_41, %c0_42] : memref<1x32xf32, #tpu.memory_space<vmem>>, vector<1x32xf32>
    %53 = vector.broadcast %52 : vector<1x32xf32> to vector<64x32xf32>
    %54 = arith.addf %51, %53 : vector<64x32xf32>
    %55 = vector.broadcast %2 : vector<64x1xf32> to vector<64x32xf32>
    %56 = arith.mulf %54, %55 : vector<64x32xf32>
    %57 = vector.extract_strided_slice %56 {offsets = [0, 0], sizes = [32, 32], strides = [1, 1]} : vector<64x32xf32> to vector<32x32xf32>
    %58 = vector.extract_strided_slice %56 {offsets = [32, 0], sizes = [32, 32], strides = [1, 1]} : vector<64x32xf32> to vector<32x32xf32>
    %59 = vector.extract_strided_slice %42 {offsets = [0, 0], sizes = [32, 32], strides = [1, 1]} : vector<64x32xf32> to vector<32x32xf32>
    %60 = vector.extract_strided_slice %42 {offsets = [32, 0], sizes = [32, 32], strides = [1, 1]} : vector<64x32xf32> to vector<32x32xf32>
    %c0_43 = arith.constant 0 : index
    %c0_44 = arith.constant 0 : index
    %61 = vector.load %arg17[%c0_43, %c0_44] : memref<32x32xf32, #tpu.memory_space<vmem>>, vector<32x32xf32>
    %cst_45 = arith.constant dense<0.000000e+00> : vector<32x32xf32>
    %62 = tpu.matmul %57, %61, %cst_45 {dimension_numbers = #tpu.dot_dimension_numbers<[1], [0], [0], [1], [0, 0, 1, 1], [], []>} : vector<32x32xf32>, vector<32x32xf32>, vector<32x32xf32> -> vector<32x32xf32>
    %c0_46 = arith.constant 0 : index
    %c0_47 = arith.constant 0 : index
    %63 = vector.load %arg18[%c0_46, %c0_47] : memref<16x16xf32, #tpu.memory_space<vmem>>, vector<16x16xf32>
    %c0_48 = arith.constant 0 : index
    %c0_49 = arith.constant 0 : index
    %64 = vector.load %arg19[%c0_48, %c0_49] : memref<1x16xf32, #tpu.memory_space<vmem>>, vector<1x16xf32>
    %c0_50 = arith.constant 0 : index
    %c0_51 = arith.constant 0 : index
    %65 = vector.load %arg20[%c0_50, %c0_51] : memref<16x16xf32, #tpu.memory_space<vmem>>, vector<16x16xf32>
    %c0_52 = arith.constant 0 : index
    %c0_53 = arith.constant 0 : index
    %66 = vector.load %arg21[%c0_52, %c0_53] : memref<1x16xf32, #tpu.memory_space<vmem>>, vector<1x16xf32>
    %67 = vector.extract_strided_slice %62 {offsets = [0, 0], sizes = [16, 32], strides = [1, 1]} : vector<32x32xf32> to vector<16x32xf32>
    %68 = vector.extract_strided_slice %58 {offsets = [0, 0], sizes = [16, 32], strides = [1, 1]} : vector<32x32xf32> to vector<16x32xf32>
    "tpu.trace_start"() <{level = 10 : i32, message = "nd,md->nm"}> : () -> ()
    %cst_54 = arith.constant dense<0.000000e+00> : vector<16x16xf32>
    %69 = tpu.matmul %67, %68, %cst_54 {dimension_numbers = #tpu.dot_dimension_numbers<[1], [1], [0], [0], [0, 0, 1, 0], [], []>} : vector<16x32xf32>, vector<16x32xf32>, vector<16x16xf32> -> vector<16x16xf32>
    "tpu.trace_stop"() : () -> ()
    %cst_55 = arith.constant dense<0.000000e+00> : vector<16x16xf32>
    %70 = tpu.matmul %69, %63, %cst_55 {dimension_numbers = #tpu.dot_dimension_numbers<[1], [0], [0], [1], [0, 0, 1, 1], [], []>} : vector<16x16xf32>, vector<16x16xf32>, vector<16x16xf32> -> vector<16x16xf32>
    %71 = vector.broadcast %64 : vector<1x16xf32> to vector<16x16xf32>
    %72 = arith.addf %70, %71 : vector<16x16xf32>
    %cst_56 = arith.constant 0.000000e+00 : f32
    %73 = vector.broadcast %cst_56 : f32 to vector<16x16xf32>
    %74 = arith.maximumf %72, %73 : vector<16x16xf32>
    %cst_57 = arith.constant dense<0.000000e+00> : vector<16x16xf32>
    %75 = tpu.matmul %74, %65, %cst_57 {dimension_numbers = #tpu.dot_dimension_numbers<[1], [0], [0], [1], [0, 0, 1, 1], [], []>} : vector<16x16xf32>, vector<16x16xf32>, vector<16x16xf32> -> vector<16x16xf32>
    %76 = vector.broadcast %66 : vector<1x16xf32> to vector<16x16xf32>
    %77 = arith.addf %75, %76 : vector<16x16xf32>
    %78 = vector.extract_strided_slice %59 {offsets = [0, 0], sizes = [16, 32], strides = [1, 1]} : vector<32x32xf32> to vector<16x32xf32>
    %79 = vector.extract_strided_slice %60 {offsets = [0, 0], sizes = [16, 32], strides = [1, 1]} : vector<32x32xf32> to vector<16x32xf32>
    %80 = vector.extract_strided_slice %62 {offsets = [16, 0], sizes = [16, 32], strides = [1, 1]} : vector<32x32xf32> to vector<16x32xf32>
    %81 = vector.extract_strided_slice %58 {offsets = [16, 0], sizes = [16, 32], strides = [1, 1]} : vector<32x32xf32> to vector<16x32xf32>
    "tpu.trace_start"() <{level = 10 : i32, message = "nd,md->nm"}> : () -> ()
    %cst_58 = arith.constant dense<0.000000e+00> : vector<16x16xf32>
    %82 = tpu.matmul %80, %81, %cst_58 {dimension_numbers = #tpu.dot_dimension_numbers<[1], [1], [0], [0], [0, 0, 1, 0], [], []>} : vector<16x32xf32>, vector<16x32xf32>, vector<16x16xf32> -> vector<16x16xf32>
    "tpu.trace_stop"() : () -> ()
    %cst_59 = arith.constant dense<0.000000e+00> : vector<16x16xf32>
    %83 = tpu.matmul %82, %63, %cst_59 {dimension_numbers = #tpu.dot_dimension_numbers<[1], [0], [0], [1], [0, 0, 1, 1], [], []>} : vector<16x16xf32>, vector<16x16xf32>, vector<16x16xf32> -> vector<16x16xf32>
    %84 = vector.broadcast %64 : vector<1x16xf32> to vector<16x16xf32>
    %85 = arith.addf %83, %84 : vector<16x16xf32>
    %cst_60 = arith.constant 0.000000e+00 : f32
    %86 = vector.broadcast %cst_60 : f32 to vector<16x16xf32>
    %87 = arith.maximumf %85, %86 : vector<16x16xf32>
    %cst_61 = arith.constant dense<0.000000e+00> : vector<16x16xf32>
    %88 = tpu.matmul %87, %65, %cst_61 {dimension_numbers = #tpu.dot_dimension_numbers<[1], [0], [0], [1], [0, 0, 1, 1], [], []>} : vector<16x16xf32>, vector<16x16xf32>, vector<16x16xf32> -> vector<16x16xf32>
    %89 = vector.broadcast %66 : vector<1x16xf32> to vector<16x16xf32>
    %90 = arith.addf %88, %89 : vector<16x16xf32>
    %91 = vector.extract_strided_slice %59 {offsets = [16, 0], sizes = [16, 32], strides = [1, 1]} : vector<32x32xf32> to vector<16x32xf32>
    %92 = vector.extract_strided_slice %60 {offsets = [16, 0], sizes = [16, 32], strides = [1, 1]} : vector<32x32xf32> to vector<16x32xf32>
    %93 = vector.shape_cast %77 : vector<16x16xf32> to vector<1x16x16xf32>
    %94 = vector.shape_cast %90 : vector<16x16xf32> to vector<1x16x16xf32>
    %95 = vector.shape_cast %77 : vector<16x16xf32> to vector<1x16x16xf32>
    %96 = vector.shape_cast %90 : vector<16x16xf32> to vector<1x16x16xf32>
    %97 = tpu.concatenate %93, %94, %95, %96 in 0 : vector<1x16x16xf32>, vector<1x16x16xf32>, vector<1x16x16xf32>, vector<1x16x16xf32> -> vector<4x16x16xf32>
    %98 = vector.shape_cast %79 : vector<16x32xf32> to vector<1x16x32xf32>
    %99 = vector.shape_cast %92 : vector<16x32xf32> to vector<1x16x32xf32>
    %100 = vector.shape_cast %79 : vector<16x32xf32> to vector<1x16x32xf32>
    %101 = vector.shape_cast %92 : vector<16x32xf32> to vector<1x16x32xf32>
    %102 = tpu.concatenate %98, %99, %100, %101 in 0 : vector<1x16x32xf32>, vector<1x16x32xf32>, vector<1x16x32xf32>, vector<1x16x32xf32> -> vector<4x16x32xf32>
    %c0_62 = arith.constant 0 : index
    %c0_63 = arith.constant 0 : index
    %c0_64 = arith.constant 0 : index
    %103 = vector.load %arg4[%c0_62, %c0_63, %c0_64] : memref<4x16x16xf32, #tpu.memory_space<vmem>>, vector<4x16x16xf32>
    %cst_65 = arith.constant 9.99999968E-21 : f32
    %104 = vector.broadcast %cst_65 : f32 to vector<4x16x16xf32>
    %105 = arith.addf %103, %104 : vector<4x16x16xf32>
    %106 = math.log %105 : vector<4x16x16xf32>
    %cst_66 = arith.constant 0.000000e+00 : f32
    %107 = vector.broadcast %cst_66 : f32 to vector<4x16x16xf32>
    %108 = arith.subf %107, %106 : vector<4x16x16xf32>
    %cst_67 = arith.constant 9.99999968E-21 : f32
    %109 = vector.broadcast %cst_67 : f32 to vector<4x16x16xf32>
    %110 = arith.addf %108, %109 : vector<4x16x16xf32>
    %111 = math.log %110 : vector<4x16x16xf32>
    %cst_68 = arith.constant 0.000000e+00 : f32
    %112 = vector.broadcast %cst_68 : f32 to vector<4x16x16xf32>
    %113 = arith.subf %112, %111 : vector<4x16x16xf32>
    %114 = arith.addf %97, %113 : vector<4x16x16xf32>
    %cst_69 = arith.constant 2.000000e+01 : f32
    %115 = vector.broadcast %cst_69 : f32 to vector<4x16x16xf32>
    %116 = arith.mulf %114, %115 : vector<4x16x16xf32>
    %cst_70 = arith.constant dense<0xFF800000> : vector<4x16xf32>
    %117 = vector.multi_reduction <maximumf>, %116, %cst_70 [2] : vector<4x16x16xf32> to vector<4x16xf32>
    %118 = vector.shape_cast %117 : vector<4x16xf32> to vector<4x16x1xf32>
    %119 = vector.broadcast %118 : vector<4x16x1xf32> to vector<4x16x16xf32>
    %120 = arith.subf %116, %119 : vector<4x16x16xf32>
    %121 = math.exp %120 : vector<4x16x16xf32>
    %cst_71 = arith.constant dense<0.000000e+00> : vector<4x16xf32>
    %122 = vector.multi_reduction <add>, %121, %cst_71 [2] : vector<4x16x16xf32> to vector<4x16xf32>
    %123 = vector.shape_cast %122 : vector<4x16xf32> to vector<4x16x1xf32>
    %124 = math.log %123 : vector<4x16x1xf32>
    %125 = arith.addf %118, %124 : vector<4x16x1xf32>
    %126 = vector.broadcast %125 : vector<4x16x1xf32> to vector<4x16x16xf32>
    %127 = arith.subf %116, %126 : vector<4x16x16xf32>
    %cst_72 = arith.constant dense<0xFF800000> : vector<4x16xf32>
    %128 = vector.multi_reduction <maximumf>, %127, %cst_72 [1] : vector<4x16x16xf32> to vector<4x16xf32>
    %129 = vector.shape_cast %128 : vector<4x16xf32> to vector<4x1x16xf32>
    %130 = vector.broadcast %129 : vector<4x1x16xf32> to vector<4x16x16xf32>
    %131 = arith.subf %127, %130 : vector<4x16x16xf32>
    %132 = math.exp %131 : vector<4x16x16xf32>
    %cst_73 = arith.constant dense<0.000000e+00> : vector<4x16xf32>
    %133 = vector.multi_reduction <add>, %132, %cst_73 [1] : vector<4x16x16xf32> to vector<4x16xf32>
    %134 = vector.shape_cast %133 : vector<4x16xf32> to vector<4x1x16xf32>
    %135 = math.log %134 : vector<4x1x16xf32>
    %136 = arith.addf %129, %135 : vector<4x1x16xf32>
    %137 = vector.broadcast %136 : vector<4x1x16xf32> to vector<4x16x16xf32>
    %138 = arith.subf %127, %137 : vector<4x16x16xf32>
    %cst_74 = arith.constant dense<0xFF800000> : vector<4x16xf32>
    %139 = vector.multi_reduction <maximumf>, %138, %cst_74 [2] : vector<4x16x16xf32> to vector<4x16xf32>
    %140 = vector.shape_cast %139 : vector<4x16xf32> to vector<4x16x1xf32>
    %141 = vector.broadcast %140 : vector<4x16x1xf32> to vector<4x16x16xf32>
    %142 = arith.subf %138, %141 : vector<4x16x16xf32>
    %143 = math.exp %142 : vector<4x16x16xf32>
    %cst_75 = arith.constant dense<0.000000e+00> : vector<4x16xf32>
    %144 = vector.multi_reduction <add>, %143, %cst_75 [2] : vector<4x16x16xf32> to vector<4x16xf32>
    %145 = vector.shape_cast %144 : vector<4x16xf32> to vector<4x16x1xf32>
    %146 = math.log %145 : vector<4x16x1xf32>
    %147 = arith.addf %140, %146 : vector<4x16x1xf32>
    %148 = vector.broadcast %147 : vector<4x16x1xf32> to vector<4x16x16xf32>
    %149 = arith.subf %138, %148 : vector<4x16x16xf32>
    %cst_76 = arith.constant dense<0xFF800000> : vector<4x16xf32>
    %150 = vector.multi_reduction <maximumf>, %149, %cst_76 [1] : vector<4x16x16xf32> to vector<4x16xf32>
    %151 = vector.shape_cast %150 : vector<4x16xf32> to vector<4x1x16xf32>
    %152 = vector.broadcast %151 : vector<4x1x16xf32> to vector<4x16x16xf32>
    %153 = arith.subf %149, %152 : vector<4x16x16xf32>
    %154 = math.exp %153 : vector<4x16x16xf32>
    %cst_77 = arith.constant dense<0.000000e+00> : vector<4x16xf32>
    %155 = vector.multi_reduction <add>, %154, %cst_77 [1] : vector<4x16x16xf32> to vector<4x16xf32>
    %156 = vector.shape_cast %155 : vector<4x16xf32> to vector<4x1x16xf32>
    %157 = math.log %156 : vector<4x1x16xf32>
    %158 = arith.addf %151, %157 : vector<4x1x16xf32>
    %159 = vector.broadcast %158 : vector<4x1x16xf32> to vector<4x16x16xf32>
    %160 = arith.subf %149, %159 : vector<4x16x16xf32>
    %cst_78 = arith.constant dense<0xFF800000> : vector<4x16xf32>
    %161 = vector.multi_reduction <maximumf>, %160, %cst_78 [2] : vector<4x16x16xf32> to vector<4x16xf32>
    %162 = vector.shape_cast %161 : vector<4x16xf32> to vector<4x16x1xf32>
    %163 = vector.broadcast %162 : vector<4x16x1xf32> to vector<4x16x16xf32>
    %164 = arith.subf %160, %163 : vector<4x16x16xf32>
    %165 = math.exp %164 : vector<4x16x16xf32>
    %cst_79 = arith.constant dense<0.000000e+00> : vector<4x16xf32>
    %166 = vector.multi_reduction <add>, %165, %cst_79 [2] : vector<4x16x16xf32> to vector<4x16xf32>
    %167 = vector.shape_cast %166 : vector<4x16xf32> to vector<4x16x1xf32>
    %168 = math.log %167 : vector<4x16x1xf32>
    %169 = arith.addf %162, %168 : vector<4x16x1xf32>
    %170 = vector.broadcast %169 : vector<4x16x1xf32> to vector<4x16x16xf32>
    %171 = arith.subf %160, %170 : vector<4x16x16xf32>
    %cst_80 = arith.constant dense<0xFF800000> : vector<4x16xf32>
    %172 = vector.multi_reduction <maximumf>, %171, %cst_80 [1] : vector<4x16x16xf32> to vector<4x16xf32>
    %173 = vector.shape_cast %172 : vector<4x16xf32> to vector<4x1x16xf32>
    %174 = vector.broadcast %173 : vector<4x1x16xf32> to vector<4x16x16xf32>
    %175 = arith.subf %171, %174 : vector<4x16x16xf32>
    %176 = math.exp %175 : vector<4x16x16xf32>
    %cst_81 = arith.constant dense<0.000000e+00> : vector<4x16xf32>
    %177 = vector.multi_reduction <add>, %176, %cst_81 [1] : vector<4x16x16xf32> to vector<4x16xf32>
    %178 = vector.shape_cast %177 : vector<4x16xf32> to vector<4x1x16xf32>
    %179 = math.log %178 : vector<4x1x16xf32>
    %180 = arith.addf %173, %179 : vector<4x1x16xf32>
    %181 = vector.broadcast %180 : vector<4x1x16xf32> to vector<4x16x16xf32>
    %182 = arith.subf %171, %181 : vector<4x16x16xf32>
    %cst_82 = arith.constant dense<0xFF800000> : vector<4x16xf32>
    %183 = vector.multi_reduction <maximumf>, %182, %cst_82 [2] : vector<4x16x16xf32> to vector<4x16xf32>
    %184 = vector.shape_cast %183 : vector<4x16xf32> to vector<4x16x1xf32>
    %185 = vector.broadcast %184 : vector<4x16x1xf32> to vector<4x16x16xf32>
    %186 = arith.subf %182, %185 : vector<4x16x16xf32>
    %187 = math.exp %186 : vector<4x16x16xf32>
    %cst_83 = arith.constant dense<0.000000e+00> : vector<4x16xf32>
    %188 = vector.multi_reduction <add>, %187, %cst_83 [2] : vector<4x16x16xf32> to vector<4x16xf32>
    %189 = vector.shape_cast %188 : vector<4x16xf32> to vector<4x16x1xf32>
    %190 = math.log %189 : vector<4x16x1xf32>
    %191 = arith.addf %184, %190 : vector<4x16x1xf32>
    %192 = vector.broadcast %191 : vector<4x16x1xf32> to vector<4x16x16xf32>
    %193 = arith.subf %182, %192 : vector<4x16x16xf32>
    %cst_84 = arith.constant dense<0xFF800000> : vector<4x16xf32>
    %194 = vector.multi_reduction <maximumf>, %193, %cst_84 [1] : vector<4x16x16xf32> to vector<4x16xf32>
    %195 = vector.shape_cast %194 : vector<4x16xf32> to vector<4x1x16xf32>
    %196 = vector.broadcast %195 : vector<4x1x16xf32> to vector<4x16x16xf32>
    %197 = arith.subf %193, %196 : vector<4x16x16xf32>
    %198 = math.exp %197 : vector<4x16x16xf32>
    %cst_85 = arith.constant dense<0.000000e+00> : vector<4x16xf32>
    %199 = vector.multi_reduction <add>, %198, %cst_85 [1] : vector<4x16x16xf32> to vector<4x16xf32>
    %200 = vector.shape_cast %199 : vector<4x16xf32> to vector<4x1x16xf32>
    %201 = math.log %200 : vector<4x1x16xf32>
    %202 = arith.addf %195, %201 : vector<4x1x16xf32>
    %203 = vector.broadcast %202 : vector<4x1x16xf32> to vector<4x16x16xf32>
    %204 = arith.subf %193, %203 : vector<4x16x16xf32>
    %cst_86 = arith.constant dense<0xFF800000> : vector<4x16xf32>
    %205 = vector.multi_reduction <maximumf>, %204, %cst_86 [2] : vector<4x16x16xf32> to vector<4x16xf32>
    %206 = vector.shape_cast %205 : vector<4x16xf32> to vector<4x16x1xf32>
    %207 = vector.broadcast %206 : vector<4x16x1xf32> to vector<4x16x16xf32>
    %208 = arith.subf %204, %207 : vector<4x16x16xf32>
    %209 = math.exp %208 : vector<4x16x16xf32>
    %cst_87 = arith.constant dense<0.000000e+00> : vector<4x16xf32>
    %210 = vector.multi_reduction <add>, %209, %cst_87 [2] : vector<4x16x16xf32> to vector<4x16xf32>
    %211 = vector.shape_cast %210 : vector<4x16xf32> to vector<4x16x1xf32>
    %212 = math.log %211 : vector<4x16x1xf32>
    %213 = arith.addf %206, %212 : vector<4x16x1xf32>
    %214 = vector.broadcast %213 : vector<4x16x1xf32> to vector<4x16x16xf32>
    %215 = arith.subf %204, %214 : vector<4x16x16xf32>
    %cst_88 = arith.constant dense<0xFF800000> : vector<4x16xf32>
    %216 = vector.multi_reduction <maximumf>, %215, %cst_88 [1] : vector<4x16x16xf32> to vector<4x16xf32>
    %217 = vector.shape_cast %216 : vector<4x16xf32> to vector<4x1x16xf32>
    %218 = vector.broadcast %217 : vector<4x1x16xf32> to vector<4x16x16xf32>
    %219 = arith.subf %215, %218 : vector<4x16x16xf32>
    %220 = math.exp %219 : vector<4x16x16xf32>
    %cst_89 = arith.constant dense<0.000000e+00> : vector<4x16xf32>
    %221 = vector.multi_reduction <add>, %220, %cst_89 [1] : vector<4x16x16xf32> to vector<4x16xf32>
    %222 = vector.shape_cast %221 : vector<4x16xf32> to vector<4x1x16xf32>
    %223 = math.log %222 : vector<4x1x16xf32>
    %224 = arith.addf %217, %223 : vector<4x1x16xf32>
    %225 = vector.broadcast %224 : vector<4x1x16xf32> to vector<4x16x16xf32>
    %226 = arith.subf %215, %225 : vector<4x16x16xf32>
    %cst_90 = arith.constant dense<0xFF800000> : vector<4x16xf32>
    %227 = vector.multi_reduction <maximumf>, %226, %cst_90 [2] : vector<4x16x16xf32> to vector<4x16xf32>
    %228 = vector.shape_cast %227 : vector<4x16xf32> to vector<4x16x1xf32>
    %229 = vector.broadcast %228 : vector<4x16x1xf32> to vector<4x16x16xf32>
    %230 = arith.subf %226, %229 : vector<4x16x16xf32>
    %231 = math.exp %230 : vector<4x16x16xf32>
    %cst_91 = arith.constant dense<0.000000e+00> : vector<4x16xf32>
    %232 = vector.multi_reduction <add>, %231, %cst_91 [2] : vector<4x16x16xf32> to vector<4x16xf32>
    %233 = vector.shape_cast %232 : vector<4x16xf32> to vector<4x16x1xf32>
    %234 = math.log %233 : vector<4x16x1xf32>
    %235 = arith.addf %228, %234 : vector<4x16x1xf32>
    %236 = vector.broadcast %235 : vector<4x16x1xf32> to vector<4x16x16xf32>
    %237 = arith.subf %226, %236 : vector<4x16x16xf32>
    %cst_92 = arith.constant dense<0xFF800000> : vector<4x16xf32>
    %238 = vector.multi_reduction <maximumf>, %237, %cst_92 [1] : vector<4x16x16xf32> to vector<4x16xf32>
    %239 = vector.shape_cast %238 : vector<4x16xf32> to vector<4x1x16xf32>
    %240 = vector.broadcast %239 : vector<4x1x16xf32> to vector<4x16x16xf32>
    %241 = arith.subf %237, %240 : vector<4x16x16xf32>
    %242 = math.exp %241 : vector<4x16x16xf32>
    %cst_93 = arith.constant dense<0.000000e+00> : vector<4x16xf32>
    %243 = vector.multi_reduction <add>, %242, %cst_93 [1] : vector<4x16x16xf32> to vector<4x16xf32>
    %244 = vector.shape_cast %243 : vector<4x16xf32> to vector<4x1x16xf32>
    %245 = math.log %244 : vector<4x1x16xf32>
    %246 = arith.addf %239, %245 : vector<4x1x16xf32>
    %247 = vector.broadcast %246 : vector<4x1x16xf32> to vector<4x16x16xf32>
    %248 = arith.subf %237, %247 : vector<4x16x16xf32>
    %cst_94 = arith.constant dense<0xFF800000> : vector<4x16xf32>
    %249 = vector.multi_reduction <maximumf>, %248, %cst_94 [2] : vector<4x16x16xf32> to vector<4x16xf32>
    %250 = vector.shape_cast %249 : vector<4x16xf32> to vector<4x16x1xf32>
    %251 = vector.broadcast %250 : vector<4x16x1xf32> to vector<4x16x16xf32>
    %252 = arith.subf %248, %251 : vector<4x16x16xf32>
    %253 = math.exp %252 : vector<4x16x16xf32>
    %cst_95 = arith.constant dense<0.000000e+00> : vector<4x16xf32>
    %254 = vector.multi_reduction <add>, %253, %cst_95 [2] : vector<4x16x16xf32> to vector<4x16xf32>
    %255 = vector.shape_cast %254 : vector<4x16xf32> to vector<4x16x1xf32>
    %256 = math.log %255 : vector<4x16x1xf32>
    %257 = arith.addf %250, %256 : vector<4x16x1xf32>
    %258 = vector.broadcast %257 : vector<4x16x1xf32> to vector<4x16x16xf32>
    %259 = arith.subf %248, %258 : vector<4x16x16xf32>
    %cst_96 = arith.constant dense<0xFF800000> : vector<4x16xf32>
    %260 = vector.multi_reduction <maximumf>, %259, %cst_96 [1] : vector<4x16x16xf32> to vector<4x16xf32>
    %261 = vector.shape_cast %260 : vector<4x16xf32> to vector<4x1x16xf32>
    %262 = vector.broadcast %261 : vector<4x1x16xf32> to vector<4x16x16xf32>
    %263 = arith.subf %259, %262 : vector<4x16x16xf32>
    %264 = math.exp %263 : vector<4x16x16xf32>
    %cst_97 = arith.constant dense<0.000000e+00> : vector<4x16xf32>
    %265 = vector.multi_reduction <add>, %264, %cst_97 [1] : vector<4x16x16xf32> to vector<4x16xf32>
    %266 = vector.shape_cast %265 : vector<4x16xf32> to vector<4x1x16xf32>
    %267 = math.log %266 : vector<4x1x16xf32>
    %268 = arith.addf %261, %267 : vector<4x1x16xf32>
    %269 = vector.broadcast %268 : vector<4x1x16xf32> to vector<4x16x16xf32>
    %270 = arith.subf %259, %269 : vector<4x16x16xf32>
    %cst_98 = arith.constant dense<0xFF800000> : vector<4x16xf32>
    %271 = vector.multi_reduction <maximumf>, %270, %cst_98 [2] : vector<4x16x16xf32> to vector<4x16xf32>
    %272 = vector.shape_cast %271 : vector<4x16xf32> to vector<4x16x1xf32>
    %273 = vector.broadcast %272 : vector<4x16x1xf32> to vector<4x16x16xf32>
    %274 = arith.subf %270, %273 : vector<4x16x16xf32>
    %275 = math.exp %274 : vector<4x16x16xf32>
    %cst_99 = arith.constant dense<0.000000e+00> : vector<4x16xf32>
    %276 = vector.multi_reduction <add>, %275, %cst_99 [2] : vector<4x16x16xf32> to vector<4x16xf32>
    %277 = vector.shape_cast %276 : vector<4x16xf32> to vector<4x16x1xf32>
    %278 = math.log %277 : vector<4x16x1xf32>
    %279 = arith.addf %272, %278 : vector<4x16x1xf32>
    %280 = vector.broadcast %279 : vector<4x16x1xf32> to vector<4x16x16xf32>
    %281 = arith.subf %270, %280 : vector<4x16x16xf32>
    %cst_100 = arith.constant dense<0xFF800000> : vector<4x16xf32>
    %282 = vector.multi_reduction <maximumf>, %281, %cst_100 [1] : vector<4x16x16xf32> to vector<4x16xf32>
    %283 = vector.shape_cast %282 : vector<4x16xf32> to vector<4x1x16xf32>
    %284 = vector.broadcast %283 : vector<4x1x16xf32> to vector<4x16x16xf32>
    %285 = arith.subf %281, %284 : vector<4x16x16xf32>
    %286 = math.exp %285 : vector<4x16x16xf32>
    %cst_101 = arith.constant dense<0.000000e+00> : vector<4x16xf32>
    %287 = vector.multi_reduction <add>, %286, %cst_101 [1] : vector<4x16x16xf32> to vector<4x16xf32>
    %288 = vector.shape_cast %287 : vector<4x16xf32> to vector<4x1x16xf32>
    %289 = math.log %288 : vector<4x1x16xf32>
    %290 = arith.addf %283, %289 : vector<4x1x16xf32>
    %291 = vector.broadcast %290 : vector<4x1x16xf32> to vector<4x16x16xf32>
    %292 = arith.subf %281, %291 : vector<4x16x16xf32>
    %cst_102 = arith.constant dense<0xFF800000> : vector<4x16xf32>
    %293 = vector.multi_reduction <maximumf>, %292, %cst_102 [2] : vector<4x16x16xf32> to vector<4x16xf32>
    %294 = vector.shape_cast %293 : vector<4x16xf32> to vector<4x16x1xf32>
    %295 = vector.broadcast %294 : vector<4x16x1xf32> to vector<4x16x16xf32>
    %296 = arith.subf %292, %295 : vector<4x16x16xf32>
    %297 = math.exp %296 : vector<4x16x16xf32>
    %cst_103 = arith.constant dense<0.000000e+00> : vector<4x16xf32>
    %298 = vector.multi_reduction <add>, %297, %cst_103 [2] : vector<4x16x16xf32> to vector<4x16xf32>
    %299 = vector.shape_cast %298 : vector<4x16xf32> to vector<4x16x1xf32>
    %300 = math.log %299 : vector<4x16x1xf32>
    %301 = arith.addf %294, %300 : vector<4x16x1xf32>
    %302 = vector.broadcast %301 : vector<4x16x1xf32> to vector<4x16x16xf32>
    %303 = arith.subf %292, %302 : vector<4x16x16xf32>
    %cst_104 = arith.constant dense<0xFF800000> : vector<4x16xf32>
    %304 = vector.multi_reduction <maximumf>, %303, %cst_104 [1] : vector<4x16x16xf32> to vector<4x16xf32>
    %305 = vector.shape_cast %304 : vector<4x16xf32> to vector<4x1x16xf32>
    %306 = vector.broadcast %305 : vector<4x1x16xf32> to vector<4x16x16xf32>
    %307 = arith.subf %303, %306 : vector<4x16x16xf32>
    %308 = math.exp %307 : vector<4x16x16xf32>
    %cst_105 = arith.constant dense<0.000000e+00> : vector<4x16xf32>
    %309 = vector.multi_reduction <add>, %308, %cst_105 [1] : vector<4x16x16xf32> to vector<4x16xf32>
    %310 = vector.shape_cast %309 : vector<4x16xf32> to vector<4x1x16xf32>
    %311 = math.log %310 : vector<4x1x16xf32>
    %312 = arith.addf %305, %311 : vector<4x1x16xf32>
    %313 = vector.broadcast %312 : vector<4x1x16xf32> to vector<4x16x16xf32>
    %314 = arith.subf %303, %313 : vector<4x16x16xf32>
    %cst_106 = arith.constant dense<0xFF800000> : vector<4x16xf32>
    %315 = vector.multi_reduction <maximumf>, %314, %cst_106 [2] : vector<4x16x16xf32> to vector<4x16xf32>
    %316 = vector.shape_cast %315 : vector<4x16xf32> to vector<4x16x1xf32>
    %317 = vector.broadcast %316 : vector<4x16x1xf32> to vector<4x16x16xf32>
    %318 = arith.subf %314, %317 : vector<4x16x16xf32>
    %319 = math.exp %318 : vector<4x16x16xf32>
    %cst_107 = arith.constant dense<0.000000e+00> : vector<4x16xf32>
    %320 = vector.multi_reduction <add>, %319, %cst_107 [2] : vector<4x16x16xf32> to vector<4x16xf32>
    %321 = vector.shape_cast %320 : vector<4x16xf32> to vector<4x16x1xf32>
    %322 = math.log %321 : vector<4x16x1xf32>
    %323 = arith.addf %316, %322 : vector<4x16x1xf32>
    %324 = vector.broadcast %323 : vector<4x16x1xf32> to vector<4x16x16xf32>
    %325 = arith.subf %314, %324 : vector<4x16x16xf32>
    %cst_108 = arith.constant dense<0xFF800000> : vector<4x16xf32>
    %326 = vector.multi_reduction <maximumf>, %325, %cst_108 [1] : vector<4x16x16xf32> to vector<4x16xf32>
    %327 = vector.shape_cast %326 : vector<4x16xf32> to vector<4x1x16xf32>
    %328 = vector.broadcast %327 : vector<4x1x16xf32> to vector<4x16x16xf32>
    %329 = arith.subf %325, %328 : vector<4x16x16xf32>
    %330 = math.exp %329 : vector<4x16x16xf32>
    %cst_109 = arith.constant dense<0.000000e+00> : vector<4x16xf32>
    %331 = vector.multi_reduction <add>, %330, %cst_109 [1] : vector<4x16x16xf32> to vector<4x16xf32>
    %332 = vector.shape_cast %331 : vector<4x16xf32> to vector<4x1x16xf32>
    %333 = math.log %332 : vector<4x1x16xf32>
    %334 = arith.addf %327, %333 : vector<4x1x16xf32>
    %335 = vector.broadcast %334 : vector<4x1x16xf32> to vector<4x16x16xf32>
    %336 = arith.subf %325, %335 : vector<4x16x16xf32>
    %cst_110 = arith.constant dense<0xFF800000> : vector<4x16xf32>
    %337 = vector.multi_reduction <maximumf>, %336, %cst_110 [2] : vector<4x16x16xf32> to vector<4x16xf32>
    %338 = vector.shape_cast %337 : vector<4x16xf32> to vector<4x16x1xf32>
    %339 = vector.broadcast %338 : vector<4x16x1xf32> to vector<4x16x16xf32>
    %340 = arith.subf %336, %339 : vector<4x16x16xf32>
    %341 = math.exp %340 : vector<4x16x16xf32>
    %cst_111 = arith.constant dense<0.000000e+00> : vector<4x16xf32>
    %342 = vector.multi_reduction <add>, %341, %cst_111 [2] : vector<4x16x16xf32> to vector<4x16xf32>
    %343 = vector.shape_cast %342 : vector<4x16xf32> to vector<4x16x1xf32>
    %344 = math.log %343 : vector<4x16x1xf32>
    %345 = arith.addf %338, %344 : vector<4x16x1xf32>
    %346 = vector.broadcast %345 : vector<4x16x1xf32> to vector<4x16x16xf32>
    %347 = arith.subf %336, %346 : vector<4x16x16xf32>
    %cst_112 = arith.constant dense<0xFF800000> : vector<4x16xf32>
    %348 = vector.multi_reduction <maximumf>, %347, %cst_112 [1] : vector<4x16x16xf32> to vector<4x16xf32>
    %349 = vector.shape_cast %348 : vector<4x16xf32> to vector<4x1x16xf32>
    %350 = vector.broadcast %349 : vector<4x1x16xf32> to vector<4x16x16xf32>
    %351 = arith.subf %347, %350 : vector<4x16x16xf32>
    %352 = math.exp %351 : vector<4x16x16xf32>
    %cst_113 = arith.constant dense<0.000000e+00> : vector<4x16xf32>
    %353 = vector.multi_reduction <add>, %352, %cst_113 [1] : vector<4x16x16xf32> to vector<4x16xf32>
    %354 = vector.shape_cast %353 : vector<4x16xf32> to vector<4x1x16xf32>
    %355 = math.log %354 : vector<4x1x16xf32>
    %356 = arith.addf %349, %355 : vector<4x1x16xf32>
    %357 = vector.broadcast %356 : vector<4x1x16xf32> to vector<4x16x16xf32>
    %358 = arith.subf %347, %357 : vector<4x16x16xf32>
    %cst_114 = arith.constant dense<0xFF800000> : vector<4x16xf32>
    %359 = vector.multi_reduction <maximumf>, %358, %cst_114 [2] : vector<4x16x16xf32> to vector<4x16xf32>
    %360 = vector.shape_cast %359 : vector<4x16xf32> to vector<4x16x1xf32>
    %361 = vector.broadcast %360 : vector<4x16x1xf32> to vector<4x16x16xf32>
    %362 = arith.subf %358, %361 : vector<4x16x16xf32>
    %363 = math.exp %362 : vector<4x16x16xf32>
    %cst_115 = arith.constant dense<0.000000e+00> : vector<4x16xf32>
    %364 = vector.multi_reduction <add>, %363, %cst_115 [2] : vector<4x16x16xf32> to vector<4x16xf32>
    %365 = vector.shape_cast %364 : vector<4x16xf32> to vector<4x16x1xf32>
    %366 = math.log %365 : vector<4x16x1xf32>
    %367 = arith.addf %360, %366 : vector<4x16x1xf32>
    %368 = vector.broadcast %367 : vector<4x16x1xf32> to vector<4x16x16xf32>
    %369 = arith.subf %358, %368 : vector<4x16x16xf32>
    %cst_116 = arith.constant dense<0xFF800000> : vector<4x16xf32>
    %370 = vector.multi_reduction <maximumf>, %369, %cst_116 [1] : vector<4x16x16xf32> to vector<4x16xf32>
    %371 = vector.shape_cast %370 : vector<4x16xf32> to vector<4x1x16xf32>
    %372 = vector.broadcast %371 : vector<4x1x16xf32> to vector<4x16x16xf32>
    %373 = arith.subf %369, %372 : vector<4x16x16xf32>
    %374 = math.exp %373 : vector<4x16x16xf32>
    %cst_117 = arith.constant dense<0.000000e+00> : vector<4x16xf32>
    %375 = vector.multi_reduction <add>, %374, %cst_117 [1] : vector<4x16x16xf32> to vector<4x16xf32>
    %376 = vector.shape_cast %375 : vector<4x16xf32> to vector<4x1x16xf32>
    %377 = math.log %376 : vector<4x1x16xf32>
    %378 = arith.addf %371, %377 : vector<4x1x16xf32>
    %379 = vector.broadcast %378 : vector<4x1x16xf32> to vector<4x16x16xf32>
    %380 = arith.subf %369, %379 : vector<4x16x16xf32>
    %cst_118 = arith.constant dense<0xFF800000> : vector<4x16xf32>
    %381 = vector.multi_reduction <maximumf>, %380, %cst_118 [2] : vector<4x16x16xf32> to vector<4x16xf32>
    %382 = vector.shape_cast %381 : vector<4x16xf32> to vector<4x16x1xf32>
    %383 = vector.broadcast %382 : vector<4x16x1xf32> to vector<4x16x16xf32>
    %384 = arith.subf %380, %383 : vector<4x16x16xf32>
    %385 = math.exp %384 : vector<4x16x16xf32>
    %cst_119 = arith.constant dense<0.000000e+00> : vector<4x16xf32>
    %386 = vector.multi_reduction <add>, %385, %cst_119 [2] : vector<4x16x16xf32> to vector<4x16xf32>
    %387 = vector.shape_cast %386 : vector<4x16xf32> to vector<4x16x1xf32>
    %388 = math.log %387 : vector<4x16x1xf32>
    %389 = arith.addf %382, %388 : vector<4x16x1xf32>
    %390 = vector.broadcast %389 : vector<4x16x1xf32> to vector<4x16x16xf32>
    %391 = arith.subf %380, %390 : vector<4x16x16xf32>
    %cst_120 = arith.constant dense<0xFF800000> : vector<4x16xf32>
    %392 = vector.multi_reduction <maximumf>, %391, %cst_120 [1] : vector<4x16x16xf32> to vector<4x16xf32>
    %393 = vector.shape_cast %392 : vector<4x16xf32> to vector<4x1x16xf32>
    %394 = vector.broadcast %393 : vector<4x1x16xf32> to vector<4x16x16xf32>
    %395 = arith.subf %391, %394 : vector<4x16x16xf32>
    %396 = math.exp %395 : vector<4x16x16xf32>
    %cst_121 = arith.constant dense<0.000000e+00> : vector<4x16xf32>
    %397 = vector.multi_reduction <add>, %396, %cst_121 [1] : vector<4x16x16xf32> to vector<4x16xf32>
    %398 = vector.shape_cast %397 : vector<4x16xf32> to vector<4x1x16xf32>
    %399 = math.log %398 : vector<4x1x16xf32>
    %400 = arith.addf %393, %399 : vector<4x1x16xf32>
    %401 = vector.broadcast %400 : vector<4x1x16xf32> to vector<4x16x16xf32>
    %402 = arith.subf %391, %401 : vector<4x16x16xf32>
    %cst_122 = arith.constant dense<0xFF800000> : vector<4x16xf32>
    %403 = vector.multi_reduction <maximumf>, %402, %cst_122 [2] : vector<4x16x16xf32> to vector<4x16xf32>
    %404 = vector.shape_cast %403 : vector<4x16xf32> to vector<4x16x1xf32>
    %405 = vector.broadcast %404 : vector<4x16x1xf32> to vector<4x16x16xf32>
    %406 = arith.subf %402, %405 : vector<4x16x16xf32>
    %407 = math.exp %406 : vector<4x16x16xf32>
    %cst_123 = arith.constant dense<0.000000e+00> : vector<4x16xf32>
    %408 = vector.multi_reduction <add>, %407, %cst_123 [2] : vector<4x16x16xf32> to vector<4x16xf32>
    %409 = vector.shape_cast %408 : vector<4x16xf32> to vector<4x16x1xf32>
    %410 = math.log %409 : vector<4x16x1xf32>
    %411 = arith.addf %404, %410 : vector<4x16x1xf32>
    %412 = vector.broadcast %411 : vector<4x16x1xf32> to vector<4x16x16xf32>
    %413 = arith.subf %402, %412 : vector<4x16x16xf32>
    %cst_124 = arith.constant dense<0xFF800000> : vector<4x16xf32>
    %414 = vector.multi_reduction <maximumf>, %413, %cst_124 [1] : vector<4x16x16xf32> to vector<4x16xf32>
    %415 = vector.shape_cast %414 : vector<4x16xf32> to vector<4x1x16xf32>
    %416 = vector.broadcast %415 : vector<4x1x16xf32> to vector<4x16x16xf32>
    %417 = arith.subf %413, %416 : vector<4x16x16xf32>
    %418 = math.exp %417 : vector<4x16x16xf32>
    %cst_125 = arith.constant dense<0.000000e+00> : vector<4x16xf32>
    %419 = vector.multi_reduction <add>, %418, %cst_125 [1] : vector<4x16x16xf32> to vector<4x16xf32>
    %420 = vector.shape_cast %419 : vector<4x16xf32> to vector<4x1x16xf32>
    %421 = math.log %420 : vector<4x1x16xf32>
    %422 = arith.addf %415, %421 : vector<4x1x16xf32>
    %423 = vector.broadcast %422 : vector<4x1x16xf32> to vector<4x16x16xf32>
    %424 = arith.subf %413, %423 : vector<4x16x16xf32>
    %cst_126 = arith.constant dense<0xFF800000> : vector<4x16xf32>
    %425 = vector.multi_reduction <maximumf>, %424, %cst_126 [2] : vector<4x16x16xf32> to vector<4x16xf32>
    %426 = vector.shape_cast %425 : vector<4x16xf32> to vector<4x16x1xf32>
    %427 = vector.broadcast %426 : vector<4x16x1xf32> to vector<4x16x16xf32>
    %428 = arith.subf %424, %427 : vector<4x16x16xf32>
    %429 = math.exp %428 : vector<4x16x16xf32>
    %cst_127 = arith.constant dense<0.000000e+00> : vector<4x16xf32>
    %430 = vector.multi_reduction <add>, %429, %cst_127 [2] : vector<4x16x16xf32> to vector<4x16xf32>
    %431 = vector.shape_cast %430 : vector<4x16xf32> to vector<4x16x1xf32>
    %432 = math.log %431 : vector<4x16x1xf32>
    %433 = arith.addf %426, %432 : vector<4x16x1xf32>
    %434 = vector.broadcast %433 : vector<4x16x1xf32> to vector<4x16x16xf32>
    %435 = arith.subf %424, %434 : vector<4x16x16xf32>
    %cst_128 = arith.constant dense<0xFF800000> : vector<4x16xf32>
    %436 = vector.multi_reduction <maximumf>, %435, %cst_128 [1] : vector<4x16x16xf32> to vector<4x16xf32>
    %437 = vector.shape_cast %436 : vector<4x16xf32> to vector<4x1x16xf32>
    %438 = vector.broadcast %437 : vector<4x1x16xf32> to vector<4x16x16xf32>
    %439 = arith.subf %435, %438 : vector<4x16x16xf32>
    %440 = math.exp %439 : vector<4x16x16xf32>
    %cst_129 = arith.constant dense<0.000000e+00> : vector<4x16xf32>
    %441 = vector.multi_reduction <add>, %440, %cst_129 [1] : vector<4x16x16xf32> to vector<4x16xf32>
    %442 = vector.shape_cast %441 : vector<4x16xf32> to vector<4x1x16xf32>
    %443 = math.log %442 : vector<4x1x16xf32>
    %444 = arith.addf %437, %443 : vector<4x1x16xf32>
    %445 = vector.broadcast %444 : vector<4x1x16xf32> to vector<4x16x16xf32>
    %446 = arith.subf %435, %445 : vector<4x16x16xf32>
    %cst_130 = arith.constant dense<0xFF800000> : vector<4x16xf32>
    %447 = vector.multi_reduction <maximumf>, %446, %cst_130 [2] : vector<4x16x16xf32> to vector<4x16xf32>
    %448 = vector.shape_cast %447 : vector<4x16xf32> to vector<4x16x1xf32>
    %449 = vector.broadcast %448 : vector<4x16x1xf32> to vector<4x16x16xf32>
    %450 = arith.subf %446, %449 : vector<4x16x16xf32>
    %451 = math.exp %450 : vector<4x16x16xf32>
    %cst_131 = arith.constant dense<0.000000e+00> : vector<4x16xf32>
    %452 = vector.multi_reduction <add>, %451, %cst_131 [2] : vector<4x16x16xf32> to vector<4x16xf32>
    %453 = vector.shape_cast %452 : vector<4x16xf32> to vector<4x16x1xf32>
    %454 = math.log %453 : vector<4x16x1xf32>
    %455 = arith.addf %448, %454 : vector<4x16x1xf32>
    %456 = vector.broadcast %455 : vector<4x16x1xf32> to vector<4x16x16xf32>
    %457 = arith.subf %446, %456 : vector<4x16x16xf32>
    %cst_132 = arith.constant dense<0xFF800000> : vector<4x16xf32>
    %458 = vector.multi_reduction <maximumf>, %457, %cst_132 [1] : vector<4x16x16xf32> to vector<4x16xf32>
    %459 = vector.shape_cast %458 : vector<4x16xf32> to vector<4x1x16xf32>
    %460 = vector.broadcast %459 : vector<4x1x16xf32> to vector<4x16x16xf32>
    %461 = arith.subf %457, %460 : vector<4x16x16xf32>
    %462 = math.exp %461 : vector<4x16x16xf32>
    %cst_133 = arith.constant dense<0.000000e+00> : vector<4x16xf32>
    %463 = vector.multi_reduction <add>, %462, %cst_133 [1] : vector<4x16x16xf32> to vector<4x16xf32>
    %464 = vector.shape_cast %463 : vector<4x16xf32> to vector<4x1x16xf32>
    %465 = math.log %464 : vector<4x1x16xf32>
    %466 = arith.addf %459, %465 : vector<4x1x16xf32>
    %467 = vector.broadcast %466 : vector<4x1x16xf32> to vector<4x16x16xf32>
    %468 = arith.subf %457, %467 : vector<4x16x16xf32>
    %cst_134 = arith.constant dense<0xFF800000> : vector<4x16xf32>
    %469 = vector.multi_reduction <maximumf>, %468, %cst_134 [2] : vector<4x16x16xf32> to vector<4x16xf32>
    %470 = vector.shape_cast %469 : vector<4x16xf32> to vector<4x16x1xf32>
    %471 = vector.broadcast %470 : vector<4x16x1xf32> to vector<4x16x16xf32>
    %472 = arith.subf %468, %471 : vector<4x16x16xf32>
    %473 = math.exp %472 : vector<4x16x16xf32>
    %cst_135 = arith.constant dense<0.000000e+00> : vector<4x16xf32>
    %474 = vector.multi_reduction <add>, %473, %cst_135 [2] : vector<4x16x16xf32> to vector<4x16xf32>
    %475 = vector.shape_cast %474 : vector<4x16xf32> to vector<4x16x1xf32>
    %476 = math.log %475 : vector<4x16x1xf32>
    %477 = arith.addf %470, %476 : vector<4x16x1xf32>
    %478 = vector.broadcast %477 : vector<4x16x1xf32> to vector<4x16x16xf32>
    %479 = arith.subf %468, %478 : vector<4x16x16xf32>
    %cst_136 = arith.constant dense<0xFF800000> : vector<4x16xf32>
    %480 = vector.multi_reduction <maximumf>, %479, %cst_136 [1] : vector<4x16x16xf32> to vector<4x16xf32>
    %481 = vector.shape_cast %480 : vector<4x16xf32> to vector<4x1x16xf32>
    %482 = vector.broadcast %481 : vector<4x1x16xf32> to vector<4x16x16xf32>
    %483 = arith.subf %479, %482 : vector<4x16x16xf32>
    %484 = math.exp %483 : vector<4x16x16xf32>
    %cst_137 = arith.constant dense<0.000000e+00> : vector<4x16xf32>
    %485 = vector.multi_reduction <add>, %484, %cst_137 [1] : vector<4x16x16xf32> to vector<4x16xf32>
    %486 = vector.shape_cast %485 : vector<4x16xf32> to vector<4x1x16xf32>
    %487 = math.log %486 : vector<4x1x16xf32>
    %488 = arith.addf %481, %487 : vector<4x1x16xf32>
    %489 = vector.broadcast %488 : vector<4x1x16xf32> to vector<4x16x16xf32>
    %490 = arith.subf %479, %489 : vector<4x16x16xf32>
    %cst_138 = arith.constant dense<0xFF800000> : vector<4x16xf32>
    %491 = vector.multi_reduction <maximumf>, %490, %cst_138 [2] : vector<4x16x16xf32> to vector<4x16xf32>
    %492 = vector.shape_cast %491 : vector<4x16xf32> to vector<4x16x1xf32>
    %493 = vector.broadcast %492 : vector<4x16x1xf32> to vector<4x16x16xf32>
    %494 = arith.subf %490, %493 : vector<4x16x16xf32>
    %495 = math.exp %494 : vector<4x16x16xf32>
    %cst_139 = arith.constant dense<0.000000e+00> : vector<4x16xf32>
    %496 = vector.multi_reduction <add>, %495, %cst_139 [2] : vector<4x16x16xf32> to vector<4x16xf32>
    %497 = vector.shape_cast %496 : vector<4x16xf32> to vector<4x16x1xf32>
    %498 = math.log %497 : vector<4x16x1xf32>
    %499 = arith.addf %492, %498 : vector<4x16x1xf32>
    %500 = vector.broadcast %499 : vector<4x16x1xf32> to vector<4x16x16xf32>
    %501 = arith.subf %490, %500 : vector<4x16x16xf32>
    %cst_140 = arith.constant dense<0xFF800000> : vector<4x16xf32>
    %502 = vector.multi_reduction <maximumf>, %501, %cst_140 [1] : vector<4x16x16xf32> to vector<4x16xf32>
    %503 = vector.shape_cast %502 : vector<4x16xf32> to vector<4x1x16xf32>
    %504 = vector.broadcast %503 : vector<4x1x16xf32> to vector<4x16x16xf32>
    %505 = arith.subf %501, %504 : vector<4x16x16xf32>
    %506 = math.exp %505 : vector<4x16x16xf32>
    %cst_141 = arith.constant dense<0.000000e+00> : vector<4x16xf32>
    %507 = vector.multi_reduction <add>, %506, %cst_141 [1] : vector<4x16x16xf32> to vector<4x16xf32>
    %508 = vector.shape_cast %507 : vector<4x16xf32> to vector<4x1x16xf32>
    %509 = math.log %508 : vector<4x1x16xf32>
    %510 = arith.addf %503, %509 : vector<4x1x16xf32>
    %511 = vector.broadcast %510 : vector<4x1x16xf32> to vector<4x16x16xf32>
    %512 = arith.subf %501, %511 : vector<4x16x16xf32>
    %cst_142 = arith.constant dense<0xFF800000> : vector<4x16xf32>
    %513 = vector.multi_reduction <maximumf>, %512, %cst_142 [2] : vector<4x16x16xf32> to vector<4x16xf32>
    %514 = vector.shape_cast %513 : vector<4x16xf32> to vector<4x16x1xf32>
    %515 = vector.broadcast %514 : vector<4x16x1xf32> to vector<4x16x16xf32>
    %516 = arith.subf %512, %515 : vector<4x16x16xf32>
    %517 = math.exp %516 : vector<4x16x16xf32>
    %cst_143 = arith.constant dense<0.000000e+00> : vector<4x16xf32>
    %518 = vector.multi_reduction <add>, %517, %cst_143 [2] : vector<4x16x16xf32> to vector<4x16xf32>
    %519 = vector.shape_cast %518 : vector<4x16xf32> to vector<4x16x1xf32>
    %520 = math.log %519 : vector<4x16x1xf32>
    %521 = arith.addf %514, %520 : vector<4x16x1xf32>
    %522 = vector.broadcast %521 : vector<4x16x1xf32> to vector<4x16x16xf32>
    %523 = arith.subf %512, %522 : vector<4x16x16xf32>
    %cst_144 = arith.constant dense<0xFF800000> : vector<4x16xf32>
    %524 = vector.multi_reduction <maximumf>, %523, %cst_144 [1] : vector<4x16x16xf32> to vector<4x16xf32>
    %525 = vector.shape_cast %524 : vector<4x16xf32> to vector<4x1x16xf32>
    %526 = vector.broadcast %525 : vector<4x1x16xf32> to vector<4x16x16xf32>
    %527 = arith.subf %523, %526 : vector<4x16x16xf32>
    %528 = math.exp %527 : vector<4x16x16xf32>
    %cst_145 = arith.constant dense<0.000000e+00> : vector<4x16xf32>
    %529 = vector.multi_reduction <add>, %528, %cst_145 [1] : vector<4x16x16xf32> to vector<4x16xf32>
    %530 = vector.shape_cast %529 : vector<4x16xf32> to vector<4x1x16xf32>
    %531 = math.log %530 : vector<4x1x16xf32>
    %532 = arith.addf %525, %531 : vector<4x1x16xf32>
    %533 = vector.broadcast %532 : vector<4x1x16xf32> to vector<4x16x16xf32>
    %534 = arith.subf %523, %533 : vector<4x16x16xf32>
    %cst_146 = arith.constant dense<0xFF800000> : vector<4x16xf32>
    %535 = vector.multi_reduction <maximumf>, %534, %cst_146 [2] : vector<4x16x16xf32> to vector<4x16xf32>
    %536 = vector.shape_cast %535 : vector<4x16xf32> to vector<4x16x1xf32>
    %537 = vector.broadcast %536 : vector<4x16x1xf32> to vector<4x16x16xf32>
    %538 = arith.subf %534, %537 : vector<4x16x16xf32>
    %539 = math.exp %538 : vector<4x16x16xf32>
    %cst_147 = arith.constant dense<0.000000e+00> : vector<4x16xf32>
    %540 = vector.multi_reduction <add>, %539, %cst_147 [2] : vector<4x16x16xf32> to vector<4x16xf32>
    %541 = vector.shape_cast %540 : vector<4x16xf32> to vector<4x16x1xf32>
    %542 = math.log %541 : vector<4x16x1xf32>
    %543 = arith.addf %536, %542 : vector<4x16x1xf32>
    %544 = vector.broadcast %543 : vector<4x16x1xf32> to vector<4x16x16xf32>
    %545 = arith.subf %534, %544 : vector<4x16x16xf32>
    %cst_148 = arith.constant dense<0xFF800000> : vector<4x16xf32>
    %546 = vector.multi_reduction <maximumf>, %545, %cst_148 [1] : vector<4x16x16xf32> to vector<4x16xf32>
    %547 = vector.shape_cast %546 : vector<4x16xf32> to vector<4x1x16xf32>
    %548 = vector.broadcast %547 : vector<4x1x16xf32> to vector<4x16x16xf32>
    %549 = arith.subf %545, %548 : vector<4x16x16xf32>
    %550 = math.exp %549 : vector<4x16x16xf32>
    %cst_149 = arith.constant dense<0.000000e+00> : vector<4x16xf32>
    %551 = vector.multi_reduction <add>, %550, %cst_149 [1] : vector<4x16x16xf32> to vector<4x16xf32>
    %552 = vector.shape_cast %551 : vector<4x16xf32> to vector<4x1x16xf32>
    %553 = math.log %552 : vector<4x1x16xf32>
    %554 = arith.addf %547, %553 : vector<4x1x16xf32>
    %555 = vector.broadcast %554 : vector<4x1x16xf32> to vector<4x16x16xf32>
    %556 = arith.subf %545, %555 : vector<4x16x16xf32>
    %557 = math.exp %556 : vector<4x16x16xf32>
    "tpu.trace_start"() <{level = 10 : i32, message = "bij,bjd->bid"}> : () -> ()
    %cst_150 = arith.constant dense<0.000000e+00> : vector<4x16x32xf32>
    %558 = tpu.matmul %557, %102, %cst_150 {dimension_numbers = #tpu.dot_dimension_numbers<[2], [1], [1], [2], [0, 0, 0, 1, 1, 2], [0], [0]>} : vector<4x16x16xf32>, vector<4x16x32xf32>, vector<4x16x32xf32> -> vector<4x16x32xf32>
    %cst_151 = arith.constant 0.000000e+00 : f32
    "tpu.trace_stop"() : () -> ()
    %559 = vector.broadcast %cst_151 : f32 to vector<1x2xf32>
    %560 = vector.extract_strided_slice %558 {offsets = [0, 0, 0], sizes = [1, 16, 32], strides = [1, 1, 1]} : vector<4x16x32xf32> to vector<1x16x32xf32>
    %561 = vector.shape_cast %560 : vector<1x16x32xf32> to vector<16x32xf32>
    %562 = arith.subf %78, %561 : vector<16x32xf32>
    %cst_152 = arith.constant dense<0.000000e+00> : vector<16xf32>
    %563 = vector.multi_reduction <add>, %562, %cst_152 [1] : vector<16x32xf32> to vector<16xf32>
    %564 = vector.shape_cast %563 : vector<16xf32> to vector<16x1xf32>
    %cst_153 = arith.constant dense<0.000000e+00> : vector<1xf32>
    %565 = vector.multi_reduction <add>, %564, %cst_153 [0] : vector<16x1xf32> to vector<1xf32>
    %566 = vector.shape_cast %565 : vector<1xf32> to vector<1x1xf32>
    %567 = vector.extract_strided_slice %558 {offsets = [1, 0, 0], sizes = [1, 16, 32], strides = [1, 1, 1]} : vector<4x16x32xf32> to vector<1x16x32xf32>
    %568 = vector.shape_cast %567 : vector<1x16x32xf32> to vector<16x32xf32>
    %569 = arith.subf %91, %568 : vector<16x32xf32>
    %cst_154 = arith.constant dense<0.000000e+00> : vector<16xf32>
    %570 = vector.multi_reduction <add>, %569, %cst_154 [1] : vector<16x32xf32> to vector<16xf32>
    %571 = vector.shape_cast %570 : vector<16xf32> to vector<16x1xf32>
    %cst_155 = arith.constant dense<0.000000e+00> : vector<1xf32>
    %572 = vector.multi_reduction <add>, %571, %cst_155 [0] : vector<16x1xf32> to vector<1xf32>
    %573 = vector.shape_cast %572 : vector<1xf32> to vector<1x1xf32>
    %574 = tpu.concatenate %566, %573 in 1 : vector<1x1xf32>, vector<1x1xf32> -> vector<1x2xf32>
    %cst_156 = arith.constant dense<0x7F800000> : vector<1xf32>
    %575 = vector.multi_reduction <minimumf>, %574, %cst_156 [1] : vector<1x2xf32> to vector<1xf32>
    %576 = vector.shape_cast %575 : vector<1xf32> to vector<1x1xf32>
    %cst_157 = arith.constant dense<0xFF800000> : vector<1xf32>
    %577 = vector.multi_reduction <maximumf>, %574, %cst_157 [1] : vector<1x2xf32> to vector<1xf32>
    %578 = vector.shape_cast %577 : vector<1xf32> to vector<1x1xf32>
    %579 = vector.broadcast %576 : vector<1x1xf32> to vector<1x2xf32>
    %580 = arith.subf %574, %579 : vector<1x2xf32>
    %cst_158 = arith.constant 0.000000e+00 : f32
    %581 = vector.broadcast %cst_158 : f32 to vector<1x2xf32>
    %582 = arith.subf %581, %580 : vector<1x2xf32>
    %583 = arith.subf %578, %576 : vector<1x1xf32>
    %584 = vector.broadcast %583 : vector<1x1xf32> to vector<1x2xf32>
    %585 = arith.divf %582, %584 : vector<1x2xf32>
    %586 = math.exp %585 : vector<1x2xf32>
    %587 = arith.addf %559, %586 : vector<1x2xf32>
    %588 = vector.extract_strided_slice %558 {offsets = [2, 0, 0], sizes = [1, 16, 32], strides = [1, 1, 1]} : vector<4x16x32xf32> to vector<1x16x32xf32>
    %589 = vector.shape_cast %588 : vector<1x16x32xf32> to vector<16x32xf32>
    %590 = arith.subf %78, %589 : vector<16x32xf32>
    %cst_159 = arith.constant dense<0.000000e+00> : vector<16xf32>
    %591 = vector.multi_reduction <add>, %590, %cst_159 [1] : vector<16x32xf32> to vector<16xf32>
    %592 = vector.shape_cast %591 : vector<16xf32> to vector<16x1xf32>
    %cst_160 = arith.constant dense<0.000000e+00> : vector<1xf32>
    %593 = vector.multi_reduction <add>, %592, %cst_160 [0] : vector<16x1xf32> to vector<1xf32>
    %594 = vector.shape_cast %593 : vector<1xf32> to vector<1x1xf32>
    %595 = vector.extract_strided_slice %558 {offsets = [3, 0, 0], sizes = [1, 16, 32], strides = [1, 1, 1]} : vector<4x16x32xf32> to vector<1x16x32xf32>
    %596 = vector.shape_cast %595 : vector<1x16x32xf32> to vector<16x32xf32>
    %597 = arith.subf %91, %596 : vector<16x32xf32>
    %cst_161 = arith.constant dense<0.000000e+00> : vector<16xf32>
    %598 = vector.multi_reduction <add>, %597, %cst_161 [1] : vector<16x32xf32> to vector<16xf32>
    %599 = vector.shape_cast %598 : vector<16xf32> to vector<16x1xf32>
    %cst_162 = arith.constant dense<0.000000e+00> : vector<1xf32>
    %600 = vector.multi_reduction <add>, %599, %cst_162 [0] : vector<16x1xf32> to vector<1xf32>
    %601 = vector.shape_cast %600 : vector<1xf32> to vector<1x1xf32>
    %602 = tpu.concatenate %594, %601 in 1 : vector<1x1xf32>, vector<1x1xf32> -> vector<1x2xf32>
    %cst_163 = arith.constant dense<0x7F800000> : vector<1xf32>
    %603 = vector.multi_reduction <minimumf>, %602, %cst_163 [1] : vector<1x2xf32> to vector<1xf32>
    %604 = vector.shape_cast %603 : vector<1xf32> to vector<1x1xf32>
    %cst_164 = arith.constant dense<0xFF800000> : vector<1xf32>
    %605 = vector.multi_reduction <maximumf>, %602, %cst_164 [1] : vector<1x2xf32> to vector<1xf32>
    %606 = vector.shape_cast %605 : vector<1xf32> to vector<1x1xf32>
    %607 = vector.broadcast %604 : vector<1x1xf32> to vector<1x2xf32>
    %608 = arith.subf %602, %607 : vector<1x2xf32>
    %cst_165 = arith.constant 0.000000e+00 : f32
    %609 = vector.broadcast %cst_165 : f32 to vector<1x2xf32>
    %610 = arith.subf %609, %608 : vector<1x2xf32>
    %611 = arith.subf %606, %604 : vector<1x1xf32>
    %612 = vector.broadcast %611 : vector<1x1xf32> to vector<1x2xf32>
    %613 = arith.divf %610, %612 : vector<1x2xf32>
    %614 = math.exp %613 : vector<1x2xf32>
    %615 = arith.addf %587, %614 : vector<1x2xf32>
    %cst_166 = arith.constant 5.000000e-01 : f32
    %616 = vector.broadcast %cst_166 : f32 to vector<1x2xf32>
    %617 = arith.mulf %615, %616 : vector<1x2xf32>
    %c0_167 = arith.constant 0 : index
    %c0_168 = arith.constant 0 : index
    %618 = vector.load %arg22[%c0_167, %c0_168] : memref<1x2xf32, #tpu.memory_space<vmem>>, vector<1x2xf32>
    tpu.vector_store %arg22[%c0_167, %c0_168], %617 {strides = array<i32>} : memref<1x2xf32, #tpu.memory_space<vmem>>, vector<1x2xf32>,
    return
  }
  func.func @transform_0(%arg0: i32) -> (i32, i32) {
    %c0_i32 = arith.constant 0 : i32
    %c0_i32_0 = arith.constant 0 : i32
    %c0_i32_1 = arith.constant 0 : i32
    return %c0_i32, %c0_i32_0 : i32, i32
  }
  func.func @transform_1(%arg0: i32) -> (i32, i32) {
    %c0_i32 = arith.constant 0 : i32
    %c0_i32_0 = arith.constant 0 : i32
    %c0_i32_1 = arith.constant 0 : i32
    return %c0_i32, %c0_i32_0 : i32, i32
  }
  func.func @transform_2(%arg0: i32) -> (i32, i32) {
    %c0_i32 = arith.constant 0 : i32
    %c0_i32_0 = arith.constant 0 : i32
    %c0_i32_1 = arith.constant 0 : i32
    return %c0_i32, %c0_i32_0 : i32, i32
  }
  func.func @transform_3(%arg0: i32) -> (i32, i32, i32) {
    %c0_i32 = arith.constant 0 : i32
    %c0_i32_0 = arith.constant 0 : i32
    %c0_i32_1 = arith.constant 0 : i32
    %c0_i32_2 = arith.constant 0 : i32
    return %c0_i32, %c0_i32_0, %c0_i32_1 : i32, i32, i32
  }
  func.func @transform_4(%arg0: i32) -> (i32, i32) {
    %c0_i32 = arith.constant 0 : i32
    %c0_i32_0 = arith.constant 0 : i32
    %c0_i32_1 = arith.constant 0 : i32
    return %c0_i32, %c0_i32_0 : i32, i32
  }
  func.func @transform_5(%arg0: i32) -> (i32, i32) {
    %c0_i32 = arith.constant 0 : i32
    %c0_i32_0 = arith.constant 0 : i32
    %c0_i32_1 = arith.constant 0 : i32
    return %c0_i32, %c0_i32_0 : i32, i32
  }
  func.func @transform_6(%arg0: i32) -> (i32, i32) {
    %c0_i32 = arith.constant 0 : i32
    %c0_i32_0 = arith.constant 0 : i32
    %c0_i32_1 = arith.constant 0 : i32
    return %c0_i32, %c0_i32_0 : i32, i32
  }
  func.func @transform_7(%arg0: i32) -> (i32, i32) {
    %c0_i32 = arith.constant 0 : i32
    %c0_i32_0 = arith.constant 0 : i32
    %c0_i32_1 = arith.constant 0 : i32
    return %c0_i32, %c0_i32_0 : i32, i32
  }
  func.func @transform_8(%arg0: i32) -> (i32, i32) {
    %c0_i32 = arith.constant 0 : i32
    %c0_i32_0 = arith.constant 0 : i32
    %c0_i32_1 = arith.constant 0 : i32
    return %c0_i32, %c0_i32_0 : i32, i32
  }
  func.func @transform_9(%arg0: i32) -> (i32, i32) {
    %c0_i32 = arith.constant 0 : i32
    %c0_i32_0 = arith.constant 0 : i32
    %c0_i32_1 = arith.constant 0 : i32
    return %c0_i32, %c0_i32_0 : i32, i32
  }
  func.func @transform_10(%arg0: i32) -> (i32, i32) {
    %c0_i32 = arith.constant 0 : i32
    %c0_i32_0 = arith.constant 0 : i32
    %c0_i32_1 = arith.constant 0 : i32
    return %c0_i32, %c0_i32_0 : i32, i32
  }
  func.func @transform_11(%arg0: i32) -> (i32, i32) {
    %c0_i32 = arith.constant 0 : i32
    %c0_i32_0 = arith.constant 0 : i32
    %c0_i32_1 = arith.constant 0 : i32
    return %c0_i32, %c0_i32_0 : i32, i32
  }
  func.func @transform_12(%arg0: i32) -> (i32, i32) {
    %c0_i32 = arith.constant 0 : i32
    %c0_i32_0 = arith.constant 0 : i32
    %c0_i32_1 = arith.constant 0 : i32
    return %c0_i32, %c0_i32_0 : i32, i32
  }
  func.func @transform_13(%arg0: i32) -> (i32, i32) {
    %c0_i32 = arith.constant 0 : i32
    %c0_i32_0 = arith.constant 0 : i32
    %c0_i32_1 = arith.constant 0 : i32
    return %c0_i32, %c0_i32_0 : i32, i32
  }
  func.func @transform_14(%arg0: i32) -> (i32, i32) {
    %c0_i32 = arith.constant 0 : i32
    %c0_i32_0 = arith.constant 0 : i32
    %c0_i32_1 = arith.constant 0 : i32
    return %c0_i32, %c0_i32_0 : i32, i32
  }
  func.func @transform_15(%arg0: i32) -> (i32, i32) {
    %c0_i32 = arith.constant 0 : i32
    %c0_i32_0 = arith.constant 0 : i32
    %c0_i32_1 = arith.constant 0 : i32
    return %c0_i32, %c0_i32_0 : i32, i32
  }
  func.func @transform_16(%arg0: i32) -> (i32, i32) {
    %c0_i32 = arith.constant 0 : i32
    %c0_i32_0 = arith.constant 0 : i32
    %c0_i32_1 = arith.constant 0 : i32
    return %c0_i32, %c0_i32_0 : i32, i32
  }
  func.func @transform_17(%arg0: i32) -> (i32, i32) {
    %c0_i32 = arith.constant 0 : i32
    %c0_i32_0 = arith.constant 0 : i32
    %c0_i32_1 = arith.constant 0 : i32
    return %c0_i32, %c0_i32_0 : i32, i32
  }
  func.func @transform_18(%arg0: i32) -> (i32, i32) {
    %c0_i32 = arith.constant 0 : i32
    %c0_i32_0 = arith.constant 0 : i32
    %c0_i32_1 = arith.constant 0 : i32
    return %c0_i32, %c0_i32_0 : i32, i32
  }
  func.func @transform_19(%arg0: i32) -> (i32, i32) {
    %c0_i32 = arith.constant 0 : i32
    %c0_i32_0 = arith.constant 0 : i32
    %c0_i32_1 = arith.constant 0 : i32
    return %c0_i32, %c0_i32_0 : i32, i32
  }
  func.func @transform_20(%arg0: i32) -> (i32, i32) {
    %c0_i32 = arith.constant 0 : i32
    %c0_i32_0 = arith.constant 0 : i32
    %c0_i32_1 = arith.constant 0 : i32
    return %c0_i32, %c0_i32_0 : i32, i32
  }
  func.func @transform_21(%arg0: i32) -> (i32, i32) {
    %c0_i32 = arith.constant 0 : i32
    %c0_i32_0 = arith.constant 0 : i32
    %c0_i32_1 = arith.constant 0 : i32
    return %c0_i32, %c0_i32_0 : i32, i32
  }
}

</mosaic_0001>

<llo_original>
// kernel: gsmodel_forward.1
$region0: #{gsmodel_forward.1}
  #allocation0 [shape = 'u32[]', space=smem, size = 0x4, offset = 0x4, fixed_abs, tag = 'smem constant byte address 0x4 - core index']
  #allocation1 [shape = 'u32[144,128]{1,0:T(1,128)}', space=vmem, size = 0x12000, scoped, tag = 'internal scratch']
  %s0 = inlined_call_operand.vmem [shape: f32[64,16], index: 0, kind: input, shape index: {}]
  %s1 = inlined_call_operand.vmem [shape: f32[64,64], index: 1, kind: input, shape index: {}]
  %s2 = inlined_call_operand.vmem [shape: f32[64,1], index: 2, kind: input, shape index: {}]
  %s3 = inlined_call_operand.vmem [shape: f32[4,16,16], index: 3, kind: input, shape index: {}]
  %s4 = inlined_call_operand.vmem [shape: f32[16,32], index: 4, kind: input, shape index: {}]
  %s5 = inlined_call_operand.vmem [shape: f32[1,32], index: 5, kind: input, shape index: {}]
  %s6 = inlined_call_operand.vmem [shape: f32[32,32], index: 6, kind: input, shape index: {}]
  %s7 = inlined_call_operand.vmem [shape: f32[1,32], index: 7, kind: input, shape index: {}]
  %s8 = inlined_call_operand.vmem [shape: f32[32,32], index: 8, kind: input, shape index: {}]
  %s9 = inlined_call_operand.vmem [shape: f32[1,32], index: 9, kind: input, shape index: {}]
  %s10 = inlined_call_operand.vmem [shape: f32[32,32], index: 10, kind: input, shape index: {}]
  %s11 = inlined_call_operand.vmem [shape: f32[1,32], index: 11, kind: input, shape index: {}]
  %s12 = inlined_call_operand.vmem [shape: f32[32,32], index: 12, kind: input, shape index: {}]
  %s13 = inlined_call_operand.vmem [shape: f32[1,32], index: 13, kind: input, shape index: {}]
  %s14 = inlined_call_operand.vmem [shape: f32[32,32], index: 14, kind: input, shape index: {}]
  %s15 = inlined_call_operand.vmem [shape: f32[1,32], index: 15, kind: input, shape index: {}]
  %s16 = inlined_call_operand.vmem [shape: f32[32,32], index: 16, kind: input, shape index: {}]
  %s17 = inlined_call_operand.vmem [shape: f32[16,16], index: 17, kind: input, shape index: {}]
  %s18 = inlined_call_operand.vmem [shape: f32[1,16], index: 18, kind: input, shape index: {}]
  %s19 = inlined_call_operand.vmem [shape: f32[16,16], index: 19, kind: input, shape index: {}]
  %s20 = inlined_call_operand.vmem [shape: f32[1,16], index: 20, kind: input, shape index: {}]
  %s21 = inlined_call_operand.hbm [shape: f32[1,2], index: 21, kind: output, shape index: {}]
  %s22 = sld [smem:[#allocation0]]
  $region94: #{gsmodel_forward.1} parent=0
    _
  %s24 = ssub.s32 1, %s22
  %s25 = scalar_select 0, %s24, %s22
  $region1: #{gsmodel_forward.1} parent=0
    #allocation2 [shape = 'u8[512]{0}', space=vmem, size = 0x400, scoped, tag = 'output window, operand 0, single buffered']
    #allocation3 [shape = 's32[1]{0}', space=sflag, size = 0x4, scoped, tag = 'scoped memory for gsmodel_forward.1']
    %26 = vsyncpa [#allocation3], 0
    // Predicated region
    $region2: #{gsmodel_forward.1} parent=1 // pred_check
      _
    $region3: #{gsmodel_forward.1} parent=1 // pred_check_branch
      %28 = sbr.rel (0) target = $region5
    $region4: #{gsmodel_forward.1} parent=1 // pred_region
      _
    $region5: #{gsmodel_forward.1} parent=1 // pred_fallthru
      _
    // Predicated region
    $region6: #{gsmodel_forward.1} parent=1 // pred_check
      _
    $region7: #{gsmodel_forward.1} parent=1 // pred_check_branch
      %30 = sbr.rel (0) target = $region9
    $region8: #{gsmodel_forward.1} parent=1 // pred_region
      _
    $region9: #{gsmodel_forward.1} parent=1 // pred_fallthru
      _
    // Predicated region
    $region10: #{gsmodel_forward.1} parent=1 // pred_check
      _
    $region11: #{gsmodel_forward.1} parent=1 // pred_check_branch
      %32 = sbr.rel (0) target = $region13
    $region12: #{gsmodel_forward.1} parent=1 // pred_region
      _
    $region13: #{gsmodel_forward.1} parent=1 // pred_fallthru
      _
    // Predicated region
    $region14: #{gsmodel_forward.1} parent=1 // pred_check
      _
    $region15: #{gsmodel_forward.1} parent=1 // pred_check_branch
      %34 = sbr.rel (0) target = $region17
    $region16: #{gsmodel_forward.1} parent=1 // pred_region
      _
    $region17: #{gsmodel_forward.1} parent=1 // pred_fallthru
      _
    // Predicated region
    $region18: #{gsmodel_forward.1} parent=1 // pred_check
      _
    $region19: #{gsmodel_forward.1} parent=1 // pred_check_branch
      %36 = sbr.rel (0) target = $region21
    $region20: #{gsmodel_forward.1} parent=1 // pred_region
      _
    $region21: #{gsmodel_forward.1} parent=1 // pred_fallthru
      _
    // Predicated region
    $region22: #{gsmodel_forward.1} parent=1 // pred_check
      _
    $region23: #{gsmodel_forward.1} parent=1 // pred_check_branch
      %38 = sbr.rel (0) target = $region25
    $region24: #{gsmodel_forward.1} parent=1 // pred_region
      _
    $region25: #{gsmodel_forward.1} parent=1 // pred_fallthru
      _
    // Predicated region
    $region26: #{gsmodel_forward.1} parent=1 // pred_check
      _
    $region27: #{gsmodel_forward.1} parent=1 // pred_check_branch
      %40 = sbr.rel (0) target = $region29
    $region28: #{gsmodel_forward.1} parent=1 // pred_region
      _
    $region29: #{gsmodel_forward.1} parent=1 // pred_fallthru
      _
    // Predicated region
    $region30: #{gsmodel_forward.1} parent=1 // pred_check
      _
    $region31: #{gsmodel_forward.1} parent=1 // pred_check_branch
      %42 = sbr.rel (0) target = $region33
    $region32: #{gsmodel_forward.1} parent=1 // pred_region
      _
    $region33: #{gsmodel_forward.1} parent=1 // pred_fallthru
      _
    // Predicated region
    $region34: #{gsmodel_forward.1} parent=1 // pred_check
      _
    $region35: #{gsmodel_forward.1} parent=1 // pred_check_branch
      %44 = sbr.rel (0) target = $region37
    $region36: #{gsmodel_forward.1} parent=1 // pred_region
      _
    $region37: #{gsmodel_forward.1} parent=1 // pred_fallthru
      _
    // Predicated region
    $region38: #{gsmodel_forward.1} parent=1 // pred_check
      _
    $region39: #{gsmodel_forward.1} parent=1 // pred_check_branch
      %46 = sbr.rel (0) target = $region41
    $region40: #{gsmodel_forward.1} parent=1 // pred_region
      _
    $region41: #{gsmodel_forward.1} parent=1 // pred_fallthru
      _
    // Predicated region
    $region42: #{gsmodel_forward.1} parent=1 // pred_check
      _
    $region43: #{gsmodel_forward.1} parent=1 // pred_check_branch
      %48 = sbr.rel (0) target = $region45
    $region44: #{gsmodel_forward.1} parent=1 // pred_region
      _
    $region45: #{gsmodel_forward.1} parent=1 // pred_fallthru
      _
    // Predicated region
    $region46: #{gsmodel_forward.1} parent=1 // pred_check
      _
    $region47: #{gsmodel_forward.1} parent=1 // pred_check_branch
      %50 = sbr.rel (0) target = $region49
    $region48: #{gsmodel_forward.1} parent=1 // pred_region
      _
    $region49: #{gsmodel_forward.1} parent=1 // pred_fallthru
      _
    // Predicated region
    $region50: #{gsmodel_forward.1} parent=1 // pred_check
      _
    $region51: #{gsmodel_forward.1} parent=1 // pred_check_branch
      %52 = sbr.rel (0) target = $region53
    $region52: #{gsmodel_forward.1} parent=1 // pred_region
      _
    $region53: #{gsmodel_forward.1} parent=1 // pred_fallthru
      _
    // Predicated region
    $region54: #{gsmodel_forward.1} parent=1 // pred_check
      _
    $region55: #{gsmodel_forward.1} parent=1 // pred_check_branch
      %54 = sbr.rel (0) target = $region57
    $region56: #{gsmodel_forward.1} parent=1 // pred_region
      _
    $region57: #{gsmodel_forward.1} parent=1 // pred_fallthru
      _
    // Predicated region
    $region58: #{gsmodel_forward.1} parent=1 // pred_check
      _
    $region59: #{gsmodel_forward.1} parent=1 // pred_check_branch
      %56 = sbr.rel (0) target = $region61
    $region60: #{gsmodel_forward.1} parent=1 // pred_region
      _
    $region61: #{gsmodel_forward.1} parent=1 // pred_fallthru
      _
    // Predicated region
    $region62: #{gsmodel_forward.1} parent=1 // pred_check
      _
    $region63: #{gsmodel_forward.1} parent=1 // pred_check_branch
      %58 = sbr.rel (0) target = $region65
    $region64: #{gsmodel_forward.1} parent=1 // pred_region
      _
    $region65: #{gsmodel_forward.1} parent=1 // pred_fallthru
      _
    // Predicated region
    $region66: #{gsmodel_forward.1} parent=1 // pred_check
      _
    $region67: #{gsmodel_forward.1} parent=1 // pred_check_branch
      %60 = sbr.rel (0) target = $region69
    $region68: #{gsmodel_forward.1} parent=1 // pred_region
      _
    $region69: #{gsmodel_forward.1} parent=1 // pred_fallthru
      _
    // Predicated region
    $region70: #{gsmodel_forward.1} parent=1 // pred_check
      _
    $region71: #{gsmodel_forward.1} parent=1 // pred_check_branch
      %62 = sbr.rel (0) target = $region73
    $region72: #{gsmodel_forward.1} parent=1 // pred_region
      _
    $region73: #{gsmodel_forward.1} parent=1 // pred_fallthru
      _
    // Predicated region
    $region74: #{gsmodel_forward.1} parent=1 // pred_check
      _
    $region75: #{gsmodel_forward.1} parent=1 // pred_check_branch
      %64 = sbr.rel (0) target = $region77
    $region76: #{gsmodel_forward.1} parent=1 // pred_region
      _
    $region77: #{gsmodel_forward.1} parent=1 // pred_fallthru
      _
    // Predicated region
    $region78: #{gsmodel_forward.1} parent=1 // pred_check
      _
    $region79: #{gsmodel_forward.1} parent=1 // pred_check_branch
      %66 = sbr.rel (0) target = $region81
    $region80: #{gsmodel_forward.1} parent=1 // pred_region
      _
    $region81: #{gsmodel_forward.1} parent=1 // pred_fallthru
      _
    // Predicated region
    $region82: #{gsmodel_forward.1} parent=1 // pred_check
      _
    $region83: #{gsmodel_forward.1} parent=1 // pred_check_branch
      %68 = sbr.rel (0) target = $region85
    $region84: #{gsmodel_forward.1} parent=1 // pred_region
      _
    $region85: #{gsmodel_forward.1} parent=1 // pred_fallthru
      _
    %v69 = vld [vmem:[%s0] sm:$0xff]
    %v70 = vld [vmem:[%s0 + $0x8] sm:$0xff]
    %v71 = vld [vmem:[%s0 + $0x10] sm:$0xff]
    %v72 = vld [vmem:[%s0 + $0x18] sm:$0xff]
    %v73 = vld [vmem:[%s0 + $0x20] sm:$0xff]
    %v74 = vld [vmem:[%s0 + $0x28] sm:$0xff]
    %v75 = vld [vmem:[%s0 + $0x30] sm:$0xff]
    %v76 = vld [vmem:[%s0 + $0x38] sm:$0xff]
    %v77 = vld [vmem:[%s1] sm:$0xff]
    %v78 = vld [vmem:[%s1 + $0x8] sm:$0xff]
    %v79 = vld [vmem:[%s1 + $0x10] sm:$0xff]
    %v80 = vld [vmem:[%s1 + $0x18] sm:$0xff]
    %v81 = vld [vmem:[%s1 + $0x20] sm:$0xff]
    %v82 = vld [vmem:[%s1 + $0x28] sm:$0xff]
    %v83 = vld [vmem:[%s1 + $0x30] sm:$0xff]
    %v84 = vld [vmem:[%s1 + $0x38] sm:$0xff]
    %v85 = vld [vmem:[%s2] sm:$0xff]
    %v86 = vld [vmem:[%s2 + $0x8] sm:$0xff]
    %v87 = vld [vmem:[%s2 + $0x10] sm:$0xff]
    %v88 = vld [vmem:[%s2 + $0x18] sm:$0xff]
    %v89 = vld [vmem:[%s2 + $0x20] sm:$0xff]
    %v90 = vld [vmem:[%s2 + $0x28] sm:$0xff]
    %v91 = vld [vmem:[%s2 + $0x30] sm:$0xff]
    %v92 = vld [vmem:[%s2 + $0x38] sm:$0xff]
    %v93 = vld [vmem:[%s4] sm:$0xff]
    %v94 = vld [vmem:[%s4 + $0x8] sm:$0xff]
    %v95 = vld [vmem:[%s5] sm:$0x1]
    %v96 = vld [vmem:[%s6] sm:$0xff]
    %v97 = vld [vmem:[%s6 + $0x8] sm:$0xff]
    %v98 = vld [vmem:[%s6 + $0x10] sm:$0xff]
    %v99 = vld [vmem:[%s6 + $0x18] sm:$0xff]
    %v100 = vld [vmem:[%s7] sm:$0x1]
    %v101 = vmul.f32 %v69, 2.0
    %v102 = vmul.f32 %v70, 2.0
    %v103 = vmul.f32 %v71, 2.0
    %v104 = vmul.f32 %v72, 2.0
    %v105 = vmul.f32 %v73, 2.0
    %v106 = vmul.f32 %v74, 2.0
    %v107 = vmul.f32 %v75, 2.0
    %v108 = vmul.f32 %v76, 2.0
    %vm109 = vcmask 523264
    %v111 = vsel %vm109, %v77, 0
    %v114 = vsel %vm109, %v78, 0
    %v117 = vsel %vm109, %v79, 0
    %v120 = vsel %vm109, %v80, 0
    %v123 = vsel %vm109, %v81, 0
    %v126 = vsel %vm109, %v82, 0
    %v129 = vsel %vm109, %v83, 0
    %v132 = vsel %vm109, %v84, 0
    %134 = vmatprep.subr.mxu0 0.0
    %135 = vmatpush1.msra.mxu0 0.0
    %136 = vmatprep.subr.mxu0 0.0
    %137 = vmatpush1.msra.mxu0 0.0
    %138 = vmatprep.subr.mxu0 0.0
    %139 = vmatpush1.msra.mxu0 0.0
    %140 = vmatprep.subr.mxu0 0.0
    %141 = vmatpush1.msra.mxu0 0.0
    %142 = vmatprep.subr.mxu0 0.0
    %143 = vmatpush1.msra.mxu0 0.0
    %144 = vmatprep.subr.mxu0 0.0
    %145 = vmatpush1.msra.mxu0 0.0
    %146 = vmatprep.subr.mxu0 0.0
    %147 = vmatpush1.msra.mxu0 0.0
    %148 = vmatprep.subr.mxu0 0.0
    %149 = vmatpush1.msra.mxu0 0.0
    %150 = vmatprep.subr.mxu0 0.0
    %151 = vmatpush1.msra.mxu0 %v76
    %152 = vmatprep.subr.mxu0 0.0
    %153 = vmatpush1.msra.mxu0 %v75
    %154 = vmatprep.subr.mxu0 0.0
    %155 = vmatpush1.msra.mxu0 %v74
    %156 = vmatprep.subr.mxu0 0.0
    %157 = vmatpush1.msra.mxu0 %v73
    %158 = vmatprep.subr.mxu0 0.0
    %159 = vmatpush1.msra.mxu0 %v72
    %160 = vmatprep.subr.mxu0 0.0
    %161 = vmatpush1.msra.mxu0 %v71
    %162 = vmatprep.subr.mxu0 0.0
    %163 = vmatpush1.msra.mxu0 %v70
    %164 = vmatprep.subr.mxu0 0.0
    %165 = vmatpush1.msra.mxu0 %v69
    %166 = vmatprep.subr.mxu0 0.0
    %167 = vmatpush2.msra.mxu0 0.0
    %168 = vmatprep.subr.mxu0 0.0
    %169 = vmatpush2.msra.mxu0 0.0
    %170 = vmatprep.subr.mxu0 0.0
    %171 = vmatpush2.msra.mxu0 0.0
    %172 = vmatprep.subr.mxu0 0.0
    %173 = vmatpush2.msra.mxu0 0.0
    %174 = vmatprep.subr.mxu0 0.0
    %175 = vmatpush2.msra.mxu0 0.0
    %176 = vmatprep.subr.mxu0 0.0
    %177 = vmatpush2.msra.mxu0 0.0
    %178 = vmatprep.subr.mxu0 0.0
    %179 = vmatpush2.msra.mxu0 0.0
    %180 = vmatprep.subr.mxu0 0.0
    %181 = vmatpush2.msra.mxu0 0.0
    %182 = vmatprep.subr.mxu0 0.0
    %183 = vmatpush2.msra.mxu0 0.0
    %184 = vmatprep.subr.mxu0 0.0
    %185 = vmatpush2.msra.mxu0 0.0
    %186 = vmatprep.subr.mxu0 0.0
    %187 = vmatpush2.msra.mxu0 0.0
    %188 = vmatprep.subr.mxu0 0.0
    %189 = vmatpush2.msra.mxu0 0.0
    %190 = vmatprep.subr.mxu0 0.0
    %191 = vmatpush2.msra.mxu0 0.0
    %192 = vmatprep.subr.mxu0 0.0
    %193 = vmatpush2.msra.mxu0 0.0
    %194 = vmatprep.subr.mxu0 0.0
    %195 = vmatpush2.msra.mxu0 0.0
    %196 = vmatprep.subr.mxu0 0.0
    %197 = vmatpush2.msra.mxu0 0.0
    %198 = vmatprep.mubr.f32.mxu0 0.0
    %199 = vmatmul.mubr.f32.gmra.mxu0 %v111
    %v200 = vpop.f32.mrf.mxu0
    %v201 = vadd.f32 %v101, %v200
    %v202 = vpop.f32.mrf.mxu0
    %203 = vmatprep.mubr.f32.mxu0 0.0
    %204 = vmatmul.mubr.f32.gmra.mxu0 %v114
    %v205 = vpop.f32.mrf.mxu0
    %v206 = vadd.f32 %v102, %v205
    %v207 = vpop.f32.mrf.mxu0
    %208 = vmatprep.mubr.f32.mxu0 0.0
    %209 = vmatmul.mubr.f32.gmra.mxu0 %v117
    %v210 = vpop.f32.mrf.mxu0
    %v211 = vadd.f32 %v103, %v210
    %v212 = vpop.f32.mrf.mxu0
    %213 = vmatprep.mubr.f32.mxu0 0.0
    %214 = vmatmul.mubr.f32.gmra.mxu0 %v120
    %v215 = vpop.f32.mrf.mxu0
    %v216 = vadd.f32 %v104, %v215
    %v217 = vpop.f32.mrf.mxu0
    %218 = vmatprep.mubr.f32.mxu0 0.0
    %219 = vmatmul.mubr.f32.gmra.mxu0 %v123
    %v220 = vpop.f32.mrf.mxu0
    %v221 = vadd.f32 %v105, %v220
    %v222 = vpop.f32.mrf.mxu0
    %223 = vmatprep.mubr.f32.mxu0 0.0
    %224 = vmatmul.mubr.f32.gmra.mxu0 %v126
    %v225 = vpop.f32.mrf.mxu0
    %v226 = vadd.f32 %v106, %v225
    %v227 = vpop.f32.mrf.mxu0
    %228 = vmatprep.mubr.f32.mxu0 0.0
    %229 = vmatmul.mubr.f32.gmra.mxu0 %v129
    %v230 = vpop.f32.mrf.mxu0
    %v231 = vadd.f32 %v107, %v230
    %v232 = vpop.f32.mrf.mxu0
    %233 = vmatprep.mubr.f32.mxu0 0.0
    %234 = vmatmul.mubr.f32.gmra.mxu0 %v132
    %v235 = vpop.f32.mrf.mxu0
    %v236 = vadd.f32 %v108, %v235
    %v237 = vpop.f32.mrf.mxu0
    %238 = vdwg.mxu0
    %v240 = vlaneseq
    %v241 = vshrl.u32 %v240, 7
    %v242 = vsub.s32 0, %v241
    %v243 = vrot.slane %v95, %v242
    %vm245 = vcmask 130048
    %v247 = vsel %vm245, %v201, 0
    %v250 = vsel %vm245, %v206, 0
    %v253 = vsel %vm245, %v211, 0
    %v256 = vsel %vm245, %v216, 0
    %v259 = vsel %vm245, %v221, 0
    %v262 = vsel %vm245, %v226, 0
    %v265 = vsel %vm245, %v231, 0
    %v268 = vsel %vm245, %v236, 0
    %270 = vmatprep.subr.mxu0 0.0
    %271 = vmatpush1.msra.mxu0 0.0
    %272 = vmatprep.subr.mxu0 0.0
    %273 = vmatpush1.msra.mxu0 0.0
    %274 = vmatprep.subr.mxu0 0.0
    %275 = vmatpush1.msra.mxu0 0.0
    %276 = vmatprep.subr.mxu0 0.0
    %277 = vmatpush1.msra.mxu0 0.0
    %278 = vmatprep.subr.mxu0 0.0
    %279 = vmatpush1.msra.mxu0 0.0
    %280 = vmatprep.subr.mxu0 0.0
    %281 = vmatpush1.msra.mxu0 0.0
    %282 = vmatprep.subr.mxu0 0.0
    %283 = vmatpush1.msra.mxu0 0.0
    %284 = vmatprep.subr.mxu0 0.0
    %285 = vmatpush1.msra.mxu0 0.0
    %286 = vmatprep.subr.mxu0 0.0
    %287 = vmatpush1.msra.mxu0 0.0
    %288 = vmatprep.subr.mxu0 0.0
    %289 = vmatpush1.msra.mxu0 0.0
    %290 = vmatprep.subr.mxu0 0.0
    %291 = vmatpush1.msra.mxu0 0.0
    %292 = vmatprep.subr.mxu0 0.0
    %293 = vmatpush1.msra.mxu0 0.0
    %294 = vmatprep.subr.mxu0 0.0
    %295 = vmatpush1.msra.mxu0 0.0
    %296 = vmatprep.subr.mxu0 0.0
    %297 = vmatpush1.msra.mxu0 0.0
    %298 = vmatprep.subr.mxu0 0.0
    %299 = vmatpush1.msra.mxu0 %v94
    %300 = vmatprep.subr.mxu0 0.0
    %301 = vmatpush1.msra.mxu0 %v93
    %302 = vmatprep.subr.mxu0 0.0
    %303 = vmatpush2.msra.mxu0 0.0
    %304 = vmatprep.subr.mxu0 0.0
    %305 = vmatpush2.msra.mxu0 0.0
    %306 = vmatprep.subr.mxu0 0.0
    %307 = vmatpush2.msra.mxu0 0.0
    %308 = vmatprep.subr.mxu0 0.0
    %309 = vmatpush2.msra.mxu0 0.0
    %310 = vmatprep.subr.mxu0 0.0
    %311 = vmatpush2.msra.mxu0 0.0
    %312 = vmatprep.subr.mxu0 0.0
    %313 = vmatpush2.msra.mxu0 0.0
    %314 = vmatprep.subr.mxu0 0.0
    %315 = vmatpush2.msra.mxu0 0.0
    %316 = vmatprep.subr.mxu0 0.0
    %317 = vmatpush2.msra.mxu0 0.0
    %318 = vmatprep.subr.mxu0 0.0
    %319 = vmatpush2.msra.mxu0 0.0
    %320 = vmatprep.subr.mxu0 0.0
    %321 = vmatpush2.msra.mxu0 0.0
    %322 = vmatprep.subr.mxu0 0.0
    %323 = vmatpush2.msra.mxu0 0.0
    %324 = vmatprep.subr.mxu0 0.0
    %325 = vmatpush2.msra.mxu0 0.0
    %326 = vmatprep.subr.mxu0 0.0
    %327 = vmatpush2.msra.mxu0 0.0
    %328 = vmatprep.subr.mxu0 0.0
    %329 = vmatpush2.msra.mxu0 0.0
    %330 = vmatprep.subr.mxu0 0.0
    %331 = vmatpush2.msra.mxu0 0.0
    %332 = vmatprep.subr.mxu0 0.0
    %333 = vmatpush2.msra.mxu0 0.0
    %334 = vmatprep.mubr.f32.mxu0 0.0
    %335 = vmatmul.mubr.f32.gmra.mxu0 %v247
    %v336 = vpop.f32.mrf.mxu0
    %v337 = vadd.f32 %v243, %v336
    %v338 = vpop.f32.mrf.mxu0
    %339 = vmatprep.mubr.f32.mxu0 0.0
    %340 = vmatmul.mubr.f32.gmra.mxu0 %v250
    %v341 = vpop.f32.mrf.mxu0
    %v342 = vadd.f32 %v243, %v341
    %v343 = vpop.f32.mrf.mxu0
    %344 = vmatprep.mubr.f32.mxu0 0.0
    %345 = vmatmul.mubr.f32.gmra.mxu0 %v253
    %v346 = vpop.f32.mrf.mxu0
    %v347 = vadd.f32 %v243, %v346
    %v348 = vpop.f32.mrf.mxu0
    %349 = vmatprep.mubr.f32.mxu0 0.0
    %350 = vmatmul.mubr.f32.gmra.mxu0 %v256
    %v351 = vpop.f32.mrf.mxu0
    %v352 = vadd.f32 %v243, %v351
    %v353 = vpop.f32.mrf.mxu0
    %354 = vmatprep.mubr.f32.mxu0 0.0
    %355 = vmatmul.mubr.f32.gmra.mxu0 %v259
    %v356 = vpop.f32.mrf.mxu0
    %v357 = vadd.f32 %v243, %v356
    %v358 = vpop.f32.mrf.mxu0
    %359 = vmatprep.mubr.f32.mxu0 0.0
    %360 = vmatmul.mubr.f32.gmra.mxu0 %v262
    %v361 = vpop.f32.mrf.mxu0
    %v362 = vadd.f32 %v243, %v361
    %v363 = vpop.f32.mrf.mxu0
    %364 = vmatprep.mubr.f32.mxu0 0.0
    %365 = vmatmul.mubr.f32.gmra.mxu0 %v265
    %v366 = vpop.f32.mrf.mxu0
    %v367 = vadd.f32 %v243, %v366
    %v368 = vpop.f32.mrf.mxu0
    %369 = vmatprep.mubr.f32.mxu0 0.0
    %370 = vmatmul.mubr.f32.gmra.mxu0 %v268
    %v371 = vpop.f32.mrf.mxu0
    %v372 = vadd.f32 %v243, %v371
    %v373 = vpop.f32.mrf.mxu0
    %374 = vdwg.mxu0
    %v375 = vmax.f32 %v337, 0.0
    %v376 = vmax.f32 %v342, 0.0
    %v377 = vmax.f32 %v347, 0.0
    %v378 = vmax.f32 %v352, 0.0
    %v379 = vmax.f32 %v357, 0.0
    %v380 = vmax.f32 %v362, 0.0
    %v381 = vmax.f32 %v367, 0.0
    %v382 = vmax.f32 %v372, 0.0
    %v384 = vlaneseq
    %v385 = vshrl.u32 %v384, 7
    %v386 = vsub.s32 0, %v385
    %v387 = vrot.slane %v100, %v386
    %vm389 = vcmask 261120
    %v391 = vsel %vm389, %v375, 0
    %v394 = vsel %vm389, %v376, 0
    %v397 = vsel %vm389, %v377, 0
    %v400 = vsel %vm389, %v378, 0
    %v403 = vsel %vm389, %v379, 0
    %v406 = vsel %vm389, %v380, 0
    %v409 = vsel %vm389, %v381, 0
    %v412 = vsel %vm389, %v382, 0
    %414 = vmatprep.subr.mxu0 0.0
    %415 = vmatpush1.msra.mxu0 0.0
    %416 = vmatprep.subr.mxu0 0.0
    %417 = vmatpush1.msra.mxu0 0.0
    %418 = vmatprep.subr.mxu0 0.0
    %419 = vmatpush1.msra.mxu0 0.0
    %420 = vmatprep.subr.mxu0 0.0
    %421 = vmatpush1.msra.mxu0 0.0
    %422 = vmatprep.subr.mxu0 0.0
    %423 = vmatpush1.msra.mxu0 0.0
    %424 = vmatprep.subr.mxu0 0.0
    %425 = vmatpush1.msra.mxu0 0.0
    %426 = vmatprep.subr.mxu0 0.0
    %427 = vmatpush1.msra.mxu0 0.0
    %428 = vmatprep.subr.mxu0 0.0
    %429 = vmatpush1.msra.mxu0 0.0
    %430 = vmatprep.subr.mxu0 0.0
    %431 = vmatpush1.msra.mxu0 0.0
    %432 = vmatprep.subr.mxu0 0.0
    %433 = vmatpush1.msra.mxu0 0.0
    %434 = vmatprep.subr.mxu0 0.0
    %435 = vmatpush1.msra.mxu0 0.0
    %436 = vmatprep.subr.mxu0 0.0
    %437 = vmatpush1.msra.mxu0 0.0
    %438 = vmatprep.subr.mxu0 0.0
    %439 = vmatpush1.msra.mxu0 %v99
    %440 = vmatprep.subr.mxu0 0.0
    %441 = vmatpush1.msra.mxu0 %v98
    %442 = vmatprep.subr.mxu0 0.0
    %443 = vmatpush1.msra.mxu0 %v97
    %444 = vmatprep.subr.mxu0 0.0
    %445 = vmatpush1.msra.mxu0 %v96
    %446 = vmatprep.subr.mxu0 0.0
    %447 = vmatpush2.msra.mxu0 0.0
    %448 = vmatprep.subr.mxu0 0.0
    %449 = vmatpush2.msra.mxu0 0.0
    %450 = vmatprep.subr.mxu0 0.0
    %451 = vmatpush2.msra.mxu0 0.0
    %452 = vmatprep.subr.mxu0 0.0
    %453 = vmatpush2.msra.mxu0 0.0
    %454 = vmatprep.subr.mxu0 0.0
    %455 = vmatpush2.msra.mxu0 0.0
    %456 = vmatprep.subr.mxu0 0.0
    %457 = vmatpush2.msra.mxu0 0.0
    %458 = vmatprep.subr.mxu0 0.0
    %459 = vmatpush2.msra.mxu0 0.0
    %460 = vmatprep.subr.mxu0 0.0
    %461 = vmatpush2.msra.mxu0 0.0
    %462 = vmatprep.subr.mxu0 0.0
    %463 = vmatpush2.msra.mxu0 0.0
    %464 = vmatprep.subr.mxu0 0.0
    %465 = vmatpush2.msra.mxu0 0.0
    %466 = vmatprep.subr.mxu0 0.0
    %467 = vmatpush2.msra.mxu0 0.0
    %468 = vmatprep.subr.mxu0 0.0
    %469 = vmatpush2.msra.mxu0 0.0
    %470 = vmatprep.subr.mxu0 0.0
    %471 = vmatpush2.msra.mxu0 0.0
    %472 = vmatprep.subr.mxu0 0.0
    %473 = vmatpush2.msra.mxu0 0.0
    %474 = vmatprep.subr.mxu0 0.0
    %475 = vmatpush2.msra.mxu0 0.0
    %476 = vmatprep.subr.mxu0 0.0
    %477 = vmatpush2.msra.mxu0 0.0
    %478 = vmatprep.mubr.f32.mxu0 0.0
    %479 = vmatmul.mubr.f32.gmra.mxu0 %v391
    %v480 = vpop.f32.mrf.mxu0
    %v481 = vadd.f32 %v387, %v480
    %v482 = vpop.f32.mrf.mxu0
    %483 = vmatprep.mubr.f32.mxu0 0.0
    %484 = vmatmul.mubr.f32.gmra.mxu0 %v394
    %v485 = vpop.f32.mrf.mxu0
    %v486 = vadd.f32 %v387, %v485
    %v487 = vpop.f32.mrf.mxu0
    %488 = vmatprep.mubr.f32.mxu0 0.0
    %489 = vmatmul.mubr.f32.gmra.mxu0 %v397
    %v490 = vpop.f32.mrf.mxu0
    %v491 = vadd.f32 %v387, %v490
    %v492 = vpop.f32.mrf.mxu0
    %493 = vmatprep.mubr.f32.mxu0 0.0
    %494 = vmatmul.mubr.f32.gmra.mxu0 %v400
    %v495 = vpop.f32.mrf.mxu0
    %v496 = vadd.f32 %v387, %v495
    %v497 = vpop.f32.mrf.mxu0
    %498 = vmatprep.mubr.f32.mxu0 0.0
    %499 = vmatmul.mubr.f32.gmra.mxu0 %v403
    %v500 = vpop.f32.mrf.mxu0
    %v501 = vadd.f32 %v387, %v500
    %v502 = vpop.f32.mrf.mxu0
    %503 = vmatprep.mubr.f32.mxu0 0.0
    %504 = vmatmul.mubr.f32.gmra.mxu0 %v406
    %v505 = vpop.f32.mrf.mxu0
    %v506 = vadd.f32 %v387, %v505
    %v507 = vpop.f32.mrf.mxu0
    %508 = vmatprep.mubr.f32.mxu0 0.0
    %509 = vmatmul.mubr.f32.gmra.mxu0 %v409
    %v510 = vpop.f32.mrf.mxu0
    %v511 = vadd.f32 %v387, %v510
    %v512 = vpop.f32.mrf.mxu0
    %513 = vmatprep.mubr.f32.mxu0 0.0
    %514 = vmatmul.mubr.f32.gmra.mxu0 %v412
    %v515 = vpop.f32.mrf.mxu0
    %v516 = vadd.f32 %v387, %v515
    %v517 = vpop.f32.mrf.mxu0
    %518 = vdwg.mxu0
    %v519 = vmax.f32 %v481, 0.0
    %v520 = vmax.f32 %v486, 0.0
    %v521 = vmax.f32 %v491, 0.0
    %v522 = vmax.f32 %v496, 0.0
    %v523 = vmax.f32 %v501, 0.0
    %v524 = vmax.f32 %v506, 0.0
    %v525 = vmax.f32 %v511, 0.0
    %v526 = vmax.f32 %v516, 0.0
    %528 = vset.pattern.permute.xlu0 0
    %529 = vperm.xlu0 %528, %v85
    %v530 = vpop.permute.xlu0 %529
    %533 = vset.pattern.permute.xlu0 0
    %534 = vperm.xlu0 %533, %v86
    %v535 = vpop.permute.xlu0 %534
    %538 = vset.pattern.permute.xlu0 0
    %539 = vperm.xlu0 %538, %v87
    %v540 = vpop.permute.xlu0 %539
    %543 = vset.pattern.permute.xlu0 0
    %544 = vperm.xlu0 %543, %v88
    %v545 = vpop.permute.xlu0 %544
    %548 = vset.pattern.permute.xlu0 0
    %549 = vperm.xlu0 %548, %v89
    %v550 = vpop.permute.xlu0 %549
    %553 = vset.pattern.permute.xlu0 0
    %554 = vperm.xlu0 %553, %v90
    %v555 = vpop.permute.xlu0 %554
    %558 = vset.pattern.permute.xlu0 0
    %559 = vperm.xlu0 %558, %v91
    %v560 = vpop.permute.xlu0 %559
    %563 = vset.pattern.permute.xlu0 0
    %564 = vperm.xlu0 %563, %v92
    %v565 = vpop.permute.xlu0 %564
    %v567 = vmul.f32 %v519, %v530
    %v568 = vmul.f32 %v520, %v535
    %v569 = vmul.f32 %v521, %v540
    %v570 = vmul.f32 %v522, %v545
    %v571 = vmul.f32 %v523, %v550
    %v572 = vmul.f32 %v524, %v555
    %v573 = vmul.f32 %v525, %v560
    %v574 = vmul.f32 %v526, %v565
    %v575 = vld [vmem:[%s8] sm:$0xff]
    %v576 = vld [vmem:[%s8 + $0x8] sm:$0xff]
    %v577 = vld [vmem:[%s8 + $0x10] sm:$0xff]
    %v578 = vld [vmem:[%s8 + $0x18] sm:$0xff]
    %v579 = vld [vmem:[%s9] sm:$0x1]
    %v580 = vld [vmem:[%s10] sm:$0xff]
    %v581 = vld [vmem:[%s10 + $0x8] sm:$0xff]
    %v582 = vld [vmem:[%s10 + $0x10] sm:$0xff]
    %v583 = vld [vmem:[%s10 + $0x18] sm:$0xff]
    %v584 = vld [vmem:[%s11] sm:$0x1]
    %v585 = vmul.f32 %v567, 2.0
    %v586 = vmul.f32 %v568, 2.0
    %v587 = vmul.f32 %v569, 2.0
    %v588 = vmul.f32 %v570, 2.0
    %v589 = vmul.f32 %v571, 2.0
    %v590 = vmul.f32 %v572, 2.0
    %v591 = vmul.f32 %v573, 2.0
    %v592 = vmul.f32 %v574, 2.0
    %593 = vmatprep.subr.mxu0 0.0
    %594 = vmatpush1.msra.mxu0 0.0
    %595 = vmatprep.subr.mxu0 0.0
    %596 = vmatpush1.msra.mxu0 0.0
    %597 = vmatprep.subr.mxu0 0.0
    %598 = vmatpush1.msra.mxu0 0.0
    %599 = vmatprep.subr.mxu0 0.0
    %600 = vmatpush1.msra.mxu0 0.0
    %601 = vmatprep.subr.mxu0 0.0
    %602 = vmatpush1.msra.mxu0 0.0
    %603 = vmatprep.subr.mxu0 0.0
    %604 = vmatpush1.msra.mxu0 0.0
    %605 = vmatprep.subr.mxu0 0.0
    %606 = vmatpush1.msra.mxu0 0.0
    %607 = vmatprep.subr.mxu0 0.0
    %608 = vmatpush1.msra.mxu0 0.0
    %609 = vmatprep.subr.mxu0 0.0
    %610 = vmatpush1.msra.mxu0 %v574
    %611 = vmatprep.subr.mxu0 0.0
    %612 = vmatpush1.msra.mxu0 %v573
    %613 = vmatprep.subr.mxu0 0.0
    %614 = vmatpush1.msra.mxu0 %v572
    %615 = vmatprep.subr.mxu0 0.0
    %616 = vmatpush1.msra.mxu0 %v571
    %617 = vmatprep.subr.mxu0 0.0
    %618 = vmatpush1.msra.mxu0 %v570
    %619 = vmatprep.subr.mxu0 0.0
    %620 = vmatpush1.msra.mxu0 %v569
    %621 = vmatprep.subr.mxu0 0.0
    %622 = vmatpush1.msra.mxu0 %v568
    %623 = vmatprep.subr.mxu0 0.0
    %624 = vmatpush1.msra.mxu0 %v567
    %625 = vmatprep.subr.mxu0 0.0
    %626 = vmatpush2.msra.mxu0 0.0
    %627 = vmatprep.subr.mxu0 0.0
    %628 = vmatpush2.msra.mxu0 0.0
    %629 = vmatprep.subr.mxu0 0.0
    %630 = vmatpush2.msra.mxu0 0.0
    %631 = vmatprep.subr.mxu0 0.0
    %632 = vmatpush2.msra.mxu0 0.0
    %633 = vmatprep.subr.mxu0 0.0
    %634 = vmatpush2.msra.mxu0 0.0
    %635 = vmatprep.subr.mxu0 0.0
    %636 = vmatpush2.msra.mxu0 0.0
    %637 = vmatprep.subr.mxu0 0.0
    %638 = vmatpush2.msra.mxu0 0.0
    %639 = vmatprep.subr.mxu0 0.0
    %640 = vmatpush2.msra.mxu0 0.0
    %641 = vmatprep.subr.mxu0 0.0
    %642 = vmatpush2.msra.mxu0 0.0
    %643 = vmatprep.subr.mxu0 0.0
    %644 = vmatpush2.msra.mxu0 0.0
    %645 = vmatprep.subr.mxu0 0.0
    %646 = vmatpush2.msra.mxu0 0.0
    %647 = vmatprep.subr.mxu0 0.0
    %648 = vmatpush2.msra.mxu0 0.0
    %649 = vmatprep.subr.mxu0 0.0
    %650 = vmatpush2.msra.mxu0 0.0
    %651 = vmatprep.subr.mxu0 0.0
    %652 = vmatpush2.msra.mxu0 0.0
    %653 = vmatprep.subr.mxu0 0.0
    %654 = vmatpush2.msra.mxu0 0.0
    %655 = vmatprep.subr.mxu0 0.0
    %656 = vmatpush2.msra.mxu0 0.0
    %657 = vmatprep.mubr.f32.mxu0 0.0
    %658 = vmatmul.mubr.f32.gmra.mxu0 %v111
    %v659 = vpop.f32.mrf.mxu0
    %v660 = vadd.f32 %v585, %v659
    %v661 = vpop.f32.mrf.mxu0
    %662 = vmatprep.mubr.f32.mxu0 0.0
    %663 = vmatmul.mubr.f32.gmra.mxu0 %v114
    %v664 = vpop.f32.mrf.mxu0
    %v665 = vadd.f32 %v586, %v664
    %v666 = vpop.f32.mrf.mxu0
    %667 = vmatprep.mubr.f32.mxu0 0.0
    %668 = vmatmul.mubr.f32.gmra.mxu0 %v117
    %v669 = vpop.f32.mrf.mxu0
    %v670 = vadd.f32 %v587, %v669
    %v671 = vpop.f32.mrf.mxu0
    %672 = vmatprep.mubr.f32.mxu0 0.0
    %673 = vmatmul.mubr.f32.gmra.mxu0 %v120
    %v674 = vpop.f32.mrf.mxu0
    %v675 = vadd.f32 %v588, %v674
    %v676 = vpop.f32.mrf.mxu0
    %677 = vmatprep.mubr.f32.mxu0 0.0
    %678 = vmatmul.mubr.f32.gmra.mxu0 %v123
    %v679 = vpop.f32.mrf.mxu0
    %v680 = vadd.f32 %v589, %v679
    %v681 = vpop.f32.mrf.mxu0
    %682 = vmatprep.mubr.f32.mxu0 0.0
    %683 = vmatmul.mubr.f32.gmra.mxu0 %v126
    %v684 = vpop.f32.mrf.mxu0
    %v685 = vadd.f32 %v590, %v684
    %v686 = vpop.f32.mrf.mxu0
    %687 = vmatprep.mubr.f32.mxu0 0.0
    %688 = vmatmul.mubr.f32.gmra.mxu0 %v129
    %v689 = vpop.f32.mrf.mxu0
    %v690 = vadd.f32 %v591, %v689
    %v691 = vpop.f32.mrf.mxu0
    %692 = vmatprep.mubr.f32.mxu0 0.0
    %693 = vmatmul.mubr.f32.gmra.mxu0 %v132
    %v694 = vpop.f32.mrf.mxu0
    %v695 = vadd.f32 %v592, %v694
    %v696 = vpop.f32.mrf.mxu0
    %697 = vdwg.mxu0
    %v699 = vlaneseq
    %v700 = vshrl.u32 %v699, 7
    %v701 = vsub.s32 0, %v700
    %v702 = vrot.slane %v579, %v701
    %v705 = vsel %vm389, %v660, 0
    %v708 = vsel %vm389, %v665, 0
    %v711 = vsel %vm389, %v670, 0
    %v714 = vsel %vm389, %v675, 0
    %v717 = vsel %vm389, %v680, 0
    %v720 = vsel %vm389, %v685, 0
    %v723 = vsel %vm389, %v690, 0
    %v726 = vsel %vm389, %v695, 0
    %728 = vmatprep.subr.mxu0 0.0
    %729 = vmatpush1.msra.mxu0 0.0
    %730 = vmatprep.subr.mxu0 0.0
    %731 = vmatpush1.msra.mxu0 0.0
    %732 = vmatprep.subr.mxu0 0.0
    %733 = vmatpush1.msra.mxu0 0.0
    %734 = vmatprep.subr.mxu0 0.0
    %735 = vmatpush1.msra.mxu0 0.0
    %736 = vmatprep.subr.mxu0 0.0
    %737 = vmatpush1.msra.mxu0 0.0
    %738 = vmatprep.subr.mxu0 0.0
    %739 = vmatpush1.msra.mxu0 0.0
    %740 = vmatprep.subr.mxu0 0.0
    %741 = vmatpush1.msra.mxu0 0.0
    %742 = vmatprep.subr.mxu0 0.0
    %743 = vmatpush1.msra.mxu0 0.0
    %744 = vmatprep.subr.mxu0 0.0
    %745 = vmatpush1.msra.mxu0 0.0
    %746 = vmatprep.subr.mxu0 0.0
    %747 = vmatpush1.msra.mxu0 0.0
    %748 = vmatprep.subr.mxu0 0.0
    %749 = vmatpush1.msra.mxu0 0.0
    %750 = vmatprep.subr.mxu0 0.0
    %751 = vmatpush1.msra.mxu0 0.0
    %752 = vmatprep.subr.mxu0 0.0
    %753 = vmatpush1.msra.mxu0 %v578
    %754 = vmatprep.subr.mxu0 0.0
    %755 = vmatpush1.msra.mxu0 %v577
    %756 = vmatprep.subr.mxu0 0.0
    %757 = vmatpush1.msra.mxu0 %v576
    %758 = vmatprep.subr.mxu0 0.0
    %759 = vmatpush1.msra.mxu0 %v575
    %760 = vmatprep.subr.mxu0 0.0
    %761 = vmatpush2.msra.mxu0 0.0
    %762 = vmatprep.subr.mxu0 0.0
    %763 = vmatpush2.msra.mxu0 0.0
    %764 = vmatprep.subr.mxu0 0.0
    %765 = vmatpush2.msra.mxu0 0.0
    %766 = vmatprep.subr.mxu0 0.0
    %767 = vmatpush2.msra.mxu0 0.0
    %768 = vmatprep.subr.mxu0 0.0
    %769 = vmatpush2.msra.mxu0 0.0
    %770 = vmatprep.subr.mxu0 0.0
    %771 = vmatpush2.msra.mxu0 0.0
    %772 = vmatprep.subr.mxu0 0.0
    %773 = vmatpush2.msra.mxu0 0.0
    %774 = vmatprep.subr.mxu0 0.0
    %775 = vmatpush2.msra.mxu0 0.0
    %776 = vmatprep.subr.mxu0 0.0
    %777 = vmatpush2.msra.mxu0 0.0
    %778 = vmatprep.subr.mxu0 0.0
    %779 = vmatpush2.msra.mxu0 0.0
    %780 = vmatprep.subr.mxu0 0.0
    %781 = vmatpush2.msra.mxu0 0.0
    %782 = vmatprep.subr.mxu0 0.0
    %783 = vmatpush2.msra.mxu0 0.0
    %784 = vmatprep.subr.mxu0 0.0
    %785 = vmatpush2.msra.mxu0 0.0
    %786 = vmatprep.subr.mxu0 0.0
    %787 = vmatpush2.msra.mxu0 0.0
    %788 = vmatprep.subr.mxu0 0.0
    %789 = vmatpush2.msra.mxu0 0.0
    %790 = vmatprep.subr.mxu0 0.0
    %791 = vmatpush2.msra.mxu0 0.0
    %792 = vmatprep.mubr.f32.mxu0 0.0
    %793 = vmatmul.mubr.f32.gmra.mxu0 %v705
    %v794 = vpop.f32.mrf.mxu0
    %v795 = vadd.f32 %v702, %v794
    %v796 = vpop.f32.mrf.mxu0
    %797 = vmatprep.mubr.f32.mxu0 0.0
    %798 = vmatmul.mubr.f32.gmra.mxu0 %v708
    %v799 = vpop.f32.mrf.mxu0
    %v800 = vadd.f32 %v702, %v799
    %v801 = vpop.f32.mrf.mxu0
    %802 = vmatprep.mubr.f32.mxu0 0.0
    %803 = vmatmul.mubr.f32.gmra.mxu0 %v711
    %v804 = vpop.f32.mrf.mxu0
    %v805 = vadd.f32 %v702, %v804
    %v806 = vpop.f32.mrf.mxu0
    %807 = vmatprep.mubr.f32.mxu0 0.0
    %808 = vmatmul.mubr.f32.gmra.mxu0 %v714
    %v809 = vpop.f32.mrf.mxu0
    %v810 = vadd.f32 %v702, %v809
    %v811 = vpop.f32.mrf.mxu0
    %812 = vmatprep.mubr.f32.mxu0 0.0
    %813 = vmatmul.mubr.f32.gmra.mxu0 %v717
    %v814 = vpop.f32.mrf.mxu0
    %v815 = vadd.f32 %v702, %v814
    %v816 = vpop.f32.mrf.mxu0
    %817 = vmatprep.mubr.f32.mxu0 0.0
    %818 = vmatmul.mubr.f32.gmra.mxu0 %v720
    %v819 = vpop.f32.mrf.mxu0
    %v820 = vadd.f32 %v702, %v819
    %v821 = vpop.f32.mrf.mxu0
    %822 = vmatprep.mubr.f32.mxu0 0.0
    %823 = vmatmul.mubr.f32.gmra.mxu0 %v723
    %v824 = vpop.f32.mrf.mxu0
    %v825 = vadd.f32 %v702, %v824
    %v826 = vpop.f32.mrf.mxu0
    %827 = vmatprep.mubr.f32.mxu0 0.0
    %828 = vmatmul.mubr.f32.gmra.mxu0 %v726
    %v829 = vpop.f32.mrf.mxu0
    %v830 = vadd.f32 %v702, %v829
    %v831 = vpop.f32.mrf.mxu0
    %832 = vdwg.mxu0
    %v833 = vmax.f32 %v795, 0.0
    %v834 = vmax.f32 %v800, 0.0
    %v835 = vmax.f32 %v805, 0.0
    %v836 = vmax.f32 %v810, 0.0
    %v837 = vmax.f32 %v815, 0.0
    %v838 = vmax.f32 %v820, 0.0
    %v839 = vmax.f32 %v825, 0.0
    %v840 = vmax.f32 %v830, 0.0
    %v842 = vlaneseq
    %v843 = vshrl.u32 %v842, 7
    %v844 = vsub.s32 0, %v843
    %v845 = vrot.slane %v584, %v844
    %v848 = vsel %vm389, %v833, 0
    %v851 = vsel %vm389, %v834, 0
    %v854 = vsel %vm389, %v835, 0
    %v857 = vsel %vm389, %v836, 0
    %v860 = vsel %vm389, %v837, 0
    %v863 = vsel %vm389, %v838, 0
    %v866 = vsel %vm389, %v839, 0
    %v869 = vsel %vm389, %v840, 0
    %871 = vmatprep.subr.mxu0 0.0
    %872 = vmatpush1.msra.mxu0 0.0
    %873 = vmatprep.subr.mxu0 0.0
    %874 = vmatpush1.msra.mxu0 0.0
    %875 = vmatprep.subr.mxu0 0.0
    %876 = vmatpush1.msra.mxu0 0.0
    %877 = vmatprep.subr.mxu0 0.0
    %878 = vmatpush1.msra.mxu0 0.0
    %879 = vmatprep.subr.mxu0 0.0
    %880 = vmatpush1.msra.mxu0 0.0
    %881 = vmatprep.subr.mxu0 0.0
    %882 = vmatpush1.msra.mxu0 0.0
    %883 = vmatprep.subr.mxu0 0.0
    %884 = vmatpush1.msra.mxu0 0.0
    %885 = vmatprep.subr.mxu0 0.0
    %886 = vmatpush1.msra.mxu0 0.0
    %887 = vmatprep.subr.mxu0 0.0
    %888 = vmatpush1.msra.mxu0 0.0
    %889 = vmatprep.subr.mxu0 0.0
    %890 = vmatpush1.msra.mxu0 0.0
    %891 = vmatprep.subr.mxu0 0.0
    %892 = vmatpush1.msra.mxu0 0.0
    %893 = vmatprep.subr.mxu0 0.0
    %894 = vmatpush1.msra.mxu0 0.0
    %895 = vmatprep.subr.mxu0 0.0
    %896 = vmatpush1.msra.mxu0 %v583
    %897 = vmatprep.subr.mxu0 0.0
    %898 = vmatpush1.msra.mxu0 %v582
    %899 = vmatprep.subr.mxu0 0.0
    %900 = vmatpush1.msra.mxu0 %v581
    %901 = vmatprep.subr.mxu0 0.0
    %902 = vmatpush1.msra.mxu0 %v580
    %903 = vmatprep.subr.mxu0 0.0
    %904 = vmatpush2.msra.mxu0 0.0
    %905 = vmatprep.subr.mxu0 0.0
    %906 = vmatpush2.msra.mxu0 0.0
    %907 = vmatprep.subr.mxu0 0.0
    %908 = vmatpush2.msra.mxu0 0.0
    %909 = vmatprep.subr.mxu0 0.0
    %910 = vmatpush2.msra.mxu0 0.0
    %911 = vmatprep.subr.mxu0 0.0
    %912 = vmatpush2.msra.mxu0 0.0
    %913 = vmatprep.subr.mxu0 0.0
    %914 = vmatpush2.msra.mxu0 0.0
    %915 = vmatprep.subr.mxu0 0.0
    %916 = vmatpush2.msra.mxu0 0.0
    %917 = vmatprep.subr.mxu0 0.0
    %918 = vmatpush2.msra.mxu0 0.0
    %919 = vmatprep.subr.mxu0 0.0
    %920 = vmatpush2.msra.mxu0 0.0
    %921 = vmatprep.subr.mxu0 0.0
    %922 = vmatpush2.msra.mxu0 0.0
    %923 = vmatprep.subr.mxu0 0.0
    %924 = vmatpush2.msra.mxu0 0.0
    %925 = vmatprep.subr.mxu0 0.0
    %926 = vmatpush2.msra.mxu0 0.0
    %927 = vmatprep.subr.mxu0 0.0
    %928 = vmatpush2.msra.mxu0 0.0
    %929 = vmatprep.subr.mxu0 0.0
    %930 = vmatpush2.msra.mxu0 0.0
    %931 = vmatprep.subr.mxu0 0.0
    %932 = vmatpush2.msra.mxu0 0.0
    %933 = vmatprep.subr.mxu0 0.0
    %934 = vmatpush2.msra.mxu0 0.0
    %935 = vmatprep.mubr.f32.mxu0 0.0
    %936 = vmatmul.mubr.f32.gmra.mxu0 %v848
    %v937 = vpop.f32.mrf.mxu0
    %v938 = vadd.f32 %v845, %v937
    %v939 = vpop.f32.mrf.mxu0
    %940 = vmatprep.mubr.f32.mxu0 0.0
    %941 = vmatmul.mubr.f32.gmra.mxu0 %v851
    %v942 = vpop.f32.mrf.mxu0
    %v943 = vadd.f32 %v845, %v942
    %v944 = vpop.f32.mrf.mxu0
    %945 = vmatprep.mubr.f32.mxu0 0.0
    %946 = vmatmul.mubr.f32.gmra.mxu0 %v854
    %v947 = vpop.f32.mrf.mxu0
    %v948 = vadd.f32 %v845, %v947
    %v949 = vpop.f32.mrf.mxu0
    %950 = vmatprep.mubr.f32.mxu0 0.0
    %951 = vmatmul.mubr.f32.gmra.mxu0 %v857
    %v952 = vpop.f32.mrf.mxu0
    %v953 = vadd.f32 %v845, %v952
    %v954 = vpop.f32.mrf.mxu0
    %955 = vmatprep.mubr.f32.mxu0 0.0
    %956 = vmatmul.mubr.f32.gmra.mxu0 %v860
    %v957 = vpop.f32.mrf.mxu0
    %v958 = vadd.f32 %v845, %v957
    %v959 = vpop.f32.mrf.mxu0
    %960 = vmatprep.mubr.f32.mxu0 0.0
    %961 = vmatmul.mubr.f32.gmra.mxu0 %v863
    %v962 = vpop.f32.mrf.mxu0
    %v963 = vadd.f32 %v845, %v962
    %v964 = vpop.f32.mrf.mxu0
    %965 = vmatprep.mubr.f32.mxu0 0.0
    %966 = vmatmul.mubr.f32.gmra.mxu0 %v866
    %v967 = vpop.f32.mrf.mxu0
    %v968 = vadd.f32 %v845, %v967
    %v969 = vpop.f32.mrf.mxu0
    %970 = vmatprep.mubr.f32.mxu0 0.0
    %971 = vmatmul.mubr.f32.gmra.mxu0 %v869
    %v972 = vpop.f32.mrf.mxu0
    %v973 = vadd.f32 %v845, %v972
    %v974 = vpop.f32.mrf.mxu0
    %975 = vdwg.mxu0
    %v976 = vmax.f32 %v938, 0.0
    %v977 = vmax.f32 %v943, 0.0
    %v978 = vmax.f32 %v948, 0.0
    %v979 = vmax.f32 %v953, 0.0
    %v980 = vmax.f32 %v958, 0.0
    %v981 = vmax.f32 %v963, 0.0
    %v982 = vmax.f32 %v968, 0.0
    %v983 = vmax.f32 %v973, 0.0
    %v984 = vmul.f32 %v976, %v530
    %v985 = vmul.f32 %v977, %v535
    %v986 = vmul.f32 %v978, %v540
    %v987 = vmul.f32 %v979, %v545
    %v988 = vmul.f32 %v980, %v550
    %v989 = vmul.f32 %v981, %v555
    %v990 = vmul.f32 %v982, %v560
    %v991 = vmul.f32 %v983, %v565
    %v992 = vld [vmem:[%s12] sm:$0xff]
    %v993 = vld [vmem:[%s12 + $0x8] sm:$0xff]
    %v994 = vld [vmem:[%s12 + $0x10] sm:$0xff]
    %v995 = vld [vmem:[%s12 + $0x18] sm:$0xff]
    %v996 = vld [vmem:[%s13] sm:$0x1]
    %v998 = vlaneseq
    %v999 = vshrl.u32 %v998, 7
    %v1000 = vsub.s32 0, %v999
    %v1001 = vrot.slane %v996, %v1000
    %v1004 = vsel %vm389, %v984, 0
    %v1007 = vsel %vm389, %v985, 0
    %v1010 = vsel %vm389, %v986, 0
    %v1013 = vsel %vm389, %v987, 0
    %v1016 = vsel %vm389, %v988, 0
    %v1019 = vsel %vm389, %v989, 0
    %v1022 = vsel %vm389, %v990, 0
    %v1025 = vsel %vm389, %v991, 0
    %1027 = vmatprep.subr.mxu0 0.0
    %1028 = vmatpush1.msra.mxu0 0.0
    %1029 = vmatprep.subr.mxu0 0.0
    %1030 = vmatpush1.msra.mxu0 0.0
    %1031 = vmatprep.subr.mxu0 0.0
    %1032 = vmatpush1.msra.mxu0 0.0
    %1033 = vmatprep.subr.mxu0 0.0
    %1034 = vmatpush1.msra.mxu0 0.0
    %1035 = vmatprep.subr.mxu0 0.0
    %1036 = vmatpush1.msra.mxu0 0.0
    %1037 = vmatprep.subr.mxu0 0.0
    %1038 = vmatpush1.msra.mxu0 0.0
    %1039 = vmatprep.subr.mxu0 0.0
    %1040 = vmatpush1.msra.mxu0 0.0
    %1041 = vmatprep.subr.mxu0 0.0
    %1042 = vmatpush1.msra.mxu0 0.0
    %1043 = vmatprep.subr.mxu0 0.0
    %1044 = vmatpush1.msra.mxu0 0.0
    %1045 = vmatprep.subr.mxu0 0.0
    %1046 = vmatpush1.msra.mxu0 0.0
    %1047 = vmatprep.subr.mxu0 0.0
    %1048 = vmatpush1.msra.mxu0 0.0
    %1049 = vmatprep.subr.mxu0 0.0
    %1050 = vmatpush1.msra.mxu0 0.0
    %1051 = vmatprep.subr.mxu0 0.0
    %1052 = vmatpush1.msra.mxu0 %v995
    %1053 = vmatprep.subr.mxu0 0.0
    %1054 = vmatpush1.msra.mxu0 %v994
    %1055 = vmatprep.subr.mxu0 0.0
    %1056 = vmatpush1.msra.mxu0 %v993
    %1057 = vmatprep.subr.mxu0 0.0
    %1058 = vmatpush1.msra.mxu0 %v992
    %1059 = vmatprep.subr.mxu0 0.0
    %1060 = vmatpush2.msra.mxu0 0.0
    %1061 = vmatprep.subr.mxu0 0.0
    %1062 = vmatpush2.msra.mxu0 0.0
    %1063 = vmatprep.subr.mxu0 0.0
    %1064 = vmatpush2.msra.mxu0 0.0
    %1065 = vmatprep.subr.mxu0 0.0
    %1066 = vmatpush2.msra.mxu0 0.0
    %1067 = vmatprep.subr.mxu0 0.0
    %1068 = vmatpush2.msra.mxu0 0.0
    %1069 = vmatprep.subr.mxu0 0.0
    %1070 = vmatpush2.msra.mxu0 0.0
    %1071 = vmatprep.subr.mxu0 0.0
    %1072 = vmatpush2.msra.mxu0 0.0
    %1073 = vmatprep.subr.mxu0 0.0
    %1074 = vmatpush2.msra.mxu0 0.0
    %1075 = vmatprep.subr.mxu0 0.0
    %1076 = vmatpush2.msra.mxu0 0.0
    %1077 = vmatprep.subr.mxu0 0.0
    %1078 = vmatpush2.msra.mxu0 0.0
    %1079 = vmatprep.subr.mxu0 0.0
    %1080 = vmatpush2.msra.mxu0 0.0
    %1081 = vmatprep.subr.mxu0 0.0
    %1082 = vmatpush2.msra.mxu0 0.0
    %1083 = vmatprep.subr.mxu0 0.0
    %1084 = vmatpush2.msra.mxu0 0.0
    %1085 = vmatprep.subr.mxu0 0.0
    %1086 = vmatpush2.msra.mxu0 0.0
    %1087 = vmatprep.subr.mxu0 0.0
    %1088 = vmatpush2.msra.mxu0 0.0
    %1089 = vmatprep.subr.mxu0 0.0
    %1090 = vmatpush2.msra.mxu0 0.0
    %1091 = vmatprep.mubr.f32.mxu0 0.0
    %1092 = vmatmul.mubr.f32.gmra.mxu0 %v1004
    %v1093 = vpop.f32.mrf.mxu0
    %v1094 = vadd.f32 %v1001, %v1093
    %v1095 = vpop.f32.mrf.mxu0
    %1096 = vmatprep.mubr.f32.mxu0 0.0
    %1097 = vmatmul.mubr.f32.gmra.mxu0 %v1007
    %v1098 = vpop.f32.mrf.mxu0
    %v1099 = vadd.f32 %v1001, %v1098
    %v1100 = vpop.f32.mrf.mxu0
    %1101 = vmatprep.mubr.f32.mxu0 0.0
    %1102 = vmatmul.mubr.f32.gmra.mxu0 %v1010
    %v1103 = vpop.f32.mrf.mxu0
    %v1104 = vadd.f32 %v1001, %v1103
    %v1105 = vpop.f32.mrf.mxu0
    %1106 = vmatprep.mubr.f32.mxu0 0.0
    %1107 = vmatmul.mubr.f32.gmra.mxu0 %v1013
    %v1108 = vpop.f32.mrf.mxu0
    %v1109 = vadd.f32 %v1001, %v1108
    %v1110 = vpop.f32.mrf.mxu0
    %1111 = vmatprep.mubr.f32.mxu0 0.0
    %1112 = vmatmul.mubr.f32.gmra.mxu0 %v1016
    %v1113 = vpop.f32.mrf.mxu0
    %v1114 = vadd.f32 %v1001, %v1113
    %v1115 = vpop.f32.mrf.mxu0
    %1116 = vmatprep.mubr.f32.mxu0 0.0
    %1117 = vmatmul.mubr.f32.gmra.mxu0 %v1019
    %v1118 = vpop.f32.mrf.mxu0
    %v1119 = vadd.f32 %v1001, %v1118
    %v1120 = vpop.f32.mrf.mxu0
    %1121 = vmatprep.mubr.f32.mxu0 0.0
    %1122 = vmatmul.mubr.f32.gmra.mxu0 %v1022
    %v1123 = vpop.f32.mrf.mxu0
    %v1124 = vadd.f32 %v1001, %v1123
    %v1125 = vpop.f32.mrf.mxu0
    %1126 = vmatprep.mubr.f32.mxu0 0.0
    %1127 = vmatmul.mubr.f32.gmra.mxu0 %v1025
    %v1128 = vpop.f32.mrf.mxu0
    %v1129 = vadd.f32 %v1001, %v1128
    %v1130 = vpop.f32.mrf.mxu0
    %1131 = vdwg.mxu0
    %v1132 = vmax.f32 %v1094, 0.0
    %v1133 = vmax.f32 %v1099, 0.0
    %v1134 = vmax.f32 %v1104, 0.0
    %v1135 = vmax.f32 %v1109, 0.0
    %v1136 = vmax.f32 %v1114, 0.0
    %v1137 = vmax.f32 %v1119, 0.0
    %v1138 = vmax.f32 %v1124, 0.0
    %v1139 = vmax.f32 %v1129, 0.0
    %v1140 = vld [vmem:[%s14] sm:$0xff]
    %v1141 = vld [vmem:[%s14 + $0x8] sm:$0xff]
    %v1142 = vld [vmem:[%s14 + $0x10] sm:$0xff]
    %v1143 = vld [vmem:[%s14 + $0x18] sm:$0xff]
    %v1144 = vld [vmem:[%s15] sm:$0x1]
    %v1146 = vlaneseq
    %v1147 = vshrl.u32 %v1146, 7
    %v1148 = vsub.s32 0, %v1147
    %v1149 = vrot.slane %v1144, %v1148
    %v1152 = vsel %vm389, %v1132, 0
    %v1155 = vsel %vm389, %v1133, 0
    %v1158 = vsel %vm389, %v1134, 0
    %v1161 = vsel %vm389, %v1135, 0
    %v1164 = vsel %vm389, %v1136, 0
    %v1167 = vsel %vm389, %v1137, 0
    %v1170 = vsel %vm389, %v1138, 0
    %v1173 = vsel %vm389, %v1139, 0
    %1175 = vmatprep.subr.mxu0 0.0
    %1176 = vmatpush1.msra.mxu0 0.0
    %1177 = vmatprep.subr.mxu0 0.0
    %1178 = vmatpush1.msra.mxu0 0.0
    %1179 = vmatprep.subr.mxu0 0.0
    %1180 = vmatpush1.msra.mxu0 0.0
    %1181 = vmatprep.subr.mxu0 0.0
    %1182 = vmatpush1.msra.mxu0 0.0
    %1183 = vmatprep.subr.mxu0 0.0
    %1184 = vmatpush1.msra.mxu0 0.0
    %1185 = vmatprep.subr.mxu0 0.0
    %1186 = vmatpush1.msra.mxu0 0.0
    %1187 = vmatprep.subr.mxu0 0.0
    %1188 = vmatpush1.msra.mxu0 0.0
    %1189 = vmatprep.subr.mxu0 0.0
    %1190 = vmatpush1.msra.mxu0 0.0
    %1191 = vmatprep.subr.mxu0 0.0
    %1192 = vmatpush1.msra.mxu0 0.0
    %1193 = vmatprep.subr.mxu0 0.0
    %1194 = vmatpush1.msra.mxu0 0.0
    %1195 = vmatprep.subr.mxu0 0.0
    %1196 = vmatpush1.msra.mxu0 0.0
    %1197 = vmatprep.subr.mxu0 0.0
    %1198 = vmatpush1.msra.mxu0 0.0
    %1199 = vmatprep.subr.mxu0 0.0
    %1200 = vmatpush1.msra.mxu0 %v1143
    %1201 = vmatprep.subr.mxu0 0.0
    %1202 = vmatpush1.msra.mxu0 %v1142
    %1203 = vmatprep.subr.mxu0 0.0
    %1204 = vmatpush1.msra.mxu0 %v1141
    %1205 = vmatprep.subr.mxu0 0.0
    %1206 = vmatpush1.msra.mxu0 %v1140
    %1207 = vmatprep.subr.mxu0 0.0
    %1208 = vmatpush2.msra.mxu0 0.0
    %1209 = vmatprep.subr.mxu0 0.0
    %1210 = vmatpush2.msra.mxu0 0.0
    %1211 = vmatprep.subr.mxu0 0.0
    %1212 = vmatpush2.msra.mxu0 0.0
    %1213 = vmatprep.subr.mxu0 0.0
    %1214 = vmatpush2.msra.mxu0 0.0
    %1215 = vmatprep.subr.mxu0 0.0
    %1216 = vmatpush2.msra.mxu0 0.0
    %1217 = vmatprep.subr.mxu0 0.0
    %1218 = vmatpush2.msra.mxu0 0.0
    %1219 = vmatprep.subr.mxu0 0.0
    %1220 = vmatpush2.msra.mxu0 0.0
    %1221 = vmatprep.subr.mxu0 0.0
    %1222 = vmatpush2.msra.mxu0 0.0
    %1223 = vmatprep.subr.mxu0 0.0
    %1224 = vmatpush2.msra.mxu0 0.0
    %1225 = vmatprep.subr.mxu0 0.0
    %1226 = vmatpush2.msra.mxu0 0.0
    %1227 = vmatprep.subr.mxu0 0.0
    %1228 = vmatpush2.msra.mxu0 0.0
    %1229 = vmatprep.subr.mxu0 0.0
    %1230 = vmatpush2.msra.mxu0 0.0
    %1231 = vmatprep.subr.mxu0 0.0
    %1232 = vmatpush2.msra.mxu0 0.0
    %1233 = vmatprep.subr.mxu0 0.0
    %1234 = vmatpush2.msra.mxu0 0.0
    %1235 = vmatprep.subr.mxu0 0.0
    %1236 = vmatpush2.msra.mxu0 0.0
    %1237 = vmatprep.subr.mxu0 0.0
    %1238 = vmatpush2.msra.mxu0 0.0
    %1239 = vmatprep.mubr.f32.mxu0 0.0
    %1240 = vmatmul.mubr.f32.gmra.mxu0 %v1152
    %v1241 = vpop.f32.mrf.mxu0
    %v1242 = vadd.f32 %v1149, %v1241
    %v1243 = vpop.f32.mrf.mxu0
    %1244 = vmatprep.mubr.f32.mxu0 0.0
    %1245 = vmatmul.mubr.f32.gmra.mxu0 %v1155
    %v1246 = vpop.f32.mrf.mxu0
    %v1247 = vadd.f32 %v1149, %v1246
    %v1248 = vpop.f32.mrf.mxu0
    %1249 = vmatprep.mubr.f32.mxu0 0.0
    %1250 = vmatmul.mubr.f32.gmra.mxu0 %v1158
    %v1251 = vpop.f32.mrf.mxu0
    %v1252 = vadd.f32 %v1149, %v1251
    %v1253 = vpop.f32.mrf.mxu0
    %1254 = vmatprep.mubr.f32.mxu0 0.0
    %1255 = vmatmul.mubr.f32.gmra.mxu0 %v1161
    %v1256 = vpop.f32.mrf.mxu0
    %v1257 = vadd.f32 %v1149, %v1256
    %v1258 = vpop.f32.mrf.mxu0
    %1259 = vmatprep.mubr.f32.mxu0 0.0
    %1260 = vmatmul.mubr.f32.gmra.mxu0 %v1164
    %v1261 = vpop.f32.mrf.mxu0
    %v1262 = vadd.f32 %v1149, %v1261
    %v1263 = vpop.f32.mrf.mxu0
    %1264 = vmatprep.mubr.f32.mxu0 0.0
    %1265 = vmatmul.mubr.f32.gmra.mxu0 %v1167
    %v1266 = vpop.f32.mrf.mxu0
    %v1267 = vadd.f32 %v1149, %v1266
    %v1268 = vpop.f32.mrf.mxu0
    %1269 = vmatprep.mubr.f32.mxu0 0.0
    %1270 = vmatmul.mubr.f32.gmra.mxu0 %v1170
    %v1271 = vpop.f32.mrf.mxu0
    %v1272 = vadd.f32 %v1149, %v1271
    %v1273 = vpop.f32.mrf.mxu0
    %1274 = vmatprep.mubr.f32.mxu0 0.0
    %1275 = vmatmul.mubr.f32.gmra.mxu0 %v1173
    %v1276 = vpop.f32.mrf.mxu0
    %v1277 = vadd.f32 %v1149, %v1276
    %v1278 = vpop.f32.mrf.mxu0
    %1279 = vdwg.mxu0
    %v1280 = vmul.f32 %v1242, %v530
    %v1281 = vmul.f32 %v1247, %v535
    %v1282 = vmul.f32 %v1252, %v540
    %v1283 = vmul.f32 %v1257, %v545
    %v1284 = vmul.f32 %v1262, %v550
    %v1285 = vmul.f32 %v1267, %v555
    %v1286 = vmul.f32 %v1272, %v560
    %v1287 = vmul.f32 %v1277, %v565
    %v1288 = vld [vmem:[%s16] sm:$0xff]
    %v1289 = vld [vmem:[%s16 + $0x8] sm:$0xff]
    %v1290 = vld [vmem:[%s16 + $0x10] sm:$0xff]
    %v1291 = vld [vmem:[%s16 + $0x18] sm:$0xff]
    %v1293 = vsel %vm389, %v1280, 0
    %v1296 = vsel %vm389, %v1281, 0
    %v1299 = vsel %vm389, %v1282, 0
    %v1302 = vsel %vm389, %v1283, 0
    %1304 = vmatprep.subr.mxu0 0.0
    %1305 = vmatpush1.msra.mxu0 0.0
    %1306 = vmatprep.subr.mxu0 0.0
    %1307 = vmatpush1.msra.mxu0 0.0
    %1308 = vmatprep.subr.mxu0 0.0
    %1309 = vmatpush1.msra.mxu0 0.0
    %1310 = vmatprep.subr.mxu0 0.0
    %1311 = vmatpush1.msra.mxu0 0.0
    %1312 = vmatprep.subr.mxu0 0.0
    %1313 = vmatpush1.msra.mxu0 0.0
    %1314 = vmatprep.subr.mxu0 0.0
    %1315 = vmatpush1.msra.mxu0 0.0
    %1316 = vmatprep.subr.mxu0 0.0
    %1317 = vmatpush1.msra.mxu0 0.0
    %1318 = vmatprep.subr.mxu0 0.0
    %1319 = vmatpush1.msra.mxu0 0.0
    %1320 = vmatprep.subr.mxu0 0.0
    %1321 = vmatpush1.msra.mxu0 0.0
    %1322 = vmatprep.subr.mxu0 0.0
    %1323 = vmatpush1.msra.mxu0 0.0
    %1324 = vmatprep.subr.mxu0 0.0
    %1325 = vmatpush1.msra.mxu0 0.0
    %1326 = vmatprep.subr.mxu0 0.0
    %1327 = vmatpush1.msra.mxu0 0.0
    %1328 = vmatprep.subr.mxu0 0.0
    %1329 = vmatpush1.msra.mxu0 %v1291
    %1330 = vmatprep.subr.mxu0 0.0
    %1331 = vmatpush1.msra.mxu0 %v1290
    %1332 = vmatprep.subr.mxu0 0.0
    %1333 = vmatpush1.msra.mxu0 %v1289
    %1334 = vmatprep.subr.mxu0 0.0
    %1335 = vmatpush1.msra.mxu0 %v1288
    %1336 = vmatprep.subr.mxu0 0.0
    %1337 = vmatpush2.msra.mxu0 0.0
    %1338 = vmatprep.subr.mxu0 0.0
    %1339 = vmatpush2.msra.mxu0 0.0
    %1340 = vmatprep.subr.mxu0 0.0
    %1341 = vmatpush2.msra.mxu0 0.0
    %1342 = vmatprep.subr.mxu0 0.0
    %1343 = vmatpush2.msra.mxu0 0.0
    %1344 = vmatprep.subr.mxu0 0.0
    %1345 = vmatpush2.msra.mxu0 0.0
    %1346 = vmatprep.subr.mxu0 0.0
    %1347 = vmatpush2.msra.mxu0 0.0
    %1348 = vmatprep.subr.mxu0 0.0
    %1349 = vmatpush2.msra.mxu0 0.0
    %1350 = vmatprep.subr.mxu0 0.0
    %1351 = vmatpush2.msra.mxu0 0.0
    %1352 = vmatprep.subr.mxu0 0.0
    %1353 = vmatpush2.msra.mxu0 0.0
    %1354 = vmatprep.subr.mxu0 0.0
    %1355 = vmatpush2.msra.mxu0 0.0
    %1356 = vmatprep.subr.mxu0 0.0
    %1357 = vmatpush2.msra.mxu0 0.0
    %1358 = vmatprep.subr.mxu0 0.0
    %1359 = vmatpush2.msra.mxu0 0.0
    %1360 = vmatprep.subr.mxu0 0.0
    %1361 = vmatpush2.msra.mxu0 0.0
    %1362 = vmatprep.subr.mxu0 0.0
    %1363 = vmatpush2.msra.mxu0 0.0
    %1364 = vmatprep.subr.mxu0 0.0
    %1365 = vmatpush2.msra.mxu0 0.0
    %1366 = vmatprep.subr.mxu0 0.0
    %1367 = vmatpush2.msra.mxu0 0.0
    %1368 = vmatprep.mubr.f32.mxu0 0.0
    %1369 = vmatmul.mubr.f32.gmra.mxu0 %v1293
    %v1370 = vpop.f32.mrf.mxu0
    %v1371 = vadd.f32 0.0, %v1370
    %v1372 = vpop.f32.mrf.mxu0
    %1373 = vmatprep.mubr.f32.mxu0 0.0
    %1374 = vmatmul.mubr.f32.gmra.mxu0 %v1296
    %v1375 = vpop.f32.mrf.mxu0
    %v1376 = vadd.f32 0.0, %v1375
    %v1377 = vpop.f32.mrf.mxu0
    %1378 = vmatprep.mubr.f32.mxu0 0.0
    %1379 = vmatmul.mubr.f32.gmra.mxu0 %v1299
    %v1380 = vpop.f32.mrf.mxu0
    %v1381 = vadd.f32 0.0, %v1380
    %v1382 = vpop.f32.mrf.mxu0
    %1383 = vmatprep.mubr.f32.mxu0 0.0
    %1384 = vmatmul.mubr.f32.gmra.mxu0 %v1302
    %v1385 = vpop.f32.mrf.mxu0
    %v1386 = vadd.f32 0.0, %v1385
    %v1387 = vpop.f32.mrf.mxu0
    %1388 = vdwg.mxu0
    %v1389 = vld [vmem:[%s17] sm:$0xff]
    %v1390 = vld [vmem:[%s17 + $0x8] sm:$0xff]
    %v1391 = vld [vmem:[%s18] sm:$0x1]
    %v1392 = vld [vmem:[%s19] sm:$0xff]
    %v1393 = vld [vmem:[%s19 + $0x8] sm:$0xff]
    %v1394 = vld [vmem:[%s20] sm:$0x1]
    %v1396 = vsel %vm389, %v1371, 0
    %v1399 = vsel %vm389, %v1376, 0
    %v1402 = vsel %vm389, %v1284, 0
    %v1405 = vsel %vm389, %v1285, 0
    %1407 = vmatprep.subr.mxu0 0.0
    %1408 = vmatpush1.xpose.msra.mxu0 0.0
    %1409 = vmatprep.subr.mxu0 0.0
    %1410 = vmatpush1.xpose.msra.mxu0 0.0
    %1411 = vmatprep.subr.mxu0 0.0
    %1412 = vmatpush1.xpose.msra.mxu0 0.0
    %1413 = vmatprep.subr.mxu0 0.0
    %1414 = vmatpush1.xpose.msra.mxu0 0.0
    %1415 = vmatprep.subr.mxu0 0.0
    %1416 = vmatpush1.xpose.msra.mxu0 0.0
    %1417 = vmatprep.subr.mxu0 0.0
    %1418 = vmatpush1.xpose.msra.mxu0 0.0
    %1419 = vmatprep.subr.mxu0 0.0
    %1420 = vmatpush1.xpose.msra.mxu0 0.0
    %1421 = vmatprep.subr.mxu0 0.0
    %1422 = vmatpush1.xpose.msra.mxu0 0.0
    %1423 = vmatprep.subr.mxu0 0.0
    %1424 = vmatpush1.xpose.msra.mxu0 0.0
    %1425 = vmatprep.subr.mxu0 0.0
    %1426 = vmatpush1.xpose.msra.mxu0 0.0
    %1427 = vmatprep.subr.mxu0 0.0
    %1428 = vmatpush1.xpose.msra.mxu0 0.0
    %1429 = vmatprep.subr.mxu0 0.0
    %1430 = vmatpush1.xpose.msra.mxu0 0.0
    %1431 = vmatprep.subr.mxu0 0.0
    %1432 = vmatpush1.xpose.msra.mxu0 0.0
    %1433 = vmatprep.subr.mxu0 0.0
    %1434 = vmatpush1.xpose.msra.mxu0 0.0
    %1435 = vmatprep.subr.mxu0 0.0
    %1436 = vmatpush1.xpose.msra.mxu0 %v1405
    %1437 = vmatprep.subr.mxu0 0.0
    %1438 = vmatpush1.xpose.msra.mxu0 %v1402
    %1439 = vmatprep.subr.mxu0 0.0
    %1440 = vmatpush2.xpose.msra.mxu0 0.0
    %1441 = vmatprep.subr.mxu0 0.0
    %1442 = vmatpush2.xpose.msra.mxu0 0.0
    %1443 = vmatprep.subr.mxu0 0.0
    %1444 = vmatpush2.xpose.msra.mxu0 0.0
    %1445 = vmatprep.subr.mxu0 0.0
    %1446 = vmatpush2.xpose.msra.mxu0 0.0
    %1447 = vmatprep.subr.mxu0 0.0
    %1448 = vmatpush2.xpose.msra.mxu0 0.0
    %1449 = vmatprep.subr.mxu0 0.0
    %1450 = vmatpush2.xpose.msra.mxu0 0.0
    %1451 = vmatprep.subr.mxu0 0.0
    %1452 = vmatpush2.xpose.msra.mxu0 0.0
    %1453 = vmatprep.subr.mxu0 0.0
    %1454 = vmatpush2.xpose.msra.mxu0 0.0
    %1455 = vmatprep.subr.mxu0 0.0
    %1456 = vmatpush2.xpose.msra.mxu0 0.0
    %1457 = vmatprep.subr.mxu0 0.0
    %1458 = vmatpush2.xpose.msra.mxu0 0.0
    %1459 = vmatprep.subr.mxu0 0.0
    %1460 = vmatpush2.xpose.msra.mxu0 0.0
    %1461 = vmatprep.subr.mxu0 0.0
    %1462 = vmatpush2.xpose.msra.mxu0 0.0
    %1463 = vmatprep.subr.mxu0 0.0
    %1464 = vmatpush2.xpose.msra.mxu0 0.0
    %1465 = vmatprep.subr.mxu0 0.0
    %1466 = vmatpush2.xpose.msra.mxu0 0.0
    %1467 = vmatprep.subr.mxu0 0.0
    %1468 = vmatpush2.xpose.msra.mxu0 0.0
    %1469 = vmatprep.subr.mxu0 0.0
    %1470 = vmatpush2.xpose.msra.mxu0 0.0
    %1471 = vmatprep.mubr.f32.mxu0 0.0
    %1472 = vmatmul.mubr.f32.gmra.mxu0 %v1396
    %v1473 = vpop.f32.mrf.mxu0
    %v1474 = vadd.f32 0.0, %v1473
    %v1475 = vpop.f32.mrf.mxu0
    %1476 = vmatprep.mubr.f32.mxu0 0.0
    %1477 = vmatmul.mubr.f32.gmra.mxu0 %v1399
    %v1478 = vpop.f32.mrf.mxu0
    %v1479 = vadd.f32 0.0, %v1478
    %v1480 = vpop.f32.mrf.mxu0
    %1481 = vdwg.mxu0
    %v1483 = vlaneseq
    %v1484 = vshrl.u32 %v1483, 7
    %v1485 = vsub.s32 0, %v1484
    %v1486 = vrot.slane %v1391, %v1485
    %v1489 = vsel %vm245, %v1474, 0
    %v1492 = vsel %vm245, %v1479, 0
    %1494 = vmatprep.subr.mxu0 0.0
    %1495 = vmatpush1.msra.mxu0 0.0
    %1496 = vmatprep.subr.mxu0 0.0
    %1497 = vmatpush1.msra.mxu0 0.0
    %1498 = vmatprep.subr.mxu0 0.0
    %1499 = vmatpush1.msra.mxu0 0.0
    %1500 = vmatprep.subr.mxu0 0.0
    %1501 = vmatpush1.msra.mxu0 0.0
    %1502 = vmatprep.subr.mxu0 0.0
    %1503 = vmatpush1.msra.mxu0 0.0
    %1504 = vmatprep.subr.mxu0 0.0
    %1505 = vmatpush1.msra.mxu0 0.0
    %1506 = vmatprep.subr.mxu0 0.0
    %1507 = vmatpush1.msra.mxu0 0.0
    %1508 = vmatprep.subr.mxu0 0.0
    %1509 = vmatpush1.msra.mxu0 0.0
    %1510 = vmatprep.subr.mxu0 0.0
    %1511 = vmatpush1.msra.mxu0 0.0
    %1512 = vmatprep.subr.mxu0 0.0
    %1513 = vmatpush1.msra.mxu0 0.0
    %1514 = vmatprep.subr.mxu0 0.0
    %1515 = vmatpush1.msra.mxu0 0.0
    %1516 = vmatprep.subr.mxu0 0.0
    %1517 = vmatpush1.msra.mxu0 0.0
    %1518 = vmatprep.subr.mxu0 0.0
    %1519 = vmatpush1.msra.mxu0 0.0
    %1520 = vmatprep.subr.mxu0 0.0
    %1521 = vmatpush1.msra.mxu0 0.0
    %1522 = vmatprep.subr.mxu0 0.0
    %1523 = vmatpush1.msra.mxu0 %v1390
    %1524 = vmatprep.subr.mxu0 0.0
    %1525 = vmatpush1.msra.mxu0 %v1389
    %1526 = vmatprep.subr.mxu0 0.0
    %1527 = vmatpush2.msra.mxu0 0.0
    %1528 = vmatprep.subr.mxu0 0.0
    %1529 = vmatpush2.msra.mxu0 0.0
    %1530 = vmatprep.subr.mxu0 0.0
    %1531 = vmatpush2.msra.mxu0 0.0
    %1532 = vmatprep.subr.mxu0 0.0
    %1533 = vmatpush2.msra.mxu0 0.0
    %1534 = vmatprep.subr.mxu0 0.0
    %1535 = vmatpush2.msra.mxu0 0.0
    %1536 = vmatprep.subr.mxu0 0.0
    %1537 = vmatpush2.msra.mxu0 0.0
    %1538 = vmatprep.subr.mxu0 0.0
    %1539 = vmatpush2.msra.mxu0 0.0
    %1540 = vmatprep.subr.mxu0 0.0
    %1541 = vmatpush2.msra.mxu0 0.0
    %1542 = vmatprep.subr.mxu0 0.0
    %1543 = vmatpush2.msra.mxu0 0.0
    %1544 = vmatprep.subr.mxu0 0.0
    %1545 = vmatpush2.msra.mxu0 0.0
    %1546 = vmatprep.subr.mxu0 0.0
    %1547 = vmatpush2.msra.mxu0 0.0
    %1548 = vmatprep.subr.mxu0 0.0
    %1549 = vmatpush2.msra.mxu0 0.0
    %1550 = vmatprep.subr.mxu0 0.0
    %1551 = vmatpush2.msra.mxu0 0.0
    %1552 = vmatprep.subr.mxu0 0.0
    %1553 = vmatpush2.msra.mxu0 0.0
    %1554 = vmatprep.subr.mxu0 0.0
    %1555 = vmatpush2.msra.mxu0 0.0
    %1556 = vmatprep.subr.mxu0 0.0
    %1557 = vmatpush2.msra.mxu0 0.0
    %1558 = vmatprep.mubr.f32.mxu0 0.0
    %1559 = vmatmul.mubr.f32.gmra.mxu0 %v1489
    %v1560 = vpop.f32.mrf.mxu0
    %v1561 = vadd.f32 %v1486, %v1560
    %v1562 = vpop.f32.mrf.mxu0
    %1563 = vmatprep.mubr.f32.mxu0 0.0
    %1564 = vmatmul.mubr.f32.gmra.mxu0 %v1492
    %v1565 = vpop.f32.mrf.mxu0
    %v1566 = vadd.f32 %v1486, %v1565
    %v1567 = vpop.f32.mrf.mxu0
    %1568 = vdwg.mxu0
    %v1569 = vmax.f32 %v1561, 0.0
    %v1570 = vmax.f32 %v1566, 0.0
    %v1572 = vlaneseq
    %v1573 = vshrl.u32 %v1572, 7
    %v1574 = vsub.s32 0, %v1573
    %v1575 = vrot.slane %v1394, %v1574
    %v1578 = vsel %vm245, %v1569, 0
    %v1581 = vsel %vm245, %v1570, 0
    %1583 = vmatprep.subr.mxu0 0.0
    %1584 = vmatpush1.msra.mxu0 0.0
    %1585 = vmatprep.subr.mxu0 0.0
    %1586 = vmatpush1.msra.mxu0 0.0
    %1587 = vmatprep.subr.mxu0 0.0
    %1588 = vmatpush1.msra.mxu0 0.0
    %1589 = vmatprep.subr.mxu0 0.0
    %1590 = vmatpush1.msra.mxu0 0.0
    %1591 = vmatprep.subr.mxu0 0.0
    %1592 = vmatpush1.msra.mxu0 0.0
    %1593 = vmatprep.subr.mxu0 0.0
    %1594 = vmatpush1.msra.mxu0 0.0
    %1595 = vmatprep.subr.mxu0 0.0
    %1596 = vmatpush1.msra.mxu0 0.0
    %1597 = vmatprep.subr.mxu0 0.0
    %1598 = vmatpush1.msra.mxu0 0.0
    %1599 = vmatprep.subr.mxu0 0.0
    %1600 = vmatpush1.msra.mxu0 0.0
    %1601 = vmatprep.subr.mxu0 0.0
    %1602 = vmatpush1.msra.mxu0 0.0
    %1603 = vmatprep.subr.mxu0 0.0
    %1604 = vmatpush1.msra.mxu0 0.0
    %1605 = vmatprep.subr.mxu0 0.0
    %1606 = vmatpush1.msra.mxu0 0.0
    %1607 = vmatprep.subr.mxu0 0.0
    %1608 = vmatpush1.msra.mxu0 0.0
    %1609 = vmatprep.subr.mxu0 0.0
    %1610 = vmatpush1.msra.mxu0 0.0
    %1611 = vmatprep.subr.mxu0 0.0
    %1612 = vmatpush1.msra.mxu0 %v1393
    %1613 = vmatprep.subr.mxu0 0.0
    %1614 = vmatpush1.msra.mxu0 %v1392
    %1615 = vmatprep.subr.mxu0 0.0
    %1616 = vmatpush2.msra.mxu0 0.0
    %1617 = vmatprep.subr.mxu0 0.0
    %1618 = vmatpush2.msra.mxu0 0.0
    %1619 = vmatprep.subr.mxu0 0.0
    %1620 = vmatpush2.msra.mxu0 0.0
    %1621 = vmatprep.subr.mxu0 0.0
    %1622 = vmatpush2.msra.mxu0 0.0
    %1623 = vmatprep.subr.mxu0 0.0
    %1624 = vmatpush2.msra.mxu0 0.0
    %1625 = vmatprep.subr.mxu0 0.0
    %1626 = vmatpush2.msra.mxu0 0.0
    %1627 = vmatprep.subr.mxu0 0.0
    %1628 = vmatpush2.msra.mxu0 0.0
    %1629 = vmatprep.subr.mxu0 0.0
    %1630 = vmatpush2.msra.mxu0 0.0
    %1631 = vmatprep.subr.mxu0 0.0
    %1632 = vmatpush2.msra.mxu0 0.0
    %1633 = vmatprep.subr.mxu0 0.0
    %1634 = vmatpush2.msra.mxu0 0.0
    %1635 = vmatprep.subr.mxu0 0.0
    %1636 = vmatpush2.msra.mxu0 0.0
    %1637 = vmatprep.subr.mxu0 0.0
    %1638 = vmatpush2.msra.mxu0 0.0
    %1639 = vmatprep.subr.mxu0 0.0
    %1640 = vmatpush2.msra.mxu0 0.0
    %1641 = vmatprep.subr.mxu0 0.0
    %1642 = vmatpush2.msra.mxu0 0.0
    %1643 = vmatprep.subr.mxu0 0.0
    %1644 = vmatpush2.msra.mxu0 0.0
    %1645 = vmatprep.subr.mxu0 0.0
    %1646 = vmatpush2.msra.mxu0 0.0
    %1647 = vmatprep.mubr.f32.mxu0 0.0
    %1648 = vmatmul.mubr.f32.gmra.mxu0 %v1578
    %v1649 = vpop.f32.mrf.mxu0
    %v1650 = vadd.f32 %v1575, %v1649
    %v1651 = vpop.f32.mrf.mxu0
    %1652 = vmatprep.mubr.f32.mxu0 0.0
    %1653 = vmatmul.mubr.f32.gmra.mxu0 %v1581
    %v1654 = vpop.f32.mrf.mxu0
    %v1655 = vadd.f32 %v1575, %v1654
    %v1656 = vpop.f32.mrf.mxu0
    %1657 = vdwg.mxu0
    %v1659 = vsel %vm389, %v1381, 0
    %v1662 = vsel %vm389, %v1386, 0
    %v1665 = vsel %vm389, %v1286, 0
    %v1668 = vsel %vm389, %v1287, 0
    %1670 = vmatprep.subr.mxu0 0.0
    %1671 = vmatpush1.xpose.msra.mxu0 0.0
    %1672 = vmatprep.subr.mxu0 0.0
    %1673 = vmatpush1.xpose.msra.mxu0 0.0
    %1674 = vmatprep.subr.mxu0 0.0
    %1675 = vmatpush1.xpose.msra.mxu0 0.0
    %1676 = vmatprep.subr.mxu0 0.0
    %1677 = vmatpush1.xpose.msra.mxu0 0.0
    %1678 = vmatprep.subr.mxu0 0.0
    %1679 = vmatpush1.xpose.msra.mxu0 0.0
    %1680 = vmatprep.subr.mxu0 0.0
    %1681 = vmatpush1.xpose.msra.mxu0 0.0
    %1682 = vmatprep.subr.mxu0 0.0
    %1683 = vmatpush1.xpose.msra.mxu0 0.0
    %1684 = vmatprep.subr.mxu0 0.0
    %1685 = vmatpush1.xpose.msra.mxu0 0.0
    %1686 = vmatprep.subr.mxu0 0.0
    %1687 = vmatpush1.xpose.msra.mxu0 0.0
    %1688 = vmatprep.subr.mxu0 0.0
    %1689 = vmatpush1.xpose.msra.mxu0 0.0
    %1690 = vmatprep.subr.mxu0 0.0
    %1691 = vmatpush1.xpose.msra.mxu0 0.0
    %1692 = vmatprep.subr.mxu0 0.0
    %1693 = vmatpush1.xpose.msra.mxu0 0.0
    %1694 = vmatprep.subr.mxu0 0.0
    %1695 = vmatpush1.xpose.msra.mxu0 0.0
    %1696 = vmatprep.subr.mxu0 0.0
    %1697 = vmatpush1.xpose.msra.mxu0 0.0
    %1698 = vmatprep.subr.mxu0 0.0
    %1699 = vmatpush1.xpose.msra.mxu0 %v1668
    %1700 = vmatprep.subr.mxu0 0.0
    %1701 = vmatpush1.xpose.msra.mxu0 %v1665
    %1702 = vmatprep.subr.mxu0 0.0
    %1703 = vmatpush2.xpose.msra.mxu0 0.0
    %1704 = vmatprep.subr.mxu0 0.0
    %1705 = vmatpush2.xpose.msra.mxu0 0.0
    %1706 = vmatprep.subr.mxu0 0.0
    %1707 = vmatpush2.xpose.msra.mxu0 0.0
    %1708 = vmatprep.subr.mxu0 0.0
    %1709 = vmatpush2.xpose.msra.mxu0 0.0
    %1710 = vmatprep.subr.mxu0 0.0
    %1711 = vmatpush2.xpose.msra.mxu0 0.0
    %1712 = vmatprep.subr.mxu0 0.0
    %1713 = vmatpush2.xpose.msra.mxu0 0.0
    %1714 = vmatprep.subr.mxu0 0.0
    %1715 = vmatpush2.xpose.msra.mxu0 0.0
    %1716 = vmatprep.subr.mxu0 0.0
    %1717 = vmatpush2.xpose.msra.mxu0 0.0
    %1718 = vmatprep.subr.mxu0 0.0
    %1719 = vmatpush2.xpose.msra.mxu0 0.0
    %1720 = vmatprep.subr.mxu0 0.0
    %1721 = vmatpush2.xpose.msra.mxu0 0.0
    %1722 = vmatprep.subr.mxu0 0.0
    %1723 = vmatpush2.xpose.msra.mxu0 0.0
    %1724 = vmatprep.subr.mxu0 0.0
    %1725 = vmatpush2.xpose.msra.mxu0 0.0
    %1726 = vmatprep.subr.mxu0 0.0
    %1727 = vmatpush2.xpose.msra.mxu0 0.0
    %1728 = vmatprep.subr.mxu0 0.0
    %1729 = vmatpush2.xpose.msra.mxu0 0.0
    %1730 = vmatprep.subr.mxu0 0.0
    %1731 = vmatpush2.xpose.msra.mxu0 0.0
    %1732 = vmatprep.subr.mxu0 0.0
    %1733 = vmatpush2.xpose.msra.mxu0 0.0
    %1734 = vmatprep.mubr.f32.mxu0 0.0
    %1735 = vmatmul.mubr.f32.gmra.mxu0 %v1659
    %v1736 = vpop.f32.mrf.mxu0
    %v1737 = vadd.f32 0.0, %v1736
    %v1738 = vpop.f32.mrf.mxu0
    %1739 = vmatprep.mubr.f32.mxu0 0.0
    %1740 = vmatmul.mubr.f32.gmra.mxu0 %v1662
    %v1741 = vpop.f32.mrf.mxu0
    %v1742 = vadd.f32 0.0, %v1741
    %v1743 = vpop.f32.mrf.mxu0
    %1744 = vdwg.mxu0
    %v1746 = vsel %vm245, %v1737, 0
    %v1749 = vsel %vm245, %v1742, 0
    %1751 = vmatprep.subr.mxu0 0.0
    %1752 = vmatpush1.msra.mxu0 0.0
    %1753 = vmatprep.subr.mxu0 0.0
    %1754 = vmatpush1.msra.mxu0 0.0
    %1755 = vmatprep.subr.mxu0 0.0
    %1756 = vmatpush1.msra.mxu0 0.0
    %1757 = vmatprep.subr.mxu0 0.0
    %1758 = vmatpush1.msra.mxu0 0.0
    %1759 = vmatprep.subr.mxu0 0.0
    %1760 = vmatpush1.msra.mxu0 0.0
    %1761 = vmatprep.subr.mxu0 0.0
    %1762 = vmatpush1.msra.mxu0 0.0
    %1763 = vmatprep.subr.mxu0 0.0
    %1764 = vmatpush1.msra.mxu0 0.0
    %1765 = vmatprep.subr.mxu0 0.0
    %1766 = vmatpush1.msra.mxu0 0.0
    %1767 = vmatprep.subr.mxu0 0.0
    %1768 = vmatpush1.msra.mxu0 0.0
    %1769 = vmatprep.subr.mxu0 0.0
    %1770 = vmatpush1.msra.mxu0 0.0
    %1771 = vmatprep.subr.mxu0 0.0
    %1772 = vmatpush1.msra.mxu0 0.0
    %1773 = vmatprep.subr.mxu0 0.0
    %1774 = vmatpush1.msra.mxu0 0.0
    %1775 = vmatprep.subr.mxu0 0.0
    %1776 = vmatpush1.msra.mxu0 0.0
    %1777 = vmatprep.subr.mxu0 0.0
    %1778 = vmatpush1.msra.mxu0 0.0
    %1779 = vmatprep.subr.mxu0 0.0
    %1780 = vmatpush1.msra.mxu0 %v1390
    %1781 = vmatprep.subr.mxu0 0.0
    %1782 = vmatpush1.msra.mxu0 %v1389
    %1783 = vmatprep.subr.mxu0 0.0
    %1784 = vmatpush2.msra.mxu0 0.0
    %1785 = vmatprep.subr.mxu0 0.0
    %1786 = vmatpush2.msra.mxu0 0.0
    %1787 = vmatprep.subr.mxu0 0.0
    %1788 = vmatpush2.msra.mxu0 0.0
    %1789 = vmatprep.subr.mxu0 0.0
    %1790 = vmatpush2.msra.mxu0 0.0
    %1791 = vmatprep.subr.mxu0 0.0
    %1792 = vmatpush2.msra.mxu0 0.0
    %1793 = vmatprep.subr.mxu0 0.0
    %1794 = vmatpush2.msra.mxu0 0.0
    %1795 = vmatprep.subr.mxu0 0.0
    %1796 = vmatpush2.msra.mxu0 0.0
    %1797 = vmatprep.subr.mxu0 0.0
    %1798 = vmatpush2.msra.mxu0 0.0
    %1799 = vmatprep.subr.mxu0 0.0
    %1800 = vmatpush2.msra.mxu0 0.0
    %1801 = vmatprep.subr.mxu0 0.0
    %1802 = vmatpush2.msra.mxu0 0.0
    %1803 = vmatprep.subr.mxu0 0.0
    %1804 = vmatpush2.msra.mxu0 0.0
    %1805 = vmatprep.subr.mxu0 0.0
    %1806 = vmatpush2.msra.mxu0 0.0
    %1807 = vmatprep.subr.mxu0 0.0
    %1808 = vmatpush2.msra.mxu0 0.0
    %1809 = vmatprep.subr.mxu0 0.0
    %1810 = vmatpush2.msra.mxu0 0.0
    %1811 = vmatprep.subr.mxu0 0.0
    %1812 = vmatpush2.msra.mxu0 0.0
    %1813 = vmatprep.subr.mxu0 0.0
    %1814 = vmatpush2.msra.mxu0 0.0
    %1815 = vmatprep.mubr.f32.mxu0 0.0
    %1816 = vmatmul.mubr.f32.gmra.mxu0 %v1746
    %v1817 = vpop.f32.mrf.mxu0
    %v1818 = vadd.f32 %v1486, %v1817
    %v1819 = vpop.f32.mrf.mxu0
    %1820 = vmatprep.mubr.f32.mxu0 0.0
    %1821 = vmatmul.mubr.f32.gmra.mxu0 %v1749
    %v1822 = vpop.f32.mrf.mxu0
    %v1823 = vadd.f32 %v1486, %v1822
    %v1824 = vpop.f32.mrf.mxu0
    %1825 = vdwg.mxu0
    %v1826 = vmax.f32 %v1818, 0.0
    %v1827 = vmax.f32 %v1823, 0.0
    %v1829 = vsel %vm245, %v1826, 0
    %v1832 = vsel %vm245, %v1827, 0
    %1834 = vmatprep.subr.mxu0 0.0
    %1835 = vmatpush1.msra.mxu0 0.0
    %1836 = vmatprep.subr.mxu0 0.0
    %1837 = vmatpush1.msra.mxu0 0.0
    %1838 = vmatprep.subr.mxu0 0.0
    %1839 = vmatpush1.msra.mxu0 0.0
    %1840 = vmatprep.subr.mxu0 0.0
    %1841 = vmatpush1.msra.mxu0 0.0
    %1842 = vmatprep.subr.mxu0 0.0
    %1843 = vmatpush1.msra.mxu0 0.0
    %1844 = vmatprep.subr.mxu0 0.0
    %1845 = vmatpush1.msra.mxu0 0.0
    %1846 = vmatprep.subr.mxu0 0.0
    %1847 = vmatpush1.msra.mxu0 0.0
    %1848 = vmatprep.subr.mxu0 0.0
    %1849 = vmatpush1.msra.mxu0 0.0
    %1850 = vmatprep.subr.mxu0 0.0
    %1851 = vmatpush1.msra.mxu0 0.0
    %1852 = vmatprep.subr.mxu0 0.0
    %1853 = vmatpush1.msra.mxu0 0.0
    %1854 = vmatprep.subr.mxu0 0.0
    %1855 = vmatpush1.msra.mxu0 0.0
    %1856 = vmatprep.subr.mxu0 0.0
    %1857 = vmatpush1.msra.mxu0 0.0
    %1858 = vmatprep.subr.mxu0 0.0
    %1859 = vmatpush1.msra.mxu0 0.0
    %1860 = vmatprep.subr.mxu0 0.0
    %1861 = vmatpush1.msra.mxu0 0.0
    %1862 = vmatprep.subr.mxu0 0.0
    %1863 = vmatpush1.msra.mxu0 %v1393
    %1864 = vmatprep.subr.mxu0 0.0
    %1865 = vmatpush1.msra.mxu0 %v1392
    %1866 = vmatprep.subr.mxu0 0.0
    %1867 = vmatpush2.msra.mxu0 0.0
    %1868 = vmatprep.subr.mxu0 0.0
    %1869 = vmatpush2.msra.mxu0 0.0
    %1870 = vmatprep.subr.mxu0 0.0
    %1871 = vmatpush2.msra.mxu0 0.0
    %1872 = vmatprep.subr.mxu0 0.0
    %1873 = vmatpush2.msra.mxu0 0.0
    %1874 = vmatprep.subr.mxu0 0.0
    %1875 = vmatpush2.msra.mxu0 0.0
    %1876 = vmatprep.subr.mxu0 0.0
    %1877 = vmatpush2.msra.mxu0 0.0
    %1878 = vmatprep.subr.mxu0 0.0
    %1879 = vmatpush2.msra.mxu0 0.0
    %1880 = vmatprep.subr.mxu0 0.0
    %1881 = vmatpush2.msra.mxu0 0.0
    %1882 = vmatprep.subr.mxu0 0.0
    %1883 = vmatpush2.msra.mxu0 0.0
    %1884 = vmatprep.subr.mxu0 0.0
    %1885 = vmatpush2.msra.mxu0 0.0
    %1886 = vmatprep.subr.mxu0 0.0
    %1887 = vmatpush2.msra.mxu0 0.0
    %1888 = vmatprep.subr.mxu0 0.0
    %1889 = vmatpush2.msra.mxu0 0.0
    %1890 = vmatprep.subr.mxu0 0.0
    %1891 = vmatpush2.msra.mxu0 0.0
    %1892 = vmatprep.subr.mxu0 0.0
    %1893 = vmatpush2.msra.mxu0 0.0
    %1894 = vmatprep.subr.mxu0 0.0
    %1895 = vmatpush2.msra.mxu0 0.0
    %1896 = vmatprep.subr.mxu0 0.0
    %1897 = vmatpush2.msra.mxu0 0.0
    %1898 = vmatprep.mubr.f32.mxu0 0.0
    %1899 = vmatmul.mubr.f32.gmra.mxu0 %v1829
    %v1900 = vpop.f32.mrf.mxu0
    %v1901 = vadd.f32 %v1575, %v1900
    %v1902 = vpop.f32.mrf.mxu0
    %1903 = vmatprep.mubr.f32.mxu0 0.0
    %1904 = vmatmul.mubr.f32.gmra.mxu0 %v1832
    %v1905 = vpop.f32.mrf.mxu0
    %v1906 = vadd.f32 %v1575, %v1905
    %v1907 = vpop.f32.mrf.mxu0
    %1908 = vdwg.mxu0
    %v1909 = vld [vmem:[%s3] sm:$0xff]
    %v1910 = vld [vmem:[%s3 + $0x8] sm:$0xff]
    %v1911 = vld [vmem:[%s3 + $0x10] sm:$0xff]
    %v1912 = vld [vmem:[%s3 + $0x18] sm:$0xff]
    %v1913 = vld [vmem:[%s3 + $0x20] sm:$0xff]
    %v1914 = vld [vmem:[%s3 + $0x28] sm:$0xff]
    %v1915 = vld [vmem:[%s3 + $0x30] sm:$0xff]
    %v1916 = vld [vmem:[%s3 + $0x38] sm:$0xff]
    %v1917 = vadd.f32 %v1909, 1e-20
    %v1918 = vadd.f32 %v1910, 1e-20
    %v1919 = vadd.f32 %v1911, 1e-20
    %v1920 = vadd.f32 %v1912, 1e-20
    %v1921 = vadd.f32 %v1913, 1e-20
    %v1922 = vadd.f32 %v1914, 1e-20
    %v1923 = vadd.f32 %v1915, 1e-20
    %v1924 = vadd.f32 %v1916, 1e-20
    %v1925 = vlog2.pop %v1917
    %v1926 = vmul.f32 %v1925, 0.6931472
    %v1927 = vlog2.pop %v1918
    %v1928 = vmul.f32 %v1927, 0.6931472
    %v1929 = vlog2.pop %v1919
    %v1930 = vmul.f32 %v1929, 0.6931472
    %v1931 = vlog2.pop %v1920
    %v1932 = vmul.f32 %v1931, 0.6931472
    %v1933 = vlog2.pop %v1921
    %v1934 = vmul.f32 %v1933, 0.6931472
    %v1935 = vlog2.pop %v1922
    %v1936 = vmul.f32 %v1935, 0.6931472
    %v1937 = vlog2.pop %v1923
    %v1938 = vmul.f32 %v1937, 0.6931472
    %v1939 = vlog2.pop %v1924
    %v1940 = vmul.f32 %v1939, 0.6931472
    %v1941 = vsub.f32 0.0, %v1926
    %v1942 = vsub.f32 0.0, %v1928
    %v1943 = vsub.f32 0.0, %v1930
    %v1944 = vsub.f32 0.0, %v1932
    %v1945 = vsub.f32 0.0, %v1934
    %v1946 = vsub.f32 0.0, %v1936
    %v1947 = vsub.f32 0.0, %v1938
    %v1948 = vsub.f32 0.0, %v1940
    %v1949 = vadd.f32 %v1941, 1e-20
    %v1950 = vadd.f32 %v1942, 1e-20
    %v1951 = vadd.f32 %v1943, 1e-20
    %v1952 = vadd.f32 %v1944, 1e-20
    %v1953 = vadd.f32 %v1945, 1e-20
    %v1954 = vadd.f32 %v1946, 1e-20
    %v1955 = vadd.f32 %v1947, 1e-20
    %v1956 = vadd.f32 %v1948, 1e-20
    %v1957 = vlog2.pop %v1949
    %v1958 = vmul.f32 %v1957, 0.6931472
    %v1959 = vlog2.pop %v1950
    %v1960 = vmul.f32 %v1959, 0.6931472
    %v1961 = vlog2.pop %v1951
    %v1962 = vmul.f32 %v1961, 0.6931472
    %v1963 = vlog2.pop %v1952
    %v1964 = vmul.f32 %v1963, 0.6931472
    %v1965 = vlog2.pop %v1953
    %v1966 = vmul.f32 %v1965, 0.6931472
    %v1967 = vlog2.pop %v1954
    %v1968 = vmul.f32 %v1967, 0.6931472
    %v1969 = vlog2.pop %v1955
    %v1970 = vmul.f32 %v1969, 0.6931472
    %v1971 = vlog2.pop %v1956
    %v1972 = vmul.f32 %v1971, 0.6931472
    %v1973 = vsub.f32 0.0, %v1958
    %v1974 = vsub.f32 0.0, %v1960
    %v1975 = vsub.f32 0.0, %v1962
    %v1976 = vsub.f32 0.0, %v1964
    %v1977 = vsub.f32 0.0, %v1966
    %v1978 = vsub.f32 0.0, %v1968
    %v1979 = vsub.f32 0.0, %v1970
    %v1980 = vsub.f32 0.0, %v1972
    %v1981 = vadd.f32 %v1650, %v1973
    %v1982 = vadd.f32 %v1655, %v1974
    %v1983 = vadd.f32 %v1901, %v1975
    %v1984 = vadd.f32 %v1906, %v1976
    %v1985 = vadd.f32 %v1650, %v1977
    %v1986 = vadd.f32 %v1655, %v1978
    %v1987 = vadd.f32 %v1901, %v1979
    %v1988 = vadd.f32 %v1906, %v1980
    %v1989 = vmul.f32 %v1981, 20.0
    %v1990 = vmul.f32 %v1982, 20.0
    %v1991 = vmul.f32 %v1983, 20.0
    %v1992 = vmul.f32 %v1984, 20.0
    %v1993 = vmul.f32 %v1985, 20.0
    %v1994 = vmul.f32 %v1986, 20.0
    %v1995 = vmul.f32 %v1987, 20.0
    %v1996 = vmul.f32 %v1988, 20.0
    %v1997 = vsel %vm245, %v1989, -inf
    %1998 = vmax.xlane.f32.xlu0 %v1997
    %v1999 = vpop.xlane.xlu0 %1998
    %v2000 = vsel %vm245, %v1990, -inf
    %2001 = vmax.xlane.f32.xlu0 %v2000
    %v2002 = vpop.xlane.xlu0 %2001
    %v2003 = vsel %vm245, %v1991, -inf
    %2004 = vmax.xlane.f32.xlu0 %v2003
    %v2005 = vpop.xlane.xlu0 %2004
    %v2006 = vsel %vm245, %v1992, -inf
    %2007 = vmax.xlane.f32.xlu0 %v2006
    %v2008 = vpop.xlane.xlu0 %2007
    %v2009 = vsel %vm245, %v1993, -inf
    %2010 = vmax.xlane.f32.xlu0 %v2009
    %v2011 = vpop.xlane.xlu0 %2010
    %v2012 = vsel %vm245, %v1994, -inf
    %2013 = vmax.xlane.f32.xlu0 %v2012
    %v2014 = vpop.xlane.xlu0 %2013
    %v2015 = vsel %vm245, %v1995, -inf
    %2016 = vmax.xlane.f32.xlu0 %v2015
    %v2017 = vpop.xlane.xlu0 %2016
    %v2018 = vsel %vm245, %v1996, -inf
    %2019 = vmax.xlane.f32.xlu0 %v2018
    %v2020 = vpop.xlane.xlu0 %2019
    %v2021 = vsub.f32 %v1989, %v1999
    %v2022 = vsub.f32 %v1990, %v2002
    %v2023 = vsub.f32 %v1991, %v2005
    %v2024 = vsub.f32 %v1992, %v2008
    %v2025 = vsub.f32 %v1993, %v2011
    %v2026 = vsub.f32 %v1994, %v2014
    %v2027 = vsub.f32 %v1995, %v2017
    %v2028 = vsub.f32 %v1996, %v2020
    %v2029 = vmul.f32 %v2021, 1.442695
    %v2030 = vpow.pop %v2029
    %v2031 = vmul.f32 %v2022, 1.442695
    %v2032 = vpow.pop %v2031
    %v2033 = vmul.f32 %v2023, 1.442695
    %v2034 = vpow.pop %v2033
    %v2035 = vmul.f32 %v2024, 1.442695
    %v2036 = vpow.pop %v2035
    %v2037 = vmul.f32 %v2025, 1.442695
    %v2038 = vpow.pop %v2037
    %v2039 = vmul.f32 %v2026, 1.442695
    %v2040 = vpow.pop %v2039
    %v2041 = vmul.f32 %v2027, 1.442695
    %v2042 = vpow.pop %v2041
    %v2043 = vmul.f32 %v2028, 1.442695
    %v2044 = vpow.pop %v2043
    %v2045 = vsel %vm245, %v2030, 0.0
    %2046 = vadd.xlane.f32.xlu0 %v2045
    %v2047 = vpop.xlane.xlu0 %2046
    %v2048 = vsel %vm245, %v2032, 0.0
    %2049 = vadd.xlane.f32.xlu0 %v2048
    %v2050 = vpop.xlane.xlu0 %2049
    %v2051 = vsel %vm245, %v2034, 0.0
    %2052 = vadd.xlane.f32.xlu0 %v2051
    %v2053 = vpop.xlane.xlu0 %2052
    %v2054 = vsel %vm245, %v2036, 0.0
    %2055 = vadd.xlane.f32.xlu0 %v2054
    %v2056 = vpop.xlane.xlu0 %2055
    %v2057 = vsel %vm245, %v2038, 0.0
    %2058 = vadd.xlane.f32.xlu0 %v2057
    %v2059 = vpop.xlane.xlu0 %2058
    %v2060 = vsel %vm245, %v2040, 0.0
    %2061 = vadd.xlane.f32.xlu0 %v2060
    %v2062 = vpop.xlane.xlu0 %2061
    %v2063 = vsel %vm245, %v2042, 0.0
    %2064 = vadd.xlane.f32.xlu0 %v2063
    %v2065 = vpop.xlane.xlu0 %2064
    %v2066 = vsel %vm245, %v2044, 0.0
    %2067 = vadd.xlane.f32.xlu0 %v2066
    %v2068 = vpop.xlane.xlu0 %2067
    %v2069 = vlog2.pop %v2047
    %v2070 = vmul.f32 %v2069, 0.6931472
    %v2071 = vlog2.pop %v2050
    %v2072 = vmul.f32 %v2071, 0.6931472
    %v2073 = vlog2.pop %v2053
    %v2074 = vmul.f32 %v2073, 0.6931472
    %v2075 = vlog2.pop %v2056
    %v2076 = vmul.f32 %v2075, 0.6931472
    %v2077 = vlog2.pop %v2059
    %v2078 = vmul.f32 %v2077, 0.6931472
    %v2079 = vlog2.pop %v2062
    %v2080 = vmul.f32 %v2079, 0.6931472
    %v2081 = vlog2.pop %v2065
    %v2082 = vmul.f32 %v2081, 0.6931472
    %v2083 = vlog2.pop %v2068
    %v2084 = vmul.f32 %v2083, 0.6931472
    %v2085 = vadd.f32 %v1999, %v2070
    %v2086 = vadd.f32 %v2002, %v2072
    %v2087 = vadd.f32 %v2005, %v2074
    %v2088 = vadd.f32 %v2008, %v2076
    %v2089 = vadd.f32 %v2011, %v2078
    %v2090 = vadd.f32 %v2014, %v2080
    %v2091 = vadd.f32 %v2017, %v2082
    %v2092 = vadd.f32 %v2020, %v2084
    %v2093 = vsub.f32 %v1989, %v2085
    %v2094 = vsub.f32 %v1990, %v2086
    %v2095 = vsub.f32 %v1991, %v2087
    %v2096 = vsub.f32 %v1992, %v2088
    %v2097 = vsub.f32 %v1993, %v2089
    %v2098 = vsub.f32 %v1994, %v2090
    %v2099 = vsub.f32 %v1995, %v2091
    %v2100 = vsub.f32 %v1996, %v2092
    %v2101 = vsel %vm245, %v2093, -inf
    %v2102 = vsel %vm245, %v2094, -inf
    %v2103 = vmax.f32 %v2101, %v2102
    %v2104 = vrot.slane %v2103, 4
    %v2105 = vmax.f32 %v2103, %v2104
    %v2106 = vrot.slane %v2105, 2
    %v2107 = vmax.f32 %v2105, %v2106
    %v2108 = vrot.slane %v2107, 1
    %v2109 = vmax.f32 %v2107, %v2108
    %v2110 = vsel %vm245, %v2095, -inf
    %v2111 = vsel %vm245, %v2096, -inf
    %v2112 = vmax.f32 %v2110, %v2111
    %v2113 = vrot.slane %v2112, 4
    %v2114 = vmax.f32 %v2112, %v2113
    %v2115 = vrot.slane %v2114, 2
    %v2116 = vmax.f32 %v2114, %v2115
    %v2117 = vrot.slane %v2116, 1
    %v2118 = vmax.f32 %v2116, %v2117
    %v2119 = vsel %vm245, %v2097, -inf
    %v2120 = vsel %vm245, %v2098, -inf
    %v2121 = vmax.f32 %v2119, %v2120
    %v2122 = vrot.slane %v2121, 4
    %v2123 = vmax.f32 %v2121, %v2122
    %v2124 = vrot.slane %v2123, 2
    %v2125 = vmax.f32 %v2123, %v2124
    %v2126 = vrot.slane %v2125, 1
    %v2127 = vmax.f32 %v2125, %v2126
    %v2128 = vsel %vm245, %v2099, -inf
    %v2129 = vsel %vm245, %v2100, -inf
    %v2130 = vmax.f32 %v2128, %v2129
    %v2131 = vrot.slane %v2130, 4
    %v2132 = vmax.f32 %v2130, %v2131
    %v2133 = vrot.slane %v2132, 2
    %v2134 = vmax.f32 %v2132, %v2133
    %v2135 = vrot.slane %v2134, 1
    %v2136 = vmax.f32 %v2134, %v2135
    %v2137 = vsub.f32 %v2093, %v2109
    %v2138 = vsub.f32 %v2094, %v2109
    %v2139 = vsub.f32 %v2095, %v2118
    %v2140 = vsub.f32 %v2096, %v2118
    %v2141 = vsub.f32 %v2097, %v2127
    %v2142 = vsub.f32 %v2098, %v2127
    %v2143 = vsub.f32 %v2099, %v2136
    %v2144 = vsub.f32 %v2100, %v2136
    %v2145 = vmul.f32 %v2137, 1.442695
    %v2146 = vpow.pop %v2145
    %v2147 = vmul.f32 %v2138, 1.442695
    %v2148 = vpow.pop %v2147
    %v2149 = vmul.f32 %v2139, 1.442695
    %v2150 = vpow.pop %v2149
    %v2151 = vmul.f32 %v2140, 1.442695
    %v2152 = vpow.pop %v2151
    %v2153 = vmul.f32 %v2141, 1.442695
    %v2154 = vpow.pop %v2153
    %v2155 = vmul.f32 %v2142, 1.442695
    %v2156 = vpow.pop %v2155
    %v2157 = vmul.f32 %v2143, 1.442695
    %v2158 = vpow.pop %v2157
    %v2159 = vmul.f32 %v2144, 1.442695
    %v2160 = vpow.pop %v2159
    %v2161 = vsel %vm245, %v2146, 0.0
    %v2162 = vsel %vm245, %v2148, 0.0
    %v2163 = vadd.f32 %v2161, %v2162
    %v2164 = vrot.slane %v2163, 4
    %v2165 = vadd.f32 %v2163, %v2164
    %v2166 = vrot.slane %v2165, 2
    %v2167 = vadd.f32 %v2165, %v2166
    %v2168 = vrot.slane %v2167, 1
    %v2169 = vadd.f32 %v2167, %v2168
    %v2170 = vsel %vm245, %v2150, 0.0
    %v2171 = vsel %vm245, %v2152, 0.0
    %v2172 = vadd.f32 %v2170, %v2171
    %v2173 = vrot.slane %v2172, 4
    %v2174 = vadd.f32 %v2172, %v2173
    %v2175 = vrot.slane %v2174, 2
    %v2176 = vadd.f32 %v2174, %v2175
    %v2177 = vrot.slane %v2176, 1
    %v2178 = vadd.f32 %v2176, %v2177
    %v2179 = vsel %vm245, %v2154, 0.0
    %v2180 = vsel %vm245, %v2156, 0.0
    %v2181 = vadd.f32 %v2179, %v2180
    %v2182 = vrot.slane %v2181, 4
    %v2183 = vadd.f32 %v2181, %v2182
    %v2184 = vrot.slane %v2183, 2
    %v2185 = vadd.f32 %v2183, %v2184
    %v2186 = vrot.slane %v2185, 1
    %v2187 = vadd.f32 %v2185, %v2186
    %v2188 = vsel %vm245, %v2158, 0.0
    %v2189 = vsel %vm245, %v2160, 0.0
    %v2190 = vadd.f32 %v2188, %v2189
    %v2191 = vrot.slane %v2190, 4
    %v2192 = vadd.f32 %v2190, %v2191
    %v2193 = vrot.slane %v2192, 2
    %v2194 = vadd.f32 %v2192, %v2193
    %v2195 = vrot.slane %v2194, 1
    %v2196 = vadd.f32 %v2194, %v2195
    %v2197 = vlog2.pop %v2169
    %v2198 = vmul.f32 %v2197, 0.6931472
    %v2199 = vlog2.pop %v2178
    %v2200 = vmul.f32 %v2199, 0.6931472
    %v2201 = vlog2.pop %v2187
    %v2202 = vmul.f32 %v2201, 0.6931472
    %v2203 = vlog2.pop %v2196
    %v2204 = vmul.f32 %v2203, 0.6931472
    %v2205 = vadd.f32 %v2109, %v2198
    %v2206 = vadd.f32 %v2118, %v2200
    %v2207 = vadd.f32 %v2127, %v2202
    %v2208 = vadd.f32 %v2136, %v2204
    %v2209 = vsub.f32 %v2093, %v2205
    %v2210 = vsub.f32 %v2094, %v2205
    %v2211 = vsub.f32 %v2095, %v2206
    %v2212 = vsub.f32 %v2096, %v2206
    %v2213 = vsub.f32 %v2097, %v2207
    %v2214 = vsub.f32 %v2098, %v2207
    %v2215 = vsub.f32 %v2099, %v2208
    %v2216 = vsub.f32 %v2100, %v2208
    %v2217 = vsel %vm245, %v2209, -inf
    %2218 = vmax.xlane.f32.xlu0 %v2217
    %v2219 = vpop.xlane.xlu0 %2218
    %v2220 = vsel %vm245, %v2210, -inf
    %2221 = vmax.xlane.f32.xlu0 %v2220
    %v2222 = vpop.xlane.xlu0 %2221
    %v2223 = vsel %vm245, %v2211, -inf
    %2224 = vmax.xlane.f32.xlu0 %v2223
    %v2225 = vpop.xlane.xlu0 %2224
    %v2226 = vsel %vm245, %v2212, -inf
    %2227 = vmax.xlane.f32.xlu0 %v2226
    %v2228 = vpop.xlane.xlu0 %2227
    %v2229 = vsel %vm245, %v2213, -inf
    %2230 = vmax.xlane.f32.xlu0 %v2229
    %v2231 = vpop.xlane.xlu0 %2230
    %v2232 = vsel %vm245, %v2214, -inf
    %2233 = vmax.xlane.f32.xlu0 %v2232
    %v2234 = vpop.xlane.xlu0 %2233
    %v2235 = vsel %vm245, %v2215, -inf
    %2236 = vmax.xlane.f32.xlu0 %v2235
    %v2237 = vpop.xlane.xlu0 %2236
    %v2238 = vsel %vm245, %v2216, -inf
    %2239 = vmax.xlane.f32.xlu0 %v2238
    %v2240 = vpop.xlane.xlu0 %2239
    %v2241 = vsub.f32 %v2209, %v2219
    %v2242 = vsub.f32 %v2210, %v2222
    %v2243 = vsub.f32 %v2211, %v2225
    %v2244 = vsub.f32 %v2212, %v2228
    %v2245 = vsub.f32 %v2213, %v2231
    %v2246 = vsub.f32 %v2214, %v2234
    %v2247 = vsub.f32 %v2215, %v2237
    %v2248 = vsub.f32 %v2216, %v2240
    %v2249 = vmul.f32 %v2241, 1.442695
    %v2250 = vpow.pop %v2249
    %v2251 = vmul.f32 %v2242, 1.442695
    %v2252 = vpow.pop %v2251
    %v2253 = vmul.f32 %v2243, 1.442695
    %v2254 = vpow.pop %v2253
    %v2255 = vmul.f32 %v2244, 1.442695
    %v2256 = vpow.pop %v2255
    %v2257 = vmul.f32 %v2245, 1.442695
    %v2258 = vpow.pop %v2257
    %v2259 = vmul.f32 %v2246, 1.442695
    %v2260 = vpow.pop %v2259
    %v2261 = vmul.f32 %v2247, 1.442695
    %v2262 = vpow.pop %v2261
    %v2263 = vmul.f32 %v2248, 1.442695
    %v2264 = vpow.pop %v2263
    %v2265 = vsel %vm245, %v2250, 0.0
    %2266 = vadd.xlane.f32.xlu0 %v2265
    %v2267 = vpop.xlane.xlu0 %2266
    %v2268 = vsel %vm245, %v2252, 0.0
    %2269 = vadd.xlane.f32.xlu0 %v2268
    %v2270 = vpop.xlane.xlu0 %2269
    %v2271 = vsel %vm245, %v2254, 0.0
    %2272 = vadd.xlane.f32.xlu0 %v2271
    %v2273 = vpop.xlane.xlu0 %2272
    %v2274 = vsel %vm245, %v2256, 0.0
    %2275 = vadd.xlane.f32.xlu0 %v2274
    %v2276 = vpop.xlane.xlu0 %2275
    %v2277 = vsel %vm245, %v2258, 0.0
    %2278 = vadd.xlane.f32.xlu0 %v2277
    %v2279 = vpop.xlane.xlu0 %2278
    %v2280 = vsel %vm245, %v2260, 0.0
    %2281 = vadd.xlane.f32.xlu0 %v2280
    %v2282 = vpop.xlane.xlu0 %2281
    %v2283 = vsel %vm245, %v2262, 0.0
    %2284 = vadd.xlane.f32.xlu0 %v2283
    %v2285 = vpop.xlane.xlu0 %2284
    %v2286 = vsel %vm245, %v2264, 0.0
    %2287 = vadd.xlane.f32.xlu0 %v2286
    %v2288 = vpop.xlane.xlu0 %2287
    %v2289 = vlog2.pop %v2267
    %v2290 = vmul.f32 %v2289, 0.6931472
    %v2291 = vlog2.pop %v2270
    %v2292 = vmul.f32 %v2291, 0.6931472
    %v2293 = vlog2.pop %v2273
    %v2294 = vmul.f32 %v2293, 0.6931472
    %v2295 = vlog2.pop %v2276
    %v2296 = vmul.f32 %v2295, 0.6931472
    %v2297 = vlog2.pop %v2279
    %v2298 = vmul.f32 %v2297, 0.6931472
    %v2299 = vlog2.pop %v2282
    %v2300 = vmul.f32 %v2299, 0.6931472
    %v2301 = vlog2.pop %v2285
    %v2302 = vmul.f32 %v2301, 0.6931472
    %v2303 = vlog2.pop %v2288
    %v2304 = vmul.f32 %v2303, 0.6931472
    %v2305 = vadd.f32 %v2219, %v2290
    %v2306 = vadd.f32 %v2222, %v2292
    %v2307 = vadd.f32 %v2225, %v2294
    %v2308 = vadd.f32 %v2228, %v2296
    %v2309 = vadd.f32 %v2231, %v2298
    %v2310 = vadd.f32 %v2234, %v2300
    %v2311 = vadd.f32 %v2237, %v2302
    %v2312 = vadd.f32 %v2240, %v2304
    %v2313 = vsub.f32 %v2209, %v2305
    %v2314 = vsub.f32 %v2210, %v2306
    %v2315 = vsub.f32 %v2211, %v2307
    %v2316 = vsub.f32 %v2212, %v2308
    %v2317 = vsub.f32 %v2213, %v2309
    %v2318 = vsub.f32 %v2214, %v2310
    %v2319 = vsub.f32 %v2215, %v2311
    %v2320 = vsub.f32 %v2216, %v2312
    %v2321 = vsel %vm245, %v2313, -inf
    %v2322 = vsel %vm245, %v2314, -inf
    %v2323 = vmax.f32 %v2321, %v2322
    %v2324 = vrot.slane %v2323, 4
    %v2325 = vmax.f32 %v2323, %v2324
    %v2326 = vrot.slane %v2325, 2
    %v2327 = vmax.f32 %v2325, %v2326
    %v2328 = vrot.slane %v2327, 1
    %v2329 = vmax.f32 %v2327, %v2328
    %v2330 = vsel %vm245, %v2315, -inf
    %v2331 = vsel %vm245, %v2316, -inf
    %v2332 = vmax.f32 %v2330, %v2331
    %v2333 = vrot.slane %v2332, 4
    %v2334 = vmax.f32 %v2332, %v2333
    %v2335 = vrot.slane %v2334, 2
    %v2336 = vmax.f32 %v2334, %v2335
    %v2337 = vrot.slane %v2336, 1
    %v2338 = vmax.f32 %v2336, %v2337
    %v2339 = vsel %vm245, %v2317, -inf
    %v2340 = vsel %vm245, %v2318, -inf
    %v2341 = vmax.f32 %v2339, %v2340
    %v2342 = vrot.slane %v2341, 4
    %v2343 = vmax.f32 %v2341, %v2342
    %v2344 = vrot.slane %v2343, 2
    %v2345 = vmax.f32 %v2343, %v2344
    %v2346 = vrot.slane %v2345, 1
    %v2347 = vmax.f32 %v2345, %v2346
    %v2348 = vsel %vm245, %v2319, -inf
    %v2349 = vsel %vm245, %v2320, -inf
    %v2350 = vmax.f32 %v2348, %v2349
    %v2351 = vrot.slane %v2350, 4
    %v2352 = vmax.f32 %v2350, %v2351
    %v2353 = vrot.slane %v2352, 2
    %v2354 = vmax.f32 %v2352, %v2353
    %v2355 = vrot.slane %v2354, 1
    %v2356 = vmax.f32 %v2354, %v2355
    %v2357 = vsub.f32 %v2313, %v2329
    %v2358 = vsub.f32 %v2314, %v2329
    %v2359 = vsub.f32 %v2315, %v2338
    %v2360 = vsub.f32 %v2316, %v2338
    %v2361 = vsub.f32 %v2317, %v2347
    %v2362 = vsub.f32 %v2318, %v2347
    %v2363 = vsub.f32 %v2319, %v2356
    %v2364 = vsub.f32 %v2320, %v2356
    %v2365 = vmul.f32 %v2357, 1.442695
    %v2366 = vpow.pop %v2365
    %v2367 = vmul.f32 %v2358, 1.442695
    %v2368 = vpow.pop %v2367
    %v2369 = vmul.f32 %v2359, 1.442695
    %v2370 = vpow.pop %v2369
    %v2371 = vmul.f32 %v2360, 1.442695
    %v2372 = vpow.pop %v2371
    %v2373 = vmul.f32 %v2361, 1.442695
    %v2374 = vpow.pop %v2373
    %v2375 = vmul.f32 %v2362, 1.442695
    %v2376 = vpow.pop %v2375
    %v2377 = vmul.f32 %v2363, 1.442695
    %v2378 = vpow.pop %v2377
    %v2379 = vmul.f32 %v2364, 1.442695
    %v2380 = vpow.pop %v2379
    %v2381 = vsel %vm245, %v2366, 0.0
    %v2382 = vsel %vm245, %v2368, 0.0
    %v2383 = vadd.f32 %v2381, %v2382
    %v2384 = vrot.slane %v2383, 4
    %v2385 = vadd.f32 %v2383, %v2384
    %v2386 = vrot.slane %v2385, 2
    %v2387 = vadd.f32 %v2385, %v2386
    %v2388 = vrot.slane %v2387, 1
    %v2389 = vadd.f32 %v2387, %v2388
    %v2390 = vsel %vm245, %v2370, 0.0
    %v2391 = vsel %vm245, %v2372, 0.0
    %v2392 = vadd.f32 %v2390, %v2391
    %v2393 = vrot.slane %v2392, 4
    %v2394 = vadd.f32 %v2392, %v2393
    %v2395 = vrot.slane %v2394, 2
    %v2396 = vadd.f32 %v2394, %v2395
    %v2397 = vrot.slane %v2396, 1
    %v2398 = vadd.f32 %v2396, %v2397
    %v2399 = vsel %vm245, %v2374, 0.0
    %v2400 = vsel %vm245, %v2376, 0.0
    %v2401 = vadd.f32 %v2399, %v2400
    %v2402 = vrot.slane %v2401, 4
    %v2403 = vadd.f32 %v2401, %v2402
    %v2404 = vrot.slane %v2403, 2
    %v2405 = vadd.f32 %v2403, %v2404
    %v2406 = vrot.slane %v2405, 1
    %v2407 = vadd.f32 %v2405, %v2406
    %v2408 = vsel %vm245, %v2378, 0.0
    %v2409 = vsel %vm245, %v2380, 0.0
    %v2410 = vadd.f32 %v2408, %v2409
    %v2411 = vrot.slane %v2410, 4
    %v2412 = vadd.f32 %v2410, %v2411
    %v2413 = vrot.slane %v2412, 2
    %v2414 = vadd.f32 %v2412, %v2413
    %v2415 = vrot.slane %v2414, 1
    %v2416 = vadd.f32 %v2414, %v2415
    %v2417 = vlog2.pop %v2389
    %v2418 = vmul.f32 %v2417, 0.6931472
    %v2419 = vlog2.pop %v2398
    %v2420 = vmul.f32 %v2419, 0.6931472
    %v2421 = vlog2.pop %v2407
    %v2422 = vmul.f32 %v2421, 0.6931472
    %v2423 = vlog2.pop %v2416
    %v2424 = vmul.f32 %v2423, 0.6931472
    %v2425 = vadd.f32 %v2329, %v2418
    %v2426 = vadd.f32 %v2338, %v2420
    %v2427 = vadd.f32 %v2347, %v2422
    %v2428 = vadd.f32 %v2356, %v2424
    %v2429 = vsub.f32 %v2313, %v2425
    %v2430 = vsub.f32 %v2314, %v2425
    %v2431 = vsub.f32 %v2315, %v2426
    %v2432 = vsub.f32 %v2316, %v2426
    %v2433 = vsub.f32 %v2317, %v2427
    %v2434 = vsub.f32 %v2318, %v2427
    %v2435 = vsub.f32 %v2319, %v2428
    %v2436 = vsub.f32 %v2320, %v2428
    %v2437 = vsel %vm245, %v2429, -inf
    %2438 = vmax.xlane.f32.xlu0 %v2437
    %v2439 = vpop.xlane.xlu0 %2438
    %v2440 = vsel %vm245, %v2430, -inf
    %2441 = vmax.xlane.f32.xlu0 %v2440
    %v2442 = vpop.xlane.xlu0 %2441
    %v2443 = vsel %vm245, %v2431, -inf
    %2444 = vmax.xlane.f32.xlu0 %v2443
    %v2445 = vpop.xlane.xlu0 %2444
    %v2446 = vsel %vm245, %v2432, -inf
    %2447 = vmax.xlane.f32.xlu0 %v2446
    %v2448 = vpop.xlane.xlu0 %2447
    %v2449 = vsel %vm245, %v2433, -inf
    %2450 = vmax.xlane.f32.xlu0 %v2449
    %v2451 = vpop.xlane.xlu0 %2450
    %v2452 = vsel %vm245, %v2434, -inf
    %2453 = vmax.xlane.f32.xlu0 %v2452
    %v2454 = vpop.xlane.xlu0 %2453
    %v2455 = vsel %vm245, %v2435, -inf
    %2456 = vmax.xlane.f32.xlu0 %v2455
    %v2457 = vpop.xlane.xlu0 %2456
    %v2458 = vsel %vm245, %v2436, -inf
    %2459 = vmax.xlane.f32.xlu0 %v2458
    %v2460 = vpop.xlane.xlu0 %2459
    %v2461 = vsub.f32 %v2429, %v2439
    %v2462 = vsub.f32 %v2430, %v2442
    %v2463 = vsub.f32 %v2431, %v2445
    %v2464 = vsub.f32 %v2432, %v2448
    %v2465 = vsub.f32 %v2433, %v2451
    %v2466 = vsub.f32 %v2434, %v2454
    %v2467 = vsub.f32 %v2435, %v2457
    %v2468 = vsub.f32 %v2436, %v2460
    %v2469 = vmul.f32 %v2461, 1.442695
    %v2470 = vpow.pop %v2469
    %v2471 = vmul.f32 %v2462, 1.442695
    %v2472 = vpow.pop %v2471
    %v2473 = vmul.f32 %v2463, 1.442695
    %v2474 = vpow.pop %v2473
    %v2475 = vmul.f32 %v2464, 1.442695
    %v2476 = vpow.pop %v2475
    %v2477 = vmul.f32 %v2465, 1.442695
    %v2478 = vpow.pop %v2477
    %v2479 = vmul.f32 %v2466, 1.442695
    %v2480 = vpow.pop %v2479
    %v2481 = vmul.f32 %v2467, 1.442695
    %v2482 = vpow.pop %v2481
    %v2483 = vmul.f32 %v2468, 1.442695
    %v2484 = vpow.pop %v2483
    %v2485 = vsel %vm245, %v2470, 0.0
    %2486 = vadd.xlane.f32.xlu0 %v2485
    %v2487 = vpop.xlane.xlu0 %2486
    %v2488 = vsel %vm245, %v2472, 0.0
    %2489 = vadd.xlane.f32.xlu0 %v2488
    %v2490 = vpop.xlane.xlu0 %2489
    %v2491 = vsel %vm245, %v2474, 0.0
    %2492 = vadd.xlane.f32.xlu0 %v2491
    %v2493 = vpop.xlane.xlu0 %2492
    %v2494 = vsel %vm245, %v2476, 0.0
    %2495 = vadd.xlane.f32.xlu0 %v2494
    %v2496 = vpop.xlane.xlu0 %2495
    %v2497 = vsel %vm245, %v2478, 0.0
    %2498 = vadd.xlane.f32.xlu0 %v2497
    %v2499 = vpop.xlane.xlu0 %2498
    %v2500 = vsel %vm245, %v2480, 0.0
    %2501 = vadd.xlane.f32.xlu0 %v2500
    %v2502 = vpop.xlane.xlu0 %2501
    %v2503 = vsel %vm245, %v2482, 0.0
    %2504 = vadd.xlane.f32.xlu0 %v2503
    %v2505 = vpop.xlane.xlu0 %2504
    %v2506 = vsel %vm245, %v2484, 0.0
    %2507 = vadd.xlane.f32.xlu0 %v2506
    %v2508 = vpop.xlane.xlu0 %2507
    %v2509 = vlog2.pop %v2487
    %v2510 = vmul.f32 %v2509, 0.6931472
    %v2511 = vlog2.pop %v2490
    %v2512 = vmul.f32 %v2511, 0.6931472
    %v2513 = vlog2.pop %v2493
    %v2514 = vmul.f32 %v2513, 0.6931472
    %v2515 = vlog2.pop %v2496
    %v2516 = vmul.f32 %v2515, 0.6931472
    %v2517 = vlog2.pop %v2499
    %v2518 = vmul.f32 %v2517, 0.6931472
    %v2519 = vlog2.pop %v2502
    %v2520 = vmul.f32 %v2519, 0.6931472
    %v2521 = vlog2.pop %v2505
    %v2522 = vmul.f32 %v2521, 0.6931472
    %v2523 = vlog2.pop %v2508
    %v2524 = vmul.f32 %v2523, 0.6931472
    %v2525 = vadd.f32 %v2439, %v2510
    %v2526 = vadd.f32 %v2442, %v2512
    %v2527 = vadd.f32 %v2445, %v2514
    %v2528 = vadd.f32 %v2448, %v2516
    %v2529 = vadd.f32 %v2451, %v2518
    %v2530 = vadd.f32 %v2454, %v2520
    %v2531 = vadd.f32 %v2457, %v2522
    %v2532 = vadd.f32 %v2460, %v2524
    %v2533 = vsub.f32 %v2429, %v2525
    %v2534 = vsub.f32 %v2430, %v2526
    %v2535 = vsub.f32 %v2431, %v2527
    %v2536 = vsub.f32 %v2432, %v2528
    %v2537 = vsub.f32 %v2433, %v2529
    %v2538 = vsub.f32 %v2434, %v2530
    %v2539 = vsub.f32 %v2435, %v2531
    %v2540 = vsub.f32 %v2436, %v2532
    %v2541 = vsel %vm245, %v2533, -inf
    %v2542 = vsel %vm245, %v2534, -inf
    %v2543 = vmax.f32 %v2541, %v2542
    %v2544 = vrot.slane %v2543, 4
    %v2545 = vmax.f32 %v2543, %v2544
    %v2546 = vrot.slane %v2545, 2
    %v2547 = vmax.f32 %v2545, %v2546
    %v2548 = vrot.slane %v2547, 1
    %v2549 = vmax.f32 %v2547, %v2548
    %v2550 = vsel %vm245, %v2535, -inf
    %v2551 = vsel %vm245, %v2536, -inf
    %v2552 = vmax.f32 %v2550, %v2551
    %v2553 = vrot.slane %v2552, 4
    %v2554 = vmax.f32 %v2552, %v2553
    %v2555 = vrot.slane %v2554, 2
    %v2556 = vmax.f32 %v2554, %v2555
    %v2557 = vrot.slane %v2556, 1
    %v2558 = vmax.f32 %v2556, %v2557
    %v2559 = vsel %vm245, %v2537, -inf
    %v2560 = vsel %vm245, %v2538, -inf
    %v2561 = vmax.f32 %v2559, %v2560
    %v2562 = vrot.slane %v2561, 4
    %v2563 = vmax.f32 %v2561, %v2562
    %v2564 = vrot.slane %v2563, 2
    %v2565 = vmax.f32 %v2563, %v2564
    %v2566 = vrot.slane %v2565, 1
    %v2567 = vmax.f32 %v2565, %v2566
    %v2568 = vsel %vm245, %v2539, -inf
    %v2569 = vsel %vm245, %v2540, -inf
    %v2570 = vmax.f32 %v2568, %v2569
    %v2571 = vrot.slane %v2570, 4
    %v2572 = vmax.f32 %v2570, %v2571
    %v2573 = vrot.slane %v2572, 2
    %v2574 = vmax.f32 %v2572, %v2573
    %v2575 = vrot.slane %v2574, 1
    %v2576 = vmax.f32 %v2574, %v2575
    %v2577 = vsub.f32 %v2533, %v2549
    %v2578 = vsub.f32 %v2534, %v2549
    %v2579 = vsub.f32 %v2535, %v2558
    %v2580 = vsub.f32 %v2536, %v2558
    %v2581 = vsub.f32 %v2537, %v2567
    %v2582 = vsub.f32 %v2538, %v2567
    %v2583 = vsub.f32 %v2539, %v2576
    %v2584 = vsub.f32 %v2540, %v2576
    %v2585 = vmul.f32 %v2577, 1.442695
    %v2586 = vpow.pop %v2585
    %v2587 = vmul.f32 %v2578, 1.442695
    %v2588 = vpow.pop %v2587
    %v2589 = vmul.f32 %v2579, 1.442695
    %v2590 = vpow.pop %v2589
    %v2591 = vmul.f32 %v2580, 1.442695
    %v2592 = vpow.pop %v2591
    %v2593 = vmul.f32 %v2581, 1.442695
    %v2594 = vpow.pop %v2593
    %v2595 = vmul.f32 %v2582, 1.442695
    %v2596 = vpow.pop %v2595
    %v2597 = vmul.f32 %v2583, 1.442695
    %v2598 = vpow.pop %v2597
    %v2599 = vmul.f32 %v2584, 1.442695
    %v2600 = vpow.pop %v2599
    %v2601 = vsel %vm245, %v2586, 0.0
    %v2602 = vsel %vm245, %v2588, 0.0
    %v2603 = vadd.f32 %v2601, %v2602
    %v2604 = vrot.slane %v2603, 4
    %v2605 = vadd.f32 %v2603, %v2604
    %v2606 = vrot.slane %v2605, 2
    %v2607 = vadd.f32 %v2605, %v2606
    %v2608 = vrot.slane %v2607, 1
    %v2609 = vadd.f32 %v2607, %v2608
    %v2610 = vsel %vm245, %v2590, 0.0
    %v2611 = vsel %vm245, %v2592, 0.0
    %v2612 = vadd.f32 %v2610, %v2611
    %v2613 = vrot.slane %v2612, 4
    %v2614 = vadd.f32 %v2612, %v2613
    %v2615 = vrot.slane %v2614, 2
    %v2616 = vadd.f32 %v2614, %v2615
    %v2617 = vrot.slane %v2616, 1
    %v2618 = vadd.f32 %v2616, %v2617
    %v2619 = vsel %vm245, %v2594, 0.0
    %v2620 = vsel %vm245, %v2596, 0.0
    %v2621 = vadd.f32 %v2619, %v2620
    %v2622 = vrot.slane %v2621, 4
    %v2623 = vadd.f32 %v2621, %v2622
    %v2624 = vrot.slane %v2623, 2
    %v2625 = vadd.f32 %v2623, %v2624
    %v2626 = vrot.slane %v2625, 1
    %v2627 = vadd.f32 %v2625, %v2626
    %v2628 = vsel %vm245, %v2598, 0.0
    %v2629 = vsel %vm245, %v2600, 0.0
    %v2630 = vadd.f32 %v2628, %v2629
    %v2631 = vrot.slane %v2630, 4
    %v2632 = vadd.f32 %v2630, %v2631
    %v2633 = vrot.slane %v2632, 2
    %v2634 = vadd.f32 %v2632, %v2633
    %v2635 = vrot.slane %v2634, 1
    %v2636 = vadd.f32 %v2634, %v2635
    %v2637 = vlog2.pop %v2609
    %v2638 = vmul.f32 %v2637, 0.6931472
    %v2639 = vlog2.pop %v2618
    %v2640 = vmul.f32 %v2639, 0.6931472
    %v2641 = vlog2.pop %v2627
    %v2642 = vmul.f32 %v2641, 0.6931472
    %v2643 = vlog2.pop %v2636
    %v2644 = vmul.f32 %v2643, 0.6931472
    %v2645 = vadd.f32 %v2549, %v2638
    %v2646 = vadd.f32 %v2558, %v2640
    %v2647 = vadd.f32 %v2567, %v2642
    %v2648 = vadd.f32 %v2576, %v2644
    %v2649 = vsub.f32 %v2533, %v2645
    %v2650 = vsub.f32 %v2534, %v2645
    %v2651 = vsub.f32 %v2535, %v2646
    %v2652 = vsub.f32 %v2536, %v2646
    %v2653 = vsub.f32 %v2537, %v2647
    %v2654 = vsub.f32 %v2538, %v2647
    %v2655 = vsub.f32 %v2539, %v2648
    %v2656 = vsub.f32 %v2540, %v2648
    %v2657 = vsel %vm245, %v2649, -inf
    %2658 = vmax.xlane.f32.xlu0 %v2657
    %v2659 = vpop.xlane.xlu0 %2658
    %v2660 = vsel %vm245, %v2650, -inf
    %2661 = vmax.xlane.f32.xlu0 %v2660
    %v2662 = vpop.xlane.xlu0 %2661
    %v2663 = vsel %vm245, %v2651, -inf
    %2664 = vmax.xlane.f32.xlu0 %v2663
    %v2665 = vpop.xlane.xlu0 %2664
    %v2666 = vsel %vm245, %v2652, -inf
    %2667 = vmax.xlane.f32.xlu0 %v2666
    %v2668 = vpop.xlane.xlu0 %2667
    %v2669 = vsel %vm245, %v2653, -inf
    %2670 = vmax.xlane.f32.xlu0 %v2669
    %v2671 = vpop.xlane.xlu0 %2670
    %v2672 = vsel %vm245, %v2654, -inf
    %2673 = vmax.xlane.f32.xlu0 %v2672
    %v2674 = vpop.xlane.xlu0 %2673
    %v2675 = vsel %vm245, %v2655, -inf
    %2676 = vmax.xlane.f32.xlu0 %v2675
    %v2677 = vpop.xlane.xlu0 %2676
    %v2678 = vsel %vm245, %v2656, -inf
    %2679 = vmax.xlane.f32.xlu0 %v2678
    %v2680 = vpop.xlane.xlu0 %2679
    %v2681 = vsub.f32 %v2649, %v2659
    %v2682 = vsub.f32 %v2650, %v2662
    %v2683 = vsub.f32 %v2651, %v2665
    %v2684 = vsub.f32 %v2652, %v2668
    %v2685 = vsub.f32 %v2653, %v2671
    %v2686 = vsub.f32 %v2654, %v2674
    %v2687 = vsub.f32 %v2655, %v2677
    %v2688 = vsub.f32 %v2656, %v2680
    %v2689 = vmul.f32 %v2681, 1.442695
    %v2690 = vpow.pop %v2689
    %v2691 = vmul.f32 %v2682, 1.442695
    %v2692 = vpow.pop %v2691
    %v2693 = vmul.f32 %v2683, 1.442695
    %v2694 = vpow.pop %v2693
    %v2695 = vmul.f32 %v2684, 1.442695
    %v2696 = vpow.pop %v2695
    %v2697 = vmul.f32 %v2685, 1.442695
    %v2698 = vpow.pop %v2697
    %v2699 = vmul.f32 %v2686, 1.442695
    %v2700 = vpow.pop %v2699
    %v2701 = vmul.f32 %v2687, 1.442695
    %v2702 = vpow.pop %v2701
    %v2703 = vmul.f32 %v2688, 1.442695
    %v2704 = vpow.pop %v2703
    %v2705 = vsel %vm245, %v2690, 0.0
    %2706 = vadd.xlane.f32.xlu0 %v2705
    %v2707 = vpop.xlane.xlu0 %2706
    %v2708 = vsel %vm245, %v2692, 0.0
    %2709 = vadd.xlane.f32.xlu0 %v2708
    %v2710 = vpop.xlane.xlu0 %2709
    %v2711 = vsel %vm245, %v2694, 0.0
    %2712 = vadd.xlane.f32.xlu0 %v2711
    %v2713 = vpop.xlane.xlu0 %2712
    %v2714 = vsel %vm245, %v2696, 0.0
    %2715 = vadd.xlane.f32.xlu0 %v2714
    %v2716 = vpop.xlane.xlu0 %2715
    %v2717 = vsel %vm245, %v2698, 0.0
    %2718 = vadd.xlane.f32.xlu0 %v2717
    %v2719 = vpop.xlane.xlu0 %2718
    %v2720 = vsel %vm245, %v2700, 0.0
    %2721 = vadd.xlane.f32.xlu0 %v2720
    %v2722 = vpop.xlane.xlu0 %2721
    %v2723 = vsel %vm245, %v2702, 0.0
    %2724 = vadd.xlane.f32.xlu0 %v2723
    %v2725 = vpop.xlane.xlu0 %2724
    %v2726 = vsel %vm245, %v2704, 0.0
    %2727 = vadd.xlane.f32.xlu0 %v2726
    %v2728 = vpop.xlane.xlu0 %2727
    %v2729 = vlog2.pop %v2707
    %v2730 = vmul.f32 %v2729, 0.6931472
    %v2731 = vlog2.pop %v2710
    %v2732 = vmul.f32 %v2731, 0.6931472
    %v2733 = vlog2.pop %v2713
    %v2734 = vmul.f32 %v2733, 0.6931472
    %v2735 = vlog2.pop %v2716
    %v2736 = vmul.f32 %v2735, 0.6931472
    %v2737 = vlog2.pop %v2719
    %v2738 = vmul.f32 %v2737, 0.6931472
    %v2739 = vlog2.pop %v2722
    %v2740 = vmul.f32 %v2739, 0.6931472
    %v2741 = vlog2.pop %v2725
    %v2742 = vmul.f32 %v2741, 0.6931472
    %v2743 = vlog2.pop %v2728
    %v2744 = vmul.f32 %v2743, 0.6931472
    %v2745 = vadd.f32 %v2659, %v2730
    %v2746 = vadd.f32 %v2662, %v2732
    %v2747 = vadd.f32 %v2665, %v2734
    %v2748 = vadd.f32 %v2668, %v2736
    %v2749 = vadd.f32 %v2671, %v2738
    %v2750 = vadd.f32 %v2674, %v2740
    %v2751 = vadd.f32 %v2677, %v2742
    %v2752 = vadd.f32 %v2680, %v2744
    %v2753 = vsub.f32 %v2649, %v2745
    %v2754 = vsub.f32 %v2650, %v2746
    %v2755 = vsub.f32 %v2651, %v2747
    %v2756 = vsub.f32 %v2652, %v2748
    %v2757 = vsub.f32 %v2653, %v2749
    %v2758 = vsub.f32 %v2654, %v2750
    %v2759 = vsub.f32 %v2655, %v2751
    %v2760 = vsub.f32 %v2656, %v2752
    %v2761 = vsel %vm245, %v2753, -inf
    %v2762 = vsel %vm245, %v2754, -inf
    %v2763 = vmax.f32 %v2761, %v2762
    %v2764 = vrot.slane %v2763, 4
    %v2765 = vmax.f32 %v2763, %v2764
    %v2766 = vrot.slane %v2765, 2
    %v2767 = vmax.f32 %v2765, %v2766
    %v2768 = vrot.slane %v2767, 1
    %v2769 = vmax.f32 %v2767, %v2768
    %v2770 = vsel %vm245, %v2755, -inf
    %v2771 = vsel %vm245, %v2756, -inf
    %v2772 = vmax.f32 %v2770, %v2771
    %v2773 = vrot.slane %v2772, 4
    %v2774 = vmax.f32 %v2772, %v2773
    %v2775 = vrot.slane %v2774, 2
    %v2776 = vmax.f32 %v2774, %v2775
    %v2777 = vrot.slane %v2776, 1
    %v2778 = vmax.f32 %v2776, %v2777
    %v2779 = vsel %vm245, %v2757, -inf
    %v2780 = vsel %vm245, %v2758, -inf
    %v2781 = vmax.f32 %v2779, %v2780
    %v2782 = vrot.slane %v2781, 4
    %v2783 = vmax.f32 %v2781, %v2782
    %v2784 = vrot.slane %v2783, 2
    %v2785 = vmax.f32 %v2783, %v2784
    %v2786 = vrot.slane %v2785, 1
    %v2787 = vmax.f32 %v2785, %v2786
    %v2788 = vsel %vm245, %v2759, -inf
    %v2789 = vsel %vm245, %v2760, -inf
    %v2790 = vmax.f32 %v2788, %v2789
    %v2791 = vrot.slane %v2790, 4
    %v2792 = vmax.f32 %v2790, %v2791
    %v2793 = vrot.slane %v2792, 2
    %v2794 = vmax.f32 %v2792, %v2793
    %v2795 = vrot.slane %v2794, 1
    %v2796 = vmax.f32 %v2794, %v2795
    %v2797 = vsub.f32 %v2753, %v2769
    %v2798 = vsub.f32 %v2754, %v2769
    %v2799 = vsub.f32 %v2755, %v2778
    %v2800 = vsub.f32 %v2756, %v2778
    %v2801 = vsub.f32 %v2757, %v2787
    %v2802 = vsub.f32 %v2758, %v2787
    %v2803 = vsub.f32 %v2759, %v2796
    %v2804 = vsub.f32 %v2760, %v2796
    %v2805 = vmul.f32 %v2797, 1.442695
    %v2806 = vpow.pop %v2805
    %v2807 = vmul.f32 %v2798, 1.442695
    %v2808 = vpow.pop %v2807
    %v2809 = vmul.f32 %v2799, 1.442695
    %v2810 = vpow.pop %v2809
    %v2811 = vmul.f32 %v2800, 1.442695
    %v2812 = vpow.pop %v2811
    %v2813 = vmul.f32 %v2801, 1.442695
    %v2814 = vpow.pop %v2813
    %v2815 = vmul.f32 %v2802, 1.442695
    %v2816 = vpow.pop %v2815
    %v2817 = vmul.f32 %v2803, 1.442695
    %v2818 = vpow.pop %v2817
    %v2819 = vmul.f32 %v2804, 1.442695
    %v2820 = vpow.pop %v2819
    %v2821 = vsel %vm245, %v2806, 0.0
    %v2822 = vsel %vm245, %v2808, 0.0
    %v2823 = vadd.f32 %v2821, %v2822
    %v2824 = vrot.slane %v2823, 4
    %v2825 = vadd.f32 %v2823, %v2824
    %v2826 = vrot.slane %v2825, 2
    %v2827 = vadd.f32 %v2825, %v2826
    %v2828 = vrot.slane %v2827, 1
    %v2829 = vadd.f32 %v2827, %v2828
    %v2830 = vsel %vm245, %v2810, 0.0
    %v2831 = vsel %vm245, %v2812, 0.0
    %v2832 = vadd.f32 %v2830, %v2831
    %v2833 = vrot.slane %v2832, 4
    %v2834 = vadd.f32 %v2832, %v2833
    %v2835 = vrot.slane %v2834, 2
    %v2836 = vadd.f32 %v2834, %v2835
    %v2837 = vrot.slane %v2836, 1
    %v2838 = vadd.f32 %v2836, %v2837
    %v2839 = vsel %vm245, %v2814, 0.0
    %v2840 = vsel %vm245, %v2816, 0.0
    %v2841 = vadd.f32 %v2839, %v2840
    %v2842 = vrot.slane %v2841, 4
    %v2843 = vadd.f32 %v2841, %v2842
    %v2844 = vrot.slane %v2843, 2
    %v2845 = vadd.f32 %v2843, %v2844
    %v2846 = vrot.slane %v2845, 1
    %v2847 = vadd.f32 %v2845, %v2846
    %v2848 = vsel %vm245, %v2818, 0.0
    %v2849 = vsel %vm245, %v2820, 0.0
    %v2850 = vadd.f32 %v2848, %v2849
    %v2851 = vrot.slane %v2850, 4
    %v2852 = vadd.f32 %v2850, %v2851
    %v2853 = vrot.slane %v2852, 2
    %v2854 = vadd.f32 %v2852, %v2853
    %v2855 = vrot.slane %v2854, 1
    %v2856 = vadd.f32 %v2854, %v2855
    %v2857 = vlog2.pop %v2829
    %v2858 = vmul.f32 %v2857, 0.6931472
    %v2859 = vlog2.pop %v2838
    %v2860 = vmul.f32 %v2859, 0.6931472
    %v2861 = vlog2.pop %v2847
    %v2862 = vmul.f32 %v2861, 0.6931472
    %v2863 = vlog2.pop %v2856
    %v2864 = vmul.f32 %v2863, 0.6931472
    %v2865 = vadd.f32 %v2769, %v2858
    %v2866 = vadd.f32 %v2778, %v2860
    %v2867 = vadd.f32 %v2787, %v2862
    %v2868 = vadd.f32 %v2796, %v2864
    %v2869 = vsub.f32 %v2753, %v2865
    %v2870 = vsub.f32 %v2754, %v2865
    %v2871 = vsub.f32 %v2755, %v2866
    %v2872 = vsub.f32 %v2756, %v2866
    %v2873 = vsub.f32 %v2757, %v2867
    %v2874 = vsub.f32 %v2758, %v2867
    %v2875 = vsub.f32 %v2759, %v2868
    %v2876 = vsub.f32 %v2760, %v2868
    %v2877 = vsel %vm245, %v2869, -inf
    %2878 = vmax.xlane.f32.xlu0 %v2877
    %v2879 = vpop.xlane.xlu0 %2878
    %v2880 = vsel %vm245, %v2870, -inf
    %2881 = vmax.xlane.f32.xlu0 %v2880
    %v2882 = vpop.xlane.xlu0 %2881
    %v2883 = vsel %vm245, %v2871, -inf
    %2884 = vmax.xlane.f32.xlu0 %v2883
    %v2885 = vpop.xlane.xlu0 %2884
    %v2886 = vsel %vm245, %v2872, -inf
    %2887 = vmax.xlane.f32.xlu0 %v2886
    %v2888 = vpop.xlane.xlu0 %2887
    %v2889 = vsel %vm245, %v2873, -inf
    %2890 = vmax.xlane.f32.xlu0 %v2889
    %v2891 = vpop.xlane.xlu0 %2890
    %v2892 = vsel %vm245, %v2874, -inf
    %2893 = vmax.xlane.f32.xlu0 %v2892
    %v2894 = vpop.xlane.xlu0 %2893
    %v2895 = vsel %vm245, %v2875, -inf
    %2896 = vmax.xlane.f32.xlu0 %v2895
    %v2897 = vpop.xlane.xlu0 %2896
    %v2898 = vsel %vm245, %v2876, -inf
    %2899 = vmax.xlane.f32.xlu0 %v2898
    %v2900 = vpop.xlane.xlu0 %2899
    %v2901 = vsub.f32 %v2869, %v2879
    %v2902 = vsub.f32 %v2870, %v2882
    %v2903 = vsub.f32 %v2871, %v2885
    %v2904 = vsub.f32 %v2872, %v2888
    %v2905 = vsub.f32 %v2873, %v2891
    %v2906 = vsub.f32 %v2874, %v2894
    %v2907 = vsub.f32 %v2875, %v2897
    %v2908 = vsub.f32 %v2876, %v2900
    %v2909 = vmul.f32 %v2901, 1.442695
    %v2910 = vpow.pop %v2909
    %v2911 = vmul.f32 %v2902, 1.442695
    %v2912 = vpow.pop %v2911
    %v2913 = vmul.f32 %v2903, 1.442695
    %v2914 = vpow.pop %v2913
    %v2915 = vmul.f32 %v2904, 1.442695
    %v2916 = vpow.pop %v2915
    %v2917 = vmul.f32 %v2905, 1.442695
    %v2918 = vpow.pop %v2917
    %v2919 = vmul.f32 %v2906, 1.442695
    %v2920 = vpow.pop %v2919
    %v2921 = vmul.f32 %v2907, 1.442695
    %v2922 = vpow.pop %v2921
    %v2923 = vmul.f32 %v2908, 1.442695
    %v2924 = vpow.pop %v2923
    %v2925 = vsel %vm245, %v2910, 0.0
    %2926 = vadd.xlane.f32.xlu0 %v2925
    %v2927 = vpop.xlane.xlu0 %2926
    %v2928 = vsel %vm245, %v2912, 0.0
    %2929 = vadd.xlane.f32.xlu0 %v2928
    %v2930 = vpop.xlane.xlu0 %2929
    %v2931 = vsel %vm245, %v2914, 0.0
    %2932 = vadd.xlane.f32.xlu0 %v2931
    %v2933 = vpop.xlane.xlu0 %2932
    %v2934 = vsel %vm245, %v2916, 0.0
    %2935 = vadd.xlane.f32.xlu0 %v2934
    %v2936 = vpop.xlane.xlu0 %2935
    %v2937 = vsel %vm245, %v2918, 0.0
    %2938 = vadd.xlane.f32.xlu0 %v2937
    %v2939 = vpop.xlane.xlu0 %2938
    %v2940 = vsel %vm245, %v2920, 0.0
    %2941 = vadd.xlane.f32.xlu0 %v2940
    %v2942 = vpop.xlane.xlu0 %2941
    %v2943 = vsel %vm245, %v2922, 0.0
    %2944 = vadd.xlane.f32.xlu0 %v2943
    %v2945 = vpop.xlane.xlu0 %2944
    %v2946 = vsel %vm245, %v2924, 0.0
    %2947 = vadd.xlane.f32.xlu0 %v2946
    %v2948 = vpop.xlane.xlu0 %2947
    %v2949 = vlog2.pop %v2927
    %v2950 = vmul.f32 %v2949, 0.6931472
    %v2951 = vlog2.pop %v2930
    %v2952 = vmul.f32 %v2951, 0.6931472
    %v2953 = vlog2.pop %v2933
    %v2954 = vmul.f32 %v2953, 0.6931472
    %v2955 = vlog2.pop %v2936
    %v2956 = vmul.f32 %v2955, 0.6931472
    %v2957 = vlog2.pop %v2939
    %v2958 = vmul.f32 %v2957, 0.6931472
    %v2959 = vlog2.pop %v2942
    %v2960 = vmul.f32 %v2959, 0.6931472
    %v2961 = vlog2.pop %v2945
    %v2962 = vmul.f32 %v2961, 0.6931472
    %v2963 = vlog2.pop %v2948
    %v2964 = vmul.f32 %v2963, 0.6931472
    %v2965 = vadd.f32 %v2879, %v2950
    %v2966 = vadd.f32 %v2882, %v2952
    %v2967 = vadd.f32 %v2885, %v2954
    %v2968 = vadd.f32 %v2888, %v2956
    %v2969 = vadd.f32 %v2891, %v2958
    %v2970 = vadd.f32 %v2894, %v2960
    %v2971 = vadd.f32 %v2897, %v2962
    %v2972 = vadd.f32 %v2900, %v2964
    %v2973 = vsub.f32 %v2869, %v2965
    %v2974 = vsub.f32 %v2870, %v2966
    %v2975 = vsub.f32 %v2871, %v2967
    %v2976 = vsub.f32 %v2872, %v2968
    %v2977 = vsub.f32 %v2873, %v2969
    %v2978 = vsub.f32 %v2874, %v2970
    %v2979 = vsub.f32 %v2875, %v2971
    %v2980 = vsub.f32 %v2876, %v2972
    %v2981 = vsel %vm245, %v2973, -inf
    %v2982 = vsel %vm245, %v2974, -inf
    %v2983 = vmax.f32 %v2981, %v2982
    %v2984 = vrot.slane %v2983, 4
    %v2985 = vmax.f32 %v2983, %v2984
    %v2986 = vrot.slane %v2985, 2
    %v2987 = vmax.f32 %v2985, %v2986
    %v2988 = vrot.slane %v2987, 1
    %v2989 = vmax.f32 %v2987, %v2988
    %v2990 = vsel %vm245, %v2975, -inf
    %v2991 = vsel %vm245, %v2976, -inf
    %v2992 = vmax.f32 %v2990, %v2991
    %v2993 = vrot.slane %v2992, 4
    %v2994 = vmax.f32 %v2992, %v2993
    %v2995 = vrot.slane %v2994, 2
    %v2996 = vmax.f32 %v2994, %v2995
    %v2997 = vrot.slane %v2996, 1
    %v2998 = vmax.f32 %v2996, %v2997
    %v2999 = vsel %vm245, %v2977, -inf
    %v3000 = vsel %vm245, %v2978, -inf
    %v3001 = vmax.f32 %v2999, %v3000
    %v3002 = vrot.slane %v3001, 4
    %v3003 = vmax.f32 %v3001, %v3002
    %v3004 = vrot.slane %v3003, 2
    %v3005 = vmax.f32 %v3003, %v3004
    %v3006 = vrot.slane %v3005, 1
    %v3007 = vmax.f32 %v3005, %v3006
    %v3008 = vsel %vm245, %v2979, -inf
    %v3009 = vsel %vm245, %v2980, -inf
    %v3010 = vmax.f32 %v3008, %v3009
    %v3011 = vrot.slane %v3010, 4
    %v3012 = vmax.f32 %v3010, %v3011
    %v3013 = vrot.slane %v3012, 2
    %v3014 = vmax.f32 %v3012, %v3013
    %v3015 = vrot.slane %v3014, 1
    %v3016 = vmax.f32 %v3014, %v3015
    %v3017 = vsub.f32 %v2973, %v2989
    %v3018 = vsub.f32 %v2974, %v2989
    %v3019 = vsub.f32 %v2975, %v2998
    %v3020 = vsub.f32 %v2976, %v2998
    %v3021 = vsub.f32 %v2977, %v3007
    %v3022 = vsub.f32 %v2978, %v3007
    %v3023 = vsub.f32 %v2979, %v3016
    %v3024 = vsub.f32 %v2980, %v3016
    %v3025 = vmul.f32 %v3017, 1.442695
    %v3026 = vpow.pop %v3025
    %v3027 = vmul.f32 %v3018, 1.442695
    %v3028 = vpow.pop %v3027
    %v3029 = vmul.f32 %v3019, 1.442695
    %v3030 = vpow.pop %v3029
    %v3031 = vmul.f32 %v3020, 1.442695
    %v3032 = vpow.pop %v3031
    %v3033 = vmul.f32 %v3021, 1.442695
    %v3034 = vpow.pop %v3033
    %v3035 = vmul.f32 %v3022, 1.442695
    %v3036 = vpow.pop %v3035
    %v3037 = vmul.f32 %v3023, 1.442695
    %v3038 = vpow.pop %v3037
    %v3039 = vmul.f32 %v3024, 1.442695
    %v3040 = vpow.pop %v3039
    %v3041 = vsel %vm245, %v3026, 0.0
    %v3042 = vsel %vm245, %v3028, 0.0
    %v3043 = vadd.f32 %v3041, %v3042
    %v3044 = vrot.slane %v3043, 4
    %v3045 = vadd.f32 %v3043, %v3044
    %v3046 = vrot.slane %v3045, 2
    %v3047 = vadd.f32 %v3045, %v3046
    %v3048 = vrot.slane %v3047, 1
    %v3049 = vadd.f32 %v3047, %v3048
    %v3050 = vsel %vm245, %v3030, 0.0
    %v3051 = vsel %vm245, %v3032, 0.0
    %v3052 = vadd.f32 %v3050, %v3051
    %v3053 = vrot.slane %v3052, 4
    %v3054 = vadd.f32 %v3052, %v3053
    %v3055 = vrot.slane %v3054, 2
    %v3056 = vadd.f32 %v3054, %v3055
    %v3057 = vrot.slane %v3056, 1
    %v3058 = vadd.f32 %v3056, %v3057
    %v3059 = vsel %vm245, %v3034, 0.0
    %v3060 = vsel %vm245, %v3036, 0.0
    %v3061 = vadd.f32 %v3059, %v3060
    %v3062 = vrot.slane %v3061, 4
    %v3063 = vadd.f32 %v3061, %v3062
    %v3064 = vrot.slane %v3063, 2
    %v3065 = vadd.f32 %v3063, %v3064
    %v3066 = vrot.slane %v3065, 1
    %v3067 = vadd.f32 %v3065, %v3066
    %v3068 = vsel %vm245, %v3038, 0.0
    %v3069 = vsel %vm245, %v3040, 0.0
    %v3070 = vadd.f32 %v3068, %v3069
    %v3071 = vrot.slane %v3070, 4
    %v3072 = vadd.f32 %v3070, %v3071
    %v3073 = vrot.slane %v3072, 2
    %v3074 = vadd.f32 %v3072, %v3073
    %v3075 = vrot.slane %v3074, 1
    %v3076 = vadd.f32 %v3074, %v3075
    %v3077 = vlog2.pop %v3049
    %v3078 = vmul.f32 %v3077, 0.6931472
    %v3079 = vlog2.pop %v3058
    %v3080 = vmul.f32 %v3079, 0.6931472
    %v3081 = vlog2.pop %v3067
    %v3082 = vmul.f32 %v3081, 0.6931472
    %v3083 = vlog2.pop %v3076
    %v3084 = vmul.f32 %v3083, 0.6931472
    %v3085 = vadd.f32 %v2989, %v3078
    %v3086 = vadd.f32 %v2998, %v3080
    %v3087 = vadd.f32 %v3007, %v3082
    %v3088 = vadd.f32 %v3016, %v3084
    %v3089 = vsub.f32 %v2973, %v3085
    %v3090 = vsub.f32 %v2974, %v3085
    %v3091 = vsub.f32 %v2975, %v3086
    %v3092 = vsub.f32 %v2976, %v3086
    %v3093 = vsub.f32 %v2977, %v3087
    %v3094 = vsub.f32 %v2978, %v3087
    %v3095 = vsub.f32 %v2979, %v3088
    %v3096 = vsub.f32 %v2980, %v3088
    %v3097 = vsel %vm245, %v3089, -inf
    %3098 = vmax.xlane.f32.xlu0 %v3097
    %v3099 = vpop.xlane.xlu0 %3098
    %v3100 = vsel %vm245, %v3090, -inf
    %3101 = vmax.xlane.f32.xlu0 %v3100
    %v3102 = vpop.xlane.xlu0 %3101
    %v3103 = vsel %vm245, %v3091, -inf
    %3104 = vmax.xlane.f32.xlu0 %v3103
    %v3105 = vpop.xlane.xlu0 %3104
    %v3106 = vsel %vm245, %v3092, -inf
    %3107 = vmax.xlane.f32.xlu0 %v3106
    %v3108 = vpop.xlane.xlu0 %3107
    %v3109 = vsel %vm245, %v3093, -inf
    %3110 = vmax.xlane.f32.xlu0 %v3109
    %v3111 = vpop.xlane.xlu0 %3110
    %v3112 = vsel %vm245, %v3094, -inf
    %3113 = vmax.xlane.f32.xlu0 %v3112
    %v3114 = vpop.xlane.xlu0 %3113
    %v3115 = vsel %vm245, %v3095, -inf
    %3116 = vmax.xlane.f32.xlu0 %v3115
    %v3117 = vpop.xlane.xlu0 %3116
    %v3118 = vsel %vm245, %v3096, -inf
    %3119 = vmax.xlane.f32.xlu0 %v3118
    %v3120 = vpop.xlane.xlu0 %3119
    %v3121 = vsub.f32 %v3089, %v3099
    %v3122 = vsub.f32 %v3090, %v3102
    %v3123 = vsub.f32 %v3091, %v3105
    %v3124 = vsub.f32 %v3092, %v3108
    %v3125 = vsub.f32 %v3093, %v3111
    %v3126 = vsub.f32 %v3094, %v3114
    %v3127 = vsub.f32 %v3095, %v3117
    %v3128 = vsub.f32 %v3096, %v3120
    %v3129 = vmul.f32 %v3121, 1.442695
    %v3130 = vpow.pop %v3129
    %v3131 = vmul.f32 %v3122, 1.442695
    %v3132 = vpow.pop %v3131
    %v3133 = vmul.f32 %v3123, 1.442695
    %v3134 = vpow.pop %v3133
    %v3135 = vmul.f32 %v3124, 1.442695
    %v3136 = vpow.pop %v3135
    %v3137 = vmul.f32 %v3125, 1.442695
    %v3138 = vpow.pop %v3137
    %v3139 = vmul.f32 %v3126, 1.442695
    %v3140 = vpow.pop %v3139
    %v3141 = vmul.f32 %v3127, 1.442695
    %v3142 = vpow.pop %v3141
    %v3143 = vmul.f32 %v3128, 1.442695
    %v3144 = vpow.pop %v3143
    %v3145 = vsel %vm245, %v3130, 0.0
    %3146 = vadd.xlane.f32.xlu0 %v3145
    %v3147 = vpop.xlane.xlu0 %3146
    %v3148 = vsel %vm245, %v3132, 0.0
    %3149 = vadd.xlane.f32.xlu0 %v3148
    %v3150 = vpop.xlane.xlu0 %3149
    %v3151 = vsel %vm245, %v3134, 0.0
    %3152 = vadd.xlane.f32.xlu0 %v3151
    %v3153 = vpop.xlane.xlu0 %3152
    %v3154 = vsel %vm245, %v3136, 0.0
    %3155 = vadd.xlane.f32.xlu0 %v3154
    %v3156 = vpop.xlane.xlu0 %3155
    %v3157 = vsel %vm245, %v3138, 0.0
    %3158 = vadd.xlane.f32.xlu0 %v3157
    %v3159 = vpop.xlane.xlu0 %3158
    %v3160 = vsel %vm245, %v3140, 0.0
    %3161 = vadd.xlane.f32.xlu0 %v3160
    %v3162 = vpop.xlane.xlu0 %3161
    %v3163 = vsel %vm245, %v3142, 0.0
    %3164 = vadd.xlane.f32.xlu0 %v3163
    %v3165 = vpop.xlane.xlu0 %3164
    %v3166 = vsel %vm245, %v3144, 0.0
    %3167 = vadd.xlane.f32.xlu0 %v3166
    %v3168 = vpop.xlane.xlu0 %3167
    %v3169 = vlog2.pop %v3147
    %v3170 = vmul.f32 %v3169, 0.6931472
    %v3171 = vlog2.pop %v3150
    %v3172 = vmul.f32 %v3171, 0.6931472
    %v3173 = vlog2.pop %v3153
    %v3174 = vmul.f32 %v3173, 0.6931472
    %v3175 = vlog2.pop %v3156
    %v3176 = vmul.f32 %v3175, 0.6931472
    %v3177 = vlog2.pop %v3159
    %v3178 = vmul.f32 %v3177, 0.6931472
    %v3179 = vlog2.pop %v3162
    %v3180 = vmul.f32 %v3179, 0.6931472
    %v3181 = vlog2.pop %v3165
    %v3182 = vmul.f32 %v3181, 0.6931472
    %v3183 = vlog2.pop %v3168
    %v3184 = vmul.f32 %v3183, 0.6931472
    %v3185 = vadd.f32 %v3099, %v3170
    %v3186 = vadd.f32 %v3102, %v3172
    %v3187 = vadd.f32 %v3105, %v3174
    %v3188 = vadd.f32 %v3108, %v3176
    %v3189 = vadd.f32 %v3111, %v3178
    %v3190 = vadd.f32 %v3114, %v3180
    %v3191 = vadd.f32 %v3117, %v3182
    %v3192 = vadd.f32 %v3120, %v3184
    %v3193 = vsub.f32 %v3089, %v3185
    %v3194 = vsub.f32 %v3090, %v3186
    %v3195 = vsub.f32 %v3091, %v3187
    %v3196 = vsub.f32 %v3092, %v3188
    %v3197 = vsub.f32 %v3093, %v3189
    %v3198 = vsub.f32 %v3094, %v3190
    %v3199 = vsub.f32 %v3095, %v3191
    %v3200 = vsub.f32 %v3096, %v3192
    %v3201 = vsel %vm245, %v3193, -inf
    %v3202 = vsel %vm245, %v3194, -inf
    %v3203 = vmax.f32 %v3201, %v3202
    %v3204 = vrot.slane %v3203, 4
    %v3205 = vmax.f32 %v3203, %v3204
    %v3206 = vrot.slane %v3205, 2
    %v3207 = vmax.f32 %v3205, %v3206
    %v3208 = vrot.slane %v3207, 1
    %v3209 = vmax.f32 %v3207, %v3208
    %v3210 = vsel %vm245, %v3195, -inf
    %v3211 = vsel %vm245, %v3196, -inf
    %v3212 = vmax.f32 %v3210, %v3211
    %v3213 = vrot.slane %v3212, 4
    %v3214 = vmax.f32 %v3212, %v3213
    %v3215 = vrot.slane %v3214, 2
    %v3216 = vmax.f32 %v3214, %v3215
    %v3217 = vrot.slane %v3216, 1
    %v3218 = vmax.f32 %v3216, %v3217
    %v3219 = vsel %vm245, %v3197, -inf
    %v3220 = vsel %vm245, %v3198, -inf
    %v3221 = vmax.f32 %v3219, %v3220
    %v3222 = vrot.slane %v3221, 4
    %v3223 = vmax.f32 %v3221, %v3222
    %v3224 = vrot.slane %v3223, 2
    %v3225 = vmax.f32 %v3223, %v3224
    %v3226 = vrot.slane %v3225, 1
    %v3227 = vmax.f32 %v3225, %v3226
    %v3228 = vsel %vm245, %v3199, -inf
    %v3229 = vsel %vm245, %v3200, -inf
    %v3230 = vmax.f32 %v3228, %v3229
    %v3231 = vrot.slane %v3230, 4
    %v3232 = vmax.f32 %v3230, %v3231
    %v3233 = vrot.slane %v3232, 2
    %v3234 = vmax.f32 %v3232, %v3233
    %v3235 = vrot.slane %v3234, 1
    %v3236 = vmax.f32 %v3234, %v3235
    %v3237 = vsub.f32 %v3193, %v3209
    %v3238 = vsub.f32 %v3194, %v3209
    %v3239 = vsub.f32 %v3195, %v3218
    %v3240 = vsub.f32 %v3196, %v3218
    %v3241 = vsub.f32 %v3197, %v3227
    %v3242 = vsub.f32 %v3198, %v3227
    %v3243 = vsub.f32 %v3199, %v3236
    %v3244 = vsub.f32 %v3200, %v3236
    %v3245 = vmul.f32 %v3237, 1.442695
    %v3246 = vpow.pop %v3245
    %v3247 = vmul.f32 %v3238, 1.442695
    %v3248 = vpow.pop %v3247
    %v3249 = vmul.f32 %v3239, 1.442695
    %v3250 = vpow.pop %v3249
    %v3251 = vmul.f32 %v3240, 1.442695
    %v3252 = vpow.pop %v3251
    %v3253 = vmul.f32 %v3241, 1.442695
    %v3254 = vpow.pop %v3253
    %v3255 = vmul.f32 %v3242, 1.442695
    %v3256 = vpow.pop %v3255
    %v3257 = vmul.f32 %v3243, 1.442695
    %v3258 = vpow.pop %v3257
    %v3259 = vmul.f32 %v3244, 1.442695
    %v3260 = vpow.pop %v3259
    %v3261 = vsel %vm245, %v3246, 0.0
    %v3262 = vsel %vm245, %v3248, 0.0
    %v3263 = vadd.f32 %v3261, %v3262
    %v3264 = vrot.slane %v3263, 4
    %v3265 = vadd.f32 %v3263, %v3264
    %v3266 = vrot.slane %v3265, 2
    %v3267 = vadd.f32 %v3265, %v3266
    %v3268 = vrot.slane %v3267, 1
    %v3269 = vadd.f32 %v3267, %v3268
    %v3270 = vsel %vm245, %v3250, 0.0
    %v3271 = vsel %vm245, %v3252, 0.0
    %v3272 = vadd.f32 %v3270, %v3271
    %v3273 = vrot.slane %v3272, 4
    %v3274 = vadd.f32 %v3272, %v3273
    %v3275 = vrot.slane %v3274, 2
    %v3276 = vadd.f32 %v3274, %v3275
    %v3277 = vrot.slane %v3276, 1
    %v3278 = vadd.f32 %v3276, %v3277
    %v3279 = vsel %vm245, %v3254, 0.0
    %v3280 = vsel %vm245, %v3256, 0.0
    %v3281 = vadd.f32 %v3279, %v3280
    %v3282 = vrot.slane %v3281, 4
    %v3283 = vadd.f32 %v3281, %v3282
    %v3284 = vrot.slane %v3283, 2
    %v3285 = vadd.f32 %v3283, %v3284
    %v3286 = vrot.slane %v3285, 1
    %v3287 = vadd.f32 %v3285, %v3286
    %v3288 = vsel %vm245, %v3258, 0.0
    %v3289 = vsel %vm245, %v3260, 0.0
    %v3290 = vadd.f32 %v3288, %v3289
    %v3291 = vrot.slane %v3290, 4
    %v3292 = vadd.f32 %v3290, %v3291
    %v3293 = vrot.slane %v3292, 2
    %v3294 = vadd.f32 %v3292, %v3293
    %v3295 = vrot.slane %v3294, 1
    %v3296 = vadd.f32 %v3294, %v3295
    %v3297 = vlog2.pop %v3269
    %v3298 = vmul.f32 %v3297, 0.6931472
    %v3299 = vlog2.pop %v3278
    %v3300 = vmul.f32 %v3299, 0.6931472
    %v3301 = vlog2.pop %v3287
    %v3302 = vmul.f32 %v3301, 0.6931472
    %v3303 = vlog2.pop %v3296
    %v3304 = vmul.f32 %v3303, 0.6931472
    %v3305 = vadd.f32 %v3209, %v3298
    %v3306 = vadd.f32 %v3218, %v3300
    %v3307 = vadd.f32 %v3227, %v3302
    %v3308 = vadd.f32 %v3236, %v3304
    %v3309 = vsub.f32 %v3193, %v3305
    %v3310 = vsub.f32 %v3194, %v3305
    %v3311 = vsub.f32 %v3195, %v3306
    %v3312 = vsub.f32 %v3196, %v3306
    %v3313 = vsub.f32 %v3197, %v3307
    %v3314 = vsub.f32 %v3198, %v3307
    %v3315 = vsub.f32 %v3199, %v3308
    %v3316 = vsub.f32 %v3200, %v3308
    %v3317 = vsel %vm245, %v3309, -inf
    %3318 = vmax.xlane.f32.xlu0 %v3317
    %v3319 = vpop.xlane.xlu0 %3318
    %v3320 = vsel %vm245, %v3310, -inf
    %3321 = vmax.xlane.f32.xlu0 %v3320
    %v3322 = vpop.xlane.xlu0 %3321
    %v3323 = vsel %vm245, %v3311, -inf
    %3324 = vmax.xlane.f32.xlu0 %v3323
    %v3325 = vpop.xlane.xlu0 %3324
    %v3326 = vsel %vm245, %v3312, -inf
    %3327 = vmax.xlane.f32.xlu0 %v3326
    %v3328 = vpop.xlane.xlu0 %3327
    %v3329 = vsel %vm245, %v3313, -inf
    %3330 = vmax.xlane.f32.xlu0 %v3329
    %v3331 = vpop.xlane.xlu0 %3330
    %v3332 = vsel %vm245, %v3314, -inf
    %3333 = vmax.xlane.f32.xlu0 %v3332
    %v3334 = vpop.xlane.xlu0 %3333
    %v3335 = vsel %vm245, %v3315, -inf
    %3336 = vmax.xlane.f32.xlu0 %v3335
    %v3337 = vpop.xlane.xlu0 %3336
    %v3338 = vsel %vm245, %v3316, -inf
    %3339 = vmax.xlane.f32.xlu0 %v3338
    %v3340 = vpop.xlane.xlu0 %3339
    %v3341 = vsub.f32 %v3309, %v3319
    %v3342 = vsub.f32 %v3310, %v3322
    %v3343 = vsub.f32 %v3311, %v3325
    %v3344 = vsub.f32 %v3312, %v3328
    %v3345 = vsub.f32 %v3313, %v3331
    %v3346 = vsub.f32 %v3314, %v3334
    %v3347 = vsub.f32 %v3315, %v3337
    %v3348 = vsub.f32 %v3316, %v3340
    %v3349 = vmul.f32 %v3341, 1.442695
    %v3350 = vpow.pop %v3349
    %v3351 = vmul.f32 %v3342, 1.442695
    %v3352 = vpow.pop %v3351
    %v3353 = vmul.f32 %v3343, 1.442695
    %v3354 = vpow.pop %v3353
    %v3355 = vmul.f32 %v3344, 1.442695
    %v3356 = vpow.pop %v3355
    %v3357 = vmul.f32 %v3345, 1.442695
    %v3358 = vpow.pop %v3357
    %v3359 = vmul.f32 %v3346, 1.442695
    %v3360 = vpow.pop %v3359
    %v3361 = vmul.f32 %v3347, 1.442695
    %v3362 = vpow.pop %v3361
    %v3363 = vmul.f32 %v3348, 1.442695
    %v3364 = vpow.pop %v3363
    %v3365 = vsel %vm245, %v3350, 0.0
    %3366 = vadd.xlane.f32.xlu0 %v3365
    %v3367 = vpop.xlane.xlu0 %3366
    %v3368 = vsel %vm245, %v3352, 0.0
    %3369 = vadd.xlane.f32.xlu0 %v3368
    %v3370 = vpop.xlane.xlu0 %3369
    %v3371 = vsel %vm245, %v3354, 0.0
    %3372 = vadd.xlane.f32.xlu0 %v3371
    %v3373 = vpop.xlane.xlu0 %3372
    %v3374 = vsel %vm245, %v3356, 0.0
    %3375 = vadd.xlane.f32.xlu0 %v3374
    %v3376 = vpop.xlane.xlu0 %3375
    %v3377 = vsel %vm245, %v3358, 0.0
    %3378 = vadd.xlane.f32.xlu0 %v3377
    %v3379 = vpop.xlane.xlu0 %3378
    %v3380 = vsel %vm245, %v3360, 0.0
    %3381 = vadd.xlane.f32.xlu0 %v3380
    %v3382 = vpop.xlane.xlu0 %3381
    %v3383 = vsel %vm245, %v3362, 0.0
    %3384 = vadd.xlane.f32.xlu0 %v3383
    %v3385 = vpop.xlane.xlu0 %3384
    %v3386 = vsel %vm245, %v3364, 0.0
    %3387 = vadd.xlane.f32.xlu0 %v3386
    %v3388 = vpop.xlane.xlu0 %3387
    %v3389 = vlog2.pop %v3367
    %v3390 = vmul.f32 %v3389, 0.6931472
    %v3391 = vlog2.pop %v3370
    %v3392 = vmul.f32 %v3391, 0.6931472
    %v3393 = vlog2.pop %v3373
    %v3394 = vmul.f32 %v3393, 0.6931472
    %v3395 = vlog2.pop %v3376
    %v3396 = vmul.f32 %v3395, 0.6931472
    %v3397 = vlog2.pop %v3379
    %v3398 = vmul.f32 %v3397, 0.6931472
    %v3399 = vlog2.pop %v3382
    %v3400 = vmul.f32 %v3399, 0.6931472
    %v3401 = vlog2.pop %v3385
    %v3402 = vmul.f32 %v3401, 0.6931472
    %v3403 = vlog2.pop %v3388
    %v3404 = vmul.f32 %v3403, 0.6931472
    %v3405 = vadd.f32 %v3319, %v3390
    %v3406 = vadd.f32 %v3322, %v3392
    %v3407 = vadd.f32 %v3325, %v3394
    %v3408 = vadd.f32 %v3328, %v3396
    %v3409 = vadd.f32 %v3331, %v3398
    %v3410 = vadd.f32 %v3334, %v3400
    %v3411 = vadd.f32 %v3337, %v3402
    %v3412 = vadd.f32 %v3340, %v3404
    %v3413 = vsub.f32 %v3309, %v3405
    %v3414 = vsub.f32 %v3310, %v3406
    %v3415 = vsub.f32 %v3311, %v3407
    %v3416 = vsub.f32 %v3312, %v3408
    %v3417 = vsub.f32 %v3313, %v3409
    %v3418 = vsub.f32 %v3314, %v3410
    %v3419 = vsub.f32 %v3315, %v3411
    %v3420 = vsub.f32 %v3316, %v3412
    %v3421 = vsel %vm245, %v3413, -inf
    %v3422 = vsel %vm245, %v3414, -inf
    %v3423 = vmax.f32 %v3421, %v3422
    %v3424 = vrot.slane %v3423, 4
    %v3425 = vmax.f32 %v3423, %v3424
    %v3426 = vrot.slane %v3425, 2
    %v3427 = vmax.f32 %v3425, %v3426
    %v3428 = vrot.slane %v3427, 1
    %v3429 = vmax.f32 %v3427, %v3428
    %v3430 = vsel %vm245, %v3415, -inf
    %v3431 = vsel %vm245, %v3416, -inf
    %v3432 = vmax.f32 %v3430, %v3431
    %v3433 = vrot.slane %v3432, 4
    %v3434 = vmax.f32 %v3432, %v3433
    %v3435 = vrot.slane %v3434, 2
    %v3436 = vmax.f32 %v3434, %v3435
    %v3437 = vrot.slane %v3436, 1
    %v3438 = vmax.f32 %v3436, %v3437
    %v3439 = vsel %vm245, %v3417, -inf
    %v3440 = vsel %vm245, %v3418, -inf
    %v3441 = vmax.f32 %v3439, %v3440
    %v3442 = vrot.slane %v3441, 4
    %v3443 = vmax.f32 %v3441, %v3442
    %v3444 = vrot.slane %v3443, 2
    %v3445 = vmax.f32 %v3443, %v3444
    %v3446 = vrot.slane %v3445, 1
    %v3447 = vmax.f32 %v3445, %v3446
    %v3448 = vsel %vm245, %v3419, -inf
    %v3449 = vsel %vm245, %v3420, -inf
    %v3450 = vmax.f32 %v3448, %v3449
    %v3451 = vrot.slane %v3450, 4
    %v3452 = vmax.f32 %v3450, %v3451
    %v3453 = vrot.slane %v3452, 2
    %v3454 = vmax.f32 %v3452, %v3453
    %v3455 = vrot.slane %v3454, 1
    %v3456 = vmax.f32 %v3454, %v3455
    %v3457 = vsub.f32 %v3413, %v3429
    %v3458 = vsub.f32 %v3414, %v3429
    %v3459 = vsub.f32 %v3415, %v3438
    %v3460 = vsub.f32 %v3416, %v3438
    %v3461 = vsub.f32 %v3417, %v3447
    %v3462 = vsub.f32 %v3418, %v3447
    %v3463 = vsub.f32 %v3419, %v3456
    %v3464 = vsub.f32 %v3420, %v3456
    %v3465 = vmul.f32 %v3457, 1.442695
    %v3466 = vpow.pop %v3465
    %v3467 = vmul.f32 %v3458, 1.442695
    %v3468 = vpow.pop %v3467
    %v3469 = vmul.f32 %v3459, 1.442695
    %v3470 = vpow.pop %v3469
    %v3471 = vmul.f32 %v3460, 1.442695
    %v3472 = vpow.pop %v3471
    %v3473 = vmul.f32 %v3461, 1.442695
    %v3474 = vpow.pop %v3473
    %v3475 = vmul.f32 %v3462, 1.442695
    %v3476 = vpow.pop %v3475
    %v3477 = vmul.f32 %v3463, 1.442695
    %v3478 = vpow.pop %v3477
    %v3479 = vmul.f32 %v3464, 1.442695
    %v3480 = vpow.pop %v3479
    %v3481 = vsel %vm245, %v3466, 0.0
    %v3482 = vsel %vm245, %v3468, 0.0
    %v3483 = vadd.f32 %v3481, %v3482
    %v3484 = vrot.slane %v3483, 4
    %v3485 = vadd.f32 %v3483, %v3484
    %v3486 = vrot.slane %v3485, 2
    %v3487 = vadd.f32 %v3485, %v3486
    %v3488 = vrot.slane %v3487, 1
    %v3489 = vadd.f32 %v3487, %v3488
    %v3490 = vsel %vm245, %v3470, 0.0
    %v3491 = vsel %vm245, %v3472, 0.0
    %v3492 = vadd.f32 %v3490, %v3491
    %v3493 = vrot.slane %v3492, 4
    %v3494 = vadd.f32 %v3492, %v3493
    %v3495 = vrot.slane %v3494, 2
    %v3496 = vadd.f32 %v3494, %v3495
    %v3497 = vrot.slane %v3496, 1
    %v3498 = vadd.f32 %v3496, %v3497
    %v3499 = vsel %vm245, %v3474, 0.0
    %v3500 = vsel %vm245, %v3476, 0.0
    %v3501 = vadd.f32 %v3499, %v3500
    %v3502 = vrot.slane %v3501, 4
    %v3503 = vadd.f32 %v3501, %v3502
    %v3504 = vrot.slane %v3503, 2
    %v3505 = vadd.f32 %v3503, %v3504
    %v3506 = vrot.slane %v3505, 1
    %v3507 = vadd.f32 %v3505, %v3506
    %v3508 = vsel %vm245, %v3478, 0.0
    %v3509 = vsel %vm245, %v3480, 0.0
    %v3510 = vadd.f32 %v3508, %v3509
    %v3511 = vrot.slane %v3510, 4
    %v3512 = vadd.f32 %v3510, %v3511
    %v3513 = vrot.slane %v3512, 2
    %v3514 = vadd.f32 %v3512, %v3513
    %v3515 = vrot.slane %v3514, 1
    %v3516 = vadd.f32 %v3514, %v3515
    %v3517 = vlog2.pop %v3489
    %v3518 = vmul.f32 %v3517, 0.6931472
    %v3519 = vlog2.pop %v3498
    %v3520 = vmul.f32 %v3519, 0.6931472
    %v3521 = vlog2.pop %v3507
    %v3522 = vmul.f32 %v3521, 0.6931472
    %v3523 = vlog2.pop %v3516
    %v3524 = vmul.f32 %v3523, 0.6931472
    %v3525 = vadd.f32 %v3429, %v3518
    %v3526 = vadd.f32 %v3438, %v3520
    %v3527 = vadd.f32 %v3447, %v3522
    %v3528 = vadd.f32 %v3456, %v3524
    %v3529 = vsub.f32 %v3413, %v3525
    %v3530 = vsub.f32 %v3414, %v3525
    %v3531 = vsub.f32 %v3415, %v3526
    %v3532 = vsub.f32 %v3416, %v3526
    %v3533 = vsub.f32 %v3417, %v3527
    %v3534 = vsub.f32 %v3418, %v3527
    %v3535 = vsub.f32 %v3419, %v3528
    %v3536 = vsub.f32 %v3420, %v3528
    %v3537 = vsel %vm245, %v3529, -inf
    %3538 = vmax.xlane.f32.xlu0 %v3537
    %v3539 = vpop.xlane.xlu0 %3538
    %v3540 = vsel %vm245, %v3530, -inf
    %3541 = vmax.xlane.f32.xlu0 %v3540
    %v3542 = vpop.xlane.xlu0 %3541
    %v3543 = vsel %vm245, %v3531, -inf
    %3544 = vmax.xlane.f32.xlu0 %v3543
    %v3545 = vpop.xlane.xlu0 %3544
    %v3546 = vsel %vm245, %v3532, -inf
    %3547 = vmax.xlane.f32.xlu0 %v3546
    %v3548 = vpop.xlane.xlu0 %3547
    %v3549 = vsel %vm245, %v3533, -inf
    %3550 = vmax.xlane.f32.xlu0 %v3549
    %v3551 = vpop.xlane.xlu0 %3550
    %v3552 = vsel %vm245, %v3534, -inf
    %3553 = vmax.xlane.f32.xlu0 %v3552
    %v3554 = vpop.xlane.xlu0 %3553
    %v3555 = vsel %vm245, %v3535, -inf
    %3556 = vmax.xlane.f32.xlu0 %v3555
    %v3557 = vpop.xlane.xlu0 %3556
    %v3558 = vsel %vm245, %v3536, -inf
    %3559 = vmax.xlane.f32.xlu0 %v3558
    %v3560 = vpop.xlane.xlu0 %3559
    %v3561 = vsub.f32 %v3529, %v3539
    %v3562 = vsub.f32 %v3530, %v3542
    %v3563 = vsub.f32 %v3531, %v3545
    %v3564 = vsub.f32 %v3532, %v3548
    %v3565 = vsub.f32 %v3533, %v3551
    %v3566 = vsub.f32 %v3534, %v3554
    %v3567 = vsub.f32 %v3535, %v3557
    %v3568 = vsub.f32 %v3536, %v3560
    %v3569 = vmul.f32 %v3561, 1.442695
    %v3570 = vpow.pop %v3569
    %v3571 = vmul.f32 %v3562, 1.442695
    %v3572 = vpow.pop %v3571
    %v3573 = vmul.f32 %v3563, 1.442695
    %v3574 = vpow.pop %v3573
    %v3575 = vmul.f32 %v3564, 1.442695
    %v3576 = vpow.pop %v3575
    %v3577 = vmul.f32 %v3565, 1.442695
    %v3578 = vpow.pop %v3577
    %v3579 = vmul.f32 %v3566, 1.442695
    %v3580 = vpow.pop %v3579
    %v3581 = vmul.f32 %v3567, 1.442695
    %v3582 = vpow.pop %v3581
    %v3583 = vmul.f32 %v3568, 1.442695
    %v3584 = vpow.pop %v3583
    %v3585 = vsel %vm245, %v3570, 0.0
    %3586 = vadd.xlane.f32.xlu0 %v3585
    %v3587 = vpop.xlane.xlu0 %3586
    %v3588 = vsel %vm245, %v3572, 0.0
    %3589 = vadd.xlane.f32.xlu0 %v3588
    %v3590 = vpop.xlane.xlu0 %3589
    %v3591 = vsel %vm245, %v3574, 0.0
    %3592 = vadd.xlane.f32.xlu0 %v3591
    %v3593 = vpop.xlane.xlu0 %3592
    %v3594 = vsel %vm245, %v3576, 0.0
    %3595 = vadd.xlane.f32.xlu0 %v3594
    %v3596 = vpop.xlane.xlu0 %3595
    %v3597 = vsel %vm245, %v3578, 0.0
    %3598 = vadd.xlane.f32.xlu0 %v3597
    %v3599 = vpop.xlane.xlu0 %3598
    %v3600 = vsel %vm245, %v3580, 0.0
    %3601 = vadd.xlane.f32.xlu0 %v3600
    %v3602 = vpop.xlane.xlu0 %3601
    %v3603 = vsel %vm245, %v3582, 0.0
    %3604 = vadd.xlane.f32.xlu0 %v3603
    %v3605 = vpop.xlane.xlu0 %3604
    %v3606 = vsel %vm245, %v3584, 0.0
    %3607 = vadd.xlane.f32.xlu0 %v3606
    %v3608 = vpop.xlane.xlu0 %3607
    %v3609 = vlog2.pop %v3587
    %v3610 = vmul.f32 %v3609, 0.6931472
    %v3611 = vlog2.pop %v3590
    %v3612 = vmul.f32 %v3611, 0.6931472
    %v3613 = vlog2.pop %v3593
    %v3614 = vmul.f32 %v3613, 0.6931472
    %v3615 = vlog2.pop %v3596
    %v3616 = vmul.f32 %v3615, 0.6931472
    %v3617 = vlog2.pop %v3599
    %v3618 = vmul.f32 %v3617, 0.6931472
    %v3619 = vlog2.pop %v3602
    %v3620 = vmul.f32 %v3619, 0.6931472
    %v3621 = vlog2.pop %v3605
    %v3622 = vmul.f32 %v3621, 0.6931472
    %v3623 = vlog2.pop %v3608
    %v3624 = vmul.f32 %v3623, 0.6931472
    %v3625 = vadd.f32 %v3539, %v3610
    %v3626 = vadd.f32 %v3542, %v3612
    %v3627 = vadd.f32 %v3545, %v3614
    %v3628 = vadd.f32 %v3548, %v3616
    %v3629 = vadd.f32 %v3551, %v3618
    %v3630 = vadd.f32 %v3554, %v3620
    %v3631 = vadd.f32 %v3557, %v3622
    %v3632 = vadd.f32 %v3560, %v3624
    %v3633 = vsub.f32 %v3529, %v3625
    %v3634 = vsub.f32 %v3530, %v3626
    %v3635 = vsub.f32 %v3531, %v3627
    %v3636 = vsub.f32 %v3532, %v3628
    %v3637 = vsub.f32 %v3533, %v3629
    %v3638 = vsub.f32 %v3534, %v3630
    %v3639 = vsub.f32 %v3535, %v3631
    %v3640 = vsub.f32 %v3536, %v3632
    %v3641 = vsel %vm245, %v3633, -inf
    %v3642 = vsel %vm245, %v3634, -inf
    %v3643 = vmax.f32 %v3641, %v3642
    %v3644 = vrot.slane %v3643, 4
    %v3645 = vmax.f32 %v3643, %v3644
    %v3646 = vrot.slane %v3645, 2
    %v3647 = vmax.f32 %v3645, %v3646
    %v3648 = vrot.slane %v3647, 1
    %v3649 = vmax.f32 %v3647, %v3648
    %v3650 = vsel %vm245, %v3635, -inf
    %v3651 = vsel %vm245, %v3636, -inf
    %v3652 = vmax.f32 %v3650, %v3651
    %v3653 = vrot.slane %v3652, 4
    %v3654 = vmax.f32 %v3652, %v3653
    %v3655 = vrot.slane %v3654, 2
    %v3656 = vmax.f32 %v3654, %v3655
    %v3657 = vrot.slane %v3656, 1
    %v3658 = vmax.f32 %v3656, %v3657
    %v3659 = vsel %vm245, %v3637, -inf
    %v3660 = vsel %vm245, %v3638, -inf
    %v3661 = vmax.f32 %v3659, %v3660
    %v3662 = vrot.slane %v3661, 4
    %v3663 = vmax.f32 %v3661, %v3662
    %v3664 = vrot.slane %v3663, 2
    %v3665 = vmax.f32 %v3663, %v3664
    %v3666 = vrot.slane %v3665, 1
    %v3667 = vmax.f32 %v3665, %v3666
    %v3668 = vsel %vm245, %v3639, -inf
    %v3669 = vsel %vm245, %v3640, -inf
    %v3670 = vmax.f32 %v3668, %v3669
    %v3671 = vrot.slane %v3670, 4
    %v3672 = vmax.f32 %v3670, %v3671
    %v3673 = vrot.slane %v3672, 2
    %v3674 = vmax.f32 %v3672, %v3673
    %v3675 = vrot.slane %v3674, 1
    %v3676 = vmax.f32 %v3674, %v3675
    %v3677 = vsub.f32 %v3633, %v3649
    %v3678 = vsub.f32 %v3634, %v3649
    %v3679 = vsub.f32 %v3635, %v3658
    %v3680 = vsub.f32 %v3636, %v3658
    %v3681 = vsub.f32 %v3637, %v3667
    %v3682 = vsub.f32 %v3638, %v3667
    %v3683 = vsub.f32 %v3639, %v3676
    %v3684 = vsub.f32 %v3640, %v3676
    %v3685 = vmul.f32 %v3677, 1.442695
    %v3686 = vpow.pop %v3685
    %v3687 = vmul.f32 %v3678, 1.442695
    %v3688 = vpow.pop %v3687
    %v3689 = vmul.f32 %v3679, 1.442695
    %v3690 = vpow.pop %v3689
    %v3691 = vmul.f32 %v3680, 1.442695
    %v3692 = vpow.pop %v3691
    %v3693 = vmul.f32 %v3681, 1.442695
    %v3694 = vpow.pop %v3693
    %v3695 = vmul.f32 %v3682, 1.442695
    %v3696 = vpow.pop %v3695
    %v3697 = vmul.f32 %v3683, 1.442695
    %v3698 = vpow.pop %v3697
    %v3699 = vmul.f32 %v3684, 1.442695
    %v3700 = vpow.pop %v3699
    %v3701 = vsel %vm245, %v3686, 0.0
    %v3702 = vsel %vm245, %v3688, 0.0
    %v3703 = vadd.f32 %v3701, %v3702
    %v3704 = vrot.slane %v3703, 4
    %v3705 = vadd.f32 %v3703, %v3704
    %v3706 = vrot.slane %v3705, 2
    %v3707 = vadd.f32 %v3705, %v3706
    %v3708 = vrot.slane %v3707, 1
    %v3709 = vadd.f32 %v3707, %v3708
    %v3710 = vsel %vm245, %v3690, 0.0
    %v3711 = vsel %vm245, %v3692, 0.0
    %v3712 = vadd.f32 %v3710, %v3711
    %v3713 = vrot.slane %v3712, 4
    %v3714 = vadd.f32 %v3712, %v3713
    %v3715 = vrot.slane %v3714, 2
    %v3716 = vadd.f32 %v3714, %v3715
    %v3717 = vrot.slane %v3716, 1
    %v3718 = vadd.f32 %v3716, %v3717
    %v3719 = vsel %vm245, %v3694, 0.0
    %v3720 = vsel %vm245, %v3696, 0.0
    %v3721 = vadd.f32 %v3719, %v3720
    %v3722 = vrot.slane %v3721, 4
    %v3723 = vadd.f32 %v3721, %v3722
    %v3724 = vrot.slane %v3723, 2
    %v3725 = vadd.f32 %v3723, %v3724
    %v3726 = vrot.slane %v3725, 1
    %v3727 = vadd.f32 %v3725, %v3726
    %v3728 = vsel %vm245, %v3698, 0.0
    %v3729 = vsel %vm245, %v3700, 0.0
    %v3730 = vadd.f32 %v3728, %v3729
    %v3731 = vrot.slane %v3730, 4
    %v3732 = vadd.f32 %v3730, %v3731
    %v3733 = vrot.slane %v3732, 2
    %v3734 = vadd.f32 %v3732, %v3733
    %v3735 = vrot.slane %v3734, 1
    %v3736 = vadd.f32 %v3734, %v3735
    %v3737 = vlog2.pop %v3709
    %v3738 = vmul.f32 %v3737, 0.6931472
    %v3739 = vlog2.pop %v3718
    %v3740 = vmul.f32 %v3739, 0.6931472
    %v3741 = vlog2.pop %v3727
    %v3742 = vmul.f32 %v3741, 0.6931472
    %v3743 = vlog2.pop %v3736
    %v3744 = vmul.f32 %v3743, 0.6931472
    %v3745 = vadd.f32 %v3649, %v3738
    %v3746 = vadd.f32 %v3658, %v3740
    %v3747 = vadd.f32 %v3667, %v3742
    %v3748 = vadd.f32 %v3676, %v3744
    %v3749 = vsub.f32 %v3633, %v3745
    %v3750 = vsub.f32 %v3634, %v3745
    %v3751 = vsub.f32 %v3635, %v3746
    %v3752 = vsub.f32 %v3636, %v3746
    %v3753 = vsub.f32 %v3637, %v3747
    %v3754 = vsub.f32 %v3638, %v3747
    %v3755 = vsub.f32 %v3639, %v3748
    %v3756 = vsub.f32 %v3640, %v3748
    %v3757 = vsel %vm245, %v3749, -inf
    %3758 = vmax.xlane.f32.xlu0 %v3757
    %v3759 = vpop.xlane.xlu0 %3758
    %v3760 = vsel %vm245, %v3750, -inf
    %3761 = vmax.xlane.f32.xlu0 %v3760
    %v3762 = vpop.xlane.xlu0 %3761
    %v3763 = vsel %vm245, %v3751, -inf
    %3764 = vmax.xlane.f32.xlu0 %v3763
    %v3765 = vpop.xlane.xlu0 %3764
    %v3766 = vsel %vm245, %v3752, -inf
    %3767 = vmax.xlane.f32.xlu0 %v3766
    %v3768 = vpop.xlane.xlu0 %3767
    %v3769 = vsel %vm245, %v3753, -inf
    %3770 = vmax.xlane.f32.xlu0 %v3769
    %v3771 = vpop.xlane.xlu0 %3770
    %v3772 = vsel %vm245, %v3754, -inf
    %3773 = vmax.xlane.f32.xlu0 %v3772
    %v3774 = vpop.xlane.xlu0 %3773
    %v3775 = vsel %vm245, %v3755, -inf
    %3776 = vmax.xlane.f32.xlu0 %v3775
    %v3777 = vpop.xlane.xlu0 %3776
    %v3778 = vsel %vm245, %v3756, -inf
    %3779 = vmax.xlane.f32.xlu0 %v3778
    %v3780 = vpop.xlane.xlu0 %3779
    %v3781 = vsub.f32 %v3749, %v3759
    %v3782 = vsub.f32 %v3750, %v3762
    %v3783 = vsub.f32 %v3751, %v3765
    %v3784 = vsub.f32 %v3752, %v3768
    %v3785 = vsub.f32 %v3753, %v3771
    %v3786 = vsub.f32 %v3754, %v3774
    %v3787 = vsub.f32 %v3755, %v3777
    %v3788 = vsub.f32 %v3756, %v3780
    %v3789 = vmul.f32 %v3781, 1.442695
    %v3790 = vpow.pop %v3789
    %v3791 = vmul.f32 %v3782, 1.442695
    %v3792 = vpow.pop %v3791
    %v3793 = vmul.f32 %v3783, 1.442695
    %v3794 = vpow.pop %v3793
    %v3795 = vmul.f32 %v3784, 1.442695
    %v3796 = vpow.pop %v3795
    %v3797 = vmul.f32 %v3785, 1.442695
    %v3798 = vpow.pop %v3797
    %v3799 = vmul.f32 %v3786, 1.442695
    %v3800 = vpow.pop %v3799
    %v3801 = vmul.f32 %v3787, 1.442695
    %v3802 = vpow.pop %v3801
    %v3803 = vmul.f32 %v3788, 1.442695
    %v3804 = vpow.pop %v3803
    %v3805 = vsel %vm245, %v3790, 0.0
    %3806 = vadd.xlane.f32.xlu0 %v3805
    %v3807 = vpop.xlane.xlu0 %3806
    %v3808 = vsel %vm245, %v3792, 0.0
    %3809 = vadd.xlane.f32.xlu0 %v3808
    %v3810 = vpop.xlane.xlu0 %3809
    %v3811 = vsel %vm245, %v3794, 0.0
    %3812 = vadd.xlane.f32.xlu0 %v3811
    %v3813 = vpop.xlane.xlu0 %3812
    %v3814 = vsel %vm245, %v3796, 0.0
    %3815 = vadd.xlane.f32.xlu0 %v3814
    %v3816 = vpop.xlane.xlu0 %3815
    %v3817 = vsel %vm245, %v3798, 0.0
    %3818 = vadd.xlane.f32.xlu0 %v3817
    %v3819 = vpop.xlane.xlu0 %3818
    %v3820 = vsel %vm245, %v3800, 0.0
    %3821 = vadd.xlane.f32.xlu0 %v3820
    %v3822 = vpop.xlane.xlu0 %3821
    %v3823 = vsel %vm245, %v3802, 0.0
    %3824 = vadd.xlane.f32.xlu0 %v3823
    %v3825 = vpop.xlane.xlu0 %3824
    %v3826 = vsel %vm245, %v3804, 0.0
    %3827 = vadd.xlane.f32.xlu0 %v3826
    %v3828 = vpop.xlane.xlu0 %3827
    %v3829 = vlog2.pop %v3807
    %v3830 = vmul.f32 %v3829, 0.6931472
    %v3831 = vlog2.pop %v3810
    %v3832 = vmul.f32 %v3831, 0.6931472
    %v3833 = vlog2.pop %v3813
    %v3834 = vmul.f32 %v3833, 0.6931472
    %v3835 = vlog2.pop %v3816
    %v3836 = vmul.f32 %v3835, 0.6931472
    %v3837 = vlog2.pop %v3819
    %v3838 = vmul.f32 %v3837, 0.6931472
    %v3839 = vlog2.pop %v3822
    %v3840 = vmul.f32 %v3839, 0.6931472
    %v3841 = vlog2.pop %v3825
    %v3842 = vmul.f32 %v3841, 0.6931472
    %v3843 = vlog2.pop %v3828
    %v3844 = vmul.f32 %v3843, 0.6931472
    %v3845 = vadd.f32 %v3759, %v3830
    %v3846 = vadd.f32 %v3762, %v3832
    %v3847 = vadd.f32 %v3765, %v3834
    %v3848 = vadd.f32 %v3768, %v3836
    %v3849 = vadd.f32 %v3771, %v3838
    %v3850 = vadd.f32 %v3774, %v3840
    %v3851 = vadd.f32 %v3777, %v3842
    %v3852 = vadd.f32 %v3780, %v3844
    %v3853 = vsub.f32 %v3749, %v3845
    %v3854 = vsub.f32 %v3750, %v3846
    %v3855 = vsub.f32 %v3751, %v3847
    %v3856 = vsub.f32 %v3752, %v3848
    %v3857 = vsub.f32 %v3753, %v3849
    %v3858 = vsub.f32 %v3754, %v3850
    %v3859 = vsub.f32 %v3755, %v3851
    %v3860 = vsub.f32 %v3756, %v3852
    %v3861 = vsel %vm245, %v3853, -inf
    %v3862 = vsel %vm245, %v3854, -inf
    %v3863 = vmax.f32 %v3861, %v3862
    %v3864 = vrot.slane %v3863, 4
    %v3865 = vmax.f32 %v3863, %v3864
    %v3866 = vrot.slane %v3865, 2
    %v3867 = vmax.f32 %v3865, %v3866
    %v3868 = vrot.slane %v3867, 1
    %v3869 = vmax.f32 %v3867, %v3868
    %v3870 = vsel %vm245, %v3855, -inf
    %v3871 = vsel %vm245, %v3856, -inf
    %v3872 = vmax.f32 %v3870, %v3871
    %v3873 = vrot.slane %v3872, 4
    %v3874 = vmax.f32 %v3872, %v3873
    %v3875 = vrot.slane %v3874, 2
    %v3876 = vmax.f32 %v3874, %v3875
    %v3877 = vrot.slane %v3876, 1
    %v3878 = vmax.f32 %v3876, %v3877
    %v3879 = vsel %vm245, %v3857, -inf
    %v3880 = vsel %vm245, %v3858, -inf
    %v3881 = vmax.f32 %v3879, %v3880
    %v3882 = vrot.slane %v3881, 4
    %v3883 = vmax.f32 %v3881, %v3882
    %v3884 = vrot.slane %v3883, 2
    %v3885 = vmax.f32 %v3883, %v3884
    %v3886 = vrot.slane %v3885, 1
    %v3887 = vmax.f32 %v3885, %v3886
    %v3888 = vsel %vm245, %v3859, -inf
    %v3889 = vsel %vm245, %v3860, -inf
    %v3890 = vmax.f32 %v3888, %v3889
    %v3891 = vrot.slane %v3890, 4
    %v3892 = vmax.f32 %v3890, %v3891
    %v3893 = vrot.slane %v3892, 2
    %v3894 = vmax.f32 %v3892, %v3893
    %v3895 = vrot.slane %v3894, 1
    %v3896 = vmax.f32 %v3894, %v3895
    %v3897 = vsub.f32 %v3853, %v3869
    %v3898 = vsub.f32 %v3854, %v3869
    %v3899 = vsub.f32 %v3855, %v3878
    %v3900 = vsub.f32 %v3856, %v3878
    %v3901 = vsub.f32 %v3857, %v3887
    %v3902 = vsub.f32 %v3858, %v3887
    %v3903 = vsub.f32 %v3859, %v3896
    %v3904 = vsub.f32 %v3860, %v3896
    %v3905 = vmul.f32 %v3897, 1.442695
    %v3906 = vpow.pop %v3905
    %v3907 = vmul.f32 %v3898, 1.442695
    %v3908 = vpow.pop %v3907
    %v3909 = vmul.f32 %v3899, 1.442695
    %v3910 = vpow.pop %v3909
    %v3911 = vmul.f32 %v3900, 1.442695
    %v3912 = vpow.pop %v3911
    %v3913 = vmul.f32 %v3901, 1.442695
    %v3914 = vpow.pop %v3913
    %v3915 = vmul.f32 %v3902, 1.442695
    %v3916 = vpow.pop %v3915
    %v3917 = vmul.f32 %v3903, 1.442695
    %v3918 = vpow.pop %v3917
    %v3919 = vmul.f32 %v3904, 1.442695
    %v3920 = vpow.pop %v3919
    %v3921 = vsel %vm245, %v3906, 0.0
    %v3922 = vsel %vm245, %v3908, 0.0
    %v3923 = vadd.f32 %v3921, %v3922
    %v3924 = vrot.slane %v3923, 4
    %v3925 = vadd.f32 %v3923, %v3924
    %v3926 = vrot.slane %v3925, 2
    %v3927 = vadd.f32 %v3925, %v3926
    %v3928 = vrot.slane %v3927, 1
    %v3929 = vadd.f32 %v3927, %v3928
    %v3930 = vsel %vm245, %v3910, 0.0
    %v3931 = vsel %vm245, %v3912, 0.0
    %v3932 = vadd.f32 %v3930, %v3931
    %v3933 = vrot.slane %v3932, 4
    %v3934 = vadd.f32 %v3932, %v3933
    %v3935 = vrot.slane %v3934, 2
    %v3936 = vadd.f32 %v3934, %v3935
    %v3937 = vrot.slane %v3936, 1
    %v3938 = vadd.f32 %v3936, %v3937
    %v3939 = vsel %vm245, %v3914, 0.0
    %v3940 = vsel %vm245, %v3916, 0.0
    %v3941 = vadd.f32 %v3939, %v3940
    %v3942 = vrot.slane %v3941, 4
    %v3943 = vadd.f32 %v3941, %v3942
    %v3944 = vrot.slane %v3943, 2
    %v3945 = vadd.f32 %v3943, %v3944
    %v3946 = vrot.slane %v3945, 1
    %v3947 = vadd.f32 %v3945, %v3946
    %v3948 = vsel %vm245, %v3918, 0.0
    %v3949 = vsel %vm245, %v3920, 0.0
    %v3950 = vadd.f32 %v3948, %v3949
    %v3951 = vrot.slane %v3950, 4
    %v3952 = vadd.f32 %v3950, %v3951
    %v3953 = vrot.slane %v3952, 2
    %v3954 = vadd.f32 %v3952, %v3953
    %v3955 = vrot.slane %v3954, 1
    %v3956 = vadd.f32 %v3954, %v3955
    %v3957 = vlog2.pop %v3929
    %v3958 = vmul.f32 %v3957, 0.6931472
    %v3959 = vlog2.pop %v3938
    %v3960 = vmul.f32 %v3959, 0.6931472
    %v3961 = vlog2.pop %v3947
    %v3962 = vmul.f32 %v3961, 0.6931472
    %v3963 = vlog2.pop %v3956
    %v3964 = vmul.f32 %v3963, 0.6931472
    %v3965 = vadd.f32 %v3869, %v3958
    %v3966 = vadd.f32 %v3878, %v3960
    %v3967 = vadd.f32 %v3887, %v3962
    %v3968 = vadd.f32 %v3896, %v3964
    %v3969 = vsub.f32 %v3853, %v3965
    %v3970 = vsub.f32 %v3854, %v3965
    %v3971 = vsub.f32 %v3855, %v3966
    %v3972 = vsub.f32 %v3856, %v3966
    %v3973 = vsub.f32 %v3857, %v3967
    %v3974 = vsub.f32 %v3858, %v3967
    %v3975 = vsub.f32 %v3859, %v3968
    %v3976 = vsub.f32 %v3860, %v3968
    %v3977 = vsel %vm245, %v3969, -inf
    %3978 = vmax.xlane.f32.xlu0 %v3977
    %v3979 = vpop.xlane.xlu0 %3978
    %v3980 = vsel %vm245, %v3970, -inf
    %3981 = vmax.xlane.f32.xlu0 %v3980
    %v3982 = vpop.xlane.xlu0 %3981
    %v3983 = vsel %vm245, %v3971, -inf
    %3984 = vmax.xlane.f32.xlu0 %v3983
    %v3985 = vpop.xlane.xlu0 %3984
    %v3986 = vsel %vm245, %v3972, -inf
    %3987 = vmax.xlane.f32.xlu0 %v3986
    %v3988 = vpop.xlane.xlu0 %3987
    %v3989 = vsel %vm245, %v3973, -inf
    %3990 = vmax.xlane.f32.xlu0 %v3989
    %v3991 = vpop.xlane.xlu0 %3990
    %v3992 = vsel %vm245, %v3974, -inf
    %3993 = vmax.xlane.f32.xlu0 %v3992
    %v3994 = vpop.xlane.xlu0 %3993
    %v3995 = vsel %vm245, %v3975, -inf
    %3996 = vmax.xlane.f32.xlu0 %v3995
    %v3997 = vpop.xlane.xlu0 %3996
    %v3998 = vsel %vm245, %v3976, -inf
    %3999 = vmax.xlane.f32.xlu0 %v3998
    %v4000 = vpop.xlane.xlu0 %3999
    %v4001 = vsub.f32 %v3969, %v3979
    %v4002 = vsub.f32 %v3970, %v3982
    %v4003 = vsub.f32 %v3971, %v3985
    %v4004 = vsub.f32 %v3972, %v3988
    %v4005 = vsub.f32 %v3973, %v3991
    %v4006 = vsub.f32 %v3974, %v3994
    %v4007 = vsub.f32 %v3975, %v3997
    %v4008 = vsub.f32 %v3976, %v4000
    %v4009 = vmul.f32 %v4001, 1.442695
    %v4010 = vpow.pop %v4009
    %v4011 = vmul.f32 %v4002, 1.442695
    %v4012 = vpow.pop %v4011
    %v4013 = vmul.f32 %v4003, 1.442695
    %v4014 = vpow.pop %v4013
    %v4015 = vmul.f32 %v4004, 1.442695
    %v4016 = vpow.pop %v4015
    %v4017 = vmul.f32 %v4005, 1.442695
    %v4018 = vpow.pop %v4017
    %v4019 = vmul.f32 %v4006, 1.442695
    %v4020 = vpow.pop %v4019
    %v4021 = vmul.f32 %v4007, 1.442695
    %v4022 = vpow.pop %v4021
    %v4023 = vmul.f32 %v4008, 1.442695
    %v4024 = vpow.pop %v4023
    %v4025 = vsel %vm245, %v4010, 0.0
    %4026 = vadd.xlane.f32.xlu0 %v4025
    %v4027 = vpop.xlane.xlu0 %4026
    %v4028 = vsel %vm245, %v4012, 0.0
    %4029 = vadd.xlane.f32.xlu0 %v4028
    %v4030 = vpop.xlane.xlu0 %4029
    %v4031 = vsel %vm245, %v4014, 0.0
    %4032 = vadd.xlane.f32.xlu0 %v4031
    %v4033 = vpop.xlane.xlu0 %4032
    %v4034 = vsel %vm245, %v4016, 0.0
    %4035 = vadd.xlane.f32.xlu0 %v4034
    %v4036 = vpop.xlane.xlu0 %4035
    %v4037 = vsel %vm245, %v4018, 0.0
    %4038 = vadd.xlane.f32.xlu0 %v4037
    %v4039 = vpop.xlane.xlu0 %4038
    %v4040 = vsel %vm245, %v4020, 0.0
    %4041 = vadd.xlane.f32.xlu0 %v4040
    %v4042 = vpop.xlane.xlu0 %4041
    %v4043 = vsel %vm245, %v4022, 0.0
    %4044 = vadd.xlane.f32.xlu0 %v4043
    %v4045 = vpop.xlane.xlu0 %4044
    %v4046 = vsel %vm245, %v4024, 0.0
    %4047 = vadd.xlane.f32.xlu0 %v4046
    %v4048 = vpop.xlane.xlu0 %4047
    %v4049 = vlog2.pop %v4027
    %v4050 = vmul.f32 %v4049, 0.6931472
    %v4051 = vlog2.pop %v4030
    %v4052 = vmul.f32 %v4051, 0.6931472
    %v4053 = vlog2.pop %v4033
    %v4054 = vmul.f32 %v4053, 0.6931472
    %v4055 = vlog2.pop %v4036
    %v4056 = vmul.f32 %v4055, 0.6931472
    %v4057 = vlog2.pop %v4039
    %v4058 = vmul.f32 %v4057, 0.6931472
    %v4059 = vlog2.pop %v4042
    %v4060 = vmul.f32 %v4059, 0.6931472
    %v4061 = vlog2.pop %v4045
    %v4062 = vmul.f32 %v4061, 0.6931472
    %v4063 = vlog2.pop %v4048
    %v4064 = vmul.f32 %v4063, 0.6931472
    %v4065 = vadd.f32 %v3979, %v4050
    %v4066 = vadd.f32 %v3982, %v4052
    %v4067 = vadd.f32 %v3985, %v4054
    %v4068 = vadd.f32 %v3988, %v4056
    %v4069 = vadd.f32 %v3991, %v4058
    %v4070 = vadd.f32 %v3994, %v4060
    %v4071 = vadd.f32 %v3997, %v4062
    %v4072 = vadd.f32 %v4000, %v4064
    %v4073 = vsub.f32 %v3969, %v4065
    %v4074 = vsub.f32 %v3970, %v4066
    %v4075 = vsub.f32 %v3971, %v4067
    %v4076 = vsub.f32 %v3972, %v4068
    %v4077 = vsub.f32 %v3973, %v4069
    %v4078 = vsub.f32 %v3974, %v4070
    %v4079 = vsub.f32 %v3975, %v4071
    %v4080 = vsub.f32 %v3976, %v4072
    %v4081 = vsel %vm245, %v4073, -inf
    %v4082 = vsel %vm245, %v4074, -inf
    %v4083 = vmax.f32 %v4081, %v4082
    %v4084 = vrot.slane %v4083, 4
    %v4085 = vmax.f32 %v4083, %v4084
    %v4086 = vrot.slane %v4085, 2
    %v4087 = vmax.f32 %v4085, %v4086
    %v4088 = vrot.slane %v4087, 1
    %v4089 = vmax.f32 %v4087, %v4088
    %v4090 = vsel %vm245, %v4075, -inf
    %v4091 = vsel %vm245, %v4076, -inf
    %v4092 = vmax.f32 %v4090, %v4091
    %v4093 = vrot.slane %v4092, 4
    %v4094 = vmax.f32 %v4092, %v4093
    %v4095 = vrot.slane %v4094, 2
    %v4096 = vmax.f32 %v4094, %v4095
    %v4097 = vrot.slane %v4096, 1
    %v4098 = vmax.f32 %v4096, %v4097
    %v4099 = vsel %vm245, %v4077, -inf
    %v4100 = vsel %vm245, %v4078, -inf
    %v4101 = vmax.f32 %v4099, %v4100
    %v4102 = vrot.slane %v4101, 4
    %v4103 = vmax.f32 %v4101, %v4102
    %v4104 = vrot.slane %v4103, 2
    %v4105 = vmax.f32 %v4103, %v4104
    %v4106 = vrot.slane %v4105, 1
    %v4107 = vmax.f32 %v4105, %v4106
    %v4108 = vsel %vm245, %v4079, -inf
    %v4109 = vsel %vm245, %v4080, -inf
    %v4110 = vmax.f32 %v4108, %v4109
    %v4111 = vrot.slane %v4110, 4
    %v4112 = vmax.f32 %v4110, %v4111
    %v4113 = vrot.slane %v4112, 2
    %v4114 = vmax.f32 %v4112, %v4113
    %v4115 = vrot.slane %v4114, 1
    %v4116 = vmax.f32 %v4114, %v4115
    %v4117 = vsub.f32 %v4073, %v4089
    %v4118 = vsub.f32 %v4074, %v4089
    %v4119 = vsub.f32 %v4075, %v4098
    %v4120 = vsub.f32 %v4076, %v4098
    %v4121 = vsub.f32 %v4077, %v4107
    %v4122 = vsub.f32 %v4078, %v4107
    %v4123 = vsub.f32 %v4079, %v4116
    %v4124 = vsub.f32 %v4080, %v4116
    %v4125 = vmul.f32 %v4117, 1.442695
    %v4126 = vpow.pop %v4125
    %v4127 = vmul.f32 %v4118, 1.442695
    %v4128 = vpow.pop %v4127
    %v4129 = vmul.f32 %v4119, 1.442695
    %v4130 = vpow.pop %v4129
    %v4131 = vmul.f32 %v4120, 1.442695
    %v4132 = vpow.pop %v4131
    %v4133 = vmul.f32 %v4121, 1.442695
    %v4134 = vpow.pop %v4133
    %v4135 = vmul.f32 %v4122, 1.442695
    %v4136 = vpow.pop %v4135
    %v4137 = vmul.f32 %v4123, 1.442695
    %v4138 = vpow.pop %v4137
    %v4139 = vmul.f32 %v4124, 1.442695
    %v4140 = vpow.pop %v4139
    %v4141 = vsel %vm245, %v4126, 0.0
    %v4142 = vsel %vm245, %v4128, 0.0
    %v4143 = vadd.f32 %v4141, %v4142
    %v4144 = vrot.slane %v4143, 4
    %v4145 = vadd.f32 %v4143, %v4144
    %v4146 = vrot.slane %v4145, 2
    %v4147 = vadd.f32 %v4145, %v4146
    %v4148 = vrot.slane %v4147, 1
    %v4149 = vadd.f32 %v4147, %v4148
    %v4150 = vsel %vm245, %v4130, 0.0
    %v4151 = vsel %vm245, %v4132, 0.0
    %v4152 = vadd.f32 %v4150, %v4151
    %v4153 = vrot.slane %v4152, 4
    %v4154 = vadd.f32 %v4152, %v4153
    %v4155 = vrot.slane %v4154, 2
    %v4156 = vadd.f32 %v4154, %v4155
    %v4157 = vrot.slane %v4156, 1
    %v4158 = vadd.f32 %v4156, %v4157
    %v4159 = vsel %vm245, %v4134, 0.0
    %v4160 = vsel %vm245, %v4136, 0.0
    %v4161 = vadd.f32 %v4159, %v4160
    %v4162 = vrot.slane %v4161, 4
    %v4163 = vadd.f32 %v4161, %v4162
    %v4164 = vrot.slane %v4163, 2
    %v4165 = vadd.f32 %v4163, %v4164
    %v4166 = vrot.slane %v4165, 1
    %v4167 = vadd.f32 %v4165, %v4166
    %v4168 = vsel %vm245, %v4138, 0.0
    %v4169 = vsel %vm245, %v4140, 0.0
    %v4170 = vadd.f32 %v4168, %v4169
    %v4171 = vrot.slane %v4170, 4
    %v4172 = vadd.f32 %v4170, %v4171
    %v4173 = vrot.slane %v4172, 2
    %v4174 = vadd.f32 %v4172, %v4173
    %v4175 = vrot.slane %v4174, 1
    %v4176 = vadd.f32 %v4174, %v4175
    %v4177 = vlog2.pop %v4149
    %v4178 = vmul.f32 %v4177, 0.6931472
    %v4179 = vlog2.pop %v4158
    %v4180 = vmul.f32 %v4179, 0.6931472
    %v4181 = vlog2.pop %v4167
    %v4182 = vmul.f32 %v4181, 0.6931472
    %v4183 = vlog2.pop %v4176
    %v4184 = vmul.f32 %v4183, 0.6931472
    %v4185 = vadd.f32 %v4089, %v4178
    %v4186 = vadd.f32 %v4098, %v4180
    %v4187 = vadd.f32 %v4107, %v4182
    %v4188 = vadd.f32 %v4116, %v4184
    %v4189 = vsub.f32 %v4073, %v4185
    %v4190 = vsub.f32 %v4074, %v4185
    %v4191 = vsub.f32 %v4075, %v4186
    %v4192 = vsub.f32 %v4076, %v4186
    %v4193 = vsub.f32 %v4077, %v4187
    %v4194 = vsub.f32 %v4078, %v4187
    %v4195 = vsub.f32 %v4079, %v4188
    %v4196 = vsub.f32 %v4080, %v4188
    %v4197 = vsel %vm245, %v4189, -inf
    %4198 = vmax.xlane.f32.xlu0 %v4197
    %v4199 = vpop.xlane.xlu0 %4198
    %v4200 = vsel %vm245, %v4190, -inf
    %4201 = vmax.xlane.f32.xlu0 %v4200
    %v4202 = vpop.xlane.xlu0 %4201
    %v4203 = vsel %vm245, %v4191, -inf
    %4204 = vmax.xlane.f32.xlu0 %v4203
    %v4205 = vpop.xlane.xlu0 %4204
    %v4206 = vsel %vm245, %v4192, -inf
    %4207 = vmax.xlane.f32.xlu0 %v4206
    %v4208 = vpop.xlane.xlu0 %4207
    %v4209 = vsel %vm245, %v4193, -inf
    %4210 = vmax.xlane.f32.xlu0 %v4209
    %v4211 = vpop.xlane.xlu0 %4210
    %v4212 = vsel %vm245, %v4194, -inf
    %4213 = vmax.xlane.f32.xlu0 %v4212
    %v4214 = vpop.xlane.xlu0 %4213
    %v4215 = vsel %vm245, %v4195, -inf
    %4216 = vmax.xlane.f32.xlu0 %v4215
    %v4217 = vpop.xlane.xlu0 %4216
    %v4218 = vsel %vm245, %v4196, -inf
    %4219 = vmax.xlane.f32.xlu0 %v4218
    %v4220 = vpop.xlane.xlu0 %4219
    %v4221 = vsub.f32 %v4189, %v4199
    %v4222 = vsub.f32 %v4190, %v4202
    %v4223 = vsub.f32 %v4191, %v4205
    %v4224 = vsub.f32 %v4192, %v4208
    %v4225 = vsub.f32 %v4193, %v4211
    %v4226 = vsub.f32 %v4194, %v4214
    %v4227 = vsub.f32 %v4195, %v4217
    %v4228 = vsub.f32 %v4196, %v4220
    %v4229 = vmul.f32 %v4221, 1.442695
    %v4230 = vpow.pop %v4229
    %v4231 = vmul.f32 %v4222, 1.442695
    %v4232 = vpow.pop %v4231
    %v4233 = vmul.f32 %v4223, 1.442695
    %v4234 = vpow.pop %v4233
    %v4235 = vmul.f32 %v4224, 1.442695
    %v4236 = vpow.pop %v4235
    %v4237 = vmul.f32 %v4225, 1.442695
    %v4238 = vpow.pop %v4237
    %v4239 = vmul.f32 %v4226, 1.442695
    %v4240 = vpow.pop %v4239
    %v4241 = vmul.f32 %v4227, 1.442695
    %v4242 = vpow.pop %v4241
    %v4243 = vmul.f32 %v4228, 1.442695
    %v4244 = vpow.pop %v4243
    %v4245 = vsel %vm245, %v4230, 0.0
    %4246 = vadd.xlane.f32.xlu0 %v4245
    %v4247 = vpop.xlane.xlu0 %4246
    %v4248 = vsel %vm245, %v4232, 0.0
    %4249 = vadd.xlane.f32.xlu0 %v4248
    %v4250 = vpop.xlane.xlu0 %4249
    %v4251 = vsel %vm245, %v4234, 0.0
    %4252 = vadd.xlane.f32.xlu0 %v4251
    %v4253 = vpop.xlane.xlu0 %4252
    %v4254 = vsel %vm245, %v4236, 0.0
    %4255 = vadd.xlane.f32.xlu0 %v4254
    %v4256 = vpop.xlane.xlu0 %4255
    %v4257 = vsel %vm245, %v4238, 0.0
    %4258 = vadd.xlane.f32.xlu0 %v4257
    %v4259 = vpop.xlane.xlu0 %4258
    %v4260 = vsel %vm245, %v4240, 0.0
    %4261 = vadd.xlane.f32.xlu0 %v4260
    %v4262 = vpop.xlane.xlu0 %4261
    %v4263 = vsel %vm245, %v4242, 0.0
    %4264 = vadd.xlane.f32.xlu0 %v4263
    %v4265 = vpop.xlane.xlu0 %4264
    %v4266 = vsel %vm245, %v4244, 0.0
    %4267 = vadd.xlane.f32.xlu0 %v4266
    %v4268 = vpop.xlane.xlu0 %4267
    %v4269 = vlog2.pop %v4247
    %v4270 = vmul.f32 %v4269, 0.6931472
    %v4271 = vlog2.pop %v4250
    %v4272 = vmul.f32 %v4271, 0.6931472
    %v4273 = vlog2.pop %v4253
    %v4274 = vmul.f32 %v4273, 0.6931472
    %v4275 = vlog2.pop %v4256
    %v4276 = vmul.f32 %v4275, 0.6931472
    %v4277 = vlog2.pop %v4259
    %v4278 = vmul.f32 %v4277, 0.6931472
    %v4279 = vlog2.pop %v4262
    %v4280 = vmul.f32 %v4279, 0.6931472
    %v4281 = vlog2.pop %v4265
    %v4282 = vmul.f32 %v4281, 0.6931472
    %v4283 = vlog2.pop %v4268
    %v4284 = vmul.f32 %v4283, 0.6931472
    %v4285 = vadd.f32 %v4199, %v4270
    %v4286 = vadd.f32 %v4202, %v4272
    %v4287 = vadd.f32 %v4205, %v4274
    %v4288 = vadd.f32 %v4208, %v4276
    %v4289 = vadd.f32 %v4211, %v4278
    %v4290 = vadd.f32 %v4214, %v4280
    %v4291 = vadd.f32 %v4217, %v4282
    %v4292 = vadd.f32 %v4220, %v4284
    %v4293 = vsub.f32 %v4189, %v4285
    %v4294 = vsub.f32 %v4190, %v4286
    %v4295 = vsub.f32 %v4191, %v4287
    %v4296 = vsub.f32 %v4192, %v4288
    %v4297 = vsub.f32 %v4193, %v4289
    %v4298 = vsub.f32 %v4194, %v4290
    %v4299 = vsub.f32 %v4195, %v4291
    %v4300 = vsub.f32 %v4196, %v4292
    %v4301 = vsel %vm245, %v4293, -inf
    %v4302 = vsel %vm245, %v4294, -inf
    %v4303 = vmax.f32 %v4301, %v4302
    %v4304 = vrot.slane %v4303, 4
    %v4305 = vmax.f32 %v4303, %v4304
    %v4306 = vrot.slane %v4305, 2
    %v4307 = vmax.f32 %v4305, %v4306
    %v4308 = vrot.slane %v4307, 1
    %v4309 = vmax.f32 %v4307, %v4308
    %v4310 = vsel %vm245, %v4295, -inf
    %v4311 = vsel %vm245, %v4296, -inf
    %v4312 = vmax.f32 %v4310, %v4311
    %v4313 = vrot.slane %v4312, 4
    %v4314 = vmax.f32 %v4312, %v4313
    %v4315 = vrot.slane %v4314, 2
    %v4316 = vmax.f32 %v4314, %v4315
    %v4317 = vrot.slane %v4316, 1
    %v4318 = vmax.f32 %v4316, %v4317
    %v4319 = vsel %vm245, %v4297, -inf
    %v4320 = vsel %vm245, %v4298, -inf
    %v4321 = vmax.f32 %v4319, %v4320
    %v4322 = vrot.slane %v4321, 4
    %v4323 = vmax.f32 %v4321, %v4322
    %v4324 = vrot.slane %v4323, 2
    %v4325 = vmax.f32 %v4323, %v4324
    %v4326 = vrot.slane %v4325, 1
    %v4327 = vmax.f32 %v4325, %v4326
    %v4328 = vsel %vm245, %v4299, -inf
    %v4329 = vsel %vm245, %v4300, -inf
    %v4330 = vmax.f32 %v4328, %v4329
    %v4331 = vrot.slane %v4330, 4
    %v4332 = vmax.f32 %v4330, %v4331
    %v4333 = vrot.slane %v4332, 2
    %v4334 = vmax.f32 %v4332, %v4333
    %v4335 = vrot.slane %v4334, 1
    %v4336 = vmax.f32 %v4334, %v4335
    %v4337 = vsub.f32 %v4293, %v4309
    %v4338 = vsub.f32 %v4294, %v4309
    %v4339 = vsub.f32 %v4295, %v4318
    %v4340 = vsub.f32 %v4296, %v4318
    %v4341 = vsub.f32 %v4297, %v4327
    %v4342 = vsub.f32 %v4298, %v4327
    %v4343 = vsub.f32 %v4299, %v4336
    %v4344 = vsub.f32 %v4300, %v4336
    %v4345 = vmul.f32 %v4337, 1.442695
    %v4346 = vpow.pop %v4345
    %v4347 = vmul.f32 %v4338, 1.442695
    %v4348 = vpow.pop %v4347
    %v4349 = vmul.f32 %v4339, 1.442695
    %v4350 = vpow.pop %v4349
    %v4351 = vmul.f32 %v4340, 1.442695
    %v4352 = vpow.pop %v4351
    %v4353 = vmul.f32 %v4341, 1.442695
    %v4354 = vpow.pop %v4353
    %v4355 = vmul.f32 %v4342, 1.442695
    %v4356 = vpow.pop %v4355
    %v4357 = vmul.f32 %v4343, 1.442695
    %v4358 = vpow.pop %v4357
    %v4359 = vmul.f32 %v4344, 1.442695
    %v4360 = vpow.pop %v4359
    %v4361 = vsel %vm245, %v4346, 0.0
    %v4362 = vsel %vm245, %v4348, 0.0
    %v4363 = vadd.f32 %v4361, %v4362
    %v4364 = vrot.slane %v4363, 4
    %v4365 = vadd.f32 %v4363, %v4364
    %v4366 = vrot.slane %v4365, 2
    %v4367 = vadd.f32 %v4365, %v4366
    %v4368 = vrot.slane %v4367, 1
    %v4369 = vadd.f32 %v4367, %v4368
    %v4370 = vsel %vm245, %v4350, 0.0
    %v4371 = vsel %vm245, %v4352, 0.0
    %v4372 = vadd.f32 %v4370, %v4371
    %v4373 = vrot.slane %v4372, 4
    %v4374 = vadd.f32 %v4372, %v4373
    %v4375 = vrot.slane %v4374, 2
    %v4376 = vadd.f32 %v4374, %v4375
    %v4377 = vrot.slane %v4376, 1
    %v4378 = vadd.f32 %v4376, %v4377
    %v4379 = vsel %vm245, %v4354, 0.0
    %v4380 = vsel %vm245, %v4356, 0.0
    %v4381 = vadd.f32 %v4379, %v4380
    %v4382 = vrot.slane %v4381, 4
    %v4383 = vadd.f32 %v4381, %v4382
    %v4384 = vrot.slane %v4383, 2
    %v4385 = vadd.f32 %v4383, %v4384
    %v4386 = vrot.slane %v4385, 1
    %v4387 = vadd.f32 %v4385, %v4386
    %v4388 = vsel %vm245, %v4358, 0.0
    %v4389 = vsel %vm245, %v4360, 0.0
    %v4390 = vadd.f32 %v4388, %v4389
    %v4391 = vrot.slane %v4390, 4
    %v4392 = vadd.f32 %v4390, %v4391
    %v4393 = vrot.slane %v4392, 2
    %v4394 = vadd.f32 %v4392, %v4393
    %v4395 = vrot.slane %v4394, 1
    %v4396 = vadd.f32 %v4394, %v4395
    %v4397 = vlog2.pop %v4369
    %v4398 = vmul.f32 %v4397, 0.6931472
    %v4399 = vlog2.pop %v4378
    %v4400 = vmul.f32 %v4399, 0.6931472
    %v4401 = vlog2.pop %v4387
    %v4402 = vmul.f32 %v4401, 0.6931472
    %v4403 = vlog2.pop %v4396
    %v4404 = vmul.f32 %v4403, 0.6931472
    %v4405 = vadd.f32 %v4309, %v4398
    %v4406 = vadd.f32 %v4318, %v4400
    %v4407 = vadd.f32 %v4327, %v4402
    %v4408 = vadd.f32 %v4336, %v4404
    %v4409 = vsub.f32 %v4293, %v4405
    %v4410 = vsub.f32 %v4294, %v4405
    %v4411 = vsub.f32 %v4295, %v4406
    %v4412 = vsub.f32 %v4296, %v4406
    %v4413 = vsub.f32 %v4297, %v4407
    %v4414 = vsub.f32 %v4298, %v4407
    %v4415 = vsub.f32 %v4299, %v4408
    %v4416 = vsub.f32 %v4300, %v4408
    %v4417 = vsel %vm245, %v4409, -inf
    %4418 = vmax.xlane.f32.xlu0 %v4417
    %v4419 = vpop.xlane.xlu0 %4418
    %v4420 = vsel %vm245, %v4410, -inf
    %4421 = vmax.xlane.f32.xlu0 %v4420
    %v4422 = vpop.xlane.xlu0 %4421
    %v4423 = vsel %vm245, %v4411, -inf
    %4424 = vmax.xlane.f32.xlu0 %v4423
    %v4425 = vpop.xlane.xlu0 %4424
    %v4426 = vsel %vm245, %v4412, -inf
    %4427 = vmax.xlane.f32.xlu0 %v4426
    %v4428 = vpop.xlane.xlu0 %4427
    %v4429 = vsel %vm245, %v4413, -inf
    %4430 = vmax.xlane.f32.xlu0 %v4429
    %v4431 = vpop.xlane.xlu0 %4430
    %v4432 = vsel %vm245, %v4414, -inf
    %4433 = vmax.xlane.f32.xlu0 %v4432
    %v4434 = vpop.xlane.xlu0 %4433
    %v4435 = vsel %vm245, %v4415, -inf
    %4436 = vmax.xlane.f32.xlu0 %v4435
    %v4437 = vpop.xlane.xlu0 %4436
    %v4438 = vsel %vm245, %v4416, -inf
    %4439 = vmax.xlane.f32.xlu0 %v4438
    %v4440 = vpop.xlane.xlu0 %4439
    %v4441 = vsub.f32 %v4409, %v4419
    %v4442 = vsub.f32 %v4410, %v4422
    %v4443 = vsub.f32 %v4411, %v4425
    %v4444 = vsub.f32 %v4412, %v4428
    %v4445 = vsub.f32 %v4413, %v4431
    %v4446 = vsub.f32 %v4414, %v4434
    %v4447 = vsub.f32 %v4415, %v4437
    %v4448 = vsub.f32 %v4416, %v4440
    %v4449 = vmul.f32 %v4441, 1.442695
    %v4450 = vpow.pop %v4449
    %v4451 = vmul.f32 %v4442, 1.442695
    %v4452 = vpow.pop %v4451
    %v4453 = vmul.f32 %v4443, 1.442695
    %v4454 = vpow.pop %v4453
    %v4455 = vmul.f32 %v4444, 1.442695
    %v4456 = vpow.pop %v4455
    %v4457 = vmul.f32 %v4445, 1.442695
    %v4458 = vpow.pop %v4457
    %v4459 = vmul.f32 %v4446, 1.442695
    %v4460 = vpow.pop %v4459
    %v4461 = vmul.f32 %v4447, 1.442695
    %v4462 = vpow.pop %v4461
    %v4463 = vmul.f32 %v4448, 1.442695
    %v4464 = vpow.pop %v4463
    %v4465 = vsel %vm245, %v4450, 0.0
    %4466 = vadd.xlane.f32.xlu0 %v4465
    %v4467 = vpop.xlane.xlu0 %4466
    %v4468 = vsel %vm245, %v4452, 0.0
    %4469 = vadd.xlane.f32.xlu0 %v4468
    %v4470 = vpop.xlane.xlu0 %4469
    %v4471 = vsel %vm245, %v4454, 0.0
    %4472 = vadd.xlane.f32.xlu0 %v4471
    %v4473 = vpop.xlane.xlu0 %4472
    %v4474 = vsel %vm245, %v4456, 0.0
    %4475 = vadd.xlane.f32.xlu0 %v4474
    %v4476 = vpop.xlane.xlu0 %4475
    %v4477 = vsel %vm245, %v4458, 0.0
    %4478 = vadd.xlane.f32.xlu0 %v4477
    %v4479 = vpop.xlane.xlu0 %4478
    %v4480 = vsel %vm245, %v4460, 0.0
    %4481 = vadd.xlane.f32.xlu0 %v4480
    %v4482 = vpop.xlane.xlu0 %4481
    %v4483 = vsel %vm245, %v4462, 0.0
    %4484 = vadd.xlane.f32.xlu0 %v4483
    %v4485 = vpop.xlane.xlu0 %4484
    %v4486 = vsel %vm245, %v4464, 0.0
    %4487 = vadd.xlane.f32.xlu0 %v4486
    %v4488 = vpop.xlane.xlu0 %4487
    %v4489 = vlog2.pop %v4467
    %v4490 = vmul.f32 %v4489, 0.6931472
    %v4491 = vlog2.pop %v4470
    %v4492 = vmul.f32 %v4491, 0.6931472
    %v4493 = vlog2.pop %v4473
    %v4494 = vmul.f32 %v4493, 0.6931472
    %v4495 = vlog2.pop %v4476
    %v4496 = vmul.f32 %v4495, 0.6931472
    %v4497 = vlog2.pop %v4479
    %v4498 = vmul.f32 %v4497, 0.6931472
    %v4499 = vlog2.pop %v4482
    %v4500 = vmul.f32 %v4499, 0.6931472
    %v4501 = vlog2.pop %v4485
    %v4502 = vmul.f32 %v4501, 0.6931472
    %v4503 = vlog2.pop %v4488
    %v4504 = vmul.f32 %v4503, 0.6931472
    %v4505 = vadd.f32 %v4419, %v4490
    %v4506 = vadd.f32 %v4422, %v4492
    %v4507 = vadd.f32 %v4425, %v4494
    %v4508 = vadd.f32 %v4428, %v4496
    %v4509 = vadd.f32 %v4431, %v4498
    %v4510 = vadd.f32 %v4434, %v4500
    %v4511 = vadd.f32 %v4437, %v4502
    %v4512 = vadd.f32 %v4440, %v4504
    %v4513 = vsub.f32 %v4409, %v4505
    %v4514 = vsub.f32 %v4410, %v4506
    %v4515 = vsub.f32 %v4411, %v4507
    %v4516 = vsub.f32 %v4412, %v4508
    %v4517 = vsub.f32 %v4413, %v4509
    %v4518 = vsub.f32 %v4414, %v4510
    %v4519 = vsub.f32 %v4415, %v4511
    %v4520 = vsub.f32 %v4416, %v4512
    %v4521 = vsel %vm245, %v4513, -inf
    %v4522 = vsel %vm245, %v4514, -inf
    %v4523 = vmax.f32 %v4521, %v4522
    %v4524 = vrot.slane %v4523, 4
    %v4525 = vmax.f32 %v4523, %v4524
    %v4526 = vrot.slane %v4525, 2
    %v4527 = vmax.f32 %v4525, %v4526
    %v4528 = vrot.slane %v4527, 1
    %v4529 = vmax.f32 %v4527, %v4528
    %v4530 = vsel %vm245, %v4515, -inf
    %v4531 = vsel %vm245, %v4516, -inf
    %v4532 = vmax.f32 %v4530, %v4531
    %v4533 = vrot.slane %v4532, 4
    %v4534 = vmax.f32 %v4532, %v4533
    %v4535 = vrot.slane %v4534, 2
    %v4536 = vmax.f32 %v4534, %v4535
    %v4537 = vrot.slane %v4536, 1
    %v4538 = vmax.f32 %v4536, %v4537
    %v4539 = vsel %vm245, %v4517, -inf
    %v4540 = vsel %vm245, %v4518, -inf
    %v4541 = vmax.f32 %v4539, %v4540
    %v4542 = vrot.slane %v4541, 4
    %v4543 = vmax.f32 %v4541, %v4542
    %v4544 = vrot.slane %v4543, 2
    %v4545 = vmax.f32 %v4543, %v4544
    %v4546 = vrot.slane %v4545, 1
    %v4547 = vmax.f32 %v4545, %v4546
    %v4548 = vsel %vm245, %v4519, -inf
    %v4549 = vsel %vm245, %v4520, -inf
    %v4550 = vmax.f32 %v4548, %v4549
    %v4551 = vrot.slane %v4550, 4
    %v4552 = vmax.f32 %v4550, %v4551
    %v4553 = vrot.slane %v4552, 2
    %v4554 = vmax.f32 %v4552, %v4553
    %v4555 = vrot.slane %v4554, 1
    %v4556 = vmax.f32 %v4554, %v4555
    %v4557 = vsub.f32 %v4513, %v4529
    %v4558 = vsub.f32 %v4514, %v4529
    %v4559 = vsub.f32 %v4515, %v4538
    %v4560 = vsub.f32 %v4516, %v4538
    %v4561 = vsub.f32 %v4517, %v4547
    %v4562 = vsub.f32 %v4518, %v4547
    %v4563 = vsub.f32 %v4519, %v4556
    %v4564 = vsub.f32 %v4520, %v4556
    %v4565 = vmul.f32 %v4557, 1.442695
    %v4566 = vpow.pop %v4565
    %v4567 = vmul.f32 %v4558, 1.442695
    %v4568 = vpow.pop %v4567
    %v4569 = vmul.f32 %v4559, 1.442695
    %v4570 = vpow.pop %v4569
    %v4571 = vmul.f32 %v4560, 1.442695
    %v4572 = vpow.pop %v4571
    %v4573 = vmul.f32 %v4561, 1.442695
    %v4574 = vpow.pop %v4573
    %v4575 = vmul.f32 %v4562, 1.442695
    %v4576 = vpow.pop %v4575
    %v4577 = vmul.f32 %v4563, 1.442695
    %v4578 = vpow.pop %v4577
    %v4579 = vmul.f32 %v4564, 1.442695
    %v4580 = vpow.pop %v4579
    %v4581 = vsel %vm245, %v4566, 0.0
    %v4582 = vsel %vm245, %v4568, 0.0
    %v4583 = vadd.f32 %v4581, %v4582
    %v4584 = vrot.slane %v4583, 4
    %v4585 = vadd.f32 %v4583, %v4584
    %v4586 = vrot.slane %v4585, 2
    %v4587 = vadd.f32 %v4585, %v4586
    %v4588 = vrot.slane %v4587, 1
    %v4589 = vadd.f32 %v4587, %v4588
    %v4590 = vsel %vm245, %v4570, 0.0
    %v4591 = vsel %vm245, %v4572, 0.0
    %v4592 = vadd.f32 %v4590, %v4591
    %v4593 = vrot.slane %v4592, 4
    %v4594 = vadd.f32 %v4592, %v4593
    %v4595 = vrot.slane %v4594, 2
    %v4596 = vadd.f32 %v4594, %v4595
    %v4597 = vrot.slane %v4596, 1
    %v4598 = vadd.f32 %v4596, %v4597
    %v4599 = vsel %vm245, %v4574, 0.0
    %v4600 = vsel %vm245, %v4576, 0.0
    %v4601 = vadd.f32 %v4599, %v4600
    %v4602 = vrot.slane %v4601, 4
    %v4603 = vadd.f32 %v4601, %v4602
    %v4604 = vrot.slane %v4603, 2
    %v4605 = vadd.f32 %v4603, %v4604
    %v4606 = vrot.slane %v4605, 1
    %v4607 = vadd.f32 %v4605, %v4606
    %v4608 = vsel %vm245, %v4578, 0.0
    %v4609 = vsel %vm245, %v4580, 0.0
    %v4610 = vadd.f32 %v4608, %v4609
    %v4611 = vrot.slane %v4610, 4
    %v4612 = vadd.f32 %v4610, %v4611
    %v4613 = vrot.slane %v4612, 2
    %v4614 = vadd.f32 %v4612, %v4613
    %v4615 = vrot.slane %v4614, 1
    %v4616 = vadd.f32 %v4614, %v4615
    %v4617 = vlog2.pop %v4589
    %v4618 = vmul.f32 %v4617, 0.6931472
    %v4619 = vlog2.pop %v4598
    %v4620 = vmul.f32 %v4619, 0.6931472
    %v4621 = vlog2.pop %v4607
    %v4622 = vmul.f32 %v4621, 0.6931472
    %v4623 = vlog2.pop %v4616
    %v4624 = vmul.f32 %v4623, 0.6931472
    %v4625 = vadd.f32 %v4529, %v4618
    %v4626 = vadd.f32 %v4538, %v4620
    %v4627 = vadd.f32 %v4547, %v4622
    %v4628 = vadd.f32 %v4556, %v4624
    %v4629 = vsub.f32 %v4513, %v4625
    %v4630 = vsub.f32 %v4514, %v4625
    %v4631 = vsub.f32 %v4515, %v4626
    %v4632 = vsub.f32 %v4516, %v4626
    %v4633 = vsub.f32 %v4517, %v4627
    %v4634 = vsub.f32 %v4518, %v4627
    %v4635 = vsub.f32 %v4519, %v4628
    %v4636 = vsub.f32 %v4520, %v4628
    %v4637 = vsel %vm245, %v4629, -inf
    %4638 = vmax.xlane.f32.xlu0 %v4637
    %v4639 = vpop.xlane.xlu0 %4638
    %v4640 = vsel %vm245, %v4630, -inf
    %4641 = vmax.xlane.f32.xlu0 %v4640
    %v4642 = vpop.xlane.xlu0 %4641
    %v4643 = vsel %vm245, %v4631, -inf
    %4644 = vmax.xlane.f32.xlu0 %v4643
    %v4645 = vpop.xlane.xlu0 %4644
    %v4646 = vsel %vm245, %v4632, -inf
    %4647 = vmax.xlane.f32.xlu0 %v4646
    %v4648 = vpop.xlane.xlu0 %4647
    %v4649 = vsel %vm245, %v4633, -inf
    %4650 = vmax.xlane.f32.xlu0 %v4649
    %v4651 = vpop.xlane.xlu0 %4650
    %v4652 = vsel %vm245, %v4634, -inf
    %4653 = vmax.xlane.f32.xlu0 %v4652
    %v4654 = vpop.xlane.xlu0 %4653
    %v4655 = vsel %vm245, %v4635, -inf
    %4656 = vmax.xlane.f32.xlu0 %v4655
    %v4657 = vpop.xlane.xlu0 %4656
    %v4658 = vsel %vm245, %v4636, -inf
    %4659 = vmax.xlane.f32.xlu0 %v4658
    %v4660 = vpop.xlane.xlu0 %4659
    %v4661 = vsub.f32 %v4629, %v4639
    %v4662 = vsub.f32 %v4630, %v4642
    %v4663 = vsub.f32 %v4631, %v4645
    %v4664 = vsub.f32 %v4632, %v4648
    %v4665 = vsub.f32 %v4633, %v4651
    %v4666 = vsub.f32 %v4634, %v4654
    %v4667 = vsub.f32 %v4635, %v4657
    %v4668 = vsub.f32 %v4636, %v4660
    %v4669 = vmul.f32 %v4661, 1.442695
    %v4670 = vpow.pop %v4669
    %v4671 = vmul.f32 %v4662, 1.442695
    %v4672 = vpow.pop %v4671
    %v4673 = vmul.f32 %v4663, 1.442695
    %v4674 = vpow.pop %v4673
    %v4675 = vmul.f32 %v4664, 1.442695
    %v4676 = vpow.pop %v4675
    %v4677 = vmul.f32 %v4665, 1.442695
    %v4678 = vpow.pop %v4677
    %v4679 = vmul.f32 %v4666, 1.442695
    %v4680 = vpow.pop %v4679
    %v4681 = vmul.f32 %v4667, 1.442695
    %v4682 = vpow.pop %v4681
    %v4683 = vmul.f32 %v4668, 1.442695
    %v4684 = vpow.pop %v4683
    %v4685 = vsel %vm245, %v4670, 0.0
    %4686 = vadd.xlane.f32.xlu0 %v4685
    %v4687 = vpop.xlane.xlu0 %4686
    %v4688 = vsel %vm245, %v4672, 0.0
    %4689 = vadd.xlane.f32.xlu0 %v4688
    %v4690 = vpop.xlane.xlu0 %4689
    %v4691 = vsel %vm245, %v4674, 0.0
    %4692 = vadd.xlane.f32.xlu0 %v4691
    %v4693 = vpop.xlane.xlu0 %4692
    %v4694 = vsel %vm245, %v4676, 0.0
    %4695 = vadd.xlane.f32.xlu0 %v4694
    %v4696 = vpop.xlane.xlu0 %4695
    %v4697 = vsel %vm245, %v4678, 0.0
    %4698 = vadd.xlane.f32.xlu0 %v4697
    %v4699 = vpop.xlane.xlu0 %4698
    %v4700 = vsel %vm245, %v4680, 0.0
    %4701 = vadd.xlane.f32.xlu0 %v4700
    %v4702 = vpop.xlane.xlu0 %4701
    %v4703 = vsel %vm245, %v4682, 0.0
    %4704 = vadd.xlane.f32.xlu0 %v4703
    %v4705 = vpop.xlane.xlu0 %4704
    %v4706 = vsel %vm245, %v4684, 0.0
    %4707 = vadd.xlane.f32.xlu0 %v4706
    %v4708 = vpop.xlane.xlu0 %4707
    %v4709 = vlog2.pop %v4687
    %v4710 = vmul.f32 %v4709, 0.6931472
    %v4711 = vlog2.pop %v4690
    %v4712 = vmul.f32 %v4711, 0.6931472
    %v4713 = vlog2.pop %v4693
    %v4714 = vmul.f32 %v4713, 0.6931472
    %v4715 = vlog2.pop %v4696
    %v4716 = vmul.f32 %v4715, 0.6931472
    %v4717 = vlog2.pop %v4699
    %v4718 = vmul.f32 %v4717, 0.6931472
    %v4719 = vlog2.pop %v4702
    %v4720 = vmul.f32 %v4719, 0.6931472
    %v4721 = vlog2.pop %v4705
    %v4722 = vmul.f32 %v4721, 0.6931472
    %v4723 = vlog2.pop %v4708
    %v4724 = vmul.f32 %v4723, 0.6931472
    %v4725 = vadd.f32 %v4639, %v4710
    %v4726 = vadd.f32 %v4642, %v4712
    %v4727 = vadd.f32 %v4645, %v4714
    %v4728 = vadd.f32 %v4648, %v4716
    %v4729 = vadd.f32 %v4651, %v4718
    %v4730 = vadd.f32 %v4654, %v4720
    %v4731 = vadd.f32 %v4657, %v4722
    %v4732 = vadd.f32 %v4660, %v4724
    %v4733 = vsub.f32 %v4629, %v4725
    %v4734 = vsub.f32 %v4630, %v4726
    %v4735 = vsub.f32 %v4631, %v4727
    %v4736 = vsub.f32 %v4632, %v4728
    %v4737 = vsub.f32 %v4633, %v4729
    %v4738 = vsub.f32 %v4634, %v4730
    %v4739 = vsub.f32 %v4635, %v4731
    %v4740 = vsub.f32 %v4636, %v4732
    %v4741 = vsel %vm245, %v4733, -inf
    %v4742 = vsel %vm245, %v4734, -inf
    %v4743 = vmax.f32 %v4741, %v4742
    %v4744 = vrot.slane %v4743, 4
    %v4745 = vmax.f32 %v4743, %v4744
    %v4746 = vrot.slane %v4745, 2
    %v4747 = vmax.f32 %v4745, %v4746
    %v4748 = vrot.slane %v4747, 1
    %v4749 = vmax.f32 %v4747, %v4748
    %v4750 = vsel %vm245, %v4735, -inf
    %v4751 = vsel %vm245, %v4736, -inf
    %v4752 = vmax.f32 %v4750, %v4751
    %v4753 = vrot.slane %v4752, 4
    %v4754 = vmax.f32 %v4752, %v4753
    %v4755 = vrot.slane %v4754, 2
    %v4756 = vmax.f32 %v4754, %v4755
    %v4757 = vrot.slane %v4756, 1
    %v4758 = vmax.f32 %v4756, %v4757
    %v4759 = vsel %vm245, %v4737, -inf
    %v4760 = vsel %vm245, %v4738, -inf
    %v4761 = vmax.f32 %v4759, %v4760
    %v4762 = vrot.slane %v4761, 4
    %v4763 = vmax.f32 %v4761, %v4762
    %v4764 = vrot.slane %v4763, 2
    %v4765 = vmax.f32 %v4763, %v4764
    %v4766 = vrot.slane %v4765, 1
    %v4767 = vmax.f32 %v4765, %v4766
    %v4768 = vsel %vm245, %v4739, -inf
    %v4769 = vsel %vm245, %v4740, -inf
    %v4770 = vmax.f32 %v4768, %v4769
    %v4771 = vrot.slane %v4770, 4
    %v4772 = vmax.f32 %v4770, %v4771
    %v4773 = vrot.slane %v4772, 2
    %v4774 = vmax.f32 %v4772, %v4773
    %v4775 = vrot.slane %v4774, 1
    %v4776 = vmax.f32 %v4774, %v4775
    %v4777 = vsub.f32 %v4733, %v4749
    %v4778 = vsub.f32 %v4734, %v4749
    %v4779 = vsub.f32 %v4735, %v4758
    %v4780 = vsub.f32 %v4736, %v4758
    %v4781 = vsub.f32 %v4737, %v4767
    %v4782 = vsub.f32 %v4738, %v4767
    %v4783 = vsub.f32 %v4739, %v4776
    %v4784 = vsub.f32 %v4740, %v4776
    %v4785 = vmul.f32 %v4777, 1.442695
    %v4786 = vpow.pop %v4785
    %v4787 = vmul.f32 %v4778, 1.442695
    %v4788 = vpow.pop %v4787
    %v4789 = vmul.f32 %v4779, 1.442695
    %v4790 = vpow.pop %v4789
    %v4791 = vmul.f32 %v4780, 1.442695
    %v4792 = vpow.pop %v4791
    %v4793 = vmul.f32 %v4781, 1.442695
    %v4794 = vpow.pop %v4793
    %v4795 = vmul.f32 %v4782, 1.442695
    %v4796 = vpow.pop %v4795
    %v4797 = vmul.f32 %v4783, 1.442695
    %v4798 = vpow.pop %v4797
    %v4799 = vmul.f32 %v4784, 1.442695
    %v4800 = vpow.pop %v4799
    %v4801 = vsel %vm245, %v4786, 0.0
    %v4802 = vsel %vm245, %v4788, 0.0
    %v4803 = vadd.f32 %v4801, %v4802
    %v4804 = vrot.slane %v4803, 4
    %v4805 = vadd.f32 %v4803, %v4804
    %v4806 = vrot.slane %v4805, 2
    %v4807 = vadd.f32 %v4805, %v4806
    %v4808 = vrot.slane %v4807, 1
    %v4809 = vadd.f32 %v4807, %v4808
    %v4810 = vsel %vm245, %v4790, 0.0
    %v4811 = vsel %vm245, %v4792, 0.0
    %v4812 = vadd.f32 %v4810, %v4811
    %v4813 = vrot.slane %v4812, 4
    %v4814 = vadd.f32 %v4812, %v4813
    %v4815 = vrot.slane %v4814, 2
    %v4816 = vadd.f32 %v4814, %v4815
    %v4817 = vrot.slane %v4816, 1
    %v4818 = vadd.f32 %v4816, %v4817
    %v4819 = vsel %vm245, %v4794, 0.0
    %v4820 = vsel %vm245, %v4796, 0.0
    %v4821 = vadd.f32 %v4819, %v4820
    %v4822 = vrot.slane %v4821, 4
    %v4823 = vadd.f32 %v4821, %v4822
    %v4824 = vrot.slane %v4823, 2
    %v4825 = vadd.f32 %v4823, %v4824
    %v4826 = vrot.slane %v4825, 1
    %v4827 = vadd.f32 %v4825, %v4826
    %v4828 = vsel %vm245, %v4798, 0.0
    %v4829 = vsel %vm245, %v4800, 0.0
    %v4830 = vadd.f32 %v4828, %v4829
    %v4831 = vrot.slane %v4830, 4
    %v4832 = vadd.f32 %v4830, %v4831
    %v4833 = vrot.slane %v4832, 2
    %v4834 = vadd.f32 %v4832, %v4833
    %v4835 = vrot.slane %v4834, 1
    %v4836 = vadd.f32 %v4834, %v4835
    %v4837 = vlog2.pop %v4809
    %v4838 = vmul.f32 %v4837, 0.6931472
    %v4839 = vlog2.pop %v4818
    %v4840 = vmul.f32 %v4839, 0.6931472
    %v4841 = vlog2.pop %v4827
    %v4842 = vmul.f32 %v4841, 0.6931472
    %v4843 = vlog2.pop %v4836
    %v4844 = vmul.f32 %v4843, 0.6931472
    %v4845 = vadd.f32 %v4749, %v4838
    %v4846 = vadd.f32 %v4758, %v4840
    %v4847 = vadd.f32 %v4767, %v4842
    %v4848 = vadd.f32 %v4776, %v4844
    %v4849 = vsub.f32 %v4733, %v4845
    %v4850 = vsub.f32 %v4734, %v4845
    %v4851 = vsub.f32 %v4735, %v4846
    %v4852 = vsub.f32 %v4736, %v4846
    %v4853 = vsub.f32 %v4737, %v4847
    %v4854 = vsub.f32 %v4738, %v4847
    %v4855 = vsub.f32 %v4739, %v4848
    %v4856 = vsub.f32 %v4740, %v4848
    %v4857 = vsel %vm245, %v4849, -inf
    %4858 = vmax.xlane.f32.xlu0 %v4857
    %v4859 = vpop.xlane.xlu0 %4858
    %v4860 = vsel %vm245, %v4850, -inf
    %4861 = vmax.xlane.f32.xlu0 %v4860
    %v4862 = vpop.xlane.xlu0 %4861
    %v4863 = vsel %vm245, %v4851, -inf
    %4864 = vmax.xlane.f32.xlu0 %v4863
    %v4865 = vpop.xlane.xlu0 %4864
    %v4866 = vsel %vm245, %v4852, -inf
    %4867 = vmax.xlane.f32.xlu0 %v4866
    %v4868 = vpop.xlane.xlu0 %4867
    %v4869 = vsel %vm245, %v4853, -inf
    %4870 = vmax.xlane.f32.xlu0 %v4869
    %v4871 = vpop.xlane.xlu0 %4870
    %v4872 = vsel %vm245, %v4854, -inf
    %4873 = vmax.xlane.f32.xlu0 %v4872
    %v4874 = vpop.xlane.xlu0 %4873
    %v4875 = vsel %vm245, %v4855, -inf
    %4876 = vmax.xlane.f32.xlu0 %v4875
    %v4877 = vpop.xlane.xlu0 %4876
    %v4878 = vsel %vm245, %v4856, -inf
    %4879 = vmax.xlane.f32.xlu0 %v4878
    %v4880 = vpop.xlane.xlu0 %4879
    %v4881 = vsub.f32 %v4849, %v4859
    %v4882 = vsub.f32 %v4850, %v4862
    %v4883 = vsub.f32 %v4851, %v4865
    %v4884 = vsub.f32 %v4852, %v4868
    %v4885 = vsub.f32 %v4853, %v4871
    %v4886 = vsub.f32 %v4854, %v4874
    %v4887 = vsub.f32 %v4855, %v4877
    %v4888 = vsub.f32 %v4856, %v4880
    %v4889 = vmul.f32 %v4881, 1.442695
    %v4890 = vpow.pop %v4889
    %v4891 = vmul.f32 %v4882, 1.442695
    %v4892 = vpow.pop %v4891
    %v4893 = vmul.f32 %v4883, 1.442695
    %v4894 = vpow.pop %v4893
    %v4895 = vmul.f32 %v4884, 1.442695
    %v4896 = vpow.pop %v4895
    %v4897 = vmul.f32 %v4885, 1.442695
    %v4898 = vpow.pop %v4897
    %v4899 = vmul.f32 %v4886, 1.442695
    %v4900 = vpow.pop %v4899
    %v4901 = vmul.f32 %v4887, 1.442695
    %v4902 = vpow.pop %v4901
    %v4903 = vmul.f32 %v4888, 1.442695
    %v4904 = vpow.pop %v4903
    %v4905 = vsel %vm245, %v4890, 0.0
    %4906 = vadd.xlane.f32.xlu0 %v4905
    %v4907 = vpop.xlane.xlu0 %4906
    %v4908 = vsel %vm245, %v4892, 0.0
    %4909 = vadd.xlane.f32.xlu0 %v4908
    %v4910 = vpop.xlane.xlu0 %4909
    %v4911 = vsel %vm245, %v4894, 0.0
    %4912 = vadd.xlane.f32.xlu0 %v4911
    %v4913 = vpop.xlane.xlu0 %4912
    %v4914 = vsel %vm245, %v4896, 0.0
    %4915 = vadd.xlane.f32.xlu0 %v4914
    %v4916 = vpop.xlane.xlu0 %4915
    %v4917 = vsel %vm245, %v4898, 0.0
    %4918 = vadd.xlane.f32.xlu0 %v4917
    %v4919 = vpop.xlane.xlu0 %4918
    %v4920 = vsel %vm245, %v4900, 0.0
    %4921 = vadd.xlane.f32.xlu0 %v4920
    %v4922 = vpop.xlane.xlu0 %4921
    %v4923 = vsel %vm245, %v4902, 0.0
    %4924 = vadd.xlane.f32.xlu0 %v4923
    %v4925 = vpop.xlane.xlu0 %4924
    %v4926 = vsel %vm245, %v4904, 0.0
    %4927 = vadd.xlane.f32.xlu0 %v4926
    %v4928 = vpop.xlane.xlu0 %4927
    %v4929 = vlog2.pop %v4907
    %v4930 = vmul.f32 %v4929, 0.6931472
    %v4931 = vlog2.pop %v4910
    %v4932 = vmul.f32 %v4931, 0.6931472
    %v4933 = vlog2.pop %v4913
    %v4934 = vmul.f32 %v4933, 0.6931472
    %v4935 = vlog2.pop %v4916
    %v4936 = vmul.f32 %v4935, 0.6931472
    %v4937 = vlog2.pop %v4919
    %v4938 = vmul.f32 %v4937, 0.6931472
    %v4939 = vlog2.pop %v4922
    %v4940 = vmul.f32 %v4939, 0.6931472
    %v4941 = vlog2.pop %v4925
    %v4942 = vmul.f32 %v4941, 0.6931472
    %v4943 = vlog2.pop %v4928
    %v4944 = vmul.f32 %v4943, 0.6931472
    %v4945 = vadd.f32 %v4859, %v4930
    %v4946 = vadd.f32 %v4862, %v4932
    %v4947 = vadd.f32 %v4865, %v4934
    %v4948 = vadd.f32 %v4868, %v4936
    %v4949 = vadd.f32 %v4871, %v4938
    %v4950 = vadd.f32 %v4874, %v4940
    %v4951 = vadd.f32 %v4877, %v4942
    %v4952 = vadd.f32 %v4880, %v4944
    %v4953 = vsub.f32 %v4849, %v4945
    %v4954 = vsub.f32 %v4850, %v4946
    %v4955 = vsub.f32 %v4851, %v4947
    %v4956 = vsub.f32 %v4852, %v4948
    %v4957 = vsub.f32 %v4853, %v4949
    %v4958 = vsub.f32 %v4854, %v4950
    %v4959 = vsub.f32 %v4855, %v4951
    %v4960 = vsub.f32 %v4856, %v4952
    %v4961 = vsel %vm245, %v4953, -inf
    %v4962 = vsel %vm245, %v4954, -inf
    %v4963 = vmax.f32 %v4961, %v4962
    %v4964 = vrot.slane %v4963, 4
    %v4965 = vmax.f32 %v4963, %v4964
    %v4966 = vrot.slane %v4965, 2
    %v4967 = vmax.f32 %v4965, %v4966
    %v4968 = vrot.slane %v4967, 1
    %v4969 = vmax.f32 %v4967, %v4968
    %v4970 = vsel %vm245, %v4955, -inf
    %v4971 = vsel %vm245, %v4956, -inf
    %v4972 = vmax.f32 %v4970, %v4971
    %v4973 = vrot.slane %v4972, 4
    %v4974 = vmax.f32 %v4972, %v4973
    %v4975 = vrot.slane %v4974, 2
    %v4976 = vmax.f32 %v4974, %v4975
    %v4977 = vrot.slane %v4976, 1
    %v4978 = vmax.f32 %v4976, %v4977
    %v4979 = vsel %vm245, %v4957, -inf
    %v4980 = vsel %vm245, %v4958, -inf
    %v4981 = vmax.f32 %v4979, %v4980
    %v4982 = vrot.slane %v4981, 4
    %v4983 = vmax.f32 %v4981, %v4982
    %v4984 = vrot.slane %v4983, 2
    %v4985 = vmax.f32 %v4983, %v4984
    %v4986 = vrot.slane %v4985, 1
    %v4987 = vmax.f32 %v4985, %v4986
    %v4988 = vsel %vm245, %v4959, -inf
    %v4989 = vsel %vm245, %v4960, -inf
    %v4990 = vmax.f32 %v4988, %v4989
    %v4991 = vrot.slane %v4990, 4
    %v4992 = vmax.f32 %v4990, %v4991
    %v4993 = vrot.slane %v4992, 2
    %v4994 = vmax.f32 %v4992, %v4993
    %v4995 = vrot.slane %v4994, 1
    %v4996 = vmax.f32 %v4994, %v4995
    %v4997 = vsub.f32 %v4953, %v4969
    %v4998 = vsub.f32 %v4954, %v4969
    %v4999 = vsub.f32 %v4955, %v4978
    %v5000 = vsub.f32 %v4956, %v4978
    %v5001 = vsub.f32 %v4957, %v4987
    %v5002 = vsub.f32 %v4958, %v4987
    %v5003 = vsub.f32 %v4959, %v4996
    %v5004 = vsub.f32 %v4960, %v4996
    %v5005 = vmul.f32 %v4997, 1.442695
    %v5006 = vpow.pop %v5005
    %v5007 = vmul.f32 %v4998, 1.442695
    %v5008 = vpow.pop %v5007
    %v5009 = vmul.f32 %v4999, 1.442695
    %v5010 = vpow.pop %v5009
    %v5011 = vmul.f32 %v5000, 1.442695
    %v5012 = vpow.pop %v5011
    %v5013 = vmul.f32 %v5001, 1.442695
    %v5014 = vpow.pop %v5013
    %v5015 = vmul.f32 %v5002, 1.442695
    %v5016 = vpow.pop %v5015
    %v5017 = vmul.f32 %v5003, 1.442695
    %v5018 = vpow.pop %v5017
    %v5019 = vmul.f32 %v5004, 1.442695
    %v5020 = vpow.pop %v5019
    %v5021 = vsel %vm245, %v5006, 0.0
    %v5022 = vsel %vm245, %v5008, 0.0
    %v5023 = vadd.f32 %v5021, %v5022
    %v5024 = vrot.slane %v5023, 4
    %v5025 = vadd.f32 %v5023, %v5024
    %v5026 = vrot.slane %v5025, 2
    %v5027 = vadd.f32 %v5025, %v5026
    %v5028 = vrot.slane %v5027, 1
    %v5029 = vadd.f32 %v5027, %v5028
    %v5030 = vsel %vm245, %v5010, 0.0
    %v5031 = vsel %vm245, %v5012, 0.0
    %v5032 = vadd.f32 %v5030, %v5031
    %v5033 = vrot.slane %v5032, 4
    %v5034 = vadd.f32 %v5032, %v5033
    %v5035 = vrot.slane %v5034, 2
    %v5036 = vadd.f32 %v5034, %v5035
    %v5037 = vrot.slane %v5036, 1
    %v5038 = vadd.f32 %v5036, %v5037
    %v5039 = vsel %vm245, %v5014, 0.0
    %v5040 = vsel %vm245, %v5016, 0.0
    %v5041 = vadd.f32 %v5039, %v5040
    %v5042 = vrot.slane %v5041, 4
    %v5043 = vadd.f32 %v5041, %v5042
    %v5044 = vrot.slane %v5043, 2
    %v5045 = vadd.f32 %v5043, %v5044
    %v5046 = vrot.slane %v5045, 1
    %v5047 = vadd.f32 %v5045, %v5046
    %v5048 = vsel %vm245, %v5018, 0.0
    %v5049 = vsel %vm245, %v5020, 0.0
    %v5050 = vadd.f32 %v5048, %v5049
    %v5051 = vrot.slane %v5050, 4
    %v5052 = vadd.f32 %v5050, %v5051
    %v5053 = vrot.slane %v5052, 2
    %v5054 = vadd.f32 %v5052, %v5053
    %v5055 = vrot.slane %v5054, 1
    %v5056 = vadd.f32 %v5054, %v5055
    %v5057 = vlog2.pop %v5029
    %v5058 = vmul.f32 %v5057, 0.6931472
    %v5059 = vlog2.pop %v5038
    %v5060 = vmul.f32 %v5059, 0.6931472
    %v5061 = vlog2.pop %v5047
    %v5062 = vmul.f32 %v5061, 0.6931472
    %v5063 = vlog2.pop %v5056
    %v5064 = vmul.f32 %v5063, 0.6931472
    %v5065 = vadd.f32 %v4969, %v5058
    %v5066 = vadd.f32 %v4978, %v5060
    %v5067 = vadd.f32 %v4987, %v5062
    %v5068 = vadd.f32 %v4996, %v5064
    %v5069 = vsub.f32 %v4953, %v5065
    %v5070 = vsub.f32 %v4954, %v5065
    %v5071 = vsub.f32 %v4955, %v5066
    %v5072 = vsub.f32 %v4956, %v5066
    %v5073 = vsub.f32 %v4957, %v5067
    %v5074 = vsub.f32 %v4958, %v5067
    %v5075 = vsub.f32 %v4959, %v5068
    %v5076 = vsub.f32 %v4960, %v5068
    %v5077 = vsel %vm245, %v5069, -inf
    %5078 = vmax.xlane.f32.xlu0 %v5077
    %v5079 = vpop.xlane.xlu0 %5078
    %v5080 = vsel %vm245, %v5070, -inf
    %5081 = vmax.xlane.f32.xlu0 %v5080
    %v5082 = vpop.xlane.xlu0 %5081
    %v5083 = vsel %vm245, %v5071, -inf
    %5084 = vmax.xlane.f32.xlu0 %v5083
    %v5085 = vpop.xlane.xlu0 %5084
    %v5086 = vsel %vm245, %v5072, -inf
    %5087 = vmax.xlane.f32.xlu0 %v5086
    %v5088 = vpop.xlane.xlu0 %5087
    %v5089 = vsel %vm245, %v5073, -inf
    %5090 = vmax.xlane.f32.xlu0 %v5089
    %v5091 = vpop.xlane.xlu0 %5090
    %v5092 = vsel %vm245, %v5074, -inf
    %5093 = vmax.xlane.f32.xlu0 %v5092
    %v5094 = vpop.xlane.xlu0 %5093
    %v5095 = vsel %vm245, %v5075, -inf
    %5096 = vmax.xlane.f32.xlu0 %v5095
    %v5097 = vpop.xlane.xlu0 %5096
    %v5098 = vsel %vm245, %v5076, -inf
    %5099 = vmax.xlane.f32.xlu0 %v5098
    %v5100 = vpop.xlane.xlu0 %5099
    %v5101 = vsub.f32 %v5069, %v5079
    %v5102 = vsub.f32 %v5070, %v5082
    %v5103 = vsub.f32 %v5071, %v5085
    %v5104 = vsub.f32 %v5072, %v5088
    %v5105 = vsub.f32 %v5073, %v5091
    %v5106 = vsub.f32 %v5074, %v5094
    %v5107 = vsub.f32 %v5075, %v5097
    %v5108 = vsub.f32 %v5076, %v5100
    %v5109 = vmul.f32 %v5101, 1.442695
    %v5110 = vpow.pop %v5109
    %v5111 = vmul.f32 %v5102, 1.442695
    %v5112 = vpow.pop %v5111
    %v5113 = vmul.f32 %v5103, 1.442695
    %v5114 = vpow.pop %v5113
    %v5115 = vmul.f32 %v5104, 1.442695
    %v5116 = vpow.pop %v5115
    %v5117 = vmul.f32 %v5105, 1.442695
    %v5118 = vpow.pop %v5117
    %v5119 = vmul.f32 %v5106, 1.442695
    %v5120 = vpow.pop %v5119
    %v5121 = vmul.f32 %v5107, 1.442695
    %v5122 = vpow.pop %v5121
    %v5123 = vmul.f32 %v5108, 1.442695
    %v5124 = vpow.pop %v5123
    %v5125 = vsel %vm245, %v5110, 0.0
    %5126 = vadd.xlane.f32.xlu0 %v5125
    %v5127 = vpop.xlane.xlu0 %5126
    %v5128 = vsel %vm245, %v5112, 0.0
    %5129 = vadd.xlane.f32.xlu0 %v5128
    %v5130 = vpop.xlane.xlu0 %5129
    %v5131 = vsel %vm245, %v5114, 0.0
    %5132 = vadd.xlane.f32.xlu0 %v5131
    %v5133 = vpop.xlane.xlu0 %5132
    %v5134 = vsel %vm245, %v5116, 0.0
    %5135 = vadd.xlane.f32.xlu0 %v5134
    %v5136 = vpop.xlane.xlu0 %5135
    %v5137 = vsel %vm245, %v5118, 0.0
    %5138 = vadd.xlane.f32.xlu0 %v5137
    %v5139 = vpop.xlane.xlu0 %5138
    %v5140 = vsel %vm245, %v5120, 0.0
    %5141 = vadd.xlane.f32.xlu0 %v5140
    %v5142 = vpop.xlane.xlu0 %5141
    %v5143 = vsel %vm245, %v5122, 0.0
    %5144 = vadd.xlane.f32.xlu0 %v5143
    %v5145 = vpop.xlane.xlu0 %5144
    %v5146 = vsel %vm245, %v5124, 0.0
    %5147 = vadd.xlane.f32.xlu0 %v5146
    %v5148 = vpop.xlane.xlu0 %5147
    %v5149 = vlog2.pop %v5127
    %v5150 = vmul.f32 %v5149, 0.6931472
    %v5151 = vlog2.pop %v5130
    %v5152 = vmul.f32 %v5151, 0.6931472
    %v5153 = vlog2.pop %v5133
    %v5154 = vmul.f32 %v5153, 0.6931472
    %v5155 = vlog2.pop %v5136
    %v5156 = vmul.f32 %v5155, 0.6931472
    %v5157 = vlog2.pop %v5139
    %v5158 = vmul.f32 %v5157, 0.6931472
    %v5159 = vlog2.pop %v5142
    %v5160 = vmul.f32 %v5159, 0.6931472
    %v5161 = vlog2.pop %v5145
    %v5162 = vmul.f32 %v5161, 0.6931472
    %v5163 = vlog2.pop %v5148
    %v5164 = vmul.f32 %v5163, 0.6931472
    %v5165 = vadd.f32 %v5079, %v5150
    %v5166 = vadd.f32 %v5082, %v5152
    %v5167 = vadd.f32 %v5085, %v5154
    %v5168 = vadd.f32 %v5088, %v5156
    %v5169 = vadd.f32 %v5091, %v5158
    %v5170 = vadd.f32 %v5094, %v5160
    %v5171 = vadd.f32 %v5097, %v5162
    %v5172 = vadd.f32 %v5100, %v5164
    %v5173 = vsub.f32 %v5069, %v5165
    %v5174 = vsub.f32 %v5070, %v5166
    %v5175 = vsub.f32 %v5071, %v5167
    %v5176 = vsub.f32 %v5072, %v5168
    %v5177 = vsub.f32 %v5073, %v5169
    %v5178 = vsub.f32 %v5074, %v5170
    %v5179 = vsub.f32 %v5075, %v5171
    %v5180 = vsub.f32 %v5076, %v5172
    %v5181 = vsel %vm245, %v5173, -inf
    %v5182 = vsel %vm245, %v5174, -inf
    %v5183 = vmax.f32 %v5181, %v5182
    %v5184 = vrot.slane %v5183, 4
    %v5185 = vmax.f32 %v5183, %v5184
    %v5186 = vrot.slane %v5185, 2
    %v5187 = vmax.f32 %v5185, %v5186
    %v5188 = vrot.slane %v5187, 1
    %v5189 = vmax.f32 %v5187, %v5188
    %v5190 = vsel %vm245, %v5175, -inf
    %v5191 = vsel %vm245, %v5176, -inf
    %v5192 = vmax.f32 %v5190, %v5191
    %v5193 = vrot.slane %v5192, 4
    %v5194 = vmax.f32 %v5192, %v5193
    %v5195 = vrot.slane %v5194, 2
    %v5196 = vmax.f32 %v5194, %v5195
    %v5197 = vrot.slane %v5196, 1
    %v5198 = vmax.f32 %v5196, %v5197
    %v5199 = vsel %vm245, %v5177, -inf
    %v5200 = vsel %vm245, %v5178, -inf
    %v5201 = vmax.f32 %v5199, %v5200
    %v5202 = vrot.slane %v5201, 4
    %v5203 = vmax.f32 %v5201, %v5202
    %v5204 = vrot.slane %v5203, 2
    %v5205 = vmax.f32 %v5203, %v5204
    %v5206 = vrot.slane %v5205, 1
    %v5207 = vmax.f32 %v5205, %v5206
    %v5208 = vsel %vm245, %v5179, -inf
    %v5209 = vsel %vm245, %v5180, -inf
    %v5210 = vmax.f32 %v5208, %v5209
    %v5211 = vrot.slane %v5210, 4
    %v5212 = vmax.f32 %v5210, %v5211
    %v5213 = vrot.slane %v5212, 2
    %v5214 = vmax.f32 %v5212, %v5213
    %v5215 = vrot.slane %v5214, 1
    %v5216 = vmax.f32 %v5214, %v5215
    %v5217 = vsub.f32 %v5173, %v5189
    %v5218 = vsub.f32 %v5174, %v5189
    %v5219 = vsub.f32 %v5175, %v5198
    %v5220 = vsub.f32 %v5176, %v5198
    %v5221 = vsub.f32 %v5177, %v5207
    %v5222 = vsub.f32 %v5178, %v5207
    %v5223 = vsub.f32 %v5179, %v5216
    %v5224 = vsub.f32 %v5180, %v5216
    %v5225 = vmul.f32 %v5217, 1.442695
    %v5226 = vpow.pop %v5225
    %v5227 = vmul.f32 %v5218, 1.442695
    %v5228 = vpow.pop %v5227
    %v5229 = vmul.f32 %v5219, 1.442695
    %v5230 = vpow.pop %v5229
    %v5231 = vmul.f32 %v5220, 1.442695
    %v5232 = vpow.pop %v5231
    %v5233 = vmul.f32 %v5221, 1.442695
    %v5234 = vpow.pop %v5233
    %v5235 = vmul.f32 %v5222, 1.442695
    %v5236 = vpow.pop %v5235
    %v5237 = vmul.f32 %v5223, 1.442695
    %v5238 = vpow.pop %v5237
    %v5239 = vmul.f32 %v5224, 1.442695
    %v5240 = vpow.pop %v5239
    %v5241 = vsel %vm245, %v5226, 0.0
    %v5242 = vsel %vm245, %v5228, 0.0
    %v5243 = vadd.f32 %v5241, %v5242
    %v5244 = vrot.slane %v5243, 4
    %v5245 = vadd.f32 %v5243, %v5244
    %v5246 = vrot.slane %v5245, 2
    %v5247 = vadd.f32 %v5245, %v5246
    %v5248 = vrot.slane %v5247, 1
    %v5249 = vadd.f32 %v5247, %v5248
    %v5250 = vsel %vm245, %v5230, 0.0
    %v5251 = vsel %vm245, %v5232, 0.0
    %v5252 = vadd.f32 %v5250, %v5251
    %v5253 = vrot.slane %v5252, 4
    %v5254 = vadd.f32 %v5252, %v5253
    %v5255 = vrot.slane %v5254, 2
    %v5256 = vadd.f32 %v5254, %v5255
    %v5257 = vrot.slane %v5256, 1
    %v5258 = vadd.f32 %v5256, %v5257
    %v5259 = vsel %vm245, %v5234, 0.0
    %v5260 = vsel %vm245, %v5236, 0.0
    %v5261 = vadd.f32 %v5259, %v5260
    %v5262 = vrot.slane %v5261, 4
    %v5263 = vadd.f32 %v5261, %v5262
    %v5264 = vrot.slane %v5263, 2
    %v5265 = vadd.f32 %v5263, %v5264
    %v5266 = vrot.slane %v5265, 1
    %v5267 = vadd.f32 %v5265, %v5266
    %v5268 = vsel %vm245, %v5238, 0.0
    %v5269 = vsel %vm245, %v5240, 0.0
    %v5270 = vadd.f32 %v5268, %v5269
    %v5271 = vrot.slane %v5270, 4
    %v5272 = vadd.f32 %v5270, %v5271
    %v5273 = vrot.slane %v5272, 2
    %v5274 = vadd.f32 %v5272, %v5273
    %v5275 = vrot.slane %v5274, 1
    %v5276 = vadd.f32 %v5274, %v5275
    %v5277 = vlog2.pop %v5249
    %v5278 = vmul.f32 %v5277, 0.6931472
    %v5279 = vlog2.pop %v5258
    %v5280 = vmul.f32 %v5279, 0.6931472
    %v5281 = vlog2.pop %v5267
    %v5282 = vmul.f32 %v5281, 0.6931472
    %v5283 = vlog2.pop %v5276
    %v5284 = vmul.f32 %v5283, 0.6931472
    %v5285 = vadd.f32 %v5189, %v5278
    %v5286 = vadd.f32 %v5198, %v5280
    %v5287 = vadd.f32 %v5207, %v5282
    %v5288 = vadd.f32 %v5216, %v5284
    %v5289 = vsub.f32 %v5173, %v5285
    %v5290 = vsub.f32 %v5174, %v5285
    %v5291 = vsub.f32 %v5175, %v5286
    %v5292 = vsub.f32 %v5176, %v5286
    %v5293 = vsub.f32 %v5177, %v5287
    %v5294 = vsub.f32 %v5178, %v5287
    %v5295 = vsub.f32 %v5179, %v5288
    %v5296 = vsub.f32 %v5180, %v5288
    %v5297 = vsel %vm245, %v5289, -inf
    %5298 = vmax.xlane.f32.xlu0 %v5297
    %v5299 = vpop.xlane.xlu0 %5298
    %v5300 = vsel %vm245, %v5290, -inf
    %5301 = vmax.xlane.f32.xlu0 %v5300
    %v5302 = vpop.xlane.xlu0 %5301
    %v5303 = vsel %vm245, %v5291, -inf
    %5304 = vmax.xlane.f32.xlu0 %v5303
    %v5305 = vpop.xlane.xlu0 %5304
    %v5306 = vsel %vm245, %v5292, -inf
    %5307 = vmax.xlane.f32.xlu0 %v5306
    %v5308 = vpop.xlane.xlu0 %5307
    %v5309 = vsel %vm245, %v5293, -inf
    %5310 = vmax.xlane.f32.xlu0 %v5309
    %v5311 = vpop.xlane.xlu0 %5310
    %v5312 = vsel %vm245, %v5294, -inf
    %5313 = vmax.xlane.f32.xlu0 %v5312
    %v5314 = vpop.xlane.xlu0 %5313
    %v5315 = vsel %vm245, %v5295, -inf
    %5316 = vmax.xlane.f32.xlu0 %v5315
    %v5317 = vpop.xlane.xlu0 %5316
    %v5318 = vsel %vm245, %v5296, -inf
    %5319 = vmax.xlane.f32.xlu0 %v5318
    %v5320 = vpop.xlane.xlu0 %5319
    %v5321 = vsub.f32 %v5289, %v5299
    %v5322 = vsub.f32 %v5290, %v5302
    %v5323 = vsub.f32 %v5291, %v5305
    %v5324 = vsub.f32 %v5292, %v5308
    %v5325 = vsub.f32 %v5293, %v5311
    %v5326 = vsub.f32 %v5294, %v5314
    %v5327 = vsub.f32 %v5295, %v5317
    %v5328 = vsub.f32 %v5296, %v5320
    %v5329 = vmul.f32 %v5321, 1.442695
    %v5330 = vpow.pop %v5329
    %v5331 = vmul.f32 %v5322, 1.442695
    %v5332 = vpow.pop %v5331
    %v5333 = vmul.f32 %v5323, 1.442695
    %v5334 = vpow.pop %v5333
    %v5335 = vmul.f32 %v5324, 1.442695
    %v5336 = vpow.pop %v5335
    %v5337 = vmul.f32 %v5325, 1.442695
    %v5338 = vpow.pop %v5337
    %v5339 = vmul.f32 %v5326, 1.442695
    %v5340 = vpow.pop %v5339
    %v5341 = vmul.f32 %v5327, 1.442695
    %v5342 = vpow.pop %v5341
    %v5343 = vmul.f32 %v5328, 1.442695
    %v5344 = vpow.pop %v5343
    %v5345 = vsel %vm245, %v5330, 0.0
    %5346 = vadd.xlane.f32.xlu0 %v5345
    %v5347 = vpop.xlane.xlu0 %5346
    %v5348 = vsel %vm245, %v5332, 0.0
    %5349 = vadd.xlane.f32.xlu0 %v5348
    %v5350 = vpop.xlane.xlu0 %5349
    %v5351 = vsel %vm245, %v5334, 0.0
    %5352 = vadd.xlane.f32.xlu0 %v5351
    %v5353 = vpop.xlane.xlu0 %5352
    %v5354 = vsel %vm245, %v5336, 0.0
    %5355 = vadd.xlane.f32.xlu0 %v5354
    %v5356 = vpop.xlane.xlu0 %5355
    %v5357 = vsel %vm245, %v5338, 0.0
    %5358 = vadd.xlane.f32.xlu0 %v5357
    %v5359 = vpop.xlane.xlu0 %5358
    %v5360 = vsel %vm245, %v5340, 0.0
    %5361 = vadd.xlane.f32.xlu0 %v5360
    %v5362 = vpop.xlane.xlu0 %5361
    %v5363 = vsel %vm245, %v5342, 0.0
    %5364 = vadd.xlane.f32.xlu0 %v5363
    %v5365 = vpop.xlane.xlu0 %5364
    %v5366 = vsel %vm245, %v5344, 0.0
    %5367 = vadd.xlane.f32.xlu0 %v5366
    %v5368 = vpop.xlane.xlu0 %5367
    %v5369 = vlog2.pop %v5347
    %v5370 = vmul.f32 %v5369, 0.6931472
    %v5371 = vlog2.pop %v5350
    %v5372 = vmul.f32 %v5371, 0.6931472
    %v5373 = vlog2.pop %v5353
    %v5374 = vmul.f32 %v5373, 0.6931472
    %v5375 = vlog2.pop %v5356
    %v5376 = vmul.f32 %v5375, 0.6931472
    %v5377 = vlog2.pop %v5359
    %v5378 = vmul.f32 %v5377, 0.6931472
    %v5379 = vlog2.pop %v5362
    %v5380 = vmul.f32 %v5379, 0.6931472
    %v5381 = vlog2.pop %v5365
    %v5382 = vmul.f32 %v5381, 0.6931472
    %v5383 = vlog2.pop %v5368
    %v5384 = vmul.f32 %v5383, 0.6931472
    %v5385 = vadd.f32 %v5299, %v5370
    %v5386 = vadd.f32 %v5302, %v5372
    %v5387 = vadd.f32 %v5305, %v5374
    %v5388 = vadd.f32 %v5308, %v5376
    %v5389 = vadd.f32 %v5311, %v5378
    %v5390 = vadd.f32 %v5314, %v5380
    %v5391 = vadd.f32 %v5317, %v5382
    %v5392 = vadd.f32 %v5320, %v5384
    %v5393 = vsub.f32 %v5289, %v5385
    %v5394 = vsub.f32 %v5290, %v5386
    %v5395 = vsub.f32 %v5291, %v5387
    %v5396 = vsub.f32 %v5292, %v5388
    %v5397 = vsub.f32 %v5293, %v5389
    %v5398 = vsub.f32 %v5294, %v5390
    %v5399 = vsub.f32 %v5295, %v5391
    %v5400 = vsub.f32 %v5296, %v5392
    %v5401 = vsel %vm245, %v5393, -inf
    %v5402 = vsel %vm245, %v5394, -inf
    %v5403 = vmax.f32 %v5401, %v5402
    %v5404 = vrot.slane %v5403, 4
    %v5405 = vmax.f32 %v5403, %v5404
    %v5406 = vrot.slane %v5405, 2
    %v5407 = vmax.f32 %v5405, %v5406
    %v5408 = vrot.slane %v5407, 1
    %v5409 = vmax.f32 %v5407, %v5408
    %v5410 = vsel %vm245, %v5395, -inf
    %v5411 = vsel %vm245, %v5396, -inf
    %v5412 = vmax.f32 %v5410, %v5411
    %v5413 = vrot.slane %v5412, 4
    %v5414 = vmax.f32 %v5412, %v5413
    %v5415 = vrot.slane %v5414, 2
    %v5416 = vmax.f32 %v5414, %v5415
    %v5417 = vrot.slane %v5416, 1
    %v5418 = vmax.f32 %v5416, %v5417
    %v5419 = vsel %vm245, %v5397, -inf
    %v5420 = vsel %vm245, %v5398, -inf
    %v5421 = vmax.f32 %v5419, %v5420
    %v5422 = vrot.slane %v5421, 4
    %v5423 = vmax.f32 %v5421, %v5422
    %v5424 = vrot.slane %v5423, 2
    %v5425 = vmax.f32 %v5423, %v5424
    %v5426 = vrot.slane %v5425, 1
    %v5427 = vmax.f32 %v5425, %v5426
    %v5428 = vsel %vm245, %v5399, -inf
    %v5429 = vsel %vm245, %v5400, -inf
    %v5430 = vmax.f32 %v5428, %v5429
    %v5431 = vrot.slane %v5430, 4
    %v5432 = vmax.f32 %v5430, %v5431
    %v5433 = vrot.slane %v5432, 2
    %v5434 = vmax.f32 %v5432, %v5433
    %v5435 = vrot.slane %v5434, 1
    %v5436 = vmax.f32 %v5434, %v5435
    %v5437 = vsub.f32 %v5393, %v5409
    %v5438 = vsub.f32 %v5394, %v5409
    %v5439 = vsub.f32 %v5395, %v5418
    %v5440 = vsub.f32 %v5396, %v5418
    %v5441 = vsub.f32 %v5397, %v5427
    %v5442 = vsub.f32 %v5398, %v5427
    %v5443 = vsub.f32 %v5399, %v5436
    %v5444 = vsub.f32 %v5400, %v5436
    %v5445 = vmul.f32 %v5437, 1.442695
    %v5446 = vpow.pop %v5445
    %v5447 = vmul.f32 %v5438, 1.442695
    %v5448 = vpow.pop %v5447
    %v5449 = vmul.f32 %v5439, 1.442695
    %v5450 = vpow.pop %v5449
    %v5451 = vmul.f32 %v5440, 1.442695
    %v5452 = vpow.pop %v5451
    %v5453 = vmul.f32 %v5441, 1.442695
    %v5454 = vpow.pop %v5453
    %v5455 = vmul.f32 %v5442, 1.442695
    %v5456 = vpow.pop %v5455
    %v5457 = vmul.f32 %v5443, 1.442695
    %v5458 = vpow.pop %v5457
    %v5459 = vmul.f32 %v5444, 1.442695
    %v5460 = vpow.pop %v5459
    %v5461 = vsel %vm245, %v5446, 0.0
    %v5462 = vsel %vm245, %v5448, 0.0
    %v5463 = vadd.f32 %v5461, %v5462
    %v5464 = vrot.slane %v5463, 4
    %v5465 = vadd.f32 %v5463, %v5464
    %v5466 = vrot.slane %v5465, 2
    %v5467 = vadd.f32 %v5465, %v5466
    %v5468 = vrot.slane %v5467, 1
    %v5469 = vadd.f32 %v5467, %v5468
    %v5470 = vsel %vm245, %v5450, 0.0
    %v5471 = vsel %vm245, %v5452, 0.0
    %v5472 = vadd.f32 %v5470, %v5471
    %v5473 = vrot.slane %v5472, 4
    %v5474 = vadd.f32 %v5472, %v5473
    %v5475 = vrot.slane %v5474, 2
    %v5476 = vadd.f32 %v5474, %v5475
    %v5477 = vrot.slane %v5476, 1
    %v5478 = vadd.f32 %v5476, %v5477
    %v5479 = vsel %vm245, %v5454, 0.0
    %v5480 = vsel %vm245, %v5456, 0.0
    %v5481 = vadd.f32 %v5479, %v5480
    %v5482 = vrot.slane %v5481, 4
    %v5483 = vadd.f32 %v5481, %v5482
    %v5484 = vrot.slane %v5483, 2
    %v5485 = vadd.f32 %v5483, %v5484
    %v5486 = vrot.slane %v5485, 1
    %v5487 = vadd.f32 %v5485, %v5486
    %v5488 = vsel %vm245, %v5458, 0.0
    %v5489 = vsel %vm245, %v5460, 0.0
    %v5490 = vadd.f32 %v5488, %v5489
    %v5491 = vrot.slane %v5490, 4
    %v5492 = vadd.f32 %v5490, %v5491
    %v5493 = vrot.slane %v5492, 2
    %v5494 = vadd.f32 %v5492, %v5493
    %v5495 = vrot.slane %v5494, 1
    %v5496 = vadd.f32 %v5494, %v5495
    %v5497 = vlog2.pop %v5469
    %v5498 = vmul.f32 %v5497, 0.6931472
    %v5499 = vlog2.pop %v5478
    %v5500 = vmul.f32 %v5499, 0.6931472
    %v5501 = vlog2.pop %v5487
    %v5502 = vmul.f32 %v5501, 0.6931472
    %v5503 = vlog2.pop %v5496
    %v5504 = vmul.f32 %v5503, 0.6931472
    %v5505 = vadd.f32 %v5409, %v5498
    %v5506 = vadd.f32 %v5418, %v5500
    %v5507 = vadd.f32 %v5427, %v5502
    %v5508 = vadd.f32 %v5436, %v5504
    %v5509 = vsub.f32 %v5393, %v5505
    %v5510 = vsub.f32 %v5394, %v5505
    %v5511 = vsub.f32 %v5395, %v5506
    %v5512 = vsub.f32 %v5396, %v5506
    %v5513 = vsub.f32 %v5397, %v5507
    %v5514 = vsub.f32 %v5398, %v5507
    %v5515 = vsub.f32 %v5399, %v5508
    %v5516 = vsub.f32 %v5400, %v5508
    %v5517 = vsel %vm245, %v5509, -inf
    %5518 = vmax.xlane.f32.xlu0 %v5517
    %v5519 = vpop.xlane.xlu0 %5518
    %v5520 = vsel %vm245, %v5510, -inf
    %5521 = vmax.xlane.f32.xlu0 %v5520
    %v5522 = vpop.xlane.xlu0 %5521
    %v5523 = vsel %vm245, %v5511, -inf
    %5524 = vmax.xlane.f32.xlu0 %v5523
    %v5525 = vpop.xlane.xlu0 %5524
    %v5526 = vsel %vm245, %v5512, -inf
    %5527 = vmax.xlane.f32.xlu0 %v5526
    %v5528 = vpop.xlane.xlu0 %5527
    %v5529 = vsel %vm245, %v5513, -inf
    %5530 = vmax.xlane.f32.xlu0 %v5529
    %v5531 = vpop.xlane.xlu0 %5530
    %v5532 = vsel %vm245, %v5514, -inf
    %5533 = vmax.xlane.f32.xlu0 %v5532
    %v5534 = vpop.xlane.xlu0 %5533
    %v5535 = vsel %vm245, %v5515, -inf
    %5536 = vmax.xlane.f32.xlu0 %v5535
    %v5537 = vpop.xlane.xlu0 %5536
    %v5538 = vsel %vm245, %v5516, -inf
    %5539 = vmax.xlane.f32.xlu0 %v5538
    %v5540 = vpop.xlane.xlu0 %5539
    %v5541 = vsub.f32 %v5509, %v5519
    %v5542 = vsub.f32 %v5510, %v5522
    %v5543 = vsub.f32 %v5511, %v5525
    %v5544 = vsub.f32 %v5512, %v5528
    %v5545 = vsub.f32 %v5513, %v5531
    %v5546 = vsub.f32 %v5514, %v5534
    %v5547 = vsub.f32 %v5515, %v5537
    %v5548 = vsub.f32 %v5516, %v5540
    %v5549 = vmul.f32 %v5541, 1.442695
    %v5550 = vpow.pop %v5549
    %v5551 = vmul.f32 %v5542, 1.442695
    %v5552 = vpow.pop %v5551
    %v5553 = vmul.f32 %v5543, 1.442695
    %v5554 = vpow.pop %v5553
    %v5555 = vmul.f32 %v5544, 1.442695
    %v5556 = vpow.pop %v5555
    %v5557 = vmul.f32 %v5545, 1.442695
    %v5558 = vpow.pop %v5557
    %v5559 = vmul.f32 %v5546, 1.442695
    %v5560 = vpow.pop %v5559
    %v5561 = vmul.f32 %v5547, 1.442695
    %v5562 = vpow.pop %v5561
    %v5563 = vmul.f32 %v5548, 1.442695
    %v5564 = vpow.pop %v5563
    %v5565 = vsel %vm245, %v5550, 0.0
    %5566 = vadd.xlane.f32.xlu0 %v5565
    %v5567 = vpop.xlane.xlu0 %5566
    %v5568 = vsel %vm245, %v5552, 0.0
    %5569 = vadd.xlane.f32.xlu0 %v5568
    %v5570 = vpop.xlane.xlu0 %5569
    %v5571 = vsel %vm245, %v5554, 0.0
    %5572 = vadd.xlane.f32.xlu0 %v5571
    %v5573 = vpop.xlane.xlu0 %5572
    %v5574 = vsel %vm245, %v5556, 0.0
    %5575 = vadd.xlane.f32.xlu0 %v5574
    %v5576 = vpop.xlane.xlu0 %5575
    %v5577 = vsel %vm245, %v5558, 0.0
    %5578 = vadd.xlane.f32.xlu0 %v5577
    %v5579 = vpop.xlane.xlu0 %5578
    %v5580 = vsel %vm245, %v5560, 0.0
    %5581 = vadd.xlane.f32.xlu0 %v5580
    %v5582 = vpop.xlane.xlu0 %5581
    %v5583 = vsel %vm245, %v5562, 0.0
    %5584 = vadd.xlane.f32.xlu0 %v5583
    %v5585 = vpop.xlane.xlu0 %5584
    %v5586 = vsel %vm245, %v5564, 0.0
    %5587 = vadd.xlane.f32.xlu0 %v5586
    %v5588 = vpop.xlane.xlu0 %5587
    %v5589 = vlog2.pop %v5567
    %v5590 = vmul.f32 %v5589, 0.6931472
    %v5591 = vlog2.pop %v5570
    %v5592 = vmul.f32 %v5591, 0.6931472
    %v5593 = vlog2.pop %v5573
    %v5594 = vmul.f32 %v5593, 0.6931472
    %v5595 = vlog2.pop %v5576
    %v5596 = vmul.f32 %v5595, 0.6931472
    %v5597 = vlog2.pop %v5579
    %v5598 = vmul.f32 %v5597, 0.6931472
    %v5599 = vlog2.pop %v5582
    %v5600 = vmul.f32 %v5599, 0.6931472
    %v5601 = vlog2.pop %v5585
    %v5602 = vmul.f32 %v5601, 0.6931472
    %v5603 = vlog2.pop %v5588
    %v5604 = vmul.f32 %v5603, 0.6931472
    %v5605 = vadd.f32 %v5519, %v5590
    %v5606 = vadd.f32 %v5522, %v5592
    %v5607 = vadd.f32 %v5525, %v5594
    %v5608 = vadd.f32 %v5528, %v5596
    %v5609 = vadd.f32 %v5531, %v5598
    %v5610 = vadd.f32 %v5534, %v5600
    %v5611 = vadd.f32 %v5537, %v5602
    %v5612 = vadd.f32 %v5540, %v5604
    %v5613 = vsub.f32 %v5509, %v5605
    %v5614 = vsub.f32 %v5510, %v5606
    %v5615 = vsub.f32 %v5511, %v5607
    %v5616 = vsub.f32 %v5512, %v5608
    %v5617 = vsub.f32 %v5513, %v5609
    %v5618 = vsub.f32 %v5514, %v5610
    %v5619 = vsub.f32 %v5515, %v5611
    %v5620 = vsub.f32 %v5516, %v5612
    %v5621 = vsel %vm245, %v5613, -inf
    %v5622 = vsel %vm245, %v5614, -inf
    %v5623 = vmax.f32 %v5621, %v5622
    %v5624 = vrot.slane %v5623, 4
    %v5625 = vmax.f32 %v5623, %v5624
    %v5626 = vrot.slane %v5625, 2
    %v5627 = vmax.f32 %v5625, %v5626
    %v5628 = vrot.slane %v5627, 1
    %v5629 = vmax.f32 %v5627, %v5628
    %v5630 = vsel %vm245, %v5615, -inf
    %v5631 = vsel %vm245, %v5616, -inf
    %v5632 = vmax.f32 %v5630, %v5631
    %v5633 = vrot.slane %v5632, 4
    %v5634 = vmax.f32 %v5632, %v5633
    %v5635 = vrot.slane %v5634, 2
    %v5636 = vmax.f32 %v5634, %v5635
    %v5637 = vrot.slane %v5636, 1
    %v5638 = vmax.f32 %v5636, %v5637
    %v5639 = vsel %vm245, %v5617, -inf
    %v5640 = vsel %vm245, %v5618, -inf
    %v5641 = vmax.f32 %v5639, %v5640
    %v5642 = vrot.slane %v5641, 4
    %v5643 = vmax.f32 %v5641, %v5642
    %v5644 = vrot.slane %v5643, 2
    %v5645 = vmax.f32 %v5643, %v5644
    %v5646 = vrot.slane %v5645, 1
    %v5647 = vmax.f32 %v5645, %v5646
    %v5648 = vsel %vm245, %v5619, -inf
    %v5649 = vsel %vm245, %v5620, -inf
    %v5650 = vmax.f32 %v5648, %v5649
    %v5651 = vrot.slane %v5650, 4
    %v5652 = vmax.f32 %v5650, %v5651
    %v5653 = vrot.slane %v5652, 2
    %v5654 = vmax.f32 %v5652, %v5653
    %v5655 = vrot.slane %v5654, 1
    %v5656 = vmax.f32 %v5654, %v5655
    %v5657 = vsub.f32 %v5613, %v5629
    %v5658 = vsub.f32 %v5614, %v5629
    %v5659 = vsub.f32 %v5615, %v5638
    %v5660 = vsub.f32 %v5616, %v5638
    %v5661 = vsub.f32 %v5617, %v5647
    %v5662 = vsub.f32 %v5618, %v5647
    %v5663 = vsub.f32 %v5619, %v5656
    %v5664 = vsub.f32 %v5620, %v5656
    %v5665 = vmul.f32 %v5657, 1.442695
    %v5666 = vpow.pop %v5665
    %v5667 = vmul.f32 %v5658, 1.442695
    %v5668 = vpow.pop %v5667
    %v5669 = vmul.f32 %v5659, 1.442695
    %v5670 = vpow.pop %v5669
    %v5671 = vmul.f32 %v5660, 1.442695
    %v5672 = vpow.pop %v5671
    %v5673 = vmul.f32 %v5661, 1.442695
    %v5674 = vpow.pop %v5673
    %v5675 = vmul.f32 %v5662, 1.442695
    %v5676 = vpow.pop %v5675
    %v5677 = vmul.f32 %v5663, 1.442695
    %v5678 = vpow.pop %v5677
    %v5679 = vmul.f32 %v5664, 1.442695
    %v5680 = vpow.pop %v5679
    %v5681 = vsel %vm245, %v5666, 0.0
    %v5682 = vsel %vm245, %v5668, 0.0
    %v5683 = vadd.f32 %v5681, %v5682
    %v5684 = vrot.slane %v5683, 4
    %v5685 = vadd.f32 %v5683, %v5684
    %v5686 = vrot.slane %v5685, 2
    %v5687 = vadd.f32 %v5685, %v5686
    %v5688 = vrot.slane %v5687, 1
    %v5689 = vadd.f32 %v5687, %v5688
    %v5690 = vsel %vm245, %v5670, 0.0
    %v5691 = vsel %vm245, %v5672, 0.0
    %v5692 = vadd.f32 %v5690, %v5691
    %v5693 = vrot.slane %v5692, 4
    %v5694 = vadd.f32 %v5692, %v5693
    %v5695 = vrot.slane %v5694, 2
    %v5696 = vadd.f32 %v5694, %v5695
    %v5697 = vrot.slane %v5696, 1
    %v5698 = vadd.f32 %v5696, %v5697
    %v5699 = vsel %vm245, %v5674, 0.0
    %v5700 = vsel %vm245, %v5676, 0.0
    %v5701 = vadd.f32 %v5699, %v5700
    %v5702 = vrot.slane %v5701, 4
    %v5703 = vadd.f32 %v5701, %v5702
    %v5704 = vrot.slane %v5703, 2
    %v5705 = vadd.f32 %v5703, %v5704
    %v5706 = vrot.slane %v5705, 1
    %v5707 = vadd.f32 %v5705, %v5706
    %v5708 = vsel %vm245, %v5678, 0.0
    %v5709 = vsel %vm245, %v5680, 0.0
    %v5710 = vadd.f32 %v5708, %v5709
    %v5711 = vrot.slane %v5710, 4
    %v5712 = vadd.f32 %v5710, %v5711
    %v5713 = vrot.slane %v5712, 2
    %v5714 = vadd.f32 %v5712, %v5713
    %v5715 = vrot.slane %v5714, 1
    %v5716 = vadd.f32 %v5714, %v5715
    %v5717 = vlog2.pop %v5689
    %v5718 = vmul.f32 %v5717, 0.6931472
    %v5719 = vlog2.pop %v5698
    %v5720 = vmul.f32 %v5719, 0.6931472
    %v5721 = vlog2.pop %v5707
    %v5722 = vmul.f32 %v5721, 0.6931472
    %v5723 = vlog2.pop %v5716
    %v5724 = vmul.f32 %v5723, 0.6931472
    %v5725 = vadd.f32 %v5629, %v5718
    %v5726 = vadd.f32 %v5638, %v5720
    %v5727 = vadd.f32 %v5647, %v5722
    %v5728 = vadd.f32 %v5656, %v5724
    %v5729 = vsub.f32 %v5613, %v5725
    %v5730 = vsub.f32 %v5614, %v5725
    %v5731 = vsub.f32 %v5615, %v5726
    %v5732 = vsub.f32 %v5616, %v5726
    %v5733 = vsub.f32 %v5617, %v5727
    %v5734 = vsub.f32 %v5618, %v5727
    %v5735 = vsub.f32 %v5619, %v5728
    %v5736 = vsub.f32 %v5620, %v5728
    %v5737 = vsel %vm245, %v5729, -inf
    %5738 = vmax.xlane.f32.xlu0 %v5737
    %v5739 = vpop.xlane.xlu0 %5738
    %v5740 = vsel %vm245, %v5730, -inf
    %5741 = vmax.xlane.f32.xlu0 %v5740
    %v5742 = vpop.xlane.xlu0 %5741
    %v5743 = vsel %vm245, %v5731, -inf
    %5744 = vmax.xlane.f32.xlu0 %v5743
    %v5745 = vpop.xlane.xlu0 %5744
    %v5746 = vsel %vm245, %v5732, -inf
    %5747 = vmax.xlane.f32.xlu0 %v5746
    %v5748 = vpop.xlane.xlu0 %5747
    %v5749 = vsel %vm245, %v5733, -inf
    %5750 = vmax.xlane.f32.xlu0 %v5749
    %v5751 = vpop.xlane.xlu0 %5750
    %v5752 = vsel %vm245, %v5734, -inf
    %5753 = vmax.xlane.f32.xlu0 %v5752
    %v5754 = vpop.xlane.xlu0 %5753
    %v5755 = vsel %vm245, %v5735, -inf
    %5756 = vmax.xlane.f32.xlu0 %v5755
    %v5757 = vpop.xlane.xlu0 %5756
    %v5758 = vsel %vm245, %v5736, -inf
    %5759 = vmax.xlane.f32.xlu0 %v5758
    %v5760 = vpop.xlane.xlu0 %5759
    %v5761 = vsub.f32 %v5729, %v5739
    %v5762 = vsub.f32 %v5730, %v5742
    %v5763 = vsub.f32 %v5731, %v5745
    %v5764 = vsub.f32 %v5732, %v5748
    %v5765 = vsub.f32 %v5733, %v5751
    %v5766 = vsub.f32 %v5734, %v5754
    %v5767 = vsub.f32 %v5735, %v5757
    %v5768 = vsub.f32 %v5736, %v5760
    %v5769 = vmul.f32 %v5761, 1.442695
    %v5770 = vpow.pop %v5769
    %v5771 = vmul.f32 %v5762, 1.442695
    %v5772 = vpow.pop %v5771
    %v5773 = vmul.f32 %v5763, 1.442695
    %v5774 = vpow.pop %v5773
    %v5775 = vmul.f32 %v5764, 1.442695
    %v5776 = vpow.pop %v5775
    %v5777 = vmul.f32 %v5765, 1.442695
    %v5778 = vpow.pop %v5777
    %v5779 = vmul.f32 %v5766, 1.442695
    %v5780 = vpow.pop %v5779
    %v5781 = vmul.f32 %v5767, 1.442695
    %v5782 = vpow.pop %v5781
    %v5783 = vmul.f32 %v5768, 1.442695
    %v5784 = vpow.pop %v5783
    %v5785 = vsel %vm245, %v5770, 0.0
    %5786 = vadd.xlane.f32.xlu0 %v5785
    %v5787 = vpop.xlane.xlu0 %5786
    %v5788 = vsel %vm245, %v5772, 0.0
    %5789 = vadd.xlane.f32.xlu0 %v5788
    %v5790 = vpop.xlane.xlu0 %5789
    %v5791 = vsel %vm245, %v5774, 0.0
    %5792 = vadd.xlane.f32.xlu0 %v5791
    %v5793 = vpop.xlane.xlu0 %5792
    %v5794 = vsel %vm245, %v5776, 0.0
    %5795 = vadd.xlane.f32.xlu0 %v5794
    %v5796 = vpop.xlane.xlu0 %5795
    %v5797 = vsel %vm245, %v5778, 0.0
    %5798 = vadd.xlane.f32.xlu0 %v5797
    %v5799 = vpop.xlane.xlu0 %5798
    %v5800 = vsel %vm245, %v5780, 0.0
    %5801 = vadd.xlane.f32.xlu0 %v5800
    %v5802 = vpop.xlane.xlu0 %5801
    %v5803 = vsel %vm245, %v5782, 0.0
    %5804 = vadd.xlane.f32.xlu0 %v5803
    %v5805 = vpop.xlane.xlu0 %5804
    %v5806 = vsel %vm245, %v5784, 0.0
    %5807 = vadd.xlane.f32.xlu0 %v5806
    %v5808 = vpop.xlane.xlu0 %5807
    %v5809 = vlog2.pop %v5787
    %v5810 = vmul.f32 %v5809, 0.6931472
    %v5811 = vlog2.pop %v5790
    %v5812 = vmul.f32 %v5811, 0.6931472
    %v5813 = vlog2.pop %v5793
    %v5814 = vmul.f32 %v5813, 0.6931472
    %v5815 = vlog2.pop %v5796
    %v5816 = vmul.f32 %v5815, 0.6931472
    %v5817 = vlog2.pop %v5799
    %v5818 = vmul.f32 %v5817, 0.6931472
    %v5819 = vlog2.pop %v5802
    %v5820 = vmul.f32 %v5819, 0.6931472
    %v5821 = vlog2.pop %v5805
    %v5822 = vmul.f32 %v5821, 0.6931472
    %v5823 = vlog2.pop %v5808
    %v5824 = vmul.f32 %v5823, 0.6931472
    %v5825 = vadd.f32 %v5739, %v5810
    %v5826 = vadd.f32 %v5742, %v5812
    %v5827 = vadd.f32 %v5745, %v5814
    %v5828 = vadd.f32 %v5748, %v5816
    %v5829 = vadd.f32 %v5751, %v5818
    %v5830 = vadd.f32 %v5754, %v5820
    %v5831 = vadd.f32 %v5757, %v5822
    %v5832 = vadd.f32 %v5760, %v5824
    %v5833 = vsub.f32 %v5729, %v5825
    %v5834 = vsub.f32 %v5730, %v5826
    %v5835 = vsub.f32 %v5731, %v5827
    %v5836 = vsub.f32 %v5732, %v5828
    %v5837 = vsub.f32 %v5733, %v5829
    %v5838 = vsub.f32 %v5734, %v5830
    %v5839 = vsub.f32 %v5735, %v5831
    %v5840 = vsub.f32 %v5736, %v5832
    %v5841 = vsel %vm245, %v5833, -inf
    %v5842 = vsel %vm245, %v5834, -inf
    %v5843 = vmax.f32 %v5841, %v5842
    %v5844 = vrot.slane %v5843, 4
    %v5845 = vmax.f32 %v5843, %v5844
    %v5846 = vrot.slane %v5845, 2
    %v5847 = vmax.f32 %v5845, %v5846
    %v5848 = vrot.slane %v5847, 1
    %v5849 = vmax.f32 %v5847, %v5848
    %v5850 = vsel %vm245, %v5835, -inf
    %v5851 = vsel %vm245, %v5836, -inf
    %v5852 = vmax.f32 %v5850, %v5851
    %v5853 = vrot.slane %v5852, 4
    %v5854 = vmax.f32 %v5852, %v5853
    %v5855 = vrot.slane %v5854, 2
    %v5856 = vmax.f32 %v5854, %v5855
    %v5857 = vrot.slane %v5856, 1
    %v5858 = vmax.f32 %v5856, %v5857
    %v5859 = vsel %vm245, %v5837, -inf
    %v5860 = vsel %vm245, %v5838, -inf
    %v5861 = vmax.f32 %v5859, %v5860
    %v5862 = vrot.slane %v5861, 4
    %v5863 = vmax.f32 %v5861, %v5862
    %v5864 = vrot.slane %v5863, 2
    %v5865 = vmax.f32 %v5863, %v5864
    %v5866 = vrot.slane %v5865, 1
    %v5867 = vmax.f32 %v5865, %v5866
    %v5868 = vsel %vm245, %v5839, -inf
    %v5869 = vsel %vm245, %v5840, -inf
    %v5870 = vmax.f32 %v5868, %v5869
    %v5871 = vrot.slane %v5870, 4
    %v5872 = vmax.f32 %v5870, %v5871
    %v5873 = vrot.slane %v5872, 2
    %v5874 = vmax.f32 %v5872, %v5873
    %v5875 = vrot.slane %v5874, 1
    %v5876 = vmax.f32 %v5874, %v5875
    %v5877 = vsub.f32 %v5833, %v5849
    %v5878 = vsub.f32 %v5834, %v5849
    %v5879 = vsub.f32 %v5835, %v5858
    %v5880 = vsub.f32 %v5836, %v5858
    %v5881 = vsub.f32 %v5837, %v5867
    %v5882 = vsub.f32 %v5838, %v5867
    %v5883 = vsub.f32 %v5839, %v5876
    %v5884 = vsub.f32 %v5840, %v5876
    %v5885 = vmul.f32 %v5877, 1.442695
    %v5886 = vpow.pop %v5885
    %v5887 = vmul.f32 %v5878, 1.442695
    %v5888 = vpow.pop %v5887
    %v5889 = vmul.f32 %v5879, 1.442695
    %v5890 = vpow.pop %v5889
    %v5891 = vmul.f32 %v5880, 1.442695
    %v5892 = vpow.pop %v5891
    %v5893 = vmul.f32 %v5881, 1.442695
    %v5894 = vpow.pop %v5893
    %v5895 = vmul.f32 %v5882, 1.442695
    %v5896 = vpow.pop %v5895
    %v5897 = vmul.f32 %v5883, 1.442695
    %v5898 = vpow.pop %v5897
    %v5899 = vmul.f32 %v5884, 1.442695
    %v5900 = vpow.pop %v5899
    %v5901 = vsel %vm245, %v5886, 0.0
    %v5902 = vsel %vm245, %v5888, 0.0
    %v5903 = vadd.f32 %v5901, %v5902
    %v5904 = vrot.slane %v5903, 4
    %v5905 = vadd.f32 %v5903, %v5904
    %v5906 = vrot.slane %v5905, 2
    %v5907 = vadd.f32 %v5905, %v5906
    %v5908 = vrot.slane %v5907, 1
    %v5909 = vadd.f32 %v5907, %v5908
    %v5910 = vsel %vm245, %v5890, 0.0
    %v5911 = vsel %vm245, %v5892, 0.0
    %v5912 = vadd.f32 %v5910, %v5911
    %v5913 = vrot.slane %v5912, 4
    %v5914 = vadd.f32 %v5912, %v5913
    %v5915 = vrot.slane %v5914, 2
    %v5916 = vadd.f32 %v5914, %v5915
    %v5917 = vrot.slane %v5916, 1
    %v5918 = vadd.f32 %v5916, %v5917
    %v5919 = vsel %vm245, %v5894, 0.0
    %v5920 = vsel %vm245, %v5896, 0.0
    %v5921 = vadd.f32 %v5919, %v5920
    %v5922 = vrot.slane %v5921, 4
    %v5923 = vadd.f32 %v5921, %v5922
    %v5924 = vrot.slane %v5923, 2
    %v5925 = vadd.f32 %v5923, %v5924
    %v5926 = vrot.slane %v5925, 1
    %v5927 = vadd.f32 %v5925, %v5926
    %v5928 = vsel %vm245, %v5898, 0.0
    %v5929 = vsel %vm245, %v5900, 0.0
    %v5930 = vadd.f32 %v5928, %v5929
    %v5931 = vrot.slane %v5930, 4
    %v5932 = vadd.f32 %v5930, %v5931
    %v5933 = vrot.slane %v5932, 2
    %v5934 = vadd.f32 %v5932, %v5933
    %v5935 = vrot.slane %v5934, 1
    %v5936 = vadd.f32 %v5934, %v5935
    %v5937 = vlog2.pop %v5909
    %v5938 = vmul.f32 %v5937, 0.6931472
    %v5939 = vlog2.pop %v5918
    %v5940 = vmul.f32 %v5939, 0.6931472
    %v5941 = vlog2.pop %v5927
    %v5942 = vmul.f32 %v5941, 0.6931472
    %v5943 = vlog2.pop %v5936
    %v5944 = vmul.f32 %v5943, 0.6931472
    %v5945 = vadd.f32 %v5849, %v5938
    %v5946 = vadd.f32 %v5858, %v5940
    %v5947 = vadd.f32 %v5867, %v5942
    %v5948 = vadd.f32 %v5876, %v5944
    %v5949 = vsub.f32 %v5833, %v5945
    %v5950 = vsub.f32 %v5834, %v5945
    %v5951 = vsub.f32 %v5835, %v5946
    %v5952 = vsub.f32 %v5836, %v5946
    %v5953 = vsub.f32 %v5837, %v5947
    %v5954 = vsub.f32 %v5838, %v5947
    %v5955 = vsub.f32 %v5839, %v5948
    %v5956 = vsub.f32 %v5840, %v5948
    %v5957 = vsel %vm245, %v5949, -inf
    %5958 = vmax.xlane.f32.xlu0 %v5957
    %v5959 = vpop.xlane.xlu0 %5958
    %v5960 = vsel %vm245, %v5950, -inf
    %5961 = vmax.xlane.f32.xlu0 %v5960
    %v5962 = vpop.xlane.xlu0 %5961
    %v5963 = vsel %vm245, %v5951, -inf
    %5964 = vmax.xlane.f32.xlu0 %v5963
    %v5965 = vpop.xlane.xlu0 %5964
    %v5966 = vsel %vm245, %v5952, -inf
    %5967 = vmax.xlane.f32.xlu0 %v5966
    %v5968 = vpop.xlane.xlu0 %5967
    %v5969 = vsel %vm245, %v5953, -inf
    %5970 = vmax.xlane.f32.xlu0 %v5969
    %v5971 = vpop.xlane.xlu0 %5970
    %v5972 = vsel %vm245, %v5954, -inf
    %5973 = vmax.xlane.f32.xlu0 %v5972
    %v5974 = vpop.xlane.xlu0 %5973
    %v5975 = vsel %vm245, %v5955, -inf
    %5976 = vmax.xlane.f32.xlu0 %v5975
    %v5977 = vpop.xlane.xlu0 %5976
    %v5978 = vsel %vm245, %v5956, -inf
    %5979 = vmax.xlane.f32.xlu0 %v5978
    %v5980 = vpop.xlane.xlu0 %5979
    %v5981 = vsub.f32 %v5949, %v5959
    %v5982 = vsub.f32 %v5950, %v5962
    %v5983 = vsub.f32 %v5951, %v5965
    %v5984 = vsub.f32 %v5952, %v5968
    %v5985 = vsub.f32 %v5953, %v5971
    %v5986 = vsub.f32 %v5954, %v5974
    %v5987 = vsub.f32 %v5955, %v5977
    %v5988 = vsub.f32 %v5956, %v5980
    %v5989 = vmul.f32 %v5981, 1.442695
    %v5990 = vpow.pop %v5989
    %v5991 = vmul.f32 %v5982, 1.442695
    %v5992 = vpow.pop %v5991
    %v5993 = vmul.f32 %v5983, 1.442695
    %v5994 = vpow.pop %v5993
    %v5995 = vmul.f32 %v5984, 1.442695
    %v5996 = vpow.pop %v5995
    %v5997 = vmul.f32 %v5985, 1.442695
    %v5998 = vpow.pop %v5997
    %v5999 = vmul.f32 %v5986, 1.442695
    %v6000 = vpow.pop %v5999
    %v6001 = vmul.f32 %v5987, 1.442695
    %v6002 = vpow.pop %v6001
    %v6003 = vmul.f32 %v5988, 1.442695
    %v6004 = vpow.pop %v6003
    %v6005 = vsel %vm245, %v5990, 0.0
    %6006 = vadd.xlane.f32.xlu0 %v6005
    %v6007 = vpop.xlane.xlu0 %6006
    %v6008 = vsel %vm245, %v5992, 0.0
    %6009 = vadd.xlane.f32.xlu0 %v6008
    %v6010 = vpop.xlane.xlu0 %6009
    %v6011 = vsel %vm245, %v5994, 0.0
    %6012 = vadd.xlane.f32.xlu0 %v6011
    %v6013 = vpop.xlane.xlu0 %6012
    %v6014 = vsel %vm245, %v5996, 0.0
    %6015 = vadd.xlane.f32.xlu0 %v6014
    %v6016 = vpop.xlane.xlu0 %6015
    %v6017 = vsel %vm245, %v5998, 0.0
    %6018 = vadd.xlane.f32.xlu0 %v6017
    %v6019 = vpop.xlane.xlu0 %6018
    %v6020 = vsel %vm245, %v6000, 0.0
    %6021 = vadd.xlane.f32.xlu0 %v6020
    %v6022 = vpop.xlane.xlu0 %6021
    %v6023 = vsel %vm245, %v6002, 0.0
    %6024 = vadd.xlane.f32.xlu0 %v6023
    %v6025 = vpop.xlane.xlu0 %6024
    %v6026 = vsel %vm245, %v6004, 0.0
    %6027 = vadd.xlane.f32.xlu0 %v6026
    %v6028 = vpop.xlane.xlu0 %6027
    %v6029 = vlog2.pop %v6007
    %v6030 = vmul.f32 %v6029, 0.6931472
    %v6031 = vlog2.pop %v6010
    %v6032 = vmul.f32 %v6031, 0.6931472
    %v6033 = vlog2.pop %v6013
    %v6034 = vmul.f32 %v6033, 0.6931472
    %v6035 = vlog2.pop %v6016
    %v6036 = vmul.f32 %v6035, 0.6931472
    %v6037 = vlog2.pop %v6019
    %v6038 = vmul.f32 %v6037, 0.6931472
    %v6039 = vlog2.pop %v6022
    %v6040 = vmul.f32 %v6039, 0.6931472
    %v6041 = vlog2.pop %v6025
    %v6042 = vmul.f32 %v6041, 0.6931472
    %v6043 = vlog2.pop %v6028
    %v6044 = vmul.f32 %v6043, 0.6931472
    %v6045 = vadd.f32 %v5959, %v6030
    %v6046 = vadd.f32 %v5962, %v6032
    %v6047 = vadd.f32 %v5965, %v6034
    %v6048 = vadd.f32 %v5968, %v6036
    %v6049 = vadd.f32 %v5971, %v6038
    %v6050 = vadd.f32 %v5974, %v6040
    %v6051 = vadd.f32 %v5977, %v6042
    %v6052 = vadd.f32 %v5980, %v6044
    %v6053 = vsub.f32 %v5949, %v6045
    %v6054 = vsub.f32 %v5950, %v6046
    %v6055 = vsub.f32 %v5951, %v6047
    %v6056 = vsub.f32 %v5952, %v6048
    %v6057 = vsub.f32 %v5953, %v6049
    %v6058 = vsub.f32 %v5954, %v6050
    %v6059 = vsub.f32 %v5955, %v6051
    %v6060 = vsub.f32 %v5956, %v6052
    %v6061 = vsel %vm245, %v6053, -inf
    %v6062 = vsel %vm245, %v6054, -inf
    %v6063 = vmax.f32 %v6061, %v6062
    %v6064 = vrot.slane %v6063, 4
    %v6065 = vmax.f32 %v6063, %v6064
    %v6066 = vrot.slane %v6065, 2
    %v6067 = vmax.f32 %v6065, %v6066
    %v6068 = vrot.slane %v6067, 1
    %v6069 = vmax.f32 %v6067, %v6068
    %v6070 = vsel %vm245, %v6055, -inf
    %v6071 = vsel %vm245, %v6056, -inf
    %v6072 = vmax.f32 %v6070, %v6071
    %v6073 = vrot.slane %v6072, 4
    %v6074 = vmax.f32 %v6072, %v6073
    %v6075 = vrot.slane %v6074, 2
    %v6076 = vmax.f32 %v6074, %v6075
    %v6077 = vrot.slane %v6076, 1
    %v6078 = vmax.f32 %v6076, %v6077
    %v6079 = vsel %vm245, %v6057, -inf
    %v6080 = vsel %vm245, %v6058, -inf
    %v6081 = vmax.f32 %v6079, %v6080
    %v6082 = vrot.slane %v6081, 4
    %v6083 = vmax.f32 %v6081, %v6082
    %v6084 = vrot.slane %v6083, 2
    %v6085 = vmax.f32 %v6083, %v6084
    %v6086 = vrot.slane %v6085, 1
    %v6087 = vmax.f32 %v6085, %v6086
    %v6088 = vsel %vm245, %v6059, -inf
    %v6089 = vsel %vm245, %v6060, -inf
    %v6090 = vmax.f32 %v6088, %v6089
    %v6091 = vrot.slane %v6090, 4
    %v6092 = vmax.f32 %v6090, %v6091
    %v6093 = vrot.slane %v6092, 2
    %v6094 = vmax.f32 %v6092, %v6093
    %v6095 = vrot.slane %v6094, 1
    %v6096 = vmax.f32 %v6094, %v6095
    %v6097 = vsub.f32 %v6053, %v6069
    %v6098 = vsub.f32 %v6054, %v6069
    %v6099 = vsub.f32 %v6055, %v6078
    %v6100 = vsub.f32 %v6056, %v6078
    %v6101 = vsub.f32 %v6057, %v6087
    %v6102 = vsub.f32 %v6058, %v6087
    %v6103 = vsub.f32 %v6059, %v6096
    %v6104 = vsub.f32 %v6060, %v6096
    %v6105 = vmul.f32 %v6097, 1.442695
    %v6106 = vpow.pop %v6105
    %v6107 = vmul.f32 %v6098, 1.442695
    %v6108 = vpow.pop %v6107
    %v6109 = vmul.f32 %v6099, 1.442695
    %v6110 = vpow.pop %v6109
    %v6111 = vmul.f32 %v6100, 1.442695
    %v6112 = vpow.pop %v6111
    %v6113 = vmul.f32 %v6101, 1.442695
    %v6114 = vpow.pop %v6113
    %v6115 = vmul.f32 %v6102, 1.442695
    %v6116 = vpow.pop %v6115
    %v6117 = vmul.f32 %v6103, 1.442695
    %v6118 = vpow.pop %v6117
    %v6119 = vmul.f32 %v6104, 1.442695
    %v6120 = vpow.pop %v6119
    %v6121 = vsel %vm245, %v6106, 0.0
    %v6122 = vsel %vm245, %v6108, 0.0
    %v6123 = vadd.f32 %v6121, %v6122
    %v6124 = vrot.slane %v6123, 4
    %v6125 = vadd.f32 %v6123, %v6124
    %v6126 = vrot.slane %v6125, 2
    %v6127 = vadd.f32 %v6125, %v6126
    %v6128 = vrot.slane %v6127, 1
    %v6129 = vadd.f32 %v6127, %v6128
    %v6130 = vsel %vm245, %v6110, 0.0
    %v6131 = vsel %vm245, %v6112, 0.0
    %v6132 = vadd.f32 %v6130, %v6131
    %v6133 = vrot.slane %v6132, 4
    %v6134 = vadd.f32 %v6132, %v6133
    %v6135 = vrot.slane %v6134, 2
    %v6136 = vadd.f32 %v6134, %v6135
    %v6137 = vrot.slane %v6136, 1
    %v6138 = vadd.f32 %v6136, %v6137
    %v6139 = vsel %vm245, %v6114, 0.0
    %v6140 = vsel %vm245, %v6116, 0.0
    %v6141 = vadd.f32 %v6139, %v6140
    %v6142 = vrot.slane %v6141, 4
    %v6143 = vadd.f32 %v6141, %v6142
    %v6144 = vrot.slane %v6143, 2
    %v6145 = vadd.f32 %v6143, %v6144
    %v6146 = vrot.slane %v6145, 1
    %v6147 = vadd.f32 %v6145, %v6146
    %v6148 = vsel %vm245, %v6118, 0.0
    %v6149 = vsel %vm245, %v6120, 0.0
    %v6150 = vadd.f32 %v6148, %v6149
    %v6151 = vrot.slane %v6150, 4
    %v6152 = vadd.f32 %v6150, %v6151
    %v6153 = vrot.slane %v6152, 2
    %v6154 = vadd.f32 %v6152, %v6153
    %v6155 = vrot.slane %v6154, 1
    %v6156 = vadd.f32 %v6154, %v6155
    %v6157 = vlog2.pop %v6129
    %v6158 = vmul.f32 %v6157, 0.6931472
    %v6159 = vlog2.pop %v6138
    %v6160 = vmul.f32 %v6159, 0.6931472
    %v6161 = vlog2.pop %v6147
    %v6162 = vmul.f32 %v6161, 0.6931472
    %v6163 = vlog2.pop %v6156
    %v6164 = vmul.f32 %v6163, 0.6931472
    %v6165 = vadd.f32 %v6069, %v6158
    %v6166 = vadd.f32 %v6078, %v6160
    %v6167 = vadd.f32 %v6087, %v6162
    %v6168 = vadd.f32 %v6096, %v6164
    %v6169 = vsub.f32 %v6053, %v6165
    %v6170 = vsub.f32 %v6054, %v6165
    %v6171 = vsub.f32 %v6055, %v6166
    %v6172 = vsub.f32 %v6056, %v6166
    %v6173 = vsub.f32 %v6057, %v6167
    %v6174 = vsub.f32 %v6058, %v6167
    %v6175 = vsub.f32 %v6059, %v6168
    %v6176 = vsub.f32 %v6060, %v6168
    %v6177 = vsel %vm245, %v6169, -inf
    %6178 = vmax.xlane.f32.xlu0 %v6177
    %v6179 = vpop.xlane.xlu0 %6178
    %v6180 = vsel %vm245, %v6170, -inf
    %6181 = vmax.xlane.f32.xlu0 %v6180
    %v6182 = vpop.xlane.xlu0 %6181
    %v6183 = vsel %vm245, %v6171, -inf
    %6184 = vmax.xlane.f32.xlu0 %v6183
    %v6185 = vpop.xlane.xlu0 %6184
    %v6186 = vsel %vm245, %v6172, -inf
    %6187 = vmax.xlane.f32.xlu0 %v6186
    %v6188 = vpop.xlane.xlu0 %6187
    %v6189 = vsel %vm245, %v6173, -inf
    %6190 = vmax.xlane.f32.xlu0 %v6189
    %v6191 = vpop.xlane.xlu0 %6190
    %v6192 = vsel %vm245, %v6174, -inf
    %6193 = vmax.xlane.f32.xlu0 %v6192
    %v6194 = vpop.xlane.xlu0 %6193
    %v6195 = vsel %vm245, %v6175, -inf
    %6196 = vmax.xlane.f32.xlu0 %v6195
    %v6197 = vpop.xlane.xlu0 %6196
    %v6198 = vsel %vm245, %v6176, -inf
    %6199 = vmax.xlane.f32.xlu0 %v6198
    %v6200 = vpop.xlane.xlu0 %6199
    %v6201 = vsub.f32 %v6169, %v6179
    %v6202 = vsub.f32 %v6170, %v6182
    %v6203 = vsub.f32 %v6171, %v6185
    %v6204 = vsub.f32 %v6172, %v6188
    %v6205 = vsub.f32 %v6173, %v6191
    %v6206 = vsub.f32 %v6174, %v6194
    %v6207 = vsub.f32 %v6175, %v6197
    %v6208 = vsub.f32 %v6176, %v6200
    %v6209 = vmul.f32 %v6201, 1.442695
    %v6210 = vpow.pop %v6209
    %v6211 = vmul.f32 %v6202, 1.442695
    %v6212 = vpow.pop %v6211
    %v6213 = vmul.f32 %v6203, 1.442695
    %v6214 = vpow.pop %v6213
    %v6215 = vmul.f32 %v6204, 1.442695
    %v6216 = vpow.pop %v6215
    %v6217 = vmul.f32 %v6205, 1.442695
    %v6218 = vpow.pop %v6217
    %v6219 = vmul.f32 %v6206, 1.442695
    %v6220 = vpow.pop %v6219
    %v6221 = vmul.f32 %v6207, 1.442695
    %v6222 = vpow.pop %v6221
    %v6223 = vmul.f32 %v6208, 1.442695
    %v6224 = vpow.pop %v6223
    %v6225 = vsel %vm245, %v6210, 0.0
    %6226 = vadd.xlane.f32.xlu0 %v6225
    %v6227 = vpop.xlane.xlu0 %6226
    %v6228 = vsel %vm245, %v6212, 0.0
    %6229 = vadd.xlane.f32.xlu0 %v6228
    %v6230 = vpop.xlane.xlu0 %6229
    %v6231 = vsel %vm245, %v6214, 0.0
    %6232 = vadd.xlane.f32.xlu0 %v6231
    %v6233 = vpop.xlane.xlu0 %6232
    %v6234 = vsel %vm245, %v6216, 0.0
    %6235 = vadd.xlane.f32.xlu0 %v6234
    %v6236 = vpop.xlane.xlu0 %6235
    %v6237 = vsel %vm245, %v6218, 0.0
    %6238 = vadd.xlane.f32.xlu0 %v6237
    %v6239 = vpop.xlane.xlu0 %6238
    %v6240 = vsel %vm245, %v6220, 0.0
    %6241 = vadd.xlane.f32.xlu0 %v6240
    %v6242 = vpop.xlane.xlu0 %6241
    %v6243 = vsel %vm245, %v6222, 0.0
    %6244 = vadd.xlane.f32.xlu0 %v6243
    %v6245 = vpop.xlane.xlu0 %6244
    %v6246 = vsel %vm245, %v6224, 0.0
    %6247 = vadd.xlane.f32.xlu0 %v6246
    %v6248 = vpop.xlane.xlu0 %6247
    %v6249 = vlog2.pop %v6227
    %v6250 = vmul.f32 %v6249, 0.6931472
    %v6251 = vlog2.pop %v6230
    %v6252 = vmul.f32 %v6251, 0.6931472
    %v6253 = vlog2.pop %v6233
    %v6254 = vmul.f32 %v6253, 0.6931472
    %v6255 = vlog2.pop %v6236
    %v6256 = vmul.f32 %v6255, 0.6931472
    %v6257 = vlog2.pop %v6239
    %v6258 = vmul.f32 %v6257, 0.6931472
    %v6259 = vlog2.pop %v6242
    %v6260 = vmul.f32 %v6259, 0.6931472
    %v6261 = vlog2.pop %v6245
    %v6262 = vmul.f32 %v6261, 0.6931472
    %v6263 = vlog2.pop %v6248
    %v6264 = vmul.f32 %v6263, 0.6931472
    %v6265 = vadd.f32 %v6179, %v6250
    %v6266 = vadd.f32 %v6182, %v6252
    %v6267 = vadd.f32 %v6185, %v6254
    %v6268 = vadd.f32 %v6188, %v6256
    %v6269 = vadd.f32 %v6191, %v6258
    %v6270 = vadd.f32 %v6194, %v6260
    %v6271 = vadd.f32 %v6197, %v6262
    %v6272 = vadd.f32 %v6200, %v6264
    %v6273 = vsub.f32 %v6169, %v6265
    %v6274 = vsub.f32 %v6170, %v6266
    %v6275 = vsub.f32 %v6171, %v6267
    %v6276 = vsub.f32 %v6172, %v6268
    %v6277 = vsub.f32 %v6173, %v6269
    %v6278 = vsub.f32 %v6174, %v6270
    %v6279 = vsub.f32 %v6175, %v6271
    %v6280 = vsub.f32 %v6176, %v6272
    %v6281 = vsel %vm245, %v6273, -inf
    %v6282 = vsel %vm245, %v6274, -inf
    %v6283 = vmax.f32 %v6281, %v6282
    %v6284 = vrot.slane %v6283, 4
    %v6285 = vmax.f32 %v6283, %v6284
    %v6286 = vrot.slane %v6285, 2
    %v6287 = vmax.f32 %v6285, %v6286
    %v6288 = vrot.slane %v6287, 1
    %v6289 = vmax.f32 %v6287, %v6288
    %v6290 = vsel %vm245, %v6275, -inf
    %v6291 = vsel %vm245, %v6276, -inf
    %v6292 = vmax.f32 %v6290, %v6291
    %v6293 = vrot.slane %v6292, 4
    %v6294 = vmax.f32 %v6292, %v6293
    %v6295 = vrot.slane %v6294, 2
    %v6296 = vmax.f32 %v6294, %v6295
    %v6297 = vrot.slane %v6296, 1
    %v6298 = vmax.f32 %v6296, %v6297
    %v6299 = vsel %vm245, %v6277, -inf
    %v6300 = vsel %vm245, %v6278, -inf
    %v6301 = vmax.f32 %v6299, %v6300
    %v6302 = vrot.slane %v6301, 4
    %v6303 = vmax.f32 %v6301, %v6302
    %v6304 = vrot.slane %v6303, 2
    %v6305 = vmax.f32 %v6303, %v6304
    %v6306 = vrot.slane %v6305, 1
    %v6307 = vmax.f32 %v6305, %v6306
    %v6308 = vsel %vm245, %v6279, -inf
    %v6309 = vsel %vm245, %v6280, -inf
    %v6310 = vmax.f32 %v6308, %v6309
    %v6311 = vrot.slane %v6310, 4
    %v6312 = vmax.f32 %v6310, %v6311
    %v6313 = vrot.slane %v6312, 2
    %v6314 = vmax.f32 %v6312, %v6313
    %v6315 = vrot.slane %v6314, 1
    %v6316 = vmax.f32 %v6314, %v6315
    %v6317 = vsub.f32 %v6273, %v6289
    %v6318 = vsub.f32 %v6274, %v6289
    %v6319 = vsub.f32 %v6275, %v6298
    %v6320 = vsub.f32 %v6276, %v6298
    %v6321 = vsub.f32 %v6277, %v6307
    %v6322 = vsub.f32 %v6278, %v6307
    %v6323 = vsub.f32 %v6279, %v6316
    %v6324 = vsub.f32 %v6280, %v6316
    %v6325 = vmul.f32 %v6317, 1.442695
    %v6326 = vpow.pop %v6325
    %v6327 = vmul.f32 %v6318, 1.442695
    %v6328 = vpow.pop %v6327
    %v6329 = vmul.f32 %v6319, 1.442695
    %v6330 = vpow.pop %v6329
    %v6331 = vmul.f32 %v6320, 1.442695
    %v6332 = vpow.pop %v6331
    %v6333 = vmul.f32 %v6321, 1.442695
    %v6334 = vpow.pop %v6333
    %v6335 = vmul.f32 %v6322, 1.442695
    %v6336 = vpow.pop %v6335
    %v6337 = vmul.f32 %v6323, 1.442695
    %v6338 = vpow.pop %v6337
    %v6339 = vmul.f32 %v6324, 1.442695
    %v6340 = vpow.pop %v6339
    %v6341 = vsel %vm245, %v6326, 0.0
    %v6342 = vsel %vm245, %v6328, 0.0
    %v6343 = vadd.f32 %v6341, %v6342
    %v6344 = vrot.slane %v6343, 4
    %v6345 = vadd.f32 %v6343, %v6344
    %v6346 = vrot.slane %v6345, 2
    %v6347 = vadd.f32 %v6345, %v6346
    %v6348 = vrot.slane %v6347, 1
    %v6349 = vadd.f32 %v6347, %v6348
    %v6350 = vsel %vm245, %v6330, 0.0
    %v6351 = vsel %vm245, %v6332, 0.0
    %v6352 = vadd.f32 %v6350, %v6351
    %v6353 = vrot.slane %v6352, 4
    %v6354 = vadd.f32 %v6352, %v6353
    %v6355 = vrot.slane %v6354, 2
    %v6356 = vadd.f32 %v6354, %v6355
    %v6357 = vrot.slane %v6356, 1
    %v6358 = vadd.f32 %v6356, %v6357
    %v6359 = vsel %vm245, %v6334, 0.0
    %v6360 = vsel %vm245, %v6336, 0.0
    %v6361 = vadd.f32 %v6359, %v6360
    %v6362 = vrot.slane %v6361, 4
    %v6363 = vadd.f32 %v6361, %v6362
    %v6364 = vrot.slane %v6363, 2
    %v6365 = vadd.f32 %v6363, %v6364
    %v6366 = vrot.slane %v6365, 1
    %v6367 = vadd.f32 %v6365, %v6366
    %v6368 = vsel %vm245, %v6338, 0.0
    %v6369 = vsel %vm245, %v6340, 0.0
    %v6370 = vadd.f32 %v6368, %v6369
    %v6371 = vrot.slane %v6370, 4
    %v6372 = vadd.f32 %v6370, %v6371
    %v6373 = vrot.slane %v6372, 2
    %v6374 = vadd.f32 %v6372, %v6373
    %v6375 = vrot.slane %v6374, 1
    %v6376 = vadd.f32 %v6374, %v6375
    %v6377 = vlog2.pop %v6349
    %v6378 = vmul.f32 %v6377, 0.6931472
    %v6379 = vlog2.pop %v6358
    %v6380 = vmul.f32 %v6379, 0.6931472
    %v6381 = vlog2.pop %v6367
    %v6382 = vmul.f32 %v6381, 0.6931472
    %v6383 = vlog2.pop %v6376
    %v6384 = vmul.f32 %v6383, 0.6931472
    %v6385 = vadd.f32 %v6289, %v6378
    %v6386 = vadd.f32 %v6298, %v6380
    %v6387 = vadd.f32 %v6307, %v6382
    %v6388 = vadd.f32 %v6316, %v6384
    %v6389 = vsub.f32 %v6273, %v6385
    %v6390 = vsub.f32 %v6274, %v6385
    %v6391 = vsub.f32 %v6275, %v6386
    %v6392 = vsub.f32 %v6276, %v6386
    %v6393 = vsub.f32 %v6277, %v6387
    %v6394 = vsub.f32 %v6278, %v6387
    %v6395 = vsub.f32 %v6279, %v6388
    %v6396 = vsub.f32 %v6280, %v6388
    %v6397 = vmul.f32 %v6389, 1.442695
    %v6398 = vpow.pop %v6397
    %v6399 = vmul.f32 %v6390, 1.442695
    %v6400 = vpow.pop %v6399
    %v6401 = vmul.f32 %v6391, 1.442695
    %v6402 = vpow.pop %v6401
    %v6403 = vmul.f32 %v6392, 1.442695
    %v6404 = vpow.pop %v6403
    %v6405 = vmul.f32 %v6393, 1.442695
    %v6406 = vpow.pop %v6405
    %v6407 = vmul.f32 %v6394, 1.442695
    %v6408 = vpow.pop %v6407
    %v6409 = vmul.f32 %v6395, 1.442695
    %v6410 = vpow.pop %v6409
    %v6411 = vmul.f32 %v6396, 1.442695
    %v6412 = vpow.pop %v6411
    %v6414 = vsel %vm245, %v6398, 0
    %v6417 = vsel %vm245, %v6400, 0
    %6419 = vmatprep.subr.mxu0 0.0
    %6420 = vmatpush1.msra.mxu0 0.0
    %6421 = vmatprep.subr.mxu0 0.0
    %6422 = vmatpush1.msra.mxu0 0.0
    %6423 = vmatprep.subr.mxu0 0.0
    %6424 = vmatpush1.msra.mxu0 0.0
    %6425 = vmatprep.subr.mxu0 0.0
    %6426 = vmatpush1.msra.mxu0 0.0
    %6427 = vmatprep.subr.mxu0 0.0
    %6428 = vmatpush1.msra.mxu0 0.0
    %6429 = vmatprep.subr.mxu0 0.0
    %6430 = vmatpush1.msra.mxu0 0.0
    %6431 = vmatprep.subr.mxu0 0.0
    %6432 = vmatpush1.msra.mxu0 0.0
    %6433 = vmatprep.subr.mxu0 0.0
    %6434 = vmatpush1.msra.mxu0 0.0
    %6435 = vmatprep.subr.mxu0 0.0
    %6436 = vmatpush1.msra.mxu0 0.0
    %6437 = vmatprep.subr.mxu0 0.0
    %6438 = vmatpush1.msra.mxu0 0.0
    %6439 = vmatprep.subr.mxu0 0.0
    %6440 = vmatpush1.msra.mxu0 0.0
    %6441 = vmatprep.subr.mxu0 0.0
    %6442 = vmatpush1.msra.mxu0 0.0
    %6443 = vmatprep.subr.mxu0 0.0
    %6444 = vmatpush1.msra.mxu0 0.0
    %6445 = vmatprep.subr.mxu0 0.0
    %6446 = vmatpush1.msra.mxu0 0.0
    %6447 = vmatprep.subr.mxu0 0.0
    %6448 = vmatpush1.msra.mxu0 %v989
    %6449 = vmatprep.subr.mxu0 0.0
    %6450 = vmatpush1.msra.mxu0 %v988
    %6451 = vmatprep.subr.mxu0 0.0
    %6452 = vmatpush2.msra.mxu0 0.0
    %6453 = vmatprep.subr.mxu0 0.0
    %6454 = vmatpush2.msra.mxu0 0.0
    %6455 = vmatprep.subr.mxu0 0.0
    %6456 = vmatpush2.msra.mxu0 0.0
    %6457 = vmatprep.subr.mxu0 0.0
    %6458 = vmatpush2.msra.mxu0 0.0
    %6459 = vmatprep.subr.mxu0 0.0
    %6460 = vmatpush2.msra.mxu0 0.0
    %6461 = vmatprep.subr.mxu0 0.0
    %6462 = vmatpush2.msra.mxu0 0.0
    %6463 = vmatprep.subr.mxu0 0.0
    %6464 = vmatpush2.msra.mxu0 0.0
    %6465 = vmatprep.subr.mxu0 0.0
    %6466 = vmatpush2.msra.mxu0 0.0
    %6467 = vmatprep.subr.mxu0 0.0
    %6468 = vmatpush2.msra.mxu0 0.0
    %6469 = vmatprep.subr.mxu0 0.0
    %6470 = vmatpush2.msra.mxu0 0.0
    %6471 = vmatprep.subr.mxu0 0.0
    %6472 = vmatpush2.msra.mxu0 0.0
    %6473 = vmatprep.subr.mxu0 0.0
    %6474 = vmatpush2.msra.mxu0 0.0
    %6475 = vmatprep.subr.mxu0 0.0
    %6476 = vmatpush2.msra.mxu0 0.0
    %6477 = vmatprep.subr.mxu0 0.0
    %6478 = vmatpush2.msra.mxu0 0.0
    %6479 = vmatprep.subr.mxu0 0.0
    %6480 = vmatpush2.msra.mxu0 0.0
    %6481 = vmatprep.subr.mxu0 0.0
    %6482 = vmatpush2.msra.mxu0 0.0
    %6483 = vmatprep.mubr.f32.mxu0 0.0
    %6484 = vmatmul.mubr.f32.gmra.mxu0 %v6414
    %v6485 = vpop.f32.mrf.mxu0
    %v6486 = vadd.f32 0.0, %v6485
    %v6487 = vpop.f32.mrf.mxu0
    %6488 = vmatprep.mubr.f32.mxu0 0.0
    %6489 = vmatmul.mubr.f32.gmra.mxu0 %v6417
    %v6490 = vpop.f32.mrf.mxu0
    %v6491 = vadd.f32 0.0, %v6490
    %v6492 = vpop.f32.mrf.mxu0
    %6493 = vdwg.mxu0
    %v6495 = vsel %vm245, %v6402, 0
    %v6498 = vsel %vm245, %v6404, 0
    %6500 = vmatprep.subr.mxu0 0.0
    %6501 = vmatpush1.msra.mxu0 0.0
    %6502 = vmatprep.subr.mxu0 0.0
    %6503 = vmatpush1.msra.mxu0 0.0
    %6504 = vmatprep.subr.mxu0 0.0
    %6505 = vmatpush1.msra.mxu0 0.0
    %6506 = vmatprep.subr.mxu0 0.0
    %6507 = vmatpush1.msra.mxu0 0.0
    %6508 = vmatprep.subr.mxu0 0.0
    %6509 = vmatpush1.msra.mxu0 0.0
    %6510 = vmatprep.subr.mxu0 0.0
    %6511 = vmatpush1.msra.mxu0 0.0
    %6512 = vmatprep.subr.mxu0 0.0
    %6513 = vmatpush1.msra.mxu0 0.0
    %6514 = vmatprep.subr.mxu0 0.0
    %6515 = vmatpush1.msra.mxu0 0.0
    %6516 = vmatprep.subr.mxu0 0.0
    %6517 = vmatpush1.msra.mxu0 0.0
    %6518 = vmatprep.subr.mxu0 0.0
    %6519 = vmatpush1.msra.mxu0 0.0
    %6520 = vmatprep.subr.mxu0 0.0
    %6521 = vmatpush1.msra.mxu0 0.0
    %6522 = vmatprep.subr.mxu0 0.0
    %6523 = vmatpush1.msra.mxu0 0.0
    %6524 = vmatprep.subr.mxu0 0.0
    %6525 = vmatpush1.msra.mxu0 0.0
    %6526 = vmatprep.subr.mxu0 0.0
    %6527 = vmatpush1.msra.mxu0 0.0
    %6528 = vmatprep.subr.mxu0 0.0
    %6529 = vmatpush1.msra.mxu0 %v991
    %6530 = vmatprep.subr.mxu0 0.0
    %6531 = vmatpush1.msra.mxu0 %v990
    %6532 = vmatprep.subr.mxu0 0.0
    %6533 = vmatpush2.msra.mxu0 0.0
    %6534 = vmatprep.subr.mxu0 0.0
    %6535 = vmatpush2.msra.mxu0 0.0
    %6536 = vmatprep.subr.mxu0 0.0
    %6537 = vmatpush2.msra.mxu0 0.0
    %6538 = vmatprep.subr.mxu0 0.0
    %6539 = vmatpush2.msra.mxu0 0.0
    %6540 = vmatprep.subr.mxu0 0.0
    %6541 = vmatpush2.msra.mxu0 0.0
    %6542 = vmatprep.subr.mxu0 0.0
    %6543 = vmatpush2.msra.mxu0 0.0
    %6544 = vmatprep.subr.mxu0 0.0
    %6545 = vmatpush2.msra.mxu0 0.0
    %6546 = vmatprep.subr.mxu0 0.0
    %6547 = vmatpush2.msra.mxu0 0.0
    %6548 = vmatprep.subr.mxu0 0.0
    %6549 = vmatpush2.msra.mxu0 0.0
    %6550 = vmatprep.subr.mxu0 0.0
    %6551 = vmatpush2.msra.mxu0 0.0
    %6552 = vmatprep.subr.mxu0 0.0
    %6553 = vmatpush2.msra.mxu0 0.0
    %6554 = vmatprep.subr.mxu0 0.0
    %6555 = vmatpush2.msra.mxu0 0.0
    %6556 = vmatprep.subr.mxu0 0.0
    %6557 = vmatpush2.msra.mxu0 0.0
    %6558 = vmatprep.subr.mxu0 0.0
    %6559 = vmatpush2.msra.mxu0 0.0
    %6560 = vmatprep.subr.mxu0 0.0
    %6561 = vmatpush2.msra.mxu0 0.0
    %6562 = vmatprep.subr.mxu0 0.0
    %6563 = vmatpush2.msra.mxu0 0.0
    %6564 = vmatprep.mubr.f32.mxu0 0.0
    %6565 = vmatmul.mubr.f32.gmra.mxu0 %v6495
    %v6566 = vpop.f32.mrf.mxu0
    %v6567 = vadd.f32 0.0, %v6566
    %v6568 = vpop.f32.mrf.mxu0
    %6569 = vmatprep.mubr.f32.mxu0 0.0
    %6570 = vmatmul.mubr.f32.gmra.mxu0 %v6498
    %v6571 = vpop.f32.mrf.mxu0
    %v6572 = vadd.f32 0.0, %v6571
    %v6573 = vpop.f32.mrf.mxu0
    %6574 = vdwg.mxu0
    %v6576 = vsel %vm245, %v6406, 0
    %v6579 = vsel %vm245, %v6408, 0
    %6581 = vmatprep.subr.mxu0 0.0
    %6582 = vmatpush1.msra.mxu0 0.0
    %6583 = vmatprep.subr.mxu0 0.0
    %6584 = vmatpush1.msra.mxu0 0.0
    %6585 = vmatprep.subr.mxu0 0.0
    %6586 = vmatpush1.msra.mxu0 0.0
    %6587 = vmatprep.subr.mxu0 0.0
    %6588 = vmatpush1.msra.mxu0 0.0
    %6589 = vmatprep.subr.mxu0 0.0
    %6590 = vmatpush1.msra.mxu0 0.0
    %6591 = vmatprep.subr.mxu0 0.0
    %6592 = vmatpush1.msra.mxu0 0.0
    %6593 = vmatprep.subr.mxu0 0.0
    %6594 = vmatpush1.msra.mxu0 0.0
    %6595 = vmatprep.subr.mxu0 0.0
    %6596 = vmatpush1.msra.mxu0 0.0
    %6597 = vmatprep.subr.mxu0 0.0
    %6598 = vmatpush1.msra.mxu0 0.0
    %6599 = vmatprep.subr.mxu0 0.0
    %6600 = vmatpush1.msra.mxu0 0.0
    %6601 = vmatprep.subr.mxu0 0.0
    %6602 = vmatpush1.msra.mxu0 0.0
    %6603 = vmatprep.subr.mxu0 0.0
    %6604 = vmatpush1.msra.mxu0 0.0
    %6605 = vmatprep.subr.mxu0 0.0
    %6606 = vmatpush1.msra.mxu0 0.0
    %6607 = vmatprep.subr.mxu0 0.0
    %6608 = vmatpush1.msra.mxu0 0.0
    %6609 = vmatprep.subr.mxu0 0.0
    %6610 = vmatpush1.msra.mxu0 %v989
    %6611 = vmatprep.subr.mxu0 0.0
    %6612 = vmatpush1.msra.mxu0 %v988
    %6613 = vmatprep.subr.mxu0 0.0
    %6614 = vmatpush2.msra.mxu0 0.0
    %6615 = vmatprep.subr.mxu0 0.0
    %6616 = vmatpush2.msra.mxu0 0.0
    %6617 = vmatprep.subr.mxu0 0.0
    %6618 = vmatpush2.msra.mxu0 0.0
    %6619 = vmatprep.subr.mxu0 0.0
    %6620 = vmatpush2.msra.mxu0 0.0
    %6621 = vmatprep.subr.mxu0 0.0
    %6622 = vmatpush2.msra.mxu0 0.0
    %6623 = vmatprep.subr.mxu0 0.0
    %6624 = vmatpush2.msra.mxu0 0.0
    %6625 = vmatprep.subr.mxu0 0.0
    %6626 = vmatpush2.msra.mxu0 0.0
    %6627 = vmatprep.subr.mxu0 0.0
    %6628 = vmatpush2.msra.mxu0 0.0
    %6629 = vmatprep.subr.mxu0 0.0
    %6630 = vmatpush2.msra.mxu0 0.0
    %6631 = vmatprep.subr.mxu0 0.0
    %6632 = vmatpush2.msra.mxu0 0.0
    %6633 = vmatprep.subr.mxu0 0.0
    %6634 = vmatpush2.msra.mxu0 0.0
    %6635 = vmatprep.subr.mxu0 0.0
    %6636 = vmatpush2.msra.mxu0 0.0
    %6637 = vmatprep.subr.mxu0 0.0
    %6638 = vmatpush2.msra.mxu0 0.0
    %6639 = vmatprep.subr.mxu0 0.0
    %6640 = vmatpush2.msra.mxu0 0.0
    %6641 = vmatprep.subr.mxu0 0.0
    %6642 = vmatpush2.msra.mxu0 0.0
    %6643 = vmatprep.subr.mxu0 0.0
    %6644 = vmatpush2.msra.mxu0 0.0
    %6645 = vmatprep.mubr.f32.mxu0 0.0
    %6646 = vmatmul.mubr.f32.gmra.mxu0 %v6576
    %v6647 = vpop.f32.mrf.mxu0
    %v6648 = vadd.f32 0.0, %v6647
    %v6649 = vpop.f32.mrf.mxu0
    %6650 = vmatprep.mubr.f32.mxu0 0.0
    %6651 = vmatmul.mubr.f32.gmra.mxu0 %v6579
    %v6652 = vpop.f32.mrf.mxu0
    %v6653 = vadd.f32 0.0, %v6652
    %v6654 = vpop.f32.mrf.mxu0
    %6655 = vdwg.mxu0
    %v6657 = vsel %vm245, %v6410, 0
    %v6660 = vsel %vm245, %v6412, 0
    %6662 = vmatprep.subr.mxu0 0.0
    %6663 = vmatpush1.msra.mxu0 0.0
    %6664 = vmatprep.subr.mxu0 0.0
    %6665 = vmatpush1.msra.mxu0 0.0
    %6666 = vmatprep.subr.mxu0 0.0
    %6667 = vmatpush1.msra.mxu0 0.0
    %6668 = vmatprep.subr.mxu0 0.0
    %6669 = vmatpush1.msra.mxu0 0.0
    %6670 = vmatprep.subr.mxu0 0.0
    %6671 = vmatpush1.msra.mxu0 0.0
    %6672 = vmatprep.subr.mxu0 0.0
    %6673 = vmatpush1.msra.mxu0 0.0
    %6674 = vmatprep.subr.mxu0 0.0
    %6675 = vmatpush1.msra.mxu0 0.0
    %6676 = vmatprep.subr.mxu0 0.0
    %6677 = vmatpush1.msra.mxu0 0.0
    %6678 = vmatprep.subr.mxu0 0.0
    %6679 = vmatpush1.msra.mxu0 0.0
    %6680 = vmatprep.subr.mxu0 0.0
    %6681 = vmatpush1.msra.mxu0 0.0
    %6682 = vmatprep.subr.mxu0 0.0
    %6683 = vmatpush1.msra.mxu0 0.0
    %6684 = vmatprep.subr.mxu0 0.0
    %6685 = vmatpush1.msra.mxu0 0.0
    %6686 = vmatprep.subr.mxu0 0.0
    %6687 = vmatpush1.msra.mxu0 0.0
    %6688 = vmatprep.subr.mxu0 0.0
    %6689 = vmatpush1.msra.mxu0 0.0
    %6690 = vmatprep.subr.mxu0 0.0
    %6691 = vmatpush1.msra.mxu0 %v991
    %6692 = vmatprep.subr.mxu0 0.0
    %6693 = vmatpush1.msra.mxu0 %v990
    %6694 = vmatprep.subr.mxu0 0.0
    %6695 = vmatpush2.msra.mxu0 0.0
    %6696 = vmatprep.subr.mxu0 0.0
    %6697 = vmatpush2.msra.mxu0 0.0
    %6698 = vmatprep.subr.mxu0 0.0
    %6699 = vmatpush2.msra.mxu0 0.0
    %6700 = vmatprep.subr.mxu0 0.0
    %6701 = vmatpush2.msra.mxu0 0.0
    %6702 = vmatprep.subr.mxu0 0.0
    %6703 = vmatpush2.msra.mxu0 0.0
    %6704 = vmatprep.subr.mxu0 0.0
    %6705 = vmatpush2.msra.mxu0 0.0
    %6706 = vmatprep.subr.mxu0 0.0
    %6707 = vmatpush2.msra.mxu0 0.0
    %6708 = vmatprep.subr.mxu0 0.0
    %6709 = vmatpush2.msra.mxu0 0.0
    %6710 = vmatprep.subr.mxu0 0.0
    %6711 = vmatpush2.msra.mxu0 0.0
    %6712 = vmatprep.subr.mxu0 0.0
    %6713 = vmatpush2.msra.mxu0 0.0
    %6714 = vmatprep.subr.mxu0 0.0
    %6715 = vmatpush2.msra.mxu0 0.0
    %6716 = vmatprep.subr.mxu0 0.0
    %6717 = vmatpush2.msra.mxu0 0.0
    %6718 = vmatprep.subr.mxu0 0.0
    %6719 = vmatpush2.msra.mxu0 0.0
    %6720 = vmatprep.subr.mxu0 0.0
    %6721 = vmatpush2.msra.mxu0 0.0
    %6722 = vmatprep.subr.mxu0 0.0
    %6723 = vmatpush2.msra.mxu0 0.0
    %6724 = vmatprep.subr.mxu0 0.0
    %6725 = vmatpush2.msra.mxu0 0.0
    %6726 = vmatprep.mubr.f32.mxu0 0.0
    %6727 = vmatmul.mubr.f32.gmra.mxu0 %v6657
    %v6728 = vpop.f32.mrf.mxu0
    %v6729 = vadd.f32 0.0, %v6728
    %v6730 = vpop.f32.mrf.mxu0
    %6731 = vmatprep.mubr.f32.mxu0 0.0
    %6732 = vmatmul.mubr.f32.gmra.mxu0 %v6660
    %v6733 = vpop.f32.mrf.mxu0
    %v6734 = vadd.f32 0.0, %v6733
    %v6735 = vpop.f32.mrf.mxu0
    %6736 = vdwg.mxu0
    %v6737 = vsub.f32 %v984, %v6486
    %v6738 = vsub.f32 %v985, %v6491
    %v6739 = vsel %vm389, %v6737, 0.0
    %6740 = vadd.xlane.f32.xlu0 %v6739
    %v6741 = vpop.xlane.xlu0 %6740
    %v6742 = vsel %vm389, %v6738, 0.0
    %6743 = vadd.xlane.f32.xlu0 %v6742
    %v6744 = vpop.xlane.xlu0 %6743
    %v6745 = vadd.f32 %v6741, %v6744
    %v6746 = vrot.slane %v6745, 4
    %v6747 = vadd.f32 %v6745, %v6746
    %v6748 = vrot.slane %v6747, 2
    %v6749 = vadd.f32 %v6747, %v6748
    %v6750 = vrot.slane %v6749, 1
    %v6751 = vadd.f32 %v6749, %v6750
    %v6752 = vsub.f32 %v986, %v6567
    %v6753 = vsub.f32 %v987, %v6572
    %v6754 = vsel %vm389, %v6752, 0.0
    %6755 = vadd.xlane.f32.xlu0 %v6754
    %v6756 = vpop.xlane.xlu0 %6755
    %v6757 = vsel %vm389, %v6753, 0.0
    %6758 = vadd.xlane.f32.xlu0 %v6757
    %v6759 = vpop.xlane.xlu0 %6758
    %v6760 = vadd.f32 %v6756, %v6759
    %v6761 = vrot.slane %v6760, 4
    %v6762 = vadd.f32 %v6760, %v6761
    %v6763 = vrot.slane %v6762, 2
    %v6764 = vadd.f32 %v6762, %v6763
    %v6765 = vrot.slane %v6764, 1
    %v6766 = vadd.f32 %v6764, %v6765
    %vm6767 = vcmask 7168
    %v6768 = vsel %vm6767, %v6751, %v6766
    %vm6769 = vcmask 8192
    %v6770 = vsel %vm6769, %v6768, inf
    %6771 = vmin.xlane.f32.xlu0 %v6770
    %v6772 = vpop.xlane.xlu0 %6771
    %v6773 = vsel %vm6769, %v6768, -inf
    %6774 = vmax.xlane.f32.xlu0 %v6773
    %v6775 = vpop.xlane.xlu0 %6774
    %v6776 = vsub.f32 %v6768, %v6772
    %v6777 = vsub.f32 0.0, %v6776
    %v6778 = vsub.f32 %v6775, %v6772
    %v6779 = vrcp.pop %v6778
    %v6780 = vmul.f32 %v6777, %v6779
    %v6781 = vmul.f32 %v6780, 1.442695
    %v6782 = vpow.pop %v6781
    %v6783 = vadd.f32 %v6782, 0.0
    %v6784 = vsub.f32 %v984, %v6648
    %v6785 = vsub.f32 %v985, %v6653
    %v6786 = vsel %vm389, %v6784, 0.0
    %6787 = vadd.xlane.f32.xlu0 %v6786
    %v6788 = vpop.xlane.xlu0 %6787
    %v6789 = vsel %vm389, %v6785, 0.0
    %6790 = vadd.xlane.f32.xlu0 %v6789
    %v6791 = vpop.xlane.xlu0 %6790
    %v6792 = vadd.f32 %v6788, %v6791
    %v6793 = vrot.slane %v6792, 4
    %v6794 = vadd.f32 %v6792, %v6793
    %v6795 = vrot.slane %v6794, 2
    %v6796 = vadd.f32 %v6794, %v6795
    %v6797 = vrot.slane %v6796, 1
    %v6798 = vadd.f32 %v6796, %v6797
    %v6799 = vsub.f32 %v986, %v6729
    %v6800 = vsub.f32 %v987, %v6734
    %v6801 = vsel %vm389, %v6799, 0.0
    %6802 = vadd.xlane.f32.xlu0 %v6801
    %v6803 = vpop.xlane.xlu0 %6802
    %v6804 = vsel %vm389, %v6800, 0.0
    %6805 = vadd.xlane.f32.xlu0 %v6804
    %v6806 = vpop.xlane.xlu0 %6805
    %v6807 = vadd.f32 %v6803, %v6806
    %v6808 = vrot.slane %v6807, 4
    %v6809 = vadd.f32 %v6807, %v6808
    %v6810 = vrot.slane %v6809, 2
    %v6811 = vadd.f32 %v6809, %v6810
    %v6812 = vrot.slane %v6811, 1
    %v6813 = vadd.f32 %v6811, %v6812
    %v6814 = vsel %vm6767, %v6798, %v6813
    %v6815 = vsel %vm6769, %v6814, inf
    %6816 = vmin.xlane.f32.xlu0 %v6815
    %v6817 = vpop.xlane.xlu0 %6816
    %v6818 = vsel %vm6769, %v6814, -inf
    %6819 = vmax.xlane.f32.xlu0 %v6818
    %v6820 = vpop.xlane.xlu0 %6819
    %v6821 = vsub.f32 %v6814, %v6817
    %v6822 = vsub.f32 0.0, %v6821
    %v6823 = vsub.f32 %v6820, %v6817
    %v6824 = vrcp.pop %v6823
    %v6825 = vmul.f32 %v6822, %v6824
    %v6826 = vmul.f32 %v6825, 1.442695
    %v6827 = vpow.pop %v6826
    %v6828 = vadd.f32 %v6783, %v6827
    %v6829 = vmul.f32 %v6828, 0.5
    %6830 = vst.msk [vmem:[#allocation2] sm:$0x1] %vm6769, %v6829
    // Predicated region
    $region86: #{gsmodel_forward.1} parent=1 // pred_check
      _
    $region87: #{gsmodel_forward.1} parent=1 // pred_check_branch
      %6832 = sbr.rel (0) target = $region89
    $region88: #{gsmodel_forward.1} parent=1 // pred_region
      %s6834 = ssub.s32 16, 16
      %6835 = vsyncadd [#allocation3], %s6834
      %s6837 = sshll.u32 [#allocation2], 4
      %s6838 = int_to_ptr.vmem [resolvable:$true] %s6837
      %6840 = dma.vmem_to_hbm [thread:$0]  %s6838, 16, %s21, [#allocation3]
    $region89: #{gsmodel_forward.1} parent=1 // pred_fallthru
      _
    // Predicated region
    $region90: #{gsmodel_forward.1} parent=1 // pred_check
      _
    $region91: #{gsmodel_forward.1} parent=1 // pred_check_branch
      %6842 = sbr.rel (0) target = $region93
    $region92: #{gsmodel_forward.1} parent=1 // pred_region
      %6843 = dma.done [#allocation3], 16
    $region93: #{gsmodel_forward.1} parent=1 // pred_fallthru
      _
    %6844 = vsyncpa [#allocation3], 1

</llo_original>
